<compile_context>
chip_gen: v7x
topology: tpu7x:2x2x1
jax: 0.10.0
libtpu: 0.0.40
codegen_flags: <defaults>
</compile_context>

<pallas_src>
import functools

import jax
import jax.numpy as jnp
import numpy as np
from jax.experimental import pallas as pl
from jax.experimental.pallas import tpu as pltpu

MATMUL_DTYPE = jnp.bfloat16   # set to jnp.float32 for bit-closer-to-f32 results


def conv3x3_bias_prelu_kernel(x0_ref, x1_ref, x2_ref, w_ref, b_ref, alpha_ref,
                              o_ref):
    """One row-tile of SAME-padded 3x3 conv + bias + PReLU.

    x{0,1,2}_ref : (TH, W+2, Cin)      kh-shifted, width-padded input slabs (bf16)
    w_ref        : (3, 3, Cin, Cout_p) conv weights (bf16), Cout padded to 128k
    b_ref        : (1, Cout_p)         bias (f32)
    alpha_ref    : (1, 1)              PReLU slope (f32, SMEM scalar)
    o_ref        : (TH*W, Cout_p)      conv+bias+PReLU output (f32, lane-dense)
    """
    th, wp2, cin = x0_ref.shape
    wd = wp2 - 2
    cout = o_ref.shape[-1]

    acc = jnp.zeros((th * wd, cout), jnp.float32)
    slabs = (x0_ref[...], x1_ref[...], x2_ref[...])
    for kh in range(3):                       # row tap: pre-shifted slab
        s = slabs[kh]
        for kw in range(3):                   # column tap: static width slice
            lhs = s[:, kw:kw + wd, :].reshape(th * wd, cin)
            acc = acc + jnp.dot(lhs, w_ref[kh, kw],
                                preferred_element_type=jnp.float32)

    h = acc + b_ref[...]                      # (TH*W, Cout_p) + (1, Cout_p)
    a = alpha_ref[0, 0]                       # PReLU slope (scalar)
    o_ref[...] = jnp.where(h > 0, h, a * h)


def _choose_row_tile(m_rows, w, cin, cout_p, budget_bytes=4 * 1024 * 1024):
    """Largest divisor `th` of N*H whose per-step blocks fit a conservative
    VMEM budget after the pipeline's double-buffering.  Row tiles may cross
    image boundaries (the kh shift is already baked into the slabs), so any
    divisor of N*H is a valid split."""
    best = None
    for th in sorted((d for d in range(1, m_rows + 1) if m_rows % d == 0),
                     reverse=True):
        out_b = th * w * cout_p * 4                 # f32 output tile
        in_b = 3 * th * (w + 2) * cin * 2           # bf16 input slabs
        if 2 * (out_b + in_b) > budget_bytes:       # x2 for double-buffering
            continue
        if (th * w) % 8 == 0 or th == m_rows:
            return th
        if best is None:
            best = th                               # fits, but not 8-aligned
    return best if best is not None else 1


@functools.partial(jax.jit, static_argnames=("scale",))
def upsampler_forward(x_nchw, params, *, scale=2):
    w_oihw = params["w"]                       # (Cout, Cin, 3, 3)
    bias = params["b"]                         # (Cout,)
    alpha = params["alpha"]                    # (1,)

    n, cin, h, w = x_nchw.shape
    cout = w_oihw.shape[0]
    assert cout == cin * scale * scale
    cout_p = ((cout + 127) // 128) * 128       # lane-dense matmul-N / output dim
    wp2 = w + 2

    # NHWC, cast to bf16 once, zero-pad spatially, build the 3 kh-shifted slabs.
    x = jnp.transpose(x_nchw, (0, 2, 3, 1)).astype(MATMUL_DTYPE)
    xpad = jnp.pad(x, ((0, 0), (1, 1), (1, 1), (0, 0)))         # (N, H+2, W+2, C)
    slabs = [xpad[:, k:k + h].reshape(n * h, wp2, cin) for k in range(3)]

    # Weights: (Cout, Cin, 3, 3) -> (3, 3, Cin, Cout_p), zero-padded, bf16.
    wmat = jnp.transpose(w_oihw, (2, 3, 1, 0))
    wmat = jnp.pad(wmat, ((0, 0), (0, 0), (0, 0), (0, cout_p - cout)))
    wmat = wmat.astype(MATMUL_DTYPE)
    bvec = jnp.pad(bias, (0, cout_p - cout)).reshape(1, cout_p).astype(jnp.float32)
    avec = alpha.reshape(1, 1).astype(jnp.float32)

    m_rows = n * h
    th = _choose_row_tile(m_rows, w, cin, cout_p)
    grid = (m_rows // th,)
    m = m_rows * w

    bytes_accessed = (3 * m_rows * wp2 * cin * 2    # bf16 input slabs
                      + 9 * cin * cout_p * 2        # bf16 weights
                      + 4 * cout_p                  # bias
                      + m * cout_p * 4)             # f32 output
    cost = pl.CostEstimate(flops=2 * m * 9 * cin * cout_p,
                           transcendentals=0,
                           bytes_accessed=bytes_accessed)

    y = pl.pallas_call(
        conv3x3_bias_prelu_kernel,
        out_shape=jax.ShapeDtypeStruct((m, cout_p), jnp.float32),
        grid=grid,
        in_specs=[
            pl.BlockSpec((th, wp2, cin), lambda i: (i, 0, 0)),
            pl.BlockSpec((th, wp2, cin), lambda i: (i, 0, 0)),
            pl.BlockSpec((th, wp2, cin), lambda i: (i, 0, 0)),
            pl.BlockSpec((3, 3, cin, cout_p), lambda i: (0, 0, 0, 0)),
            pl.BlockSpec((1, cout_p), lambda i: (0, 0)),
            pl.BlockSpec((1, 1), lambda i: (0, 0),
                         memory_space=pltpu.MemorySpace.SMEM),
        ],
        out_specs=pl.BlockSpec((th * w, cout_p), lambda i: (i, 0)),
        compiler_params=pltpu.CompilerParams(
            dimension_semantics=("parallel",),
            vmem_limit_bytes=32 * 1024 * 1024),
        cost_estimate=cost,
    )(slabs[0], slabs[1], slabs[2], wmat, bvec, avec)

    # TODO(synk): pixel-shuffle could be fused into the kernel's output path if
    # channel padding were reorganized; kept in XLA as pure data movement.
    c_out = cout // (scale * scale)
    y = y[:, :cout].reshape(n, h, w, c_out, scale, scale)
    out = jnp.transpose(y, (0, 3, 1, 4, 2, 5)).reshape(
        n, c_out, h * scale, w * scale)
    return out


def _reference_forward(x_nchw, params, *, scale=2):
    """Pure-JAX f32 reference matching the PyTorch module's forward."""
    w, b, alpha = params["w"], params["b"], params["alpha"]
    y = jax.lax.conv_general_dilated(
        x_nchw, w, window_strides=(1, 1), padding="SAME",
        dimension_numbers=("NCHW", "OIHW", "NCHW"))
    y = y + b[None, :, None, None]
    a = alpha[0]
    y = jnp.where(y > 0, y, a * y)                          # PReLU
    n, cr2, h, wd = y.shape
    c = cr2 // (scale * scale)
    y = y.reshape(n, c, scale, scale, h, wd)
    y = jnp.transpose(y, (0, 1, 4, 2, 5, 3))                # PixelShuffle
    return y.reshape(n, c, h * scale, wd * scale)


def init_params(key, channel, scale):
    cout = channel * scale * scale
    return {
        # torch.normal(zeros, 0.02) on (Cout, Cin, 3, 3)
        "w": 0.02 * jax.random.normal(key, (cout, channel, 3, 3), jnp.float32),
        "b": jnp.zeros((cout,), jnp.float32),
        "alpha": jnp.array([0.25], jnp.float32),            # nn.PReLU() default
    }


if __name__ == "__main__":
    key = jax.random.PRNGKey(0)
    kx, kp = jax.random.split(key)

    N, C, H, W = 2, 4, 16, 16
    SCALE = 2
    x = jax.random.normal(kx, (N, C, H, W), jnp.float32)
    params = init_params(kp, C, SCALE)

    out = jax.block_until_ready(upsampler_forward(x, params, scale=SCALE))
    ref = jax.block_until_ready(_reference_forward(x, params, scale=SCALE))

    assert out.shape == (N, C, H * SCALE, W * SCALE), out.shape
    # bf16 MXU operands with f32 accumulation: tolerance sized accordingly.
    np.testing.assert_allclose(np.asarray(out), np.asarray(ref),
                               rtol=3e-2, atol=3e-3)
    print("KERNEL_OK")
</pallas_src>

<mosaic_0001>
module attributes {stable_mosaic.version = 11 : i64} {
  func.func @conv3x3_bias_prelu_kernel(%arg0: i32, %arg1: memref<32x18x4xbf16, #tpu.memory_space<vmem>>, %arg2: memref<32x18x4xbf16, #tpu.memory_space<vmem>>, %arg3: memref<32x18x4xbf16, #tpu.memory_space<vmem>>, %arg4: memref<3x3x4x128xbf16, #tpu.memory_space<vmem>>, %arg5: memref<1x128xf32, #tpu.memory_space<vmem>>, %arg6: memref<1x1xf32, #tpu.memory_space<smem>>, %arg7: memref<512x128xf32, #tpu.memory_space<vmem>>) attributes {dimension_semantics = [#tpu.dimension_semantics<parallel>], iteration_bounds = array<i64: 1>, scalar_prefetch = 0 : i64, scratch_operands = 0 : i64, tpu.core_type = #tpu.core_type<tc>, window_params = [{transform_indices = @transform_0, window_bounds = array<i64: 32, 18, 4>}, {transform_indices = @transform_1, window_bounds = array<i64: 32, 18, 4>}, {transform_indices = @transform_2, window_bounds = array<i64: 32, 18, 4>}, {pipeline_mode = #tpu.pipeline_mode<synchronous>, transform_indices = @transform_3, window_bounds = array<i64: 3, 3, 4, 128>}, {pipeline_mode = #tpu.pipeline_mode<synchronous>, transform_indices = @transform_4, window_bounds = array<i64: 1, 128>}, {transform_indices = @transform_5, window_bounds = array<i64: 1, 1>}, {transform_indices = @transform_6, window_bounds = array<i64: 512, 128>}]} {
    %cst = arith.constant 0.000000e+00 : f32
    %0 = vector.broadcast %cst : f32 to vector<512x128xf32>
    %c0 = arith.constant 0 : index
    %c0_0 = arith.constant 0 : index
    %c0_1 = arith.constant 0 : index
    %1 = vector.load %arg1[%c0, %c0_0, %c0_1] : memref<32x18x4xbf16, #tpu.memory_space<vmem>>, vector<32x18x4xbf16>
    %c0_2 = arith.constant 0 : index
    %c0_3 = arith.constant 0 : index
    %c0_4 = arith.constant 0 : index
    %2 = vector.load %arg2[%c0_2, %c0_3, %c0_4] : memref<32x18x4xbf16, #tpu.memory_space<vmem>>, vector<32x18x4xbf16>
    %c0_5 = arith.constant 0 : index
    %c0_6 = arith.constant 0 : index
    %c0_7 = arith.constant 0 : index
    %3 = vector.load %arg3[%c0_5, %c0_6, %c0_7] : memref<32x18x4xbf16, #tpu.memory_space<vmem>>, vector<32x18x4xbf16>
    %4 = vector.extract_strided_slice %1 {offsets = [0, 0, 0], sizes = [32, 16, 4], strides = [1, 1, 1]} : vector<32x18x4xbf16> to vector<32x16x4xbf16>
    %5 = vector.shape_cast %4 : vector<32x16x4xbf16> to vector<512x4xbf16>
    %c0_8 = arith.constant 0 : index
    %c0_9 = arith.constant 0 : index
    %c0_10 = arith.constant 0 : index
    %c0_11 = arith.constant 0 : index
    %6 = vector.load %arg4[%c0_8, %c0_9, %c0_10, %c0_11] : memref<3x3x4x128xbf16, #tpu.memory_space<vmem>>, vector<1x1x4x128xbf16>
    %7 = vector.shape_cast %6 : vector<1x1x4x128xbf16> to vector<4x128xbf16>
    %cst_12 = arith.constant dense<0.000000e+00> : vector<512x128xf32>
    %8 = tpu.matmul %5, %7, %cst_12 {dimension_numbers = #tpu.dot_dimension_numbers<[1], [0], [0], [1], [0, 0, 1, 1], [], []>} : vector<512x4xbf16>, vector<4x128xbf16>, vector<512x128xf32> -> vector<512x128xf32>
    %9 = arith.addf %0, %8 : vector<512x128xf32>
    %10 = vector.extract_strided_slice %1 {offsets = [0, 1, 0], sizes = [32, 16, 4], strides = [1, 1, 1]} : vector<32x18x4xbf16> to vector<32x16x4xbf16>
    %11 = vector.shape_cast %10 : vector<32x16x4xbf16> to vector<512x4xbf16>
    %c0_13 = arith.constant 0 : index
    %c1 = arith.constant 1 : index
    %c0_14 = arith.constant 0 : index
    %c0_15 = arith.constant 0 : index
    %12 = vector.load %arg4[%c0_13, %c1, %c0_14, %c0_15] : memref<3x3x4x128xbf16, #tpu.memory_space<vmem>>, vector<1x1x4x128xbf16>
    %13 = vector.shape_cast %12 : vector<1x1x4x128xbf16> to vector<4x128xbf16>
    %cst_16 = arith.constant dense<0.000000e+00> : vector<512x128xf32>
    %14 = tpu.matmul %11, %13, %cst_16 {dimension_numbers = #tpu.dot_dimension_numbers<[1], [0], [0], [1], [0, 0, 1, 1], [], []>} : vector<512x4xbf16>, vector<4x128xbf16>, vector<512x128xf32> -> vector<512x128xf32>
    %15 = arith.addf %9, %14 : vector<512x128xf32>
    %16 = vector.extract_strided_slice %1 {offsets = [0, 2, 0], sizes = [32, 16, 4], strides = [1, 1, 1]} : vector<32x18x4xbf16> to vector<32x16x4xbf16>
    %17 = vector.shape_cast %16 : vector<32x16x4xbf16> to vector<512x4xbf16>
    %c0_17 = arith.constant 0 : index
    %c2 = arith.constant 2 : index
    %c0_18 = arith.constant 0 : index
    %c0_19 = arith.constant 0 : index
    %18 = vector.load %arg4[%c0_17, %c2, %c0_18, %c0_19] : memref<3x3x4x128xbf16, #tpu.memory_space<vmem>>, vector<1x1x4x128xbf16>
    %19 = vector.shape_cast %18 : vector<1x1x4x128xbf16> to vector<4x128xbf16>
    %cst_20 = arith.constant dense<0.000000e+00> : vector<512x128xf32>
    %20 = tpu.matmul %17, %19, %cst_20 {dimension_numbers = #tpu.dot_dimension_numbers<[1], [0], [0], [1], [0, 0, 1, 1], [], []>} : vector<512x4xbf16>, vector<4x128xbf16>, vector<512x128xf32> -> vector<512x128xf32>
    %21 = arith.addf %15, %20 : vector<512x128xf32>
    %22 = vector.extract_strided_slice %2 {offsets = [0, 0, 0], sizes = [32, 16, 4], strides = [1, 1, 1]} : vector<32x18x4xbf16> to vector<32x16x4xbf16>
    %23 = vector.shape_cast %22 : vector<32x16x4xbf16> to vector<512x4xbf16>
    %c1_21 = arith.constant 1 : index
    %c0_22 = arith.constant 0 : index
    %c0_23 = arith.constant 0 : index
    %c0_24 = arith.constant 0 : index
    %24 = vector.load %arg4[%c1_21, %c0_22, %c0_23, %c0_24] : memref<3x3x4x128xbf16, #tpu.memory_space<vmem>>, vector<1x1x4x128xbf16>
    %25 = vector.shape_cast %24 : vector<1x1x4x128xbf16> to vector<4x128xbf16>
    %cst_25 = arith.constant dense<0.000000e+00> : vector<512x128xf32>
    %26 = tpu.matmul %23, %25, %cst_25 {dimension_numbers = #tpu.dot_dimension_numbers<[1], [0], [0], [1], [0, 0, 1, 1], [], []>} : vector<512x4xbf16>, vector<4x128xbf16>, vector<512x128xf32> -> vector<512x128xf32>
    %27 = arith.addf %21, %26 : vector<512x128xf32>
    %28 = vector.extract_strided_slice %2 {offsets = [0, 1, 0], sizes = [32, 16, 4], strides = [1, 1, 1]} : vector<32x18x4xbf16> to vector<32x16x4xbf16>
    %29 = vector.shape_cast %28 : vector<32x16x4xbf16> to vector<512x4xbf16>
    %c1_26 = arith.constant 1 : index
    %c1_27 = arith.constant 1 : index
    %c0_28 = arith.constant 0 : index
    %c0_29 = arith.constant 0 : index
    %30 = vector.load %arg4[%c1_26, %c1_27, %c0_28, %c0_29] : memref<3x3x4x128xbf16, #tpu.memory_space<vmem>>, vector<1x1x4x128xbf16>
    %31 = vector.shape_cast %30 : vector<1x1x4x128xbf16> to vector<4x128xbf16>
    %cst_30 = arith.constant dense<0.000000e+00> : vector<512x128xf32>
    %32 = tpu.matmul %29, %31, %cst_30 {dimension_numbers = #tpu.dot_dimension_numbers<[1], [0], [0], [1], [0, 0, 1, 1], [], []>} : vector<512x4xbf16>, vector<4x128xbf16>, vector<512x128xf32> -> vector<512x128xf32>
    %33 = arith.addf %27, %32 : vector<512x128xf32>
    %34 = vector.extract_strided_slice %2 {offsets = [0, 2, 0], sizes = [32, 16, 4], strides = [1, 1, 1]} : vector<32x18x4xbf16> to vector<32x16x4xbf16>
    %35 = vector.shape_cast %34 : vector<32x16x4xbf16> to vector<512x4xbf16>
    %c1_31 = arith.constant 1 : index
    %c2_32 = arith.constant 2 : index
    %c0_33 = arith.constant 0 : index
    %c0_34 = arith.constant 0 : index
    %36 = vector.load %arg4[%c1_31, %c2_32, %c0_33, %c0_34] : memref<3x3x4x128xbf16, #tpu.memory_space<vmem>>, vector<1x1x4x128xbf16>
    %37 = vector.shape_cast %36 : vector<1x1x4x128xbf16> to vector<4x128xbf16>
    %cst_35 = arith.constant dense<0.000000e+00> : vector<512x128xf32>
    %38 = tpu.matmul %35, %37, %cst_35 {dimension_numbers = #tpu.dot_dimension_numbers<[1], [0], [0], [1], [0, 0, 1, 1], [], []>} : vector<512x4xbf16>, vector<4x128xbf16>, vector<512x128xf32> -> vector<512x128xf32>
    %39 = arith.addf %33, %38 : vector<512x128xf32>
    %40 = vector.extract_strided_slice %3 {offsets = [0, 0, 0], sizes = [32, 16, 4], strides = [1, 1, 1]} : vector<32x18x4xbf16> to vector<32x16x4xbf16>
    %41 = vector.shape_cast %40 : vector<32x16x4xbf16> to vector<512x4xbf16>
    %c2_36 = arith.constant 2 : index
    %c0_37 = arith.constant 0 : index
    %c0_38 = arith.constant 0 : index
    %c0_39 = arith.constant 0 : index
    %42 = vector.load %arg4[%c2_36, %c0_37, %c0_38, %c0_39] : memref<3x3x4x128xbf16, #tpu.memory_space<vmem>>, vector<1x1x4x128xbf16>
    %43 = vector.shape_cast %42 : vector<1x1x4x128xbf16> to vector<4x128xbf16>
    %cst_40 = arith.constant dense<0.000000e+00> : vector<512x128xf32>
    %44 = tpu.matmul %41, %43, %cst_40 {dimension_numbers = #tpu.dot_dimension_numbers<[1], [0], [0], [1], [0, 0, 1, 1], [], []>} : vector<512x4xbf16>, vector<4x128xbf16>, vector<512x128xf32> -> vector<512x128xf32>
    %45 = arith.addf %39, %44 : vector<512x128xf32>
    %46 = vector.extract_strided_slice %3 {offsets = [0, 1, 0], sizes = [32, 16, 4], strides = [1, 1, 1]} : vector<32x18x4xbf16> to vector<32x16x4xbf16>
    %47 = vector.shape_cast %46 : vector<32x16x4xbf16> to vector<512x4xbf16>
    %c2_41 = arith.constant 2 : index
    %c1_42 = arith.constant 1 : index
    %c0_43 = arith.constant 0 : index
    %c0_44 = arith.constant 0 : index
    %48 = vector.load %arg4[%c2_41, %c1_42, %c0_43, %c0_44] : memref<3x3x4x128xbf16, #tpu.memory_space<vmem>>, vector<1x1x4x128xbf16>
    %49 = vector.shape_cast %48 : vector<1x1x4x128xbf16> to vector<4x128xbf16>
    %cst_45 = arith.constant dense<0.000000e+00> : vector<512x128xf32>
    %50 = tpu.matmul %47, %49, %cst_45 {dimension_numbers = #tpu.dot_dimension_numbers<[1], [0], [0], [1], [0, 0, 1, 1], [], []>} : vector<512x4xbf16>, vector<4x128xbf16>, vector<512x128xf32> -> vector<512x128xf32>
    %51 = arith.addf %45, %50 : vector<512x128xf32>
    %52 = vector.extract_strided_slice %3 {offsets = [0, 2, 0], sizes = [32, 16, 4], strides = [1, 1, 1]} : vector<32x18x4xbf16> to vector<32x16x4xbf16>
    %53 = vector.shape_cast %52 : vector<32x16x4xbf16> to vector<512x4xbf16>
    %c2_46 = arith.constant 2 : index
    %c2_47 = arith.constant 2 : index
    %c0_48 = arith.constant 0 : index
    %c0_49 = arith.constant 0 : index
    %54 = vector.load %arg4[%c2_46, %c2_47, %c0_48, %c0_49] : memref<3x3x4x128xbf16, #tpu.memory_space<vmem>>, vector<1x1x4x128xbf16>
    %55 = vector.shape_cast %54 : vector<1x1x4x128xbf16> to vector<4x128xbf16>
    %cst_50 = arith.constant dense<0.000000e+00> : vector<512x128xf32>
    %56 = tpu.matmul %53, %55, %cst_50 {dimension_numbers = #tpu.dot_dimension_numbers<[1], [0], [0], [1], [0, 0, 1, 1], [], []>} : vector<512x4xbf16>, vector<4x128xbf16>, vector<512x128xf32> -> vector<512x128xf32>
    %57 = arith.addf %51, %56 : vector<512x128xf32>
    %c0_51 = arith.constant 0 : index
    %c0_52 = arith.constant 0 : index
    %58 = vector.load %arg5[%c0_51, %c0_52] : memref<1x128xf32, #tpu.memory_space<vmem>>, vector<1x128xf32>
    %59 = vector.broadcast %58 : vector<1x128xf32> to vector<512x128xf32>
    %60 = arith.addf %57, %59 : vector<512x128xf32>
    %c0_53 = arith.constant 0 : index
    %c0_54 = arith.constant 0 : index
    %61 = memref.load %arg6[%c0_53, %c0_54] : memref<1x1xf32, #tpu.memory_space<smem>>
    %cst_55 = arith.constant 0.000000e+00 : f32
    %62 = vector.broadcast %cst_55 : f32 to vector<512x128xf32>
    %63 = arith.cmpf ogt, %60, %62 : vector<512x128xf32>
    %64 = vector.broadcast %61 : f32 to vector<512x128xf32>
    %65 = arith.mulf %64, %60 : vector<512x128xf32>
    %66 = arith.select %63, %60, %65 : vector<512x128xi1>, vector<512x128xf32>
    %c0_56 = arith.constant 0 : index
    %c0_57 = arith.constant 0 : index
    %67 = vector.load %arg7[%c0_56, %c0_57] : memref<512x128xf32, #tpu.memory_space<vmem>>, vector<512x128xf32>
    tpu.vector_store %arg7[%c0_56, %c0_57], %66 {strides = array<i32>} : memref<512x128xf32, #tpu.memory_space<vmem>>, vector<512x128xf32>,
    return
  }
  func.func @transform_0(%arg0: i32) -> (i32, i32, i32) {
    %c0_i32 = arith.constant 0 : i32
    %c0_i32_0 = arith.constant 0 : i32
    %c0_i32_1 = arith.constant 0 : i32
    return %arg0, %c0_i32, %c0_i32_0 : i32, i32, i32
  }
  func.func @transform_1(%arg0: i32) -> (i32, i32, i32) {
    %c0_i32 = arith.constant 0 : i32
    %c0_i32_0 = arith.constant 0 : i32
    %c0_i32_1 = arith.constant 0 : i32
    return %arg0, %c0_i32, %c0_i32_0 : i32, i32, i32
  }
  func.func @transform_2(%arg0: i32) -> (i32, i32, i32) {
    %c0_i32 = arith.constant 0 : i32
    %c0_i32_0 = arith.constant 0 : i32
    %c0_i32_1 = arith.constant 0 : i32
    return %arg0, %c0_i32, %c0_i32_0 : i32, i32, i32
  }
  func.func @transform_3(%arg0: i32) -> (i32, i32, i32, i32) {
    %c0_i32 = arith.constant 0 : i32
    %c0_i32_0 = arith.constant 0 : i32
    %c0_i32_1 = arith.constant 0 : i32
    %c0_i32_2 = arith.constant 0 : i32
    %c0_i32_3 = arith.constant 0 : i32
    return %c0_i32, %c0_i32_0, %c0_i32_1, %c0_i32_2 : i32, i32, i32, i32
  }
  func.func @transform_4(%arg0: i32) -> (i32, i32) {
    %c0_i32 = arith.constant 0 : i32
    %c0_i32_0 = arith.constant 0 : i32
    %c0_i32_1 = arith.constant 0 : i32
    return %c0_i32, %c0_i32_0 : i32, i32
  }
  func.func @transform_5(%arg0: i32) -> (i32, i32) {
    %c0_i32 = arith.constant 0 : i32
    %c0_i32_0 = arith.constant 0 : i32
    %c0_i32_1 = arith.constant 0 : i32
    return %c0_i32, %c0_i32_0 : i32, i32
  }
  func.func @transform_6(%arg0: i32) -> (i32, i32) {
    %c0_i32 = arith.constant 0 : i32
    %c0_i32_0 = arith.constant 0 : i32
    return %arg0, %c0_i32 : i32, i32
  }
}

</mosaic_0001>

<llo_original>
// kernel: upsampler_forward.1
$region0: #{upsampler_forward.1}
  #allocation0 [shape = 'u32[]', space=smem, size = 0x4, offset = 0x4, fixed_abs, tag = 'smem constant byte address 0x4 - core index']
  #allocation1 [shape = 'u32[144,128]{1,0:T(1,128)}', space=vmem, size = 0x12000, scoped, tag = 'internal scratch']
  #allocation2 [shape = 'f32[1,1]{1,0:T(1,128)S(6)}', space=smem, size = 0x200, scoped, tag = 'scoped memory for upsampler_forward.1']
  %s0 = inlined_call_operand.vmem [shape: bf16[32,18,4], index: 0, kind: input, shape index: {}]
  %s1 = inlined_call_operand.vmem [shape: bf16[32,18,4], index: 1, kind: input, shape index: {}]
  %s2 = inlined_call_operand.vmem [shape: bf16[32,18,4], index: 2, kind: input, shape index: {}]
  %s3 = inlined_call_operand.vmem [shape: bf16[3,3,4,128], index: 3, kind: input, shape index: {}]
  %s4 = inlined_call_operand.vmem [shape: f32[1,128], index: 4, kind: input, shape index: {}]
  %s5 = inlined_call_operand.<no memory space> [shape: f32[1,1], index: 5, kind: input, shape index: {}]
  %s6 = inlined_call_operand.vmem [shape: f32[512,128], index: 6, kind: output, shape index: {}]
  %s7 = sld [smem:[#allocation0]]
  $region34: #{upsampler_forward.1} parent=0
    _
  %s9 = ssub.s32 1, %s7
  %s10 = scalar_select 0, %s9, %s7
  %11 = sst [smem:[#allocation2]] %s5
  // Predicated region
  $region2: #{upsampler_forward.1} parent=0 // pred_check
    _
  $region3: #{upsampler_forward.1} parent=0 // pred_check_branch
    %13 = sbr.rel (0) target = $region5
  $region4: #{upsampler_forward.1} parent=0 // pred_region
    _
  $region5: #{upsampler_forward.1} parent=0 // pred_fallthru
    _
  // Predicated region
  $region6: #{upsampler_forward.1} parent=0 // pred_check
    _
  $region7: #{upsampler_forward.1} parent=0 // pred_check_branch
    %15 = sbr.rel (0) target = $region9
  $region8: #{upsampler_forward.1} parent=0 // pred_region
    _
  $region9: #{upsampler_forward.1} parent=0 // pred_fallthru
    _
  // Predicated region
  $region10: #{upsampler_forward.1} parent=0 // pred_check
    _
  $region11: #{upsampler_forward.1} parent=0 // pred_check_branch
    %17 = sbr.rel (0) target = $region13
  $region12: #{upsampler_forward.1} parent=0 // pred_region
    _
  $region13: #{upsampler_forward.1} parent=0 // pred_fallthru
    _
  // Predicated region
  $region14: #{upsampler_forward.1} parent=0 // pred_check
    _
  $region15: #{upsampler_forward.1} parent=0 // pred_check_branch
    %19 = sbr.rel (0) target = $region17
  $region16: #{upsampler_forward.1} parent=0 // pred_region
    _
  $region17: #{upsampler_forward.1} parent=0 // pred_fallthru
    _
  // Predicated region
  $region18: #{upsampler_forward.1} parent=0 // pred_check
    _
  $region19: #{upsampler_forward.1} parent=0 // pred_check_branch
    %21 = sbr.rel (0) target = $region21
  $region20: #{upsampler_forward.1} parent=0 // pred_region
    _
  $region21: #{upsampler_forward.1} parent=0 // pred_fallthru
    _
  // Predicated region
  $region22: #{upsampler_forward.1} parent=0 // pred_check
    _
  $region23: #{upsampler_forward.1} parent=0 // pred_check_branch
    %23 = sbr.rel (0) target = $region25
  $region24: #{upsampler_forward.1} parent=0 // pred_region
    _
  $region25: #{upsampler_forward.1} parent=0 // pred_fallthru
    _
  %v25 = vld [vmem:[%s0] sm:$0xf]
  %v26 = vld [vmem:[%s0 + $0x4] sm:$0xf]
  %v27 = vld [vmem:[%s0 + $0x8] sm:$0x1]
  %v28 = vld [vmem:[%s0 + $0xc] sm:$0xf]
  %v29 = vld [vmem:[%s0 + $0x10] sm:$0xf]
  %v30 = vld [vmem:[%s0 + $0x14] sm:$0x1]
  %v31 = vld [vmem:[%s0 + $0x18] sm:$0xf]
  %v32 = vld [vmem:[%s0 + $0x1c] sm:$0xf]
  %v33 = vld [vmem:[%s0 + $0x20] sm:$0x1]
  %v34 = vld [vmem:[%s0 + $0x24] sm:$0xf]
  %v35 = vld [vmem:[%s0 + $0x28] sm:$0xf]
  %v36 = vld [vmem:[%s0 + $0x2c] sm:$0x1]
  %v37 = vld [vmem:[%s0 + $0x30] sm:$0xf]
  %v38 = vld [vmem:[%s0 + $0x34] sm:$0xf]
  %v39 = vld [vmem:[%s0 + $0x38] sm:$0x1]
  %v40 = vld [vmem:[%s0 + $0x3c] sm:$0xf]
  %v41 = vld [vmem:[%s0 + $0x40] sm:$0xf]
  %v42 = vld [vmem:[%s0 + $0x44] sm:$0x1]
  %v43 = vld [vmem:[%s0 + $0x48] sm:$0xf]
  %v44 = vld [vmem:[%s0 + $0x4c] sm:$0xf]
  %v45 = vld [vmem:[%s0 + $0x50] sm:$0x1]
  %v46 = vld [vmem:[%s0 + $0x54] sm:$0xf]
  %v47 = vld [vmem:[%s0 + $0x58] sm:$0xf]
  %v48 = vld [vmem:[%s0 + $0x5c] sm:$0x1]
  %v49 = vld [vmem:[%s0 + $0x60] sm:$0xf]
  %v50 = vld [vmem:[%s0 + $0x64] sm:$0xf]
  %v51 = vld [vmem:[%s0 + $0x68] sm:$0x1]
  %v52 = vld [vmem:[%s0 + $0x6c] sm:$0xf]
  %v53 = vld [vmem:[%s0 + $0x70] sm:$0xf]
  %v54 = vld [vmem:[%s0 + $0x74] sm:$0x1]
  %v55 = vld [vmem:[%s0 + $0x78] sm:$0xf]
  %v56 = vld [vmem:[%s0 + $0x7c] sm:$0xf]
  %v57 = vld [vmem:[%s0 + $0x80] sm:$0x1]
  %v58 = vld [vmem:[%s0 + $0x84] sm:$0xf]
  %v59 = vld [vmem:[%s0 + $0x88] sm:$0xf]
  %v60 = vld [vmem:[%s0 + $0x8c] sm:$0x1]
  %v61 = vld [vmem:[%s0 + $0x90] sm:$0xf]
  %v62 = vld [vmem:[%s0 + $0x94] sm:$0xf]
  %v63 = vld [vmem:[%s0 + $0x98] sm:$0x1]
  %v64 = vld [vmem:[%s0 + $0x9c] sm:$0xf]
  %v65 = vld [vmem:[%s0 + $0xa0] sm:$0xf]
  %v66 = vld [vmem:[%s0 + $0xa4] sm:$0x1]
  %v67 = vld [vmem:[%s0 + $0xa8] sm:$0xf]
  %v68 = vld [vmem:[%s0 + $0xac] sm:$0xf]
  %v69 = vld [vmem:[%s0 + $0xb0] sm:$0x1]
  %v70 = vld [vmem:[%s0 + $0xb4] sm:$0xf]
  %v71 = vld [vmem:[%s0 + $0xb8] sm:$0xf]
  %v72 = vld [vmem:[%s0 + $0xbc] sm:$0x1]
  %v73 = vld [vmem:[%s0 + $0xc0] sm:$0xf]
  %v74 = vld [vmem:[%s0 + $0xc4] sm:$0xf]
  %v75 = vld [vmem:[%s0 + $0xc8] sm:$0x1]
  %v76 = vld [vmem:[%s0 + $0xcc] sm:$0xf]
  %v77 = vld [vmem:[%s0 + $0xd0] sm:$0xf]
  %v78 = vld [vmem:[%s0 + $0xd4] sm:$0x1]
  %v79 = vld [vmem:[%s0 + $0xd8] sm:$0xf]
  %v80 = vld [vmem:[%s0 + $0xdc] sm:$0xf]
  %v81 = vld [vmem:[%s0 + $0xe0] sm:$0x1]
  %v82 = vld [vmem:[%s0 + $0xe4] sm:$0xf]
  %v83 = vld [vmem:[%s0 + $0xe8] sm:$0xf]
  %v84 = vld [vmem:[%s0 + $0xec] sm:$0x1]
  %v85 = vld [vmem:[%s0 + $0xf0] sm:$0xf]
  %v86 = vld [vmem:[%s0 + $0xf4] sm:$0xf]
  %v87 = vld [vmem:[%s0 + $0xf8] sm:$0x1]
  %v88 = vld [vmem:[%s0 + $0xfc] sm:$0xf]
  %v89 = vld [vmem:[%s0 + $0x100] sm:$0xf]
  %v90 = vld [vmem:[%s0 + $0x104] sm:$0x1]
  %v91 = vld [vmem:[%s0 + $0x108] sm:$0xf]
  %v92 = vld [vmem:[%s0 + $0x10c] sm:$0xf]
  %v93 = vld [vmem:[%s0 + $0x110] sm:$0x1]
  %v94 = vld [vmem:[%s0 + $0x114] sm:$0xf]
  %v95 = vld [vmem:[%s0 + $0x118] sm:$0xf]
  %v96 = vld [vmem:[%s0 + $0x11c] sm:$0x1]
  %v97 = vld [vmem:[%s0 + $0x120] sm:$0xf]
  %v98 = vld [vmem:[%s0 + $0x124] sm:$0xf]
  %v99 = vld [vmem:[%s0 + $0x128] sm:$0x1]
  %v100 = vld [vmem:[%s0 + $0x12c] sm:$0xf]
  %v101 = vld [vmem:[%s0 + $0x130] sm:$0xf]
  %v102 = vld [vmem:[%s0 + $0x134] sm:$0x1]
  %v103 = vld [vmem:[%s0 + $0x138] sm:$0xf]
  %v104 = vld [vmem:[%s0 + $0x13c] sm:$0xf]
  %v105 = vld [vmem:[%s0 + $0x140] sm:$0x1]
  %v106 = vld [vmem:[%s0 + $0x144] sm:$0xf]
  %v107 = vld [vmem:[%s0 + $0x148] sm:$0xf]
  %v108 = vld [vmem:[%s0 + $0x14c] sm:$0x1]
  %v109 = vld [vmem:[%s0 + $0x150] sm:$0xf]
  %v110 = vld [vmem:[%s0 + $0x154] sm:$0xf]
  %v111 = vld [vmem:[%s0 + $0x158] sm:$0x1]
  %v112 = vld [vmem:[%s0 + $0x15c] sm:$0xf]
  %v113 = vld [vmem:[%s0 + $0x160] sm:$0xf]
  %v114 = vld [vmem:[%s0 + $0x164] sm:$0x1]
  %v115 = vld [vmem:[%s0 + $0x168] sm:$0xf]
  %v116 = vld [vmem:[%s0 + $0x16c] sm:$0xf]
  %v117 = vld [vmem:[%s0 + $0x170] sm:$0x1]
  %v118 = vld [vmem:[%s0 + $0x174] sm:$0xf]
  %v119 = vld [vmem:[%s0 + $0x178] sm:$0xf]
  %v120 = vld [vmem:[%s0 + $0x17c] sm:$0x1]
  %v121 = vld [vmem:[%s1] sm:$0xf]
  %v122 = vld [vmem:[%s1 + $0x4] sm:$0xf]
  %v123 = vld [vmem:[%s1 + $0x8] sm:$0x1]
  %v124 = vld [vmem:[%s1 + $0xc] sm:$0xf]
  %v125 = vld [vmem:[%s1 + $0x10] sm:$0xf]
  %v126 = vld [vmem:[%s1 + $0x14] sm:$0x1]
  %v127 = vld [vmem:[%s1 + $0x18] sm:$0xf]
  %v128 = vld [vmem:[%s1 + $0x1c] sm:$0xf]
  %v129 = vld [vmem:[%s1 + $0x20] sm:$0x1]
  %v130 = vld [vmem:[%s1 + $0x24] sm:$0xf]
  %v131 = vld [vmem:[%s1 + $0x28] sm:$0xf]
  %v132 = vld [vmem:[%s1 + $0x2c] sm:$0x1]
  %v133 = vld [vmem:[%s1 + $0x30] sm:$0xf]
  %v134 = vld [vmem:[%s1 + $0x34] sm:$0xf]
  %v135 = vld [vmem:[%s1 + $0x38] sm:$0x1]
  %v136 = vld [vmem:[%s1 + $0x3c] sm:$0xf]
  %v137 = vld [vmem:[%s1 + $0x40] sm:$0xf]
  %v138 = vld [vmem:[%s1 + $0x44] sm:$0x1]
  %v139 = vld [vmem:[%s1 + $0x48] sm:$0xf]
  %v140 = vld [vmem:[%s1 + $0x4c] sm:$0xf]
  %v141 = vld [vmem:[%s1 + $0x50] sm:$0x1]
  %v142 = vld [vmem:[%s1 + $0x54] sm:$0xf]
  %v143 = vld [vmem:[%s1 + $0x58] sm:$0xf]
  %v144 = vld [vmem:[%s1 + $0x5c] sm:$0x1]
  %v145 = vld [vmem:[%s1 + $0x60] sm:$0xf]
  %v146 = vld [vmem:[%s1 + $0x64] sm:$0xf]
  %v147 = vld [vmem:[%s1 + $0x68] sm:$0x1]
  %v148 = vld [vmem:[%s1 + $0x6c] sm:$0xf]
  %v149 = vld [vmem:[%s1 + $0x70] sm:$0xf]
  %v150 = vld [vmem:[%s1 + $0x74] sm:$0x1]
  %v151 = vld [vmem:[%s1 + $0x78] sm:$0xf]
  %v152 = vld [vmem:[%s1 + $0x7c] sm:$0xf]
  %v153 = vld [vmem:[%s1 + $0x80] sm:$0x1]
  %v154 = vld [vmem:[%s1 + $0x84] sm:$0xf]
  %v155 = vld [vmem:[%s1 + $0x88] sm:$0xf]
  %v156 = vld [vmem:[%s1 + $0x8c] sm:$0x1]
  %v157 = vld [vmem:[%s1 + $0x90] sm:$0xf]
  %v158 = vld [vmem:[%s1 + $0x94] sm:$0xf]
  %v159 = vld [vmem:[%s1 + $0x98] sm:$0x1]
  %v160 = vld [vmem:[%s1 + $0x9c] sm:$0xf]
  %v161 = vld [vmem:[%s1 + $0xa0] sm:$0xf]
  %v162 = vld [vmem:[%s1 + $0xa4] sm:$0x1]
  %v163 = vld [vmem:[%s1 + $0xa8] sm:$0xf]
  %v164 = vld [vmem:[%s1 + $0xac] sm:$0xf]
  %v165 = vld [vmem:[%s1 + $0xb0] sm:$0x1]
  %v166 = vld [vmem:[%s1 + $0xb4] sm:$0xf]
  %v167 = vld [vmem:[%s1 + $0xb8] sm:$0xf]
  %v168 = vld [vmem:[%s1 + $0xbc] sm:$0x1]
  %v169 = vld [vmem:[%s1 + $0xc0] sm:$0xf]
  %v170 = vld [vmem:[%s1 + $0xc4] sm:$0xf]
  %v171 = vld [vmem:[%s1 + $0xc8] sm:$0x1]
  %v172 = vld [vmem:[%s1 + $0xcc] sm:$0xf]
  %v173 = vld [vmem:[%s1 + $0xd0] sm:$0xf]
  %v174 = vld [vmem:[%s1 + $0xd4] sm:$0x1]
  %v175 = vld [vmem:[%s1 + $0xd8] sm:$0xf]
  %v176 = vld [vmem:[%s1 + $0xdc] sm:$0xf]
  %v177 = vld [vmem:[%s1 + $0xe0] sm:$0x1]
  %v178 = vld [vmem:[%s1 + $0xe4] sm:$0xf]
  %v179 = vld [vmem:[%s1 + $0xe8] sm:$0xf]
  %v180 = vld [vmem:[%s1 + $0xec] sm:$0x1]
  %v181 = vld [vmem:[%s1 + $0xf0] sm:$0xf]
  %v182 = vld [vmem:[%s1 + $0xf4] sm:$0xf]
  %v183 = vld [vmem:[%s1 + $0xf8] sm:$0x1]
  %v184 = vld [vmem:[%s1 + $0xfc] sm:$0xf]
  %v185 = vld [vmem:[%s1 + $0x100] sm:$0xf]
  %v186 = vld [vmem:[%s1 + $0x104] sm:$0x1]
  %v187 = vld [vmem:[%s1 + $0x108] sm:$0xf]
  %v188 = vld [vmem:[%s1 + $0x10c] sm:$0xf]
  %v189 = vld [vmem:[%s1 + $0x110] sm:$0x1]
  %v190 = vld [vmem:[%s1 + $0x114] sm:$0xf]
  %v191 = vld [vmem:[%s1 + $0x118] sm:$0xf]
  %v192 = vld [vmem:[%s1 + $0x11c] sm:$0x1]
  %v193 = vld [vmem:[%s1 + $0x120] sm:$0xf]
  %v194 = vld [vmem:[%s1 + $0x124] sm:$0xf]
  %v195 = vld [vmem:[%s1 + $0x128] sm:$0x1]
  %v196 = vld [vmem:[%s1 + $0x12c] sm:$0xf]
  %v197 = vld [vmem:[%s1 + $0x130] sm:$0xf]
  %v198 = vld [vmem:[%s1 + $0x134] sm:$0x1]
  %v199 = vld [vmem:[%s1 + $0x138] sm:$0xf]
  %v200 = vld [vmem:[%s1 + $0x13c] sm:$0xf]
  %v201 = vld [vmem:[%s1 + $0x140] sm:$0x1]
  %v202 = vld [vmem:[%s1 + $0x144] sm:$0xf]
  %v203 = vld [vmem:[%s1 + $0x148] sm:$0xf]
  %v204 = vld [vmem:[%s1 + $0x14c] sm:$0x1]
  %v205 = vld [vmem:[%s1 + $0x150] sm:$0xf]
  %v206 = vld [vmem:[%s1 + $0x154] sm:$0xf]
  %v207 = vld [vmem:[%s1 + $0x158] sm:$0x1]
  %v208 = vld [vmem:[%s1 + $0x15c] sm:$0xf]
  %v209 = vld [vmem:[%s1 + $0x160] sm:$0xf]
  %v210 = vld [vmem:[%s1 + $0x164] sm:$0x1]
  %v211 = vld [vmem:[%s1 + $0x168] sm:$0xf]
  %v212 = vld [vmem:[%s1 + $0x16c] sm:$0xf]
  %v213 = vld [vmem:[%s1 + $0x170] sm:$0x1]
  %v214 = vld [vmem:[%s1 + $0x174] sm:$0xf]
  %v215 = vld [vmem:[%s1 + $0x178] sm:$0xf]
  %v216 = vld [vmem:[%s1 + $0x17c] sm:$0x1]
  %v217 = vld [vmem:[%s2] sm:$0xf]
  %v218 = vld [vmem:[%s2 + $0x4] sm:$0xf]
  %v219 = vld [vmem:[%s2 + $0x8] sm:$0x1]
  %v220 = vld [vmem:[%s2 + $0xc] sm:$0xf]
  %v221 = vld [vmem:[%s2 + $0x10] sm:$0xf]
  %v222 = vld [vmem:[%s2 + $0x14] sm:$0x1]
  %v223 = vld [vmem:[%s2 + $0x18] sm:$0xf]
  %v224 = vld [vmem:[%s2 + $0x1c] sm:$0xf]
  %v225 = vld [vmem:[%s2 + $0x20] sm:$0x1]
  %v226 = vld [vmem:[%s2 + $0x24] sm:$0xf]
  %v227 = vld [vmem:[%s2 + $0x28] sm:$0xf]
  %v228 = vld [vmem:[%s2 + $0x2c] sm:$0x1]
  %v229 = vld [vmem:[%s2 + $0x30] sm:$0xf]
  %v230 = vld [vmem:[%s2 + $0x34] sm:$0xf]
  %v231 = vld [vmem:[%s2 + $0x38] sm:$0x1]
  %v232 = vld [vmem:[%s2 + $0x3c] sm:$0xf]
  %v233 = vld [vmem:[%s2 + $0x40] sm:$0xf]
  %v234 = vld [vmem:[%s2 + $0x44] sm:$0x1]
  %v235 = vld [vmem:[%s2 + $0x48] sm:$0xf]
  %v236 = vld [vmem:[%s2 + $0x4c] sm:$0xf]
  %v237 = vld [vmem:[%s2 + $0x50] sm:$0x1]
  %v238 = vld [vmem:[%s2 + $0x54] sm:$0xf]
  %v239 = vld [vmem:[%s2 + $0x58] sm:$0xf]
  %v240 = vld [vmem:[%s2 + $0x5c] sm:$0x1]
  %v241 = vld [vmem:[%s2 + $0x60] sm:$0xf]
  %v242 = vld [vmem:[%s2 + $0x64] sm:$0xf]
  %v243 = vld [vmem:[%s2 + $0x68] sm:$0x1]
  %v244 = vld [vmem:[%s2 + $0x6c] sm:$0xf]
  %v245 = vld [vmem:[%s2 + $0x70] sm:$0xf]
  %v246 = vld [vmem:[%s2 + $0x74] sm:$0x1]
  %v247 = vld [vmem:[%s2 + $0x78] sm:$0xf]
  %v248 = vld [vmem:[%s2 + $0x7c] sm:$0xf]
  %v249 = vld [vmem:[%s2 + $0x80] sm:$0x1]
  %v250 = vld [vmem:[%s2 + $0x84] sm:$0xf]
  %v251 = vld [vmem:[%s2 + $0x88] sm:$0xf]
  %v252 = vld [vmem:[%s2 + $0x8c] sm:$0x1]
  %v253 = vld [vmem:[%s2 + $0x90] sm:$0xf]
  %v254 = vld [vmem:[%s2 + $0x94] sm:$0xf]
  %v255 = vld [vmem:[%s2 + $0x98] sm:$0x1]
  %v256 = vld [vmem:[%s2 + $0x9c] sm:$0xf]
  %v257 = vld [vmem:[%s2 + $0xa0] sm:$0xf]
  %v258 = vld [vmem:[%s2 + $0xa4] sm:$0x1]
  %v259 = vld [vmem:[%s2 + $0xa8] sm:$0xf]
  %v260 = vld [vmem:[%s2 + $0xac] sm:$0xf]
  %v261 = vld [vmem:[%s2 + $0xb0] sm:$0x1]
  %v262 = vld [vmem:[%s2 + $0xb4] sm:$0xf]
  %v263 = vld [vmem:[%s2 + $0xb8] sm:$0xf]
  %v264 = vld [vmem:[%s2 + $0xbc] sm:$0x1]
  %v265 = vld [vmem:[%s2 + $0xc0] sm:$0xf]
  %v266 = vld [vmem:[%s2 + $0xc4] sm:$0xf]
  %v267 = vld [vmem:[%s2 + $0xc8] sm:$0x1]
  %v268 = vld [vmem:[%s2 + $0xcc] sm:$0xf]
  %v269 = vld [vmem:[%s2 + $0xd0] sm:$0xf]
  %v270 = vld [vmem:[%s2 + $0xd4] sm:$0x1]
  %v271 = vld [vmem:[%s2 + $0xd8] sm:$0xf]
  %v272 = vld [vmem:[%s2 + $0xdc] sm:$0xf]
  %v273 = vld [vmem:[%s2 + $0xe0] sm:$0x1]
  %v274 = vld [vmem:[%s2 + $0xe4] sm:$0xf]
  %v275 = vld [vmem:[%s2 + $0xe8] sm:$0xf]
  %v276 = vld [vmem:[%s2 + $0xec] sm:$0x1]
  %v277 = vld [vmem:[%s2 + $0xf0] sm:$0xf]
  %v278 = vld [vmem:[%s2 + $0xf4] sm:$0xf]
  %v279 = vld [vmem:[%s2 + $0xf8] sm:$0x1]
  %v280 = vld [vmem:[%s2 + $0xfc] sm:$0xf]
  %v281 = vld [vmem:[%s2 + $0x100] sm:$0xf]
  %v282 = vld [vmem:[%s2 + $0x104] sm:$0x1]
  %v283 = vld [vmem:[%s2 + $0x108] sm:$0xf]
  %v284 = vld [vmem:[%s2 + $0x10c] sm:$0xf]
  %v285 = vld [vmem:[%s2 + $0x110] sm:$0x1]
  %v286 = vld [vmem:[%s2 + $0x114] sm:$0xf]
  %v287 = vld [vmem:[%s2 + $0x118] sm:$0xf]
  %v288 = vld [vmem:[%s2 + $0x11c] sm:$0x1]
  %v289 = vld [vmem:[%s2 + $0x120] sm:$0xf]
  %v290 = vld [vmem:[%s2 + $0x124] sm:$0xf]
  %v291 = vld [vmem:[%s2 + $0x128] sm:$0x1]
  %v292 = vld [vmem:[%s2 + $0x12c] sm:$0xf]
  %v293 = vld [vmem:[%s2 + $0x130] sm:$0xf]
  %v294 = vld [vmem:[%s2 + $0x134] sm:$0x1]
  %v295 = vld [vmem:[%s2 + $0x138] sm:$0xf]
  %v296 = vld [vmem:[%s2 + $0x13c] sm:$0xf]
  %v297 = vld [vmem:[%s2 + $0x140] sm:$0x1]
  %v298 = vld [vmem:[%s2 + $0x144] sm:$0xf]
  %v299 = vld [vmem:[%s2 + $0x148] sm:$0xf]
  %v300 = vld [vmem:[%s2 + $0x14c] sm:$0x1]
  %v301 = vld [vmem:[%s2 + $0x150] sm:$0xf]
  %v302 = vld [vmem:[%s2 + $0x154] sm:$0xf]
  %v303 = vld [vmem:[%s2 + $0x158] sm:$0x1]
  %v304 = vld [vmem:[%s2 + $0x15c] sm:$0xf]
  %v305 = vld [vmem:[%s2 + $0x160] sm:$0xf]
  %v306 = vld [vmem:[%s2 + $0x164] sm:$0x1]
  %v307 = vld [vmem:[%s2 + $0x168] sm:$0xf]
  %v308 = vld [vmem:[%s2 + $0x16c] sm:$0xf]
  %v309 = vld [vmem:[%s2 + $0x170] sm:$0x1]
  %v310 = vld [vmem:[%s2 + $0x174] sm:$0xf]
  %v311 = vld [vmem:[%s2 + $0x178] sm:$0xf]
  %v312 = vld [vmem:[%s2 + $0x17c] sm:$0x1]
  %v313 = vld [vmem:[%s3] sm:$0x3]
  %vm314 = vsmask.f32 3328
  %vm315 = vsmask.f32 7440
  %vm316 = vmor %vm314, %vm315
  %v318 = vshrl.u32 %v25, 16
  %v320 = vrot.slane %v318, 4
  %v321 = vshll.u32 %v25, 16
  %v323 = vrot.slane %v321, 5
  %v324 = vor.u32 %v320, %v323
  %v325 = vrot.slane %v324, 4
  %v327 = vshll.u32 %v26, 16
  %v329 = vrot.slane %v327, 5
  %v330 = vsel %vm316, %v325, %v329
  %v331 = vshrl.u32 %v26, 16
  %v333 = vrot.slane %v331, 4
  %v334 = vor.u32 %v333, %v329
  %v335 = vrot.slane %v334, 4
  %v337 = vshll.u32 %v27, 16
  %v339 = vrot.slane %v337, 5
  %v340 = vsel %vm316, %v335, %v339
  %v342 = vshrl.u32 %v28, 16
  %v344 = vrot.slane %v342, 4
  %v345 = vshll.u32 %v28, 16
  %v347 = vrot.slane %v345, 5
  %v348 = vor.u32 %v344, %v347
  %v349 = vrot.slane %v348, 4
  %v351 = vshll.u32 %v29, 16
  %v353 = vrot.slane %v351, 5
  %v354 = vsel %vm316, %v349, %v353
  %v355 = vshrl.u32 %v29, 16
  %v357 = vrot.slane %v355, 4
  %v358 = vor.u32 %v357, %v353
  %v359 = vrot.slane %v358, 4
  %v361 = vshll.u32 %v30, 16
  %v363 = vrot.slane %v361, 5
  %v364 = vsel %vm316, %v359, %v363
  %v366 = vshrl.u32 %v31, 16
  %v368 = vrot.slane %v366, 4
  %v369 = vshll.u32 %v31, 16
  %v371 = vrot.slane %v369, 5
  %v372 = vor.u32 %v368, %v371
  %v373 = vrot.slane %v372, 4
  %v375 = vshll.u32 %v32, 16
  %v377 = vrot.slane %v375, 5
  %v378 = vsel %vm316, %v373, %v377
  %v379 = vshrl.u32 %v32, 16
  %v381 = vrot.slane %v379, 4
  %v382 = vor.u32 %v381, %v377
  %v383 = vrot.slane %v382, 4
  %v385 = vshll.u32 %v33, 16
  %v387 = vrot.slane %v385, 5
  %v388 = vsel %vm316, %v383, %v387
  %v390 = vshrl.u32 %v34, 16
  %v392 = vrot.slane %v390, 4
  %v393 = vshll.u32 %v34, 16
  %v395 = vrot.slane %v393, 5
  %v396 = vor.u32 %v392, %v395
  %v397 = vrot.slane %v396, 4
  %v399 = vshll.u32 %v35, 16
  %v401 = vrot.slane %v399, 5
  %v402 = vsel %vm316, %v397, %v401
  %v403 = vshrl.u32 %v35, 16
  %v405 = vrot.slane %v403, 4
  %v406 = vor.u32 %v405, %v401
  %v407 = vrot.slane %v406, 4
  %v409 = vshll.u32 %v36, 16
  %v411 = vrot.slane %v409, 5
  %v412 = vsel %vm316, %v407, %v411
  %v414 = vshrl.u32 %v37, 16
  %v416 = vrot.slane %v414, 4
  %v417 = vshll.u32 %v37, 16
  %v419 = vrot.slane %v417, 5
  %v420 = vor.u32 %v416, %v419
  %v421 = vrot.slane %v420, 4
  %v423 = vshll.u32 %v38, 16
  %v425 = vrot.slane %v423, 5
  %v426 = vsel %vm316, %v421, %v425
  %v427 = vshrl.u32 %v38, 16
  %v429 = vrot.slane %v427, 4
  %v430 = vor.u32 %v429, %v425
  %v431 = vrot.slane %v430, 4
  %v433 = vshll.u32 %v39, 16
  %v435 = vrot.slane %v433, 5
  %v436 = vsel %vm316, %v431, %v435
  %v438 = vshrl.u32 %v40, 16
  %v440 = vrot.slane %v438, 4
  %v441 = vshll.u32 %v40, 16
  %v443 = vrot.slane %v441, 5
  %v444 = vor.u32 %v440, %v443
  %v445 = vrot.slane %v444, 4
  %v447 = vshll.u32 %v41, 16
  %v449 = vrot.slane %v447, 5
  %v450 = vsel %vm316, %v445, %v449
  %v451 = vshrl.u32 %v41, 16
  %v453 = vrot.slane %v451, 4
  %v454 = vor.u32 %v453, %v449
  %v455 = vrot.slane %v454, 4
  %v457 = vshll.u32 %v42, 16
  %v459 = vrot.slane %v457, 5
  %v460 = vsel %vm316, %v455, %v459
  %v462 = vshrl.u32 %v43, 16
  %v464 = vrot.slane %v462, 4
  %v465 = vshll.u32 %v43, 16
  %v467 = vrot.slane %v465, 5
  %v468 = vor.u32 %v464, %v467
  %v469 = vrot.slane %v468, 4
  %v471 = vshll.u32 %v44, 16
  %v473 = vrot.slane %v471, 5
  %v474 = vsel %vm316, %v469, %v473
  %v475 = vshrl.u32 %v44, 16
  %v477 = vrot.slane %v475, 4
  %v478 = vor.u32 %v477, %v473
  %v479 = vrot.slane %v478, 4
  %v481 = vshll.u32 %v45, 16
  %v483 = vrot.slane %v481, 5
  %v484 = vsel %vm316, %v479, %v483
  %v486 = vshrl.u32 %v46, 16
  %v488 = vrot.slane %v486, 4
  %v489 = vshll.u32 %v46, 16
  %v491 = vrot.slane %v489, 5
  %v492 = vor.u32 %v488, %v491
  %v493 = vrot.slane %v492, 4
  %v495 = vshll.u32 %v47, 16
  %v497 = vrot.slane %v495, 5
  %v498 = vsel %vm316, %v493, %v497
  %v499 = vshrl.u32 %v47, 16
  %v501 = vrot.slane %v499, 4
  %v502 = vor.u32 %v501, %v497
  %v503 = vrot.slane %v502, 4
  %v505 = vshll.u32 %v48, 16
  %v507 = vrot.slane %v505, 5
  %v508 = vsel %vm316, %v503, %v507
  %v510 = vshrl.u32 %v49, 16
  %v512 = vrot.slane %v510, 4
  %v513 = vshll.u32 %v49, 16
  %v515 = vrot.slane %v513, 5
  %v516 = vor.u32 %v512, %v515
  %v517 = vrot.slane %v516, 4
  %v519 = vshll.u32 %v50, 16
  %v521 = vrot.slane %v519, 5
  %v522 = vsel %vm316, %v517, %v521
  %v523 = vshrl.u32 %v50, 16
  %v525 = vrot.slane %v523, 4
  %v526 = vor.u32 %v525, %v521
  %v527 = vrot.slane %v526, 4
  %v529 = vshll.u32 %v51, 16
  %v531 = vrot.slane %v529, 5
  %v532 = vsel %vm316, %v527, %v531
  %v534 = vshrl.u32 %v52, 16
  %v536 = vrot.slane %v534, 4
  %v537 = vshll.u32 %v52, 16
  %v539 = vrot.slane %v537, 5
  %v540 = vor.u32 %v536, %v539
  %v541 = vrot.slane %v540, 4
  %v543 = vshll.u32 %v53, 16
  %v545 = vrot.slane %v543, 5
  %v546 = vsel %vm316, %v541, %v545
  %v547 = vshrl.u32 %v53, 16
  %v549 = vrot.slane %v547, 4
  %v550 = vor.u32 %v549, %v545
  %v551 = vrot.slane %v550, 4
  %v553 = vshll.u32 %v54, 16
  %v555 = vrot.slane %v553, 5
  %v556 = vsel %vm316, %v551, %v555
  %v558 = vshrl.u32 %v55, 16
  %v560 = vrot.slane %v558, 4
  %v561 = vshll.u32 %v55, 16
  %v563 = vrot.slane %v561, 5
  %v564 = vor.u32 %v560, %v563
  %v565 = vrot.slane %v564, 4
  %v567 = vshll.u32 %v56, 16
  %v569 = vrot.slane %v567, 5
  %v570 = vsel %vm316, %v565, %v569
  %v571 = vshrl.u32 %v56, 16
  %v573 = vrot.slane %v571, 4
  %v574 = vor.u32 %v573, %v569
  %v575 = vrot.slane %v574, 4
  %v577 = vshll.u32 %v57, 16
  %v579 = vrot.slane %v577, 5
  %v580 = vsel %vm316, %v575, %v579
  %v582 = vshrl.u32 %v58, 16
  %v584 = vrot.slane %v582, 4
  %v585 = vshll.u32 %v58, 16
  %v587 = vrot.slane %v585, 5
  %v588 = vor.u32 %v584, %v587
  %v589 = vrot.slane %v588, 4
  %v591 = vshll.u32 %v59, 16
  %v593 = vrot.slane %v591, 5
  %v594 = vsel %vm316, %v589, %v593
  %v595 = vshrl.u32 %v59, 16
  %v597 = vrot.slane %v595, 4
  %v598 = vor.u32 %v597, %v593
  %v599 = vrot.slane %v598, 4
  %v601 = vshll.u32 %v60, 16
  %v603 = vrot.slane %v601, 5
  %v604 = vsel %vm316, %v599, %v603
  %v606 = vshrl.u32 %v61, 16
  %v608 = vrot.slane %v606, 4
  %v609 = vshll.u32 %v61, 16
  %v611 = vrot.slane %v609, 5
  %v612 = vor.u32 %v608, %v611
  %v613 = vrot.slane %v612, 4
  %v615 = vshll.u32 %v62, 16
  %v617 = vrot.slane %v615, 5
  %v618 = vsel %vm316, %v613, %v617
  %v619 = vshrl.u32 %v62, 16
  %v621 = vrot.slane %v619, 4
  %v622 = vor.u32 %v621, %v617
  %v623 = vrot.slane %v622, 4
  %v625 = vshll.u32 %v63, 16
  %v627 = vrot.slane %v625, 5
  %v628 = vsel %vm316, %v623, %v627
  %v630 = vshrl.u32 %v64, 16
  %v632 = vrot.slane %v630, 4
  %v633 = vshll.u32 %v64, 16
  %v635 = vrot.slane %v633, 5
  %v636 = vor.u32 %v632, %v635
  %v637 = vrot.slane %v636, 4
  %v639 = vshll.u32 %v65, 16
  %v641 = vrot.slane %v639, 5
  %v642 = vsel %vm316, %v637, %v641
  %v643 = vshrl.u32 %v65, 16
  %v645 = vrot.slane %v643, 4
  %v646 = vor.u32 %v645, %v641
  %v647 = vrot.slane %v646, 4
  %v649 = vshll.u32 %v66, 16
  %v651 = vrot.slane %v649, 5
  %v652 = vsel %vm316, %v647, %v651
  %v654 = vshrl.u32 %v67, 16
  %v656 = vrot.slane %v654, 4
  %v657 = vshll.u32 %v67, 16
  %v659 = vrot.slane %v657, 5
  %v660 = vor.u32 %v656, %v659
  %v661 = vrot.slane %v660, 4
  %v663 = vshll.u32 %v68, 16
  %v665 = vrot.slane %v663, 5
  %v666 = vsel %vm316, %v661, %v665
  %v667 = vshrl.u32 %v68, 16
  %v669 = vrot.slane %v667, 4
  %v670 = vor.u32 %v669, %v665
  %v671 = vrot.slane %v670, 4
  %v673 = vshll.u32 %v69, 16
  %v675 = vrot.slane %v673, 5
  %v676 = vsel %vm316, %v671, %v675
  %v678 = vshrl.u32 %v70, 16
  %v680 = vrot.slane %v678, 4
  %v681 = vshll.u32 %v70, 16
  %v683 = vrot.slane %v681, 5
  %v684 = vor.u32 %v680, %v683
  %v685 = vrot.slane %v684, 4
  %v687 = vshll.u32 %v71, 16
  %v689 = vrot.slane %v687, 5
  %v690 = vsel %vm316, %v685, %v689
  %v691 = vshrl.u32 %v71, 16
  %v693 = vrot.slane %v691, 4
  %v694 = vor.u32 %v693, %v689
  %v695 = vrot.slane %v694, 4
  %v697 = vshll.u32 %v72, 16
  %v699 = vrot.slane %v697, 5
  %v700 = vsel %vm316, %v695, %v699
  %v702 = vshrl.u32 %v73, 16
  %v704 = vrot.slane %v702, 4
  %v705 = vshll.u32 %v73, 16
  %v707 = vrot.slane %v705, 5
  %v708 = vor.u32 %v704, %v707
  %v709 = vrot.slane %v708, 4
  %v711 = vshll.u32 %v74, 16
  %v713 = vrot.slane %v711, 5
  %v714 = vsel %vm316, %v709, %v713
  %v715 = vshrl.u32 %v74, 16
  %v717 = vrot.slane %v715, 4
  %v718 = vor.u32 %v717, %v713
  %v719 = vrot.slane %v718, 4
  %v721 = vshll.u32 %v75, 16
  %v723 = vrot.slane %v721, 5
  %v724 = vsel %vm316, %v719, %v723
  %v726 = vshrl.u32 %v76, 16
  %v728 = vrot.slane %v726, 4
  %v729 = vshll.u32 %v76, 16
  %v731 = vrot.slane %v729, 5
  %v732 = vor.u32 %v728, %v731
  %v733 = vrot.slane %v732, 4
  %v735 = vshll.u32 %v77, 16
  %v737 = vrot.slane %v735, 5
  %v738 = vsel %vm316, %v733, %v737
  %v739 = vshrl.u32 %v77, 16
  %v741 = vrot.slane %v739, 4
  %v742 = vor.u32 %v741, %v737
  %v743 = vrot.slane %v742, 4
  %v745 = vshll.u32 %v78, 16
  %v747 = vrot.slane %v745, 5
  %v748 = vsel %vm316, %v743, %v747
  %v750 = vshrl.u32 %v79, 16
  %v752 = vrot.slane %v750, 4
  %v753 = vshll.u32 %v79, 16
  %v755 = vrot.slane %v753, 5
  %v756 = vor.u32 %v752, %v755
  %v757 = vrot.slane %v756, 4
  %v759 = vshll.u32 %v80, 16
  %v761 = vrot.slane %v759, 5
  %v762 = vsel %vm316, %v757, %v761
  %v763 = vshrl.u32 %v80, 16
  %v765 = vrot.slane %v763, 4
  %v766 = vor.u32 %v765, %v761
  %v767 = vrot.slane %v766, 4
  %v769 = vshll.u32 %v81, 16
  %v771 = vrot.slane %v769, 5
  %v772 = vsel %vm316, %v767, %v771
  %v774 = vshrl.u32 %v82, 16
  %v776 = vrot.slane %v774, 4
  %v777 = vshll.u32 %v82, 16
  %v779 = vrot.slane %v777, 5
  %v780 = vor.u32 %v776, %v779
  %v781 = vrot.slane %v780, 4
  %v783 = vshll.u32 %v83, 16
  %v785 = vrot.slane %v783, 5
  %v786 = vsel %vm316, %v781, %v785
  %v787 = vshrl.u32 %v83, 16
  %v789 = vrot.slane %v787, 4
  %v790 = vor.u32 %v789, %v785
  %v791 = vrot.slane %v790, 4
  %v793 = vshll.u32 %v84, 16
  %v795 = vrot.slane %v793, 5
  %v796 = vsel %vm316, %v791, %v795
  %v798 = vshrl.u32 %v85, 16
  %v800 = vrot.slane %v798, 4
  %v801 = vshll.u32 %v85, 16
  %v803 = vrot.slane %v801, 5
  %v804 = vor.u32 %v800, %v803
  %v805 = vrot.slane %v804, 4
  %v807 = vshll.u32 %v86, 16
  %v809 = vrot.slane %v807, 5
  %v810 = vsel %vm316, %v805, %v809
  %v811 = vshrl.u32 %v86, 16
  %v813 = vrot.slane %v811, 4
  %v814 = vor.u32 %v813, %v809
  %v815 = vrot.slane %v814, 4
  %v817 = vshll.u32 %v87, 16
  %v819 = vrot.slane %v817, 5
  %v820 = vsel %vm316, %v815, %v819
  %v822 = vshrl.u32 %v88, 16
  %v824 = vrot.slane %v822, 4
  %v825 = vshll.u32 %v88, 16
  %v827 = vrot.slane %v825, 5
  %v828 = vor.u32 %v824, %v827
  %v829 = vrot.slane %v828, 4
  %v831 = vshll.u32 %v89, 16
  %v833 = vrot.slane %v831, 5
  %v834 = vsel %vm316, %v829, %v833
  %v835 = vshrl.u32 %v89, 16
  %v837 = vrot.slane %v835, 4
  %v838 = vor.u32 %v837, %v833
  %v839 = vrot.slane %v838, 4
  %v841 = vshll.u32 %v90, 16
  %v843 = vrot.slane %v841, 5
  %v844 = vsel %vm316, %v839, %v843
  %v846 = vshrl.u32 %v91, 16
  %v848 = vrot.slane %v846, 4
  %v849 = vshll.u32 %v91, 16
  %v851 = vrot.slane %v849, 5
  %v852 = vor.u32 %v848, %v851
  %v853 = vrot.slane %v852, 4
  %v855 = vshll.u32 %v92, 16
  %v857 = vrot.slane %v855, 5
  %v858 = vsel %vm316, %v853, %v857
  %v859 = vshrl.u32 %v92, 16
  %v861 = vrot.slane %v859, 4
  %v862 = vor.u32 %v861, %v857
  %v863 = vrot.slane %v862, 4
  %v865 = vshll.u32 %v93, 16
  %v867 = vrot.slane %v865, 5
  %v868 = vsel %vm316, %v863, %v867
  %v870 = vshrl.u32 %v94, 16
  %v872 = vrot.slane %v870, 4
  %v873 = vshll.u32 %v94, 16
  %v875 = vrot.slane %v873, 5
  %v876 = vor.u32 %v872, %v875
  %v877 = vrot.slane %v876, 4
  %v879 = vshll.u32 %v95, 16
  %v881 = vrot.slane %v879, 5
  %v882 = vsel %vm316, %v877, %v881
  %v883 = vshrl.u32 %v95, 16
  %v885 = vrot.slane %v883, 4
  %v886 = vor.u32 %v885, %v881
  %v887 = vrot.slane %v886, 4
  %v889 = vshll.u32 %v96, 16
  %v891 = vrot.slane %v889, 5
  %v892 = vsel %vm316, %v887, %v891
  %v894 = vshrl.u32 %v97, 16
  %v896 = vrot.slane %v894, 4
  %v897 = vshll.u32 %v97, 16
  %v899 = vrot.slane %v897, 5
  %v900 = vor.u32 %v896, %v899
  %v901 = vrot.slane %v900, 4
  %v903 = vshll.u32 %v98, 16
  %v905 = vrot.slane %v903, 5
  %v906 = vsel %vm316, %v901, %v905
  %v907 = vshrl.u32 %v98, 16
  %v909 = vrot.slane %v907, 4
  %v910 = vor.u32 %v909, %v905
  %v911 = vrot.slane %v910, 4
  %v913 = vshll.u32 %v99, 16
  %v915 = vrot.slane %v913, 5
  %v916 = vsel %vm316, %v911, %v915
  %v918 = vshrl.u32 %v100, 16
  %v920 = vrot.slane %v918, 4
  %v921 = vshll.u32 %v100, 16
  %v923 = vrot.slane %v921, 5
  %v924 = vor.u32 %v920, %v923
  %v925 = vrot.slane %v924, 4
  %v927 = vshll.u32 %v101, 16
  %v929 = vrot.slane %v927, 5
  %v930 = vsel %vm316, %v925, %v929
  %v931 = vshrl.u32 %v101, 16
  %v933 = vrot.slane %v931, 4
  %v934 = vor.u32 %v933, %v929
  %v935 = vrot.slane %v934, 4
  %v937 = vshll.u32 %v102, 16
  %v939 = vrot.slane %v937, 5
  %v940 = vsel %vm316, %v935, %v939
  %v942 = vshrl.u32 %v103, 16
  %v944 = vrot.slane %v942, 4
  %v945 = vshll.u32 %v103, 16
  %v947 = vrot.slane %v945, 5
  %v948 = vor.u32 %v944, %v947
  %v949 = vrot.slane %v948, 4
  %v951 = vshll.u32 %v104, 16
  %v953 = vrot.slane %v951, 5
  %v954 = vsel %vm316, %v949, %v953
  %v955 = vshrl.u32 %v104, 16
  %v957 = vrot.slane %v955, 4
  %v958 = vor.u32 %v957, %v953
  %v959 = vrot.slane %v958, 4
  %v961 = vshll.u32 %v105, 16
  %v963 = vrot.slane %v961, 5
  %v964 = vsel %vm316, %v959, %v963
  %v966 = vshrl.u32 %v106, 16
  %v968 = vrot.slane %v966, 4
  %v969 = vshll.u32 %v106, 16
  %v971 = vrot.slane %v969, 5
  %v972 = vor.u32 %v968, %v971
  %v973 = vrot.slane %v972, 4
  %v975 = vshll.u32 %v107, 16
  %v977 = vrot.slane %v975, 5
  %v978 = vsel %vm316, %v973, %v977
  %v979 = vshrl.u32 %v107, 16
  %v981 = vrot.slane %v979, 4
  %v982 = vor.u32 %v981, %v977
  %v983 = vrot.slane %v982, 4
  %v985 = vshll.u32 %v108, 16
  %v987 = vrot.slane %v985, 5
  %v988 = vsel %vm316, %v983, %v987
  %v990 = vshrl.u32 %v109, 16
  %v992 = vrot.slane %v990, 4
  %v993 = vshll.u32 %v109, 16
  %v995 = vrot.slane %v993, 5
  %v996 = vor.u32 %v992, %v995
  %v997 = vrot.slane %v996, 4
  %v999 = vshll.u32 %v110, 16
  %v1001 = vrot.slane %v999, 5
  %v1002 = vsel %vm316, %v997, %v1001
  %v1003 = vshrl.u32 %v110, 16
  %v1005 = vrot.slane %v1003, 4
  %v1006 = vor.u32 %v1005, %v1001
  %v1007 = vrot.slane %v1006, 4
  %v1009 = vshll.u32 %v111, 16
  %v1011 = vrot.slane %v1009, 5
  %v1012 = vsel %vm316, %v1007, %v1011
  %v1014 = vshrl.u32 %v112, 16
  %v1016 = vrot.slane %v1014, 4
  %v1017 = vshll.u32 %v112, 16
  %v1019 = vrot.slane %v1017, 5
  %v1020 = vor.u32 %v1016, %v1019
  %v1021 = vrot.slane %v1020, 4
  %v1023 = vshll.u32 %v113, 16
  %v1025 = vrot.slane %v1023, 5
  %v1026 = vsel %vm316, %v1021, %v1025
  %v1027 = vshrl.u32 %v113, 16
  %v1029 = vrot.slane %v1027, 4
  %v1030 = vor.u32 %v1029, %v1025
  %v1031 = vrot.slane %v1030, 4
  %v1033 = vshll.u32 %v114, 16
  %v1035 = vrot.slane %v1033, 5
  %v1036 = vsel %vm316, %v1031, %v1035
  %v1038 = vshrl.u32 %v115, 16
  %v1040 = vrot.slane %v1038, 4
  %v1041 = vshll.u32 %v115, 16
  %v1043 = vrot.slane %v1041, 5
  %v1044 = vor.u32 %v1040, %v1043
  %v1045 = vrot.slane %v1044, 4
  %v1047 = vshll.u32 %v116, 16
  %v1049 = vrot.slane %v1047, 5
  %v1050 = vsel %vm316, %v1045, %v1049
  %v1051 = vshrl.u32 %v116, 16
  %v1053 = vrot.slane %v1051, 4
  %v1054 = vor.u32 %v1053, %v1049
  %v1055 = vrot.slane %v1054, 4
  %v1057 = vshll.u32 %v117, 16
  %v1059 = vrot.slane %v1057, 5
  %v1060 = vsel %vm316, %v1055, %v1059
  %v1062 = vshrl.u32 %v118, 16
  %v1064 = vrot.slane %v1062, 4
  %v1065 = vshll.u32 %v118, 16
  %v1067 = vrot.slane %v1065, 5
  %v1068 = vor.u32 %v1064, %v1067
  %v1069 = vrot.slane %v1068, 4
  %v1071 = vshll.u32 %v119, 16
  %v1073 = vrot.slane %v1071, 5
  %v1074 = vsel %vm316, %v1069, %v1073
  %v1075 = vshrl.u32 %v119, 16
  %v1077 = vrot.slane %v1075, 4
  %v1078 = vor.u32 %v1077, %v1073
  %v1079 = vrot.slane %v1078, 4
  %v1081 = vshll.u32 %v120, 16
  %v1083 = vrot.slane %v1081, 5
  %v1084 = vsel %vm316, %v1079, %v1083
  %s1085 = scalar_lea.vmem %s3, 2
  %v1086 = vld [vmem:[%s1085] sm:$0x3]
  %v1087 = vunpack.c.l.b16 %v330
  %v1088 = vunpack.c.l.b16 %v340
  %v1089 = vunpack.c.l.b16 %v354
  %v1090 = vunpack.c.l.b16 %v364
  %v1091 = vunpack.c.l.b16 %v378
  %v1092 = vunpack.c.l.b16 %v388
  %v1093 = vunpack.c.l.b16 %v402
  %v1094 = vunpack.c.l.b16 %v412
  %v1095 = vunpack.c.l.b16 %v426
  %v1096 = vunpack.c.l.b16 %v436
  %v1097 = vunpack.c.l.b16 %v450
  %v1098 = vunpack.c.l.b16 %v460
  %v1099 = vunpack.c.l.b16 %v474
  %v1100 = vunpack.c.l.b16 %v484
  %v1101 = vunpack.c.l.b16 %v498
  %v1102 = vunpack.c.l.b16 %v508
  %v1103 = vunpack.c.l.b16 %v522
  %v1104 = vunpack.c.l.b16 %v532
  %v1105 = vunpack.c.l.b16 %v546
  %v1106 = vunpack.c.l.b16 %v556
  %v1107 = vunpack.c.l.b16 %v570
  %v1108 = vunpack.c.l.b16 %v580
  %v1109 = vunpack.c.l.b16 %v594
  %v1110 = vunpack.c.l.b16 %v604
  %v1111 = vunpack.c.l.b16 %v618
  %v1112 = vunpack.c.l.b16 %v628
  %v1113 = vunpack.c.l.b16 %v642
  %v1114 = vunpack.c.l.b16 %v652
  %v1115 = vunpack.c.l.b16 %v666
  %v1116 = vunpack.c.l.b16 %v676
  %v1117 = vunpack.c.l.b16 %v690
  %v1118 = vunpack.c.l.b16 %v700
  %v1119 = vunpack.c.l.b16 %v714
  %v1120 = vunpack.c.l.b16 %v724
  %v1121 = vunpack.c.l.b16 %v738
  %v1122 = vunpack.c.l.b16 %v748
  %v1123 = vunpack.c.l.b16 %v762
  %v1124 = vunpack.c.l.b16 %v772
  %v1125 = vunpack.c.l.b16 %v786
  %v1126 = vunpack.c.l.b16 %v796
  %v1127 = vunpack.c.l.b16 %v810
  %v1128 = vunpack.c.l.b16 %v820
  %v1129 = vunpack.c.l.b16 %v834
  %v1130 = vunpack.c.l.b16 %v844
  %v1131 = vunpack.c.l.b16 %v858
  %v1132 = vunpack.c.l.b16 %v868
  %v1133 = vunpack.c.l.b16 %v882
  %v1134 = vunpack.c.l.b16 %v892
  %v1135 = vunpack.c.l.b16 %v906
  %v1136 = vunpack.c.l.b16 %v916
  %v1137 = vunpack.c.l.b16 %v930
  %v1138 = vunpack.c.l.b16 %v940
  %v1139 = vunpack.c.l.b16 %v954
  %v1140 = vunpack.c.l.b16 %v964
  %v1141 = vunpack.c.l.b16 %v978
  %v1142 = vunpack.c.l.b16 %v988
  %v1143 = vunpack.c.l.b16 %v1002
  %v1144 = vunpack.c.l.b16 %v1012
  %v1145 = vunpack.c.l.b16 %v1026
  %v1146 = vunpack.c.l.b16 %v1036
  %v1147 = vunpack.c.l.b16 %v1050
  %v1148 = vunpack.c.l.b16 %v1060
  %v1149 = vunpack.c.l.b16 %v1074
  %v1150 = vunpack.c.l.b16 %v1084
  %v1151 = vpack.c.b16 %v1088, %v1087
  %v1152 = vpack.c.b16 %v1090, %v1089
  %v1153 = vpack.c.b16 %v1092, %v1091
  %v1154 = vpack.c.b16 %v1094, %v1093
  %v1155 = vpack.c.b16 %v1096, %v1095
  %v1156 = vpack.c.b16 %v1098, %v1097
  %v1157 = vpack.c.b16 %v1100, %v1099
  %v1158 = vpack.c.b16 %v1102, %v1101
  %v1159 = vpack.c.b16 %v1104, %v1103
  %v1160 = vpack.c.b16 %v1106, %v1105
  %v1161 = vpack.c.b16 %v1108, %v1107
  %v1162 = vpack.c.b16 %v1110, %v1109
  %v1163 = vpack.c.b16 %v1112, %v1111
  %v1164 = vpack.c.b16 %v1114, %v1113
  %v1165 = vpack.c.b16 %v1116, %v1115
  %v1166 = vpack.c.b16 %v1118, %v1117
  %v1167 = vpack.c.b16 %v1120, %v1119
  %v1168 = vpack.c.b16 %v1122, %v1121
  %v1169 = vpack.c.b16 %v1124, %v1123
  %v1170 = vpack.c.b16 %v1126, %v1125
  %v1171 = vpack.c.b16 %v1128, %v1127
  %v1172 = vpack.c.b16 %v1130, %v1129
  %v1173 = vpack.c.b16 %v1132, %v1131
  %v1174 = vpack.c.b16 %v1134, %v1133
  %v1175 = vpack.c.b16 %v1136, %v1135
  %v1176 = vpack.c.b16 %v1138, %v1137
  %v1177 = vpack.c.b16 %v1140, %v1139
  %v1178 = vpack.c.b16 %v1142, %v1141
  %v1179 = vpack.c.b16 %v1144, %v1143
  %v1180 = vpack.c.b16 %v1146, %v1145
  %v1181 = vpack.c.b16 %v1148, %v1147
  %v1182 = vpack.c.b16 %v1150, %v1149
  %vm1183 = vcmask 31744
  %v1185 = vsel %vm1183, %v1151, 0
  %v1188 = vsel %vm1183, %v1152, 0
  %v1191 = vsel %vm1183, %v1153, 0
  %v1194 = vsel %vm1183, %v1154, 0
  %v1197 = vsel %vm1183, %v1155, 0
  %v1200 = vsel %vm1183, %v1156, 0
  %v1203 = vsel %vm1183, %v1157, 0
  %v1206 = vsel %vm1183, %v1158, 0
  %v1209 = vsel %vm1183, %v1159, 0
  %v1212 = vsel %vm1183, %v1160, 0
  %v1215 = vsel %vm1183, %v1161, 0
  %v1218 = vsel %vm1183, %v1162, 0
  %v1221 = vsel %vm1183, %v1163, 0
  %v1224 = vsel %vm1183, %v1164, 0
  %v1227 = vsel %vm1183, %v1165, 0
  %v1230 = vsel %vm1183, %v1166, 0
  %v1233 = vsel %vm1183, %v1167, 0
  %v1236 = vsel %vm1183, %v1168, 0
  %v1239 = vsel %vm1183, %v1169, 0
  %v1242 = vsel %vm1183, %v1170, 0
  %v1245 = vsel %vm1183, %v1171, 0
  %v1248 = vsel %vm1183, %v1172, 0
  %v1251 = vsel %vm1183, %v1173, 0
  %v1254 = vsel %vm1183, %v1174, 0
  %v1257 = vsel %vm1183, %v1175, 0
  %v1260 = vsel %vm1183, %v1176, 0
  %v1263 = vsel %vm1183, %v1177, 0
  %v1266 = vsel %vm1183, %v1178, 0
  %v1269 = vsel %vm1183, %v1179, 0
  %v1272 = vsel %vm1183, %v1180, 0
  %v1275 = vsel %vm1183, %v1181, 0
  %v1278 = vsel %vm1183, %v1182, 0
  %vm1280 = vcmask 1041408
  %v1282 = vsel %vm1280, %v1086, 0
  %1284 = vmatprep.subr.bf16.mxu0 0
  %1285 = vmatpush1.bf16.msra.mxu0 %v1282
  %1286 = vmatprep.subr.bf16.mxu0 0
  %1287 = vmatpush1.bf16.msra.mxu0 0
  %1288 = vmatprep.subr.bf16.mxu0 0
  %1289 = vmatpush1.bf16.msra.mxu0 0
  %1290 = vmatprep.subr.bf16.mxu0 0
  %1291 = vmatpush1.bf16.msra.mxu0 0
  %1292 = vmatprep.subr.bf16.mxu0 0
  %1293 = vmatpush1.bf16.msra.mxu0 0
  %1294 = vmatprep.subr.bf16.mxu0 0
  %1295 = vmatpush1.bf16.msra.mxu0 0
  %1296 = vmatprep.subr.bf16.mxu0 0
  %1297 = vmatpush1.bf16.msra.mxu0 0
  %1298 = vmatprep.subr.bf16.mxu0 0
  %1299 = vmatpush1.bf16.msra.mxu0 0
  %1300 = vmatprep.subr.bf16.mxu0 0
  %1301 = vmatpush1.bf16.msra.mxu0 0
  %1302 = vmatprep.subr.bf16.mxu0 0
  %1303 = vmatpush1.bf16.msra.mxu0 0
  %1304 = vmatprep.subr.bf16.mxu0 0
  %1305 = vmatpush1.bf16.msra.mxu0 0
  %1306 = vmatprep.subr.bf16.mxu0 0
  %1307 = vmatpush1.bf16.msra.mxu0 0
  %1308 = vmatprep.subr.bf16.mxu0 0
  %1309 = vmatpush1.bf16.msra.mxu0 0
  %1310 = vmatprep.subr.bf16.mxu0 0
  %1311 = vmatpush1.bf16.msra.mxu0 0
  %1312 = vmatprep.subr.bf16.mxu0 0
  %1313 = vmatpush1.bf16.msra.mxu0 0
  %1314 = vmatprep.subr.bf16.mxu0 0
  %1315 = vmatpush1.bf16.msra.mxu0 0
  %1316 = vmatprep.mubr.bf16.mxu0 0
  %1317 = vmatmul.mubr.bf16.gmra.mrb[0].mxu0 %v1185
  %v1318 = vpop.f32.mrb[0].mxu0
  %v1319 = vadd.f32 0.0, %v1318
  %v1320 = vpop.f32.mrb[0].mxu0
  %v1321 = vpop.f32.mrb[0].mxu0
  %v1322 = vadd.f32 0.0, %v1321
  %v1323 = vpop.f32.mrb[0].mxu0
  %1324 = vmatprep.mubr.bf16.mxu0 0
  %1325 = vmatmul.mubr.bf16.gmra.mrb[0].mxu0 %v1188
  %v1326 = vpop.f32.mrb[0].mxu0
  %v1327 = vadd.f32 0.0, %v1326
  %v1328 = vpop.f32.mrb[0].mxu0
  %v1329 = vpop.f32.mrb[0].mxu0
  %v1330 = vadd.f32 0.0, %v1329
  %v1331 = vpop.f32.mrb[0].mxu0
  %1332 = vmatprep.mubr.bf16.mxu0 0
  %1333 = vmatmul.mubr.bf16.gmra.mrb[0].mxu0 %v1191
  %v1334 = vpop.f32.mrb[0].mxu0
  %v1335 = vadd.f32 0.0, %v1334
  %v1336 = vpop.f32.mrb[0].mxu0
  %v1337 = vpop.f32.mrb[0].mxu0
  %v1338 = vadd.f32 0.0, %v1337
  %v1339 = vpop.f32.mrb[0].mxu0
  %1340 = vmatprep.mubr.bf16.mxu0 0
  %1341 = vmatmul.mubr.bf16.gmra.mrb[0].mxu0 %v1194
  %v1342 = vpop.f32.mrb[0].mxu0
  %v1343 = vadd.f32 0.0, %v1342
  %v1344 = vpop.f32.mrb[0].mxu0
  %v1345 = vpop.f32.mrb[0].mxu0
  %v1346 = vadd.f32 0.0, %v1345
  %v1347 = vpop.f32.mrb[0].mxu0
  %1348 = vmatprep.mubr.bf16.mxu0 0
  %1349 = vmatmul.mubr.bf16.gmra.mrb[0].mxu0 %v1197
  %v1350 = vpop.f32.mrb[0].mxu0
  %v1351 = vadd.f32 0.0, %v1350
  %v1352 = vpop.f32.mrb[0].mxu0
  %v1353 = vpop.f32.mrb[0].mxu0
  %v1354 = vadd.f32 0.0, %v1353
  %v1355 = vpop.f32.mrb[0].mxu0
  %1356 = vmatprep.mubr.bf16.mxu0 0
  %1357 = vmatmul.mubr.bf16.gmra.mrb[0].mxu0 %v1200
  %v1358 = vpop.f32.mrb[0].mxu0
  %v1359 = vadd.f32 0.0, %v1358
  %v1360 = vpop.f32.mrb[0].mxu0
  %v1361 = vpop.f32.mrb[0].mxu0
  %v1362 = vadd.f32 0.0, %v1361
  %v1363 = vpop.f32.mrb[0].mxu0
  %1364 = vmatprep.mubr.bf16.mxu0 0
  %1365 = vmatmul.mubr.bf16.gmra.mrb[0].mxu0 %v1203
  %v1366 = vpop.f32.mrb[0].mxu0
  %v1367 = vadd.f32 0.0, %v1366
  %v1368 = vpop.f32.mrb[0].mxu0
  %v1369 = vpop.f32.mrb[0].mxu0
  %v1370 = vadd.f32 0.0, %v1369
  %v1371 = vpop.f32.mrb[0].mxu0
  %1372 = vmatprep.mubr.bf16.mxu0 0
  %1373 = vmatmul.mubr.bf16.gmra.mrb[0].mxu0 %v1206
  %v1374 = vpop.f32.mrb[0].mxu0
  %v1375 = vadd.f32 0.0, %v1374
  %v1376 = vpop.f32.mrb[0].mxu0
  %v1377 = vpop.f32.mrb[0].mxu0
  %v1378 = vadd.f32 0.0, %v1377
  %v1379 = vpop.f32.mrb[0].mxu0
  %1380 = vmatprep.mubr.bf16.mxu0 0
  %1381 = vmatmul.mubr.bf16.gmra.mrb[0].mxu0 %v1209
  %v1382 = vpop.f32.mrb[0].mxu0
  %v1383 = vadd.f32 0.0, %v1382
  %v1384 = vpop.f32.mrb[0].mxu0
  %v1385 = vpop.f32.mrb[0].mxu0
  %v1386 = vadd.f32 0.0, %v1385
  %v1387 = vpop.f32.mrb[0].mxu0
  %1388 = vmatprep.mubr.bf16.mxu0 0
  %1389 = vmatmul.mubr.bf16.gmra.mrb[0].mxu0 %v1212
  %v1390 = vpop.f32.mrb[0].mxu0
  %v1391 = vadd.f32 0.0, %v1390
  %v1392 = vpop.f32.mrb[0].mxu0
  %v1393 = vpop.f32.mrb[0].mxu0
  %v1394 = vadd.f32 0.0, %v1393
  %v1395 = vpop.f32.mrb[0].mxu0
  %1396 = vmatprep.mubr.bf16.mxu0 0
  %1397 = vmatmul.mubr.bf16.gmra.mrb[0].mxu0 %v1215
  %v1398 = vpop.f32.mrb[0].mxu0
  %v1399 = vadd.f32 0.0, %v1398
  %v1400 = vpop.f32.mrb[0].mxu0
  %v1401 = vpop.f32.mrb[0].mxu0
  %v1402 = vadd.f32 0.0, %v1401
  %v1403 = vpop.f32.mrb[0].mxu0
  %1404 = vmatprep.mubr.bf16.mxu0 0
  %1405 = vmatmul.mubr.bf16.gmra.mrb[0].mxu0 %v1218
  %v1406 = vpop.f32.mrb[0].mxu0
  %v1407 = vadd.f32 0.0, %v1406
  %v1408 = vpop.f32.mrb[0].mxu0
  %v1409 = vpop.f32.mrb[0].mxu0
  %v1410 = vadd.f32 0.0, %v1409
  %v1411 = vpop.f32.mrb[0].mxu0
  %1412 = vmatprep.mubr.bf16.mxu0 0
  %1413 = vmatmul.mubr.bf16.gmra.mrb[0].mxu0 %v1221
  %v1414 = vpop.f32.mrb[0].mxu0
  %v1415 = vadd.f32 0.0, %v1414
  %v1416 = vpop.f32.mrb[0].mxu0
  %v1417 = vpop.f32.mrb[0].mxu0
  %v1418 = vadd.f32 0.0, %v1417
  %v1419 = vpop.f32.mrb[0].mxu0
  %1420 = vmatprep.mubr.bf16.mxu0 0
  %1421 = vmatmul.mubr.bf16.gmra.mrb[0].mxu0 %v1224
  %v1422 = vpop.f32.mrb[0].mxu0
  %v1423 = vadd.f32 0.0, %v1422
  %v1424 = vpop.f32.mrb[0].mxu0
  %v1425 = vpop.f32.mrb[0].mxu0
  %v1426 = vadd.f32 0.0, %v1425
  %v1427 = vpop.f32.mrb[0].mxu0
  %1428 = vmatprep.mubr.bf16.mxu0 0
  %1429 = vmatmul.mubr.bf16.gmra.mrb[0].mxu0 %v1227
  %v1430 = vpop.f32.mrb[0].mxu0
  %v1431 = vadd.f32 0.0, %v1430
  %v1432 = vpop.f32.mrb[0].mxu0
  %v1433 = vpop.f32.mrb[0].mxu0
  %v1434 = vadd.f32 0.0, %v1433
  %v1435 = vpop.f32.mrb[0].mxu0
  %1436 = vmatprep.mubr.bf16.mxu0 0
  %1437 = vmatmul.mubr.bf16.gmra.mrb[0].mxu0 %v1230
  %v1438 = vpop.f32.mrb[0].mxu0
  %v1439 = vadd.f32 0.0, %v1438
  %v1440 = vpop.f32.mrb[0].mxu0
  %v1441 = vpop.f32.mrb[0].mxu0
  %v1442 = vadd.f32 0.0, %v1441
  %v1443 = vpop.f32.mrb[0].mxu0
  %1444 = vmatprep.mubr.bf16.mxu0 0
  %1445 = vmatmul.mubr.bf16.gmra.mrb[0].mxu0 %v1233
  %v1446 = vpop.f32.mrb[0].mxu0
  %v1447 = vadd.f32 0.0, %v1446
  %v1448 = vpop.f32.mrb[0].mxu0
  %v1449 = vpop.f32.mrb[0].mxu0
  %v1450 = vadd.f32 0.0, %v1449
  %v1451 = vpop.f32.mrb[0].mxu0
  %1452 = vmatprep.mubr.bf16.mxu0 0
  %1453 = vmatmul.mubr.bf16.gmra.mrb[0].mxu0 %v1236
  %v1454 = vpop.f32.mrb[0].mxu0
  %v1455 = vadd.f32 0.0, %v1454
  %v1456 = vpop.f32.mrb[0].mxu0
  %v1457 = vpop.f32.mrb[0].mxu0
  %v1458 = vadd.f32 0.0, %v1457
  %v1459 = vpop.f32.mrb[0].mxu0
  %1460 = vmatprep.mubr.bf16.mxu0 0
  %1461 = vmatmul.mubr.bf16.gmra.mrb[0].mxu0 %v1239
  %v1462 = vpop.f32.mrb[0].mxu0
  %v1463 = vadd.f32 0.0, %v1462
  %v1464 = vpop.f32.mrb[0].mxu0
  %v1465 = vpop.f32.mrb[0].mxu0
  %v1466 = vadd.f32 0.0, %v1465
  %v1467 = vpop.f32.mrb[0].mxu0
  %1468 = vmatprep.mubr.bf16.mxu0 0
  %1469 = vmatmul.mubr.bf16.gmra.mrb[0].mxu0 %v1242
  %v1470 = vpop.f32.mrb[0].mxu0
  %v1471 = vadd.f32 0.0, %v1470
  %v1472 = vpop.f32.mrb[0].mxu0
  %v1473 = vpop.f32.mrb[0].mxu0
  %v1474 = vadd.f32 0.0, %v1473
  %v1475 = vpop.f32.mrb[0].mxu0
  %1476 = vmatprep.mubr.bf16.mxu0 0
  %1477 = vmatmul.mubr.bf16.gmra.mrb[0].mxu0 %v1245
  %v1478 = vpop.f32.mrb[0].mxu0
  %v1479 = vadd.f32 0.0, %v1478
  %v1480 = vpop.f32.mrb[0].mxu0
  %v1481 = vpop.f32.mrb[0].mxu0
  %v1482 = vadd.f32 0.0, %v1481
  %v1483 = vpop.f32.mrb[0].mxu0
  %1484 = vmatprep.mubr.bf16.mxu0 0
  %1485 = vmatmul.mubr.bf16.gmra.mrb[0].mxu0 %v1248
  %v1486 = vpop.f32.mrb[0].mxu0
  %v1487 = vadd.f32 0.0, %v1486
  %v1488 = vpop.f32.mrb[0].mxu0
  %v1489 = vpop.f32.mrb[0].mxu0
  %v1490 = vadd.f32 0.0, %v1489
  %v1491 = vpop.f32.mrb[0].mxu0
  %1492 = vmatprep.mubr.bf16.mxu0 0
  %1493 = vmatmul.mubr.bf16.gmra.mrb[0].mxu0 %v1251
  %v1494 = vpop.f32.mrb[0].mxu0
  %v1495 = vadd.f32 0.0, %v1494
  %v1496 = vpop.f32.mrb[0].mxu0
  %v1497 = vpop.f32.mrb[0].mxu0
  %v1498 = vadd.f32 0.0, %v1497
  %v1499 = vpop.f32.mrb[0].mxu0
  %1500 = vmatprep.mubr.bf16.mxu0 0
  %1501 = vmatmul.mubr.bf16.gmra.mrb[0].mxu0 %v1254
  %v1502 = vpop.f32.mrb[0].mxu0
  %v1503 = vadd.f32 0.0, %v1502
  %v1504 = vpop.f32.mrb[0].mxu0
  %v1505 = vpop.f32.mrb[0].mxu0
  %v1506 = vadd.f32 0.0, %v1505
  %v1507 = vpop.f32.mrb[0].mxu0
  %1508 = vmatprep.mubr.bf16.mxu0 0
  %1509 = vmatmul.mubr.bf16.gmra.mrb[0].mxu0 %v1257
  %v1510 = vpop.f32.mrb[0].mxu0
  %v1511 = vadd.f32 0.0, %v1510
  %v1512 = vpop.f32.mrb[0].mxu0
  %v1513 = vpop.f32.mrb[0].mxu0
  %v1514 = vadd.f32 0.0, %v1513
  %v1515 = vpop.f32.mrb[0].mxu0
  %1516 = vmatprep.mubr.bf16.mxu0 0
  %1517 = vmatmul.mubr.bf16.gmra.mrb[0].mxu0 %v1260
  %v1518 = vpop.f32.mrb[0].mxu0
  %v1519 = vadd.f32 0.0, %v1518
  %v1520 = vpop.f32.mrb[0].mxu0
  %v1521 = vpop.f32.mrb[0].mxu0
  %v1522 = vadd.f32 0.0, %v1521
  %v1523 = vpop.f32.mrb[0].mxu0
  %1524 = vmatprep.mubr.bf16.mxu0 0
  %1525 = vmatmul.mubr.bf16.gmra.mrb[0].mxu0 %v1263
  %v1526 = vpop.f32.mrb[0].mxu0
  %v1527 = vadd.f32 0.0, %v1526
  %v1528 = vpop.f32.mrb[0].mxu0
  %v1529 = vpop.f32.mrb[0].mxu0
  %v1530 = vadd.f32 0.0, %v1529
  %v1531 = vpop.f32.mrb[0].mxu0
  %1532 = vmatprep.mubr.bf16.mxu0 0
  %1533 = vmatmul.mubr.bf16.gmra.mrb[0].mxu0 %v1266
  %v1534 = vpop.f32.mrb[0].mxu0
  %v1535 = vadd.f32 0.0, %v1534
  %v1536 = vpop.f32.mrb[0].mxu0
  %v1537 = vpop.f32.mrb[0].mxu0
  %v1538 = vadd.f32 0.0, %v1537
  %v1539 = vpop.f32.mrb[0].mxu0
  %1540 = vmatprep.mubr.bf16.mxu0 0
  %1541 = vmatmul.mubr.bf16.gmra.mrb[0].mxu0 %v1269
  %v1542 = vpop.f32.mrb[0].mxu0
  %v1543 = vadd.f32 0.0, %v1542
  %v1544 = vpop.f32.mrb[0].mxu0
  %v1545 = vpop.f32.mrb[0].mxu0
  %v1546 = vadd.f32 0.0, %v1545
  %v1547 = vpop.f32.mrb[0].mxu0
  %1548 = vmatprep.mubr.bf16.mxu0 0
  %1549 = vmatmul.mubr.bf16.gmra.mrb[0].mxu0 %v1272
  %v1550 = vpop.f32.mrb[0].mxu0
  %v1551 = vadd.f32 0.0, %v1550
  %v1552 = vpop.f32.mrb[0].mxu0
  %v1553 = vpop.f32.mrb[0].mxu0
  %v1554 = vadd.f32 0.0, %v1553
  %v1555 = vpop.f32.mrb[0].mxu0
  %1556 = vmatprep.mubr.bf16.mxu0 0
  %1557 = vmatmul.mubr.bf16.gmra.mrb[0].mxu0 %v1275
  %v1558 = vpop.f32.mrb[0].mxu0
  %v1559 = vadd.f32 0.0, %v1558
  %v1560 = vpop.f32.mrb[0].mxu0
  %v1561 = vpop.f32.mrb[0].mxu0
  %v1562 = vadd.f32 0.0, %v1561
  %v1563 = vpop.f32.mrb[0].mxu0
  %1564 = vmatprep.mubr.bf16.mxu0 0
  %1565 = vmatmul.mubr.bf16.gmra.mrb[0].mxu0 %v1278
  %v1566 = vpop.f32.mrb[0].mxu0
  %v1567 = vadd.f32 0.0, %v1566
  %v1568 = vpop.f32.mrb[0].mxu0
  %v1569 = vpop.f32.mrb[0].mxu0
  %v1570 = vadd.f32 0.0, %v1569
  %v1571 = vpop.f32.mrb[0].mxu0
  %1572 = vdwg.mxu0
  %v1637 = vunpack.c.l.b16 %v25
  %v1638 = vunpack.c.l.b16 %v26
  %v1639 = vunpack.c.l.b16 %v28
  %v1640 = vunpack.c.l.b16 %v29
  %v1641 = vunpack.c.l.b16 %v31
  %v1642 = vunpack.c.l.b16 %v32
  %v1643 = vunpack.c.l.b16 %v34
  %v1644 = vunpack.c.l.b16 %v35
  %v1645 = vunpack.c.l.b16 %v37
  %v1646 = vunpack.c.l.b16 %v38
  %v1647 = vunpack.c.l.b16 %v40
  %v1648 = vunpack.c.l.b16 %v41
  %v1649 = vunpack.c.l.b16 %v43
  %v1650 = vunpack.c.l.b16 %v44
  %v1651 = vunpack.c.l.b16 %v46
  %v1652 = vunpack.c.l.b16 %v47
  %v1653 = vunpack.c.l.b16 %v49
  %v1654 = vunpack.c.l.b16 %v50
  %v1655 = vunpack.c.l.b16 %v52
  %v1656 = vunpack.c.l.b16 %v53
  %v1657 = vunpack.c.l.b16 %v55
  %v1658 = vunpack.c.l.b16 %v56
  %v1659 = vunpack.c.l.b16 %v58
  %v1660 = vunpack.c.l.b16 %v59
  %v1661 = vunpack.c.l.b16 %v61
  %v1662 = vunpack.c.l.b16 %v62
  %v1663 = vunpack.c.l.b16 %v64
  %v1664 = vunpack.c.l.b16 %v65
  %v1665 = vunpack.c.l.b16 %v67
  %v1666 = vunpack.c.l.b16 %v68
  %v1667 = vunpack.c.l.b16 %v70
  %v1668 = vunpack.c.l.b16 %v71
  %v1669 = vunpack.c.l.b16 %v73
  %v1670 = vunpack.c.l.b16 %v74
  %v1671 = vunpack.c.l.b16 %v76
  %v1672 = vunpack.c.l.b16 %v77
  %v1673 = vunpack.c.l.b16 %v79
  %v1674 = vunpack.c.l.b16 %v80
  %v1675 = vunpack.c.l.b16 %v82
  %v1676 = vunpack.c.l.b16 %v83
  %v1677 = vunpack.c.l.b16 %v85
  %v1678 = vunpack.c.l.b16 %v86
  %v1679 = vunpack.c.l.b16 %v88
  %v1680 = vunpack.c.l.b16 %v89
  %v1681 = vunpack.c.l.b16 %v91
  %v1682 = vunpack.c.l.b16 %v92
  %v1683 = vunpack.c.l.b16 %v94
  %v1684 = vunpack.c.l.b16 %v95
  %v1685 = vunpack.c.l.b16 %v97
  %v1686 = vunpack.c.l.b16 %v98
  %v1687 = vunpack.c.l.b16 %v100
  %v1688 = vunpack.c.l.b16 %v101
  %v1689 = vunpack.c.l.b16 %v103
  %v1690 = vunpack.c.l.b16 %v104
  %v1691 = vunpack.c.l.b16 %v106
  %v1692 = vunpack.c.l.b16 %v107
  %v1693 = vunpack.c.l.b16 %v109
  %v1694 = vunpack.c.l.b16 %v110
  %v1695 = vunpack.c.l.b16 %v112
  %v1696 = vunpack.c.l.b16 %v113
  %v1697 = vunpack.c.l.b16 %v115
  %v1698 = vunpack.c.l.b16 %v116
  %v1699 = vunpack.c.l.b16 %v118
  %v1700 = vunpack.c.l.b16 %v119
  %v1701 = vpack.c.b16 %v1638, %v1637
  %v1702 = vpack.c.b16 %v1640, %v1639
  %v1703 = vpack.c.b16 %v1642, %v1641
  %v1704 = vpack.c.b16 %v1644, %v1643
  %v1705 = vpack.c.b16 %v1646, %v1645
  %v1706 = vpack.c.b16 %v1648, %v1647
  %v1707 = vpack.c.b16 %v1650, %v1649
  %v1708 = vpack.c.b16 %v1652, %v1651
  %v1709 = vpack.c.b16 %v1654, %v1653
  %v1710 = vpack.c.b16 %v1656, %v1655
  %v1711 = vpack.c.b16 %v1658, %v1657
  %v1712 = vpack.c.b16 %v1660, %v1659
  %v1713 = vpack.c.b16 %v1662, %v1661
  %v1714 = vpack.c.b16 %v1664, %v1663
  %v1715 = vpack.c.b16 %v1666, %v1665
  %v1716 = vpack.c.b16 %v1668, %v1667
  %v1717 = vpack.c.b16 %v1670, %v1669
  %v1718 = vpack.c.b16 %v1672, %v1671
  %v1719 = vpack.c.b16 %v1674, %v1673
  %v1720 = vpack.c.b16 %v1676, %v1675
  %v1721 = vpack.c.b16 %v1678, %v1677
  %v1722 = vpack.c.b16 %v1680, %v1679
  %v1723 = vpack.c.b16 %v1682, %v1681
  %v1724 = vpack.c.b16 %v1684, %v1683
  %v1725 = vpack.c.b16 %v1686, %v1685
  %v1726 = vpack.c.b16 %v1688, %v1687
  %v1727 = vpack.c.b16 %v1690, %v1689
  %v1728 = vpack.c.b16 %v1692, %v1691
  %v1729 = vpack.c.b16 %v1694, %v1693
  %v1730 = vpack.c.b16 %v1696, %v1695
  %v1731 = vpack.c.b16 %v1698, %v1697
  %v1732 = vpack.c.b16 %v1700, %v1699
  %v1734 = vsel %vm1183, %v1701, 0
  %v1737 = vsel %vm1183, %v1702, 0
  %v1740 = vsel %vm1183, %v1703, 0
  %v1743 = vsel %vm1183, %v1704, 0
  %v1746 = vsel %vm1183, %v1705, 0
  %v1749 = vsel %vm1183, %v1706, 0
  %v1752 = vsel %vm1183, %v1707, 0
  %v1755 = vsel %vm1183, %v1708, 0
  %v1758 = vsel %vm1183, %v1709, 0
  %v1761 = vsel %vm1183, %v1710, 0
  %v1764 = vsel %vm1183, %v1711, 0
  %v1767 = vsel %vm1183, %v1712, 0
  %v1770 = vsel %vm1183, %v1713, 0
  %v1773 = vsel %vm1183, %v1714, 0
  %v1776 = vsel %vm1183, %v1715, 0
  %v1779 = vsel %vm1183, %v1716, 0
  %v1782 = vsel %vm1183, %v1717, 0
  %v1785 = vsel %vm1183, %v1718, 0
  %v1788 = vsel %vm1183, %v1719, 0
  %v1791 = vsel %vm1183, %v1720, 0
  %v1794 = vsel %vm1183, %v1721, 0
  %v1797 = vsel %vm1183, %v1722, 0
  %v1800 = vsel %vm1183, %v1723, 0
  %v1803 = vsel %vm1183, %v1724, 0
  %v1806 = vsel %vm1183, %v1725, 0
  %v1809 = vsel %vm1183, %v1726, 0
  %v1812 = vsel %vm1183, %v1727, 0
  %v1815 = vsel %vm1183, %v1728, 0
  %v1818 = vsel %vm1183, %v1729, 0
  %v1821 = vsel %vm1183, %v1730, 0
  %v1824 = vsel %vm1183, %v1731, 0
  %v1827 = vsel %vm1183, %v1732, 0
  %v1830 = vsel %vm1280, %v313, 0
  %1832 = vmatprep.subr.bf16.mxu0 0
  %1833 = vmatpush1.bf16.msra.mxu0 %v1830
  %1834 = vmatprep.subr.bf16.mxu0 0
  %1835 = vmatpush1.bf16.msra.mxu0 0
  %1836 = vmatprep.subr.bf16.mxu0 0
  %1837 = vmatpush1.bf16.msra.mxu0 0
  %1838 = vmatprep.subr.bf16.mxu0 0
  %1839 = vmatpush1.bf16.msra.mxu0 0
  %1840 = vmatprep.subr.bf16.mxu0 0
  %1841 = vmatpush1.bf16.msra.mxu0 0
  %1842 = vmatprep.subr.bf16.mxu0 0
  %1843 = vmatpush1.bf16.msra.mxu0 0
  %1844 = vmatprep.subr.bf16.mxu0 0
  %1845 = vmatpush1.bf16.msra.mxu0 0
  %1846 = vmatprep.subr.bf16.mxu0 0
  %1847 = vmatpush1.bf16.msra.mxu0 0
  %1848 = vmatprep.subr.bf16.mxu0 0
  %1849 = vmatpush1.bf16.msra.mxu0 0
  %1850 = vmatprep.subr.bf16.mxu0 0
  %1851 = vmatpush1.bf16.msra.mxu0 0
  %1852 = vmatprep.subr.bf16.mxu0 0
  %1853 = vmatpush1.bf16.msra.mxu0 0
  %1854 = vmatprep.subr.bf16.mxu0 0
  %1855 = vmatpush1.bf16.msra.mxu0 0
  %1856 = vmatprep.subr.bf16.mxu0 0
  %1857 = vmatpush1.bf16.msra.mxu0 0
  %1858 = vmatprep.subr.bf16.mxu0 0
  %1859 = vmatpush1.bf16.msra.mxu0 0
  %1860 = vmatprep.subr.bf16.mxu0 0
  %1861 = vmatpush1.bf16.msra.mxu0 0
  %1862 = vmatprep.subr.bf16.mxu0 0
  %1863 = vmatpush1.bf16.msra.mxu0 0
  %1864 = vmatprep.mubr.bf16.mxu0 0
  %1865 = vmatmul.mubr.bf16.gmra.mrb[0].mxu0 %v1734
  %v1866 = vpop.f32.mrb[0].mxu0
  %v1867 = vadd.f32 %v1319, %v1866
  %v1868 = vpop.f32.mrb[0].mxu0
  %v1869 = vpop.f32.mrb[0].mxu0
  %v1870 = vadd.f32 %v1322, %v1869
  %v1871 = vpop.f32.mrb[0].mxu0
  %1872 = vmatprep.mubr.bf16.mxu0 0
  %1873 = vmatmul.mubr.bf16.gmra.mrb[0].mxu0 %v1737
  %v1874 = vpop.f32.mrb[0].mxu0
  %v1875 = vadd.f32 %v1327, %v1874
  %v1876 = vpop.f32.mrb[0].mxu0
  %v1877 = vpop.f32.mrb[0].mxu0
  %v1878 = vadd.f32 %v1330, %v1877
  %v1879 = vpop.f32.mrb[0].mxu0
  %1880 = vmatprep.mubr.bf16.mxu0 0
  %1881 = vmatmul.mubr.bf16.gmra.mrb[0].mxu0 %v1740
  %v1882 = vpop.f32.mrb[0].mxu0
  %v1883 = vadd.f32 %v1335, %v1882
  %v1884 = vpop.f32.mrb[0].mxu0
  %v1885 = vpop.f32.mrb[0].mxu0
  %v1886 = vadd.f32 %v1338, %v1885
  %v1887 = vpop.f32.mrb[0].mxu0
  %1888 = vmatprep.mubr.bf16.mxu0 0
  %1889 = vmatmul.mubr.bf16.gmra.mrb[0].mxu0 %v1743
  %v1890 = vpop.f32.mrb[0].mxu0
  %v1891 = vadd.f32 %v1343, %v1890
  %v1892 = vpop.f32.mrb[0].mxu0
  %v1893 = vpop.f32.mrb[0].mxu0
  %v1894 = vadd.f32 %v1346, %v1893
  %v1895 = vpop.f32.mrb[0].mxu0
  %1896 = vmatprep.mubr.bf16.mxu0 0
  %1897 = vmatmul.mubr.bf16.gmra.mrb[0].mxu0 %v1746
  %v1898 = vpop.f32.mrb[0].mxu0
  %v1899 = vadd.f32 %v1351, %v1898
  %v1900 = vpop.f32.mrb[0].mxu0
  %v1901 = vpop.f32.mrb[0].mxu0
  %v1902 = vadd.f32 %v1354, %v1901
  %v1903 = vpop.f32.mrb[0].mxu0
  %1904 = vmatprep.mubr.bf16.mxu0 0
  %1905 = vmatmul.mubr.bf16.gmra.mrb[0].mxu0 %v1749
  %v1906 = vpop.f32.mrb[0].mxu0
  %v1907 = vadd.f32 %v1359, %v1906
  %v1908 = vpop.f32.mrb[0].mxu0
  %v1909 = vpop.f32.mrb[0].mxu0
  %v1910 = vadd.f32 %v1362, %v1909
  %v1911 = vpop.f32.mrb[0].mxu0
  %1912 = vmatprep.mubr.bf16.mxu0 0
  %1913 = vmatmul.mubr.bf16.gmra.mrb[0].mxu0 %v1752
  %v1914 = vpop.f32.mrb[0].mxu0
  %v1915 = vadd.f32 %v1367, %v1914
  %v1916 = vpop.f32.mrb[0].mxu0
  %v1917 = vpop.f32.mrb[0].mxu0
  %v1918 = vadd.f32 %v1370, %v1917
  %v1919 = vpop.f32.mrb[0].mxu0
  %1920 = vmatprep.mubr.bf16.mxu0 0
  %1921 = vmatmul.mubr.bf16.gmra.mrb[0].mxu0 %v1755
  %v1922 = vpop.f32.mrb[0].mxu0
  %v1923 = vadd.f32 %v1375, %v1922
  %v1924 = vpop.f32.mrb[0].mxu0
  %v1925 = vpop.f32.mrb[0].mxu0
  %v1926 = vadd.f32 %v1378, %v1925
  %v1927 = vpop.f32.mrb[0].mxu0
  %1928 = vmatprep.mubr.bf16.mxu0 0
  %1929 = vmatmul.mubr.bf16.gmra.mrb[0].mxu0 %v1758
  %v1930 = vpop.f32.mrb[0].mxu0
  %v1931 = vadd.f32 %v1383, %v1930
  %v1932 = vpop.f32.mrb[0].mxu0
  %v1933 = vpop.f32.mrb[0].mxu0
  %v1934 = vadd.f32 %v1386, %v1933
  %v1935 = vpop.f32.mrb[0].mxu0
  %1936 = vmatprep.mubr.bf16.mxu0 0
  %1937 = vmatmul.mubr.bf16.gmra.mrb[0].mxu0 %v1761
  %v1938 = vpop.f32.mrb[0].mxu0
  %v1939 = vadd.f32 %v1391, %v1938
  %v1940 = vpop.f32.mrb[0].mxu0
  %v1941 = vpop.f32.mrb[0].mxu0
  %v1942 = vadd.f32 %v1394, %v1941
  %v1943 = vpop.f32.mrb[0].mxu0
  %1944 = vmatprep.mubr.bf16.mxu0 0
  %1945 = vmatmul.mubr.bf16.gmra.mrb[0].mxu0 %v1764
  %v1946 = vpop.f32.mrb[0].mxu0
  %v1947 = vadd.f32 %v1399, %v1946
  %v1948 = vpop.f32.mrb[0].mxu0
  %v1949 = vpop.f32.mrb[0].mxu0
  %v1950 = vadd.f32 %v1402, %v1949
  %v1951 = vpop.f32.mrb[0].mxu0
  %1952 = vmatprep.mubr.bf16.mxu0 0
  %1953 = vmatmul.mubr.bf16.gmra.mrb[0].mxu0 %v1767
  %v1954 = vpop.f32.mrb[0].mxu0
  %v1955 = vadd.f32 %v1407, %v1954
  %v1956 = vpop.f32.mrb[0].mxu0
  %v1957 = vpop.f32.mrb[0].mxu0
  %v1958 = vadd.f32 %v1410, %v1957
  %v1959 = vpop.f32.mrb[0].mxu0
  %1960 = vmatprep.mubr.bf16.mxu0 0
  %1961 = vmatmul.mubr.bf16.gmra.mrb[0].mxu0 %v1770
  %v1962 = vpop.f32.mrb[0].mxu0
  %v1963 = vadd.f32 %v1415, %v1962
  %v1964 = vpop.f32.mrb[0].mxu0
  %v1965 = vpop.f32.mrb[0].mxu0
  %v1966 = vadd.f32 %v1418, %v1965
  %v1967 = vpop.f32.mrb[0].mxu0
  %1968 = vmatprep.mubr.bf16.mxu0 0
  %1969 = vmatmul.mubr.bf16.gmra.mrb[0].mxu0 %v1773
  %v1970 = vpop.f32.mrb[0].mxu0
  %v1971 = vadd.f32 %v1423, %v1970
  %v1972 = vpop.f32.mrb[0].mxu0
  %v1973 = vpop.f32.mrb[0].mxu0
  %v1974 = vadd.f32 %v1426, %v1973
  %v1975 = vpop.f32.mrb[0].mxu0
  %1976 = vmatprep.mubr.bf16.mxu0 0
  %1977 = vmatmul.mubr.bf16.gmra.mrb[0].mxu0 %v1776
  %v1978 = vpop.f32.mrb[0].mxu0
  %v1979 = vadd.f32 %v1431, %v1978
  %v1980 = vpop.f32.mrb[0].mxu0
  %v1981 = vpop.f32.mrb[0].mxu0
  %v1982 = vadd.f32 %v1434, %v1981
  %v1983 = vpop.f32.mrb[0].mxu0
  %1984 = vmatprep.mubr.bf16.mxu0 0
  %1985 = vmatmul.mubr.bf16.gmra.mrb[0].mxu0 %v1779
  %v1986 = vpop.f32.mrb[0].mxu0
  %v1987 = vadd.f32 %v1439, %v1986
  %v1988 = vpop.f32.mrb[0].mxu0
  %v1989 = vpop.f32.mrb[0].mxu0
  %v1990 = vadd.f32 %v1442, %v1989
  %v1991 = vpop.f32.mrb[0].mxu0
  %1992 = vmatprep.mubr.bf16.mxu0 0
  %1993 = vmatmul.mubr.bf16.gmra.mrb[0].mxu0 %v1782
  %v1994 = vpop.f32.mrb[0].mxu0
  %v1995 = vadd.f32 %v1447, %v1994
  %v1996 = vpop.f32.mrb[0].mxu0
  %v1997 = vpop.f32.mrb[0].mxu0
  %v1998 = vadd.f32 %v1450, %v1997
  %v1999 = vpop.f32.mrb[0].mxu0
  %2000 = vmatprep.mubr.bf16.mxu0 0
  %2001 = vmatmul.mubr.bf16.gmra.mrb[0].mxu0 %v1785
  %v2002 = vpop.f32.mrb[0].mxu0
  %v2003 = vadd.f32 %v1455, %v2002
  %v2004 = vpop.f32.mrb[0].mxu0
  %v2005 = vpop.f32.mrb[0].mxu0
  %v2006 = vadd.f32 %v1458, %v2005
  %v2007 = vpop.f32.mrb[0].mxu0
  %2008 = vmatprep.mubr.bf16.mxu0 0
  %2009 = vmatmul.mubr.bf16.gmra.mrb[0].mxu0 %v1788
  %v2010 = vpop.f32.mrb[0].mxu0
  %v2011 = vadd.f32 %v1463, %v2010
  %v2012 = vpop.f32.mrb[0].mxu0
  %v2013 = vpop.f32.mrb[0].mxu0
  %v2014 = vadd.f32 %v1466, %v2013
  %v2015 = vpop.f32.mrb[0].mxu0
  %2016 = vmatprep.mubr.bf16.mxu0 0
  %2017 = vmatmul.mubr.bf16.gmra.mrb[0].mxu0 %v1791
  %v2018 = vpop.f32.mrb[0].mxu0
  %v2019 = vadd.f32 %v1471, %v2018
  %v2020 = vpop.f32.mrb[0].mxu0
  %v2021 = vpop.f32.mrb[0].mxu0
  %v2022 = vadd.f32 %v1474, %v2021
  %v2023 = vpop.f32.mrb[0].mxu0
  %2024 = vmatprep.mubr.bf16.mxu0 0
  %2025 = vmatmul.mubr.bf16.gmra.mrb[0].mxu0 %v1794
  %v2026 = vpop.f32.mrb[0].mxu0
  %v2027 = vadd.f32 %v1479, %v2026
  %v2028 = vpop.f32.mrb[0].mxu0
  %v2029 = vpop.f32.mrb[0].mxu0
  %v2030 = vadd.f32 %v1482, %v2029
  %v2031 = vpop.f32.mrb[0].mxu0
  %2032 = vmatprep.mubr.bf16.mxu0 0
  %2033 = vmatmul.mubr.bf16.gmra.mrb[0].mxu0 %v1797
  %v2034 = vpop.f32.mrb[0].mxu0
  %v2035 = vadd.f32 %v1487, %v2034
  %v2036 = vpop.f32.mrb[0].mxu0
  %v2037 = vpop.f32.mrb[0].mxu0
  %v2038 = vadd.f32 %v1490, %v2037
  %v2039 = vpop.f32.mrb[0].mxu0
  %2040 = vmatprep.mubr.bf16.mxu0 0
  %2041 = vmatmul.mubr.bf16.gmra.mrb[0].mxu0 %v1800
  %v2042 = vpop.f32.mrb[0].mxu0
  %v2043 = vadd.f32 %v1495, %v2042
  %v2044 = vpop.f32.mrb[0].mxu0
  %v2045 = vpop.f32.mrb[0].mxu0
  %v2046 = vadd.f32 %v1498, %v2045
  %v2047 = vpop.f32.mrb[0].mxu0
  %2048 = vmatprep.mubr.bf16.mxu0 0
  %2049 = vmatmul.mubr.bf16.gmra.mrb[0].mxu0 %v1803
  %v2050 = vpop.f32.mrb[0].mxu0
  %v2051 = vadd.f32 %v1503, %v2050
  %v2052 = vpop.f32.mrb[0].mxu0
  %v2053 = vpop.f32.mrb[0].mxu0
  %v2054 = vadd.f32 %v1506, %v2053
  %v2055 = vpop.f32.mrb[0].mxu0
  %2056 = vmatprep.mubr.bf16.mxu0 0
  %2057 = vmatmul.mubr.bf16.gmra.mrb[0].mxu0 %v1806
  %v2058 = vpop.f32.mrb[0].mxu0
  %v2059 = vadd.f32 %v1511, %v2058
  %v2060 = vpop.f32.mrb[0].mxu0
  %v2061 = vpop.f32.mrb[0].mxu0
  %v2062 = vadd.f32 %v1514, %v2061
  %v2063 = vpop.f32.mrb[0].mxu0
  %2064 = vmatprep.mubr.bf16.mxu0 0
  %2065 = vmatmul.mubr.bf16.gmra.mrb[0].mxu0 %v1809
  %v2066 = vpop.f32.mrb[0].mxu0
  %v2067 = vadd.f32 %v1519, %v2066
  %v2068 = vpop.f32.mrb[0].mxu0
  %v2069 = vpop.f32.mrb[0].mxu0
  %v2070 = vadd.f32 %v1522, %v2069
  %v2071 = vpop.f32.mrb[0].mxu0
  %2072 = vmatprep.mubr.bf16.mxu0 0
  %2073 = vmatmul.mubr.bf16.gmra.mrb[0].mxu0 %v1812
  %v2074 = vpop.f32.mrb[0].mxu0
  %v2075 = vadd.f32 %v1527, %v2074
  %v2076 = vpop.f32.mrb[0].mxu0
  %v2077 = vpop.f32.mrb[0].mxu0
  %v2078 = vadd.f32 %v1530, %v2077
  %v2079 = vpop.f32.mrb[0].mxu0
  %2080 = vmatprep.mubr.bf16.mxu0 0
  %2081 = vmatmul.mubr.bf16.gmra.mrb[0].mxu0 %v1815
  %v2082 = vpop.f32.mrb[0].mxu0
  %v2083 = vadd.f32 %v1535, %v2082
  %v2084 = vpop.f32.mrb[0].mxu0
  %v2085 = vpop.f32.mrb[0].mxu0
  %v2086 = vadd.f32 %v1538, %v2085
  %v2087 = vpop.f32.mrb[0].mxu0
  %2088 = vmatprep.mubr.bf16.mxu0 0
  %2089 = vmatmul.mubr.bf16.gmra.mrb[0].mxu0 %v1818
  %v2090 = vpop.f32.mrb[0].mxu0
  %v2091 = vadd.f32 %v1543, %v2090
  %v2092 = vpop.f32.mrb[0].mxu0
  %v2093 = vpop.f32.mrb[0].mxu0
  %v2094 = vadd.f32 %v1546, %v2093
  %v2095 = vpop.f32.mrb[0].mxu0
  %2096 = vmatprep.mubr.bf16.mxu0 0
  %2097 = vmatmul.mubr.bf16.gmra.mrb[0].mxu0 %v1821
  %v2098 = vpop.f32.mrb[0].mxu0
  %v2099 = vadd.f32 %v1551, %v2098
  %v2100 = vpop.f32.mrb[0].mxu0
  %v2101 = vpop.f32.mrb[0].mxu0
  %v2102 = vadd.f32 %v1554, %v2101
  %v2103 = vpop.f32.mrb[0].mxu0
  %2104 = vmatprep.mubr.bf16.mxu0 0
  %2105 = vmatmul.mubr.bf16.gmra.mrb[0].mxu0 %v1824
  %v2106 = vpop.f32.mrb[0].mxu0
  %v2107 = vadd.f32 %v1559, %v2106
  %v2108 = vpop.f32.mrb[0].mxu0
  %v2109 = vpop.f32.mrb[0].mxu0
  %v2110 = vadd.f32 %v1562, %v2109
  %v2111 = vpop.f32.mrb[0].mxu0
  %2112 = vmatprep.mubr.bf16.mxu0 0
  %2113 = vmatmul.mubr.bf16.gmra.mrb[0].mxu0 %v1827
  %v2114 = vpop.f32.mrb[0].mxu0
  %v2115 = vadd.f32 %v1567, %v2114
  %v2116 = vpop.f32.mrb[0].mxu0
  %v2117 = vpop.f32.mrb[0].mxu0
  %v2118 = vadd.f32 %v1570, %v2117
  %v2119 = vpop.f32.mrb[0].mxu0
  %2120 = vdwg.mxu0
  %vm2153 = vcmask 1042432
  %vm2154 = vcmask 1046532
  %vm2155 = vmor %vm2153, %vm2154
  %v2156 = vrot.slane %v25, 5
  %v2157 = vrot.slane %v2156, 4
  %v2158 = vrot.slane %v26, 5
  %v2159 = vsel %vm2155, %v2157, %v2158
  %v2160 = vrot.slane %v2158, 4
  %v2161 = vrot.slane %v27, 5
  %v2162 = vsel %vm2155, %v2160, %v2161
  %v2163 = vrot.slane %v28, 5
  %v2164 = vrot.slane %v2163, 4
  %v2165 = vrot.slane %v29, 5
  %v2166 = vsel %vm2155, %v2164, %v2165
  %v2167 = vrot.slane %v2165, 4
  %v2168 = vrot.slane %v30, 5
  %v2169 = vsel %vm2155, %v2167, %v2168
  %v2170 = vrot.slane %v31, 5
  %v2171 = vrot.slane %v2170, 4
  %v2172 = vrot.slane %v32, 5
  %v2173 = vsel %vm2155, %v2171, %v2172
  %v2174 = vrot.slane %v2172, 4
  %v2175 = vrot.slane %v33, 5
  %v2176 = vsel %vm2155, %v2174, %v2175
  %v2177 = vrot.slane %v34, 5
  %v2178 = vrot.slane %v2177, 4
  %v2179 = vrot.slane %v35, 5
  %v2180 = vsel %vm2155, %v2178, %v2179
  %v2181 = vrot.slane %v2179, 4
  %v2182 = vrot.slane %v36, 5
  %v2183 = vsel %vm2155, %v2181, %v2182
  %v2184 = vrot.slane %v37, 5
  %v2185 = vrot.slane %v2184, 4
  %v2186 = vrot.slane %v38, 5
  %v2187 = vsel %vm2155, %v2185, %v2186
  %v2188 = vrot.slane %v2186, 4
  %v2189 = vrot.slane %v39, 5
  %v2190 = vsel %vm2155, %v2188, %v2189
  %v2191 = vrot.slane %v40, 5
  %v2192 = vrot.slane %v2191, 4
  %v2193 = vrot.slane %v41, 5
  %v2194 = vsel %vm2155, %v2192, %v2193
  %v2195 = vrot.slane %v2193, 4
  %v2196 = vrot.slane %v42, 5
  %v2197 = vsel %vm2155, %v2195, %v2196
  %v2198 = vrot.slane %v43, 5
  %v2199 = vrot.slane %v2198, 4
  %v2200 = vrot.slane %v44, 5
  %v2201 = vsel %vm2155, %v2199, %v2200
  %v2202 = vrot.slane %v2200, 4
  %v2203 = vrot.slane %v45, 5
  %v2204 = vsel %vm2155, %v2202, %v2203
  %v2205 = vrot.slane %v46, 5
  %v2206 = vrot.slane %v2205, 4
  %v2207 = vrot.slane %v47, 5
  %v2208 = vsel %vm2155, %v2206, %v2207
  %v2209 = vrot.slane %v2207, 4
  %v2210 = vrot.slane %v48, 5
  %v2211 = vsel %vm2155, %v2209, %v2210
  %v2212 = vrot.slane %v49, 5
  %v2213 = vrot.slane %v2212, 4
  %v2214 = vrot.slane %v50, 5
  %v2215 = vsel %vm2155, %v2213, %v2214
  %v2216 = vrot.slane %v2214, 4
  %v2217 = vrot.slane %v51, 5
  %v2218 = vsel %vm2155, %v2216, %v2217
  %v2219 = vrot.slane %v52, 5
  %v2220 = vrot.slane %v2219, 4
  %v2221 = vrot.slane %v53, 5
  %v2222 = vsel %vm2155, %v2220, %v2221
  %v2223 = vrot.slane %v2221, 4
  %v2224 = vrot.slane %v54, 5
  %v2225 = vsel %vm2155, %v2223, %v2224
  %v2226 = vrot.slane %v55, 5
  %v2227 = vrot.slane %v2226, 4
  %v2228 = vrot.slane %v56, 5
  %v2229 = vsel %vm2155, %v2227, %v2228
  %v2230 = vrot.slane %v2228, 4
  %v2231 = vrot.slane %v57, 5
  %v2232 = vsel %vm2155, %v2230, %v2231
  %v2233 = vrot.slane %v58, 5
  %v2234 = vrot.slane %v2233, 4
  %v2235 = vrot.slane %v59, 5
  %v2236 = vsel %vm2155, %v2234, %v2235
  %v2237 = vrot.slane %v2235, 4
  %v2238 = vrot.slane %v60, 5
  %v2239 = vsel %vm2155, %v2237, %v2238
  %v2240 = vrot.slane %v61, 5
  %v2241 = vrot.slane %v2240, 4
  %v2242 = vrot.slane %v62, 5
  %v2243 = vsel %vm2155, %v2241, %v2242
  %v2244 = vrot.slane %v2242, 4
  %v2245 = vrot.slane %v63, 5
  %v2246 = vsel %vm2155, %v2244, %v2245
  %v2247 = vrot.slane %v64, 5
  %v2248 = vrot.slane %v2247, 4
  %v2249 = vrot.slane %v65, 5
  %v2250 = vsel %vm2155, %v2248, %v2249
  %v2251 = vrot.slane %v2249, 4
  %v2252 = vrot.slane %v66, 5
  %v2253 = vsel %vm2155, %v2251, %v2252
  %v2254 = vrot.slane %v67, 5
  %v2255 = vrot.slane %v2254, 4
  %v2256 = vrot.slane %v68, 5
  %v2257 = vsel %vm2155, %v2255, %v2256
  %v2258 = vrot.slane %v2256, 4
  %v2259 = vrot.slane %v69, 5
  %v2260 = vsel %vm2155, %v2258, %v2259
  %v2261 = vrot.slane %v70, 5
  %v2262 = vrot.slane %v2261, 4
  %v2263 = vrot.slane %v71, 5
  %v2264 = vsel %vm2155, %v2262, %v2263
  %v2265 = vrot.slane %v2263, 4
  %v2266 = vrot.slane %v72, 5
  %v2267 = vsel %vm2155, %v2265, %v2266
  %v2268 = vrot.slane %v73, 5
  %v2269 = vrot.slane %v2268, 4
  %v2270 = vrot.slane %v74, 5
  %v2271 = vsel %vm2155, %v2269, %v2270
  %v2272 = vrot.slane %v2270, 4
  %v2273 = vrot.slane %v75, 5
  %v2274 = vsel %vm2155, %v2272, %v2273
  %v2275 = vrot.slane %v76, 5
  %v2276 = vrot.slane %v2275, 4
  %v2277 = vrot.slane %v77, 5
  %v2278 = vsel %vm2155, %v2276, %v2277
  %v2279 = vrot.slane %v2277, 4
  %v2280 = vrot.slane %v78, 5
  %v2281 = vsel %vm2155, %v2279, %v2280
  %v2282 = vrot.slane %v79, 5
  %v2283 = vrot.slane %v2282, 4
  %v2284 = vrot.slane %v80, 5
  %v2285 = vsel %vm2155, %v2283, %v2284
  %v2286 = vrot.slane %v2284, 4
  %v2287 = vrot.slane %v81, 5
  %v2288 = vsel %vm2155, %v2286, %v2287
  %v2289 = vrot.slane %v82, 5
  %v2290 = vrot.slane %v2289, 4
  %v2291 = vrot.slane %v83, 5
  %v2292 = vsel %vm2155, %v2290, %v2291
  %v2293 = vrot.slane %v2291, 4
  %v2294 = vrot.slane %v84, 5
  %v2295 = vsel %vm2155, %v2293, %v2294
  %v2296 = vrot.slane %v85, 5
  %v2297 = vrot.slane %v2296, 4
  %v2298 = vrot.slane %v86, 5
  %v2299 = vsel %vm2155, %v2297, %v2298
  %v2300 = vrot.slane %v2298, 4
  %v2301 = vrot.slane %v87, 5
  %v2302 = vsel %vm2155, %v2300, %v2301
  %v2303 = vrot.slane %v88, 5
  %v2304 = vrot.slane %v2303, 4
  %v2305 = vrot.slane %v89, 5
  %v2306 = vsel %vm2155, %v2304, %v2305
  %v2307 = vrot.slane %v2305, 4
  %v2308 = vrot.slane %v90, 5
  %v2309 = vsel %vm2155, %v2307, %v2308
  %v2310 = vrot.slane %v91, 5
  %v2311 = vrot.slane %v2310, 4
  %v2312 = vrot.slane %v92, 5
  %v2313 = vsel %vm2155, %v2311, %v2312
  %v2314 = vrot.slane %v2312, 4
  %v2315 = vrot.slane %v93, 5
  %v2316 = vsel %vm2155, %v2314, %v2315
  %v2317 = vrot.slane %v94, 5
  %v2318 = vrot.slane %v2317, 4
  %v2319 = vrot.slane %v95, 5
  %v2320 = vsel %vm2155, %v2318, %v2319
  %v2321 = vrot.slane %v2319, 4
  %v2322 = vrot.slane %v96, 5
  %v2323 = vsel %vm2155, %v2321, %v2322
  %v2324 = vrot.slane %v97, 5
  %v2325 = vrot.slane %v2324, 4
  %v2326 = vrot.slane %v98, 5
  %v2327 = vsel %vm2155, %v2325, %v2326
  %v2328 = vrot.slane %v2326, 4
  %v2329 = vrot.slane %v99, 5
  %v2330 = vsel %vm2155, %v2328, %v2329
  %v2331 = vrot.slane %v100, 5
  %v2332 = vrot.slane %v2331, 4
  %v2333 = vrot.slane %v101, 5
  %v2334 = vsel %vm2155, %v2332, %v2333
  %v2335 = vrot.slane %v2333, 4
  %v2336 = vrot.slane %v102, 5
  %v2337 = vsel %vm2155, %v2335, %v2336
  %v2338 = vrot.slane %v103, 5
  %v2339 = vrot.slane %v2338, 4
  %v2340 = vrot.slane %v104, 5
  %v2341 = vsel %vm2155, %v2339, %v2340
  %v2342 = vrot.slane %v2340, 4
  %v2343 = vrot.slane %v105, 5
  %v2344 = vsel %vm2155, %v2342, %v2343
  %v2345 = vrot.slane %v106, 5
  %v2346 = vrot.slane %v2345, 4
  %v2347 = vrot.slane %v107, 5
  %v2348 = vsel %vm2155, %v2346, %v2347
  %v2349 = vrot.slane %v2347, 4
  %v2350 = vrot.slane %v108, 5
  %v2351 = vsel %vm2155, %v2349, %v2350
  %v2352 = vrot.slane %v109, 5
  %v2353 = vrot.slane %v2352, 4
  %v2354 = vrot.slane %v110, 5
  %v2355 = vsel %vm2155, %v2353, %v2354
  %v2356 = vrot.slane %v2354, 4
  %v2357 = vrot.slane %v111, 5
  %v2358 = vsel %vm2155, %v2356, %v2357
  %v2359 = vrot.slane %v112, 5
  %v2360 = vrot.slane %v2359, 4
  %v2361 = vrot.slane %v113, 5
  %v2362 = vsel %vm2155, %v2360, %v2361
  %v2363 = vrot.slane %v2361, 4
  %v2364 = vrot.slane %v114, 5
  %v2365 = vsel %vm2155, %v2363, %v2364
  %v2366 = vrot.slane %v115, 5
  %v2367 = vrot.slane %v2366, 4
  %v2368 = vrot.slane %v116, 5
  %v2369 = vsel %vm2155, %v2367, %v2368
  %v2370 = vrot.slane %v2368, 4
  %v2371 = vrot.slane %v117, 5
  %v2372 = vsel %vm2155, %v2370, %v2371
  %v2373 = vrot.slane %v118, 5
  %v2374 = vrot.slane %v2373, 4
  %v2375 = vrot.slane %v119, 5
  %v2376 = vsel %vm2155, %v2374, %v2375
  %v2377 = vrot.slane %v2375, 4
  %v2378 = vrot.slane %v120, 5
  %v2379 = vsel %vm2155, %v2377, %v2378
  %s2380 = scalar_lea.vmem %s3, 4
  %v2381 = vld [vmem:[%s2380] sm:$0x3]
  %v2382 = vunpack.c.l.b16 %v2159
  %v2383 = vunpack.c.l.b16 %v2162
  %v2384 = vunpack.c.l.b16 %v2166
  %v2385 = vunpack.c.l.b16 %v2169
  %v2386 = vunpack.c.l.b16 %v2173
  %v2387 = vunpack.c.l.b16 %v2176
  %v2388 = vunpack.c.l.b16 %v2180
  %v2389 = vunpack.c.l.b16 %v2183
  %v2390 = vunpack.c.l.b16 %v2187
  %v2391 = vunpack.c.l.b16 %v2190
  %v2392 = vunpack.c.l.b16 %v2194
  %v2393 = vunpack.c.l.b16 %v2197
  %v2394 = vunpack.c.l.b16 %v2201
  %v2395 = vunpack.c.l.b16 %v2204
  %v2396 = vunpack.c.l.b16 %v2208
  %v2397 = vunpack.c.l.b16 %v2211
  %v2398 = vunpack.c.l.b16 %v2215
  %v2399 = vunpack.c.l.b16 %v2218
  %v2400 = vunpack.c.l.b16 %v2222
  %v2401 = vunpack.c.l.b16 %v2225
  %v2402 = vunpack.c.l.b16 %v2229
  %v2403 = vunpack.c.l.b16 %v2232
  %v2404 = vunpack.c.l.b16 %v2236
  %v2405 = vunpack.c.l.b16 %v2239
  %v2406 = vunpack.c.l.b16 %v2243
  %v2407 = vunpack.c.l.b16 %v2246
  %v2408 = vunpack.c.l.b16 %v2250
  %v2409 = vunpack.c.l.b16 %v2253
  %v2410 = vunpack.c.l.b16 %v2257
  %v2411 = vunpack.c.l.b16 %v2260
  %v2412 = vunpack.c.l.b16 %v2264
  %v2413 = vunpack.c.l.b16 %v2267
  %v2414 = vunpack.c.l.b16 %v2271
  %v2415 = vunpack.c.l.b16 %v2274
  %v2416 = vunpack.c.l.b16 %v2278
  %v2417 = vunpack.c.l.b16 %v2281
  %v2418 = vunpack.c.l.b16 %v2285
  %v2419 = vunpack.c.l.b16 %v2288
  %v2420 = vunpack.c.l.b16 %v2292
  %v2421 = vunpack.c.l.b16 %v2295
  %v2422 = vunpack.c.l.b16 %v2299
  %v2423 = vunpack.c.l.b16 %v2302
  %v2424 = vunpack.c.l.b16 %v2306
  %v2425 = vunpack.c.l.b16 %v2309
  %v2426 = vunpack.c.l.b16 %v2313
  %v2427 = vunpack.c.l.b16 %v2316
  %v2428 = vunpack.c.l.b16 %v2320
  %v2429 = vunpack.c.l.b16 %v2323
  %v2430 = vunpack.c.l.b16 %v2327
  %v2431 = vunpack.c.l.b16 %v2330
  %v2432 = vunpack.c.l.b16 %v2334
  %v2433 = vunpack.c.l.b16 %v2337
  %v2434 = vunpack.c.l.b16 %v2341
  %v2435 = vunpack.c.l.b16 %v2344
  %v2436 = vunpack.c.l.b16 %v2348
  %v2437 = vunpack.c.l.b16 %v2351
  %v2438 = vunpack.c.l.b16 %v2355
  %v2439 = vunpack.c.l.b16 %v2358
  %v2440 = vunpack.c.l.b16 %v2362
  %v2441 = vunpack.c.l.b16 %v2365
  %v2442 = vunpack.c.l.b16 %v2369
  %v2443 = vunpack.c.l.b16 %v2372
  %v2444 = vunpack.c.l.b16 %v2376
  %v2445 = vunpack.c.l.b16 %v2379
  %v2446 = vpack.c.b16 %v2383, %v2382
  %v2447 = vpack.c.b16 %v2385, %v2384
  %v2448 = vpack.c.b16 %v2387, %v2386
  %v2449 = vpack.c.b16 %v2389, %v2388
  %v2450 = vpack.c.b16 %v2391, %v2390
  %v2451 = vpack.c.b16 %v2393, %v2392
  %v2452 = vpack.c.b16 %v2395, %v2394
  %v2453 = vpack.c.b16 %v2397, %v2396
  %v2454 = vpack.c.b16 %v2399, %v2398
  %v2455 = vpack.c.b16 %v2401, %v2400
  %v2456 = vpack.c.b16 %v2403, %v2402
  %v2457 = vpack.c.b16 %v2405, %v2404
  %v2458 = vpack.c.b16 %v2407, %v2406
  %v2459 = vpack.c.b16 %v2409, %v2408
  %v2460 = vpack.c.b16 %v2411, %v2410
  %v2461 = vpack.c.b16 %v2413, %v2412
  %v2462 = vpack.c.b16 %v2415, %v2414
  %v2463 = vpack.c.b16 %v2417, %v2416
  %v2464 = vpack.c.b16 %v2419, %v2418
  %v2465 = vpack.c.b16 %v2421, %v2420
  %v2466 = vpack.c.b16 %v2423, %v2422
  %v2467 = vpack.c.b16 %v2425, %v2424
  %v2468 = vpack.c.b16 %v2427, %v2426
  %v2469 = vpack.c.b16 %v2429, %v2428
  %v2470 = vpack.c.b16 %v2431, %v2430
  %v2471 = vpack.c.b16 %v2433, %v2432
  %v2472 = vpack.c.b16 %v2435, %v2434
  %v2473 = vpack.c.b16 %v2437, %v2436
  %v2474 = vpack.c.b16 %v2439, %v2438
  %v2475 = vpack.c.b16 %v2441, %v2440
  %v2476 = vpack.c.b16 %v2443, %v2442
  %v2477 = vpack.c.b16 %v2445, %v2444
  %v2479 = vsel %vm1183, %v2446, 0
  %v2482 = vsel %vm1183, %v2447, 0
  %v2485 = vsel %vm1183, %v2448, 0
  %v2488 = vsel %vm1183, %v2449, 0
  %v2491 = vsel %vm1183, %v2450, 0
  %v2494 = vsel %vm1183, %v2451, 0
  %v2497 = vsel %vm1183, %v2452, 0
  %v2500 = vsel %vm1183, %v2453, 0
  %v2503 = vsel %vm1183, %v2454, 0
  %v2506 = vsel %vm1183, %v2455, 0
  %v2509 = vsel %vm1183, %v2456, 0
  %v2512 = vsel %vm1183, %v2457, 0
  %v2515 = vsel %vm1183, %v2458, 0
  %v2518 = vsel %vm1183, %v2459, 0
  %v2521 = vsel %vm1183, %v2460, 0
  %v2524 = vsel %vm1183, %v2461, 0
  %v2527 = vsel %vm1183, %v2462, 0
  %v2530 = vsel %vm1183, %v2463, 0
  %v2533 = vsel %vm1183, %v2464, 0
  %v2536 = vsel %vm1183, %v2465, 0
  %v2539 = vsel %vm1183, %v2466, 0
  %v2542 = vsel %vm1183, %v2467, 0
  %v2545 = vsel %vm1183, %v2468, 0
  %v2548 = vsel %vm1183, %v2469, 0
  %v2551 = vsel %vm1183, %v2470, 0
  %v2554 = vsel %vm1183, %v2471, 0
  %v2557 = vsel %vm1183, %v2472, 0
  %v2560 = vsel %vm1183, %v2473, 0
  %v2563 = vsel %vm1183, %v2474, 0
  %v2566 = vsel %vm1183, %v2475, 0
  %v2569 = vsel %vm1183, %v2476, 0
  %v2572 = vsel %vm1183, %v2477, 0
  %v2575 = vsel %vm1280, %v2381, 0
  %2577 = vmatprep.subr.bf16.mxu0 0
  %2578 = vmatpush1.bf16.msra.mxu0 %v2575
  %2579 = vmatprep.subr.bf16.mxu0 0
  %2580 = vmatpush1.bf16.msra.mxu0 0
  %2581 = vmatprep.subr.bf16.mxu0 0
  %2582 = vmatpush1.bf16.msra.mxu0 0
  %2583 = vmatprep.subr.bf16.mxu0 0
  %2584 = vmatpush1.bf16.msra.mxu0 0
  %2585 = vmatprep.subr.bf16.mxu0 0
  %2586 = vmatpush1.bf16.msra.mxu0 0
  %2587 = vmatprep.subr.bf16.mxu0 0
  %2588 = vmatpush1.bf16.msra.mxu0 0
  %2589 = vmatprep.subr.bf16.mxu0 0
  %2590 = vmatpush1.bf16.msra.mxu0 0
  %2591 = vmatprep.subr.bf16.mxu0 0
  %2592 = vmatpush1.bf16.msra.mxu0 0
  %2593 = vmatprep.subr.bf16.mxu0 0
  %2594 = vmatpush1.bf16.msra.mxu0 0
  %2595 = vmatprep.subr.bf16.mxu0 0
  %2596 = vmatpush1.bf16.msra.mxu0 0
  %2597 = vmatprep.subr.bf16.mxu0 0
  %2598 = vmatpush1.bf16.msra.mxu0 0
  %2599 = vmatprep.subr.bf16.mxu0 0
  %2600 = vmatpush1.bf16.msra.mxu0 0
  %2601 = vmatprep.subr.bf16.mxu0 0
  %2602 = vmatpush1.bf16.msra.mxu0 0
  %2603 = vmatprep.subr.bf16.mxu0 0
  %2604 = vmatpush1.bf16.msra.mxu0 0
  %2605 = vmatprep.subr.bf16.mxu0 0
  %2606 = vmatpush1.bf16.msra.mxu0 0
  %2607 = vmatprep.subr.bf16.mxu0 0
  %2608 = vmatpush1.bf16.msra.mxu0 0
  %2609 = vmatprep.mubr.bf16.mxu0 0
  %2610 = vmatmul.mubr.bf16.gmra.mrb[0].mxu0 %v2479
  %v2611 = vpop.f32.mrb[0].mxu0
  %v2612 = vadd.f32 0.0, %v2611
  %v2613 = vpop.f32.mrb[0].mxu0
  %v2614 = vpop.f32.mrb[0].mxu0
  %v2615 = vadd.f32 0.0, %v2614
  %v2616 = vpop.f32.mrb[0].mxu0
  %2617 = vmatprep.mubr.bf16.mxu0 0
  %2618 = vmatmul.mubr.bf16.gmra.mrb[0].mxu0 %v2482
  %v2619 = vpop.f32.mrb[0].mxu0
  %v2620 = vadd.f32 0.0, %v2619
  %v2621 = vpop.f32.mrb[0].mxu0
  %v2622 = vpop.f32.mrb[0].mxu0
  %v2623 = vadd.f32 0.0, %v2622
  %v2624 = vpop.f32.mrb[0].mxu0
  %2625 = vmatprep.mubr.bf16.mxu0 0
  %2626 = vmatmul.mubr.bf16.gmra.mrb[0].mxu0 %v2485
  %v2627 = vpop.f32.mrb[0].mxu0
  %v2628 = vadd.f32 0.0, %v2627
  %v2629 = vpop.f32.mrb[0].mxu0
  %v2630 = vpop.f32.mrb[0].mxu0
  %v2631 = vadd.f32 0.0, %v2630
  %v2632 = vpop.f32.mrb[0].mxu0
  %2633 = vmatprep.mubr.bf16.mxu0 0
  %2634 = vmatmul.mubr.bf16.gmra.mrb[0].mxu0 %v2488
  %v2635 = vpop.f32.mrb[0].mxu0
  %v2636 = vadd.f32 0.0, %v2635
  %v2637 = vpop.f32.mrb[0].mxu0
  %v2638 = vpop.f32.mrb[0].mxu0
  %v2639 = vadd.f32 0.0, %v2638
  %v2640 = vpop.f32.mrb[0].mxu0
  %2641 = vmatprep.mubr.bf16.mxu0 0
  %2642 = vmatmul.mubr.bf16.gmra.mrb[0].mxu0 %v2491
  %v2643 = vpop.f32.mrb[0].mxu0
  %v2644 = vadd.f32 0.0, %v2643
  %v2645 = vpop.f32.mrb[0].mxu0
  %v2646 = vpop.f32.mrb[0].mxu0
  %v2647 = vadd.f32 0.0, %v2646
  %v2648 = vpop.f32.mrb[0].mxu0
  %2649 = vmatprep.mubr.bf16.mxu0 0
  %2650 = vmatmul.mubr.bf16.gmra.mrb[0].mxu0 %v2494
  %v2651 = vpop.f32.mrb[0].mxu0
  %v2652 = vadd.f32 0.0, %v2651
  %v2653 = vpop.f32.mrb[0].mxu0
  %v2654 = vpop.f32.mrb[0].mxu0
  %v2655 = vadd.f32 0.0, %v2654
  %v2656 = vpop.f32.mrb[0].mxu0
  %2657 = vmatprep.mubr.bf16.mxu0 0
  %2658 = vmatmul.mubr.bf16.gmra.mrb[0].mxu0 %v2497
  %v2659 = vpop.f32.mrb[0].mxu0
  %v2660 = vadd.f32 0.0, %v2659
  %v2661 = vpop.f32.mrb[0].mxu0
  %v2662 = vpop.f32.mrb[0].mxu0
  %v2663 = vadd.f32 0.0, %v2662
  %v2664 = vpop.f32.mrb[0].mxu0
  %2665 = vmatprep.mubr.bf16.mxu0 0
  %2666 = vmatmul.mubr.bf16.gmra.mrb[0].mxu0 %v2500
  %v2667 = vpop.f32.mrb[0].mxu0
  %v2668 = vadd.f32 0.0, %v2667
  %v2669 = vpop.f32.mrb[0].mxu0
  %v2670 = vpop.f32.mrb[0].mxu0
  %v2671 = vadd.f32 0.0, %v2670
  %v2672 = vpop.f32.mrb[0].mxu0
  %2673 = vmatprep.mubr.bf16.mxu0 0
  %2674 = vmatmul.mubr.bf16.gmra.mrb[0].mxu0 %v2503
  %v2675 = vpop.f32.mrb[0].mxu0
  %v2676 = vadd.f32 0.0, %v2675
  %v2677 = vpop.f32.mrb[0].mxu0
  %v2678 = vpop.f32.mrb[0].mxu0
  %v2679 = vadd.f32 0.0, %v2678
  %v2680 = vpop.f32.mrb[0].mxu0
  %2681 = vmatprep.mubr.bf16.mxu0 0
  %2682 = vmatmul.mubr.bf16.gmra.mrb[0].mxu0 %v2506
  %v2683 = vpop.f32.mrb[0].mxu0
  %v2684 = vadd.f32 0.0, %v2683
  %v2685 = vpop.f32.mrb[0].mxu0
  %v2686 = vpop.f32.mrb[0].mxu0
  %v2687 = vadd.f32 0.0, %v2686
  %v2688 = vpop.f32.mrb[0].mxu0
  %2689 = vmatprep.mubr.bf16.mxu0 0
  %2690 = vmatmul.mubr.bf16.gmra.mrb[0].mxu0 %v2509
  %v2691 = vpop.f32.mrb[0].mxu0
  %v2692 = vadd.f32 0.0, %v2691
  %v2693 = vpop.f32.mrb[0].mxu0
  %v2694 = vpop.f32.mrb[0].mxu0
  %v2695 = vadd.f32 0.0, %v2694
  %v2696 = vpop.f32.mrb[0].mxu0
  %2697 = vmatprep.mubr.bf16.mxu0 0
  %2698 = vmatmul.mubr.bf16.gmra.mrb[0].mxu0 %v2512
  %v2699 = vpop.f32.mrb[0].mxu0
  %v2700 = vadd.f32 0.0, %v2699
  %v2701 = vpop.f32.mrb[0].mxu0
  %v2702 = vpop.f32.mrb[0].mxu0
  %v2703 = vadd.f32 0.0, %v2702
  %v2704 = vpop.f32.mrb[0].mxu0
  %2705 = vmatprep.mubr.bf16.mxu0 0
  %2706 = vmatmul.mubr.bf16.gmra.mrb[0].mxu0 %v2515
  %v2707 = vpop.f32.mrb[0].mxu0
  %v2708 = vadd.f32 0.0, %v2707
  %v2709 = vpop.f32.mrb[0].mxu0
  %v2710 = vpop.f32.mrb[0].mxu0
  %v2711 = vadd.f32 0.0, %v2710
  %v2712 = vpop.f32.mrb[0].mxu0
  %2713 = vmatprep.mubr.bf16.mxu0 0
  %2714 = vmatmul.mubr.bf16.gmra.mrb[0].mxu0 %v2518
  %v2715 = vpop.f32.mrb[0].mxu0
  %v2716 = vadd.f32 0.0, %v2715
  %v2717 = vpop.f32.mrb[0].mxu0
  %v2718 = vpop.f32.mrb[0].mxu0
  %v2719 = vadd.f32 0.0, %v2718
  %v2720 = vpop.f32.mrb[0].mxu0
  %2721 = vmatprep.mubr.bf16.mxu0 0
  %2722 = vmatmul.mubr.bf16.gmra.mrb[0].mxu0 %v2521
  %v2723 = vpop.f32.mrb[0].mxu0
  %v2724 = vadd.f32 0.0, %v2723
  %v2725 = vpop.f32.mrb[0].mxu0
  %v2726 = vpop.f32.mrb[0].mxu0
  %v2727 = vadd.f32 0.0, %v2726
  %v2728 = vpop.f32.mrb[0].mxu0
  %2729 = vmatprep.mubr.bf16.mxu0 0
  %2730 = vmatmul.mubr.bf16.gmra.mrb[0].mxu0 %v2524
  %v2731 = vpop.f32.mrb[0].mxu0
  %v2732 = vadd.f32 0.0, %v2731
  %v2733 = vpop.f32.mrb[0].mxu0
  %v2734 = vpop.f32.mrb[0].mxu0
  %v2735 = vadd.f32 0.0, %v2734
  %v2736 = vpop.f32.mrb[0].mxu0
  %2737 = vmatprep.mubr.bf16.mxu0 0
  %2738 = vmatmul.mubr.bf16.gmra.mrb[0].mxu0 %v2527
  %v2739 = vpop.f32.mrb[0].mxu0
  %v2740 = vadd.f32 0.0, %v2739
  %v2741 = vpop.f32.mrb[0].mxu0
  %v2742 = vpop.f32.mrb[0].mxu0
  %v2743 = vadd.f32 0.0, %v2742
  %v2744 = vpop.f32.mrb[0].mxu0
  %2745 = vmatprep.mubr.bf16.mxu0 0
  %2746 = vmatmul.mubr.bf16.gmra.mrb[0].mxu0 %v2530
  %v2747 = vpop.f32.mrb[0].mxu0
  %v2748 = vadd.f32 0.0, %v2747
  %v2749 = vpop.f32.mrb[0].mxu0
  %v2750 = vpop.f32.mrb[0].mxu0
  %v2751 = vadd.f32 0.0, %v2750
  %v2752 = vpop.f32.mrb[0].mxu0
  %2753 = vmatprep.mubr.bf16.mxu0 0
  %2754 = vmatmul.mubr.bf16.gmra.mrb[0].mxu0 %v2533
  %v2755 = vpop.f32.mrb[0].mxu0
  %v2756 = vadd.f32 0.0, %v2755
  %v2757 = vpop.f32.mrb[0].mxu0
  %v2758 = vpop.f32.mrb[0].mxu0
  %v2759 = vadd.f32 0.0, %v2758
  %v2760 = vpop.f32.mrb[0].mxu0
  %2761 = vmatprep.mubr.bf16.mxu0 0
  %2762 = vmatmul.mubr.bf16.gmra.mrb[0].mxu0 %v2536
  %v2763 = vpop.f32.mrb[0].mxu0
  %v2764 = vadd.f32 0.0, %v2763
  %v2765 = vpop.f32.mrb[0].mxu0
  %v2766 = vpop.f32.mrb[0].mxu0
  %v2767 = vadd.f32 0.0, %v2766
  %v2768 = vpop.f32.mrb[0].mxu0
  %2769 = vmatprep.mubr.bf16.mxu0 0
  %2770 = vmatmul.mubr.bf16.gmra.mrb[0].mxu0 %v2539
  %v2771 = vpop.f32.mrb[0].mxu0
  %v2772 = vadd.f32 0.0, %v2771
  %v2773 = vpop.f32.mrb[0].mxu0
  %v2774 = vpop.f32.mrb[0].mxu0
  %v2775 = vadd.f32 0.0, %v2774
  %v2776 = vpop.f32.mrb[0].mxu0
  %2777 = vmatprep.mubr.bf16.mxu0 0
  %2778 = vmatmul.mubr.bf16.gmra.mrb[0].mxu0 %v2542
  %v2779 = vpop.f32.mrb[0].mxu0
  %v2780 = vadd.f32 0.0, %v2779
  %v2781 = vpop.f32.mrb[0].mxu0
  %v2782 = vpop.f32.mrb[0].mxu0
  %v2783 = vadd.f32 0.0, %v2782
  %v2784 = vpop.f32.mrb[0].mxu0
  %2785 = vmatprep.mubr.bf16.mxu0 0
  %2786 = vmatmul.mubr.bf16.gmra.mrb[0].mxu0 %v2545
  %v2787 = vpop.f32.mrb[0].mxu0
  %v2788 = vadd.f32 0.0, %v2787
  %v2789 = vpop.f32.mrb[0].mxu0
  %v2790 = vpop.f32.mrb[0].mxu0
  %v2791 = vadd.f32 0.0, %v2790
  %v2792 = vpop.f32.mrb[0].mxu0
  %2793 = vmatprep.mubr.bf16.mxu0 0
  %2794 = vmatmul.mubr.bf16.gmra.mrb[0].mxu0 %v2548
  %v2795 = vpop.f32.mrb[0].mxu0
  %v2796 = vadd.f32 0.0, %v2795
  %v2797 = vpop.f32.mrb[0].mxu0
  %v2798 = vpop.f32.mrb[0].mxu0
  %v2799 = vadd.f32 0.0, %v2798
  %v2800 = vpop.f32.mrb[0].mxu0
  %2801 = vmatprep.mubr.bf16.mxu0 0
  %2802 = vmatmul.mubr.bf16.gmra.mrb[0].mxu0 %v2551
  %v2803 = vpop.f32.mrb[0].mxu0
  %v2804 = vadd.f32 0.0, %v2803
  %v2805 = vpop.f32.mrb[0].mxu0
  %v2806 = vpop.f32.mrb[0].mxu0
  %v2807 = vadd.f32 0.0, %v2806
  %v2808 = vpop.f32.mrb[0].mxu0
  %2809 = vmatprep.mubr.bf16.mxu0 0
  %2810 = vmatmul.mubr.bf16.gmra.mrb[0].mxu0 %v2554
  %v2811 = vpop.f32.mrb[0].mxu0
  %v2812 = vadd.f32 0.0, %v2811
  %v2813 = vpop.f32.mrb[0].mxu0
  %v2814 = vpop.f32.mrb[0].mxu0
  %v2815 = vadd.f32 0.0, %v2814
  %v2816 = vpop.f32.mrb[0].mxu0
  %2817 = vmatprep.mubr.bf16.mxu0 0
  %2818 = vmatmul.mubr.bf16.gmra.mrb[0].mxu0 %v2557
  %v2819 = vpop.f32.mrb[0].mxu0
  %v2820 = vadd.f32 0.0, %v2819
  %v2821 = vpop.f32.mrb[0].mxu0
  %v2822 = vpop.f32.mrb[0].mxu0
  %v2823 = vadd.f32 0.0, %v2822
  %v2824 = vpop.f32.mrb[0].mxu0
  %2825 = vmatprep.mubr.bf16.mxu0 0
  %2826 = vmatmul.mubr.bf16.gmra.mrb[0].mxu0 %v2560
  %v2827 = vpop.f32.mrb[0].mxu0
  %v2828 = vadd.f32 0.0, %v2827
  %v2829 = vpop.f32.mrb[0].mxu0
  %v2830 = vpop.f32.mrb[0].mxu0
  %v2831 = vadd.f32 0.0, %v2830
  %v2832 = vpop.f32.mrb[0].mxu0
  %2833 = vmatprep.mubr.bf16.mxu0 0
  %2834 = vmatmul.mubr.bf16.gmra.mrb[0].mxu0 %v2563
  %v2835 = vpop.f32.mrb[0].mxu0
  %v2836 = vadd.f32 0.0, %v2835
  %v2837 = vpop.f32.mrb[0].mxu0
  %v2838 = vpop.f32.mrb[0].mxu0
  %v2839 = vadd.f32 0.0, %v2838
  %v2840 = vpop.f32.mrb[0].mxu0
  %2841 = vmatprep.mubr.bf16.mxu0 0
  %2842 = vmatmul.mubr.bf16.gmra.mrb[0].mxu0 %v2566
  %v2843 = vpop.f32.mrb[0].mxu0
  %v2844 = vadd.f32 0.0, %v2843
  %v2845 = vpop.f32.mrb[0].mxu0
  %v2846 = vpop.f32.mrb[0].mxu0
  %v2847 = vadd.f32 0.0, %v2846
  %v2848 = vpop.f32.mrb[0].mxu0
  %2849 = vmatprep.mubr.bf16.mxu0 0
  %2850 = vmatmul.mubr.bf16.gmra.mrb[0].mxu0 %v2569
  %v2851 = vpop.f32.mrb[0].mxu0
  %v2852 = vadd.f32 0.0, %v2851
  %v2853 = vpop.f32.mrb[0].mxu0
  %v2854 = vpop.f32.mrb[0].mxu0
  %v2855 = vadd.f32 0.0, %v2854
  %v2856 = vpop.f32.mrb[0].mxu0
  %2857 = vmatprep.mubr.bf16.mxu0 0
  %2858 = vmatmul.mubr.bf16.gmra.mrb[0].mxu0 %v2572
  %v2859 = vpop.f32.mrb[0].mxu0
  %v2860 = vadd.f32 0.0, %v2859
  %v2861 = vpop.f32.mrb[0].mxu0
  %v2862 = vpop.f32.mrb[0].mxu0
  %v2863 = vadd.f32 0.0, %v2862
  %v2864 = vpop.f32.mrb[0].mxu0
  %2865 = vdwg.mxu0
  %v2866 = vadd.f32 %v1867, %v2612
  %v2867 = vadd.f32 %v1870, %v2615
  %v2868 = vadd.f32 %v1875, %v2620
  %v2869 = vadd.f32 %v1878, %v2623
  %v2870 = vadd.f32 %v1883, %v2628
  %v2871 = vadd.f32 %v1886, %v2631
  %v2872 = vadd.f32 %v1891, %v2636
  %v2873 = vadd.f32 %v1894, %v2639
  %v2874 = vadd.f32 %v1899, %v2644
  %v2875 = vadd.f32 %v1902, %v2647
  %v2876 = vadd.f32 %v1907, %v2652
  %v2877 = vadd.f32 %v1910, %v2655
  %v2878 = vadd.f32 %v1915, %v2660
  %v2879 = vadd.f32 %v1918, %v2663
  %v2880 = vadd.f32 %v1923, %v2668
  %v2881 = vadd.f32 %v1926, %v2671
  %v2882 = vadd.f32 %v1931, %v2676
  %v2883 = vadd.f32 %v1934, %v2679
  %v2884 = vadd.f32 %v1939, %v2684
  %v2885 = vadd.f32 %v1942, %v2687
  %v2886 = vadd.f32 %v1947, %v2692
  %v2887 = vadd.f32 %v1950, %v2695
  %v2888 = vadd.f32 %v1955, %v2700
  %v2889 = vadd.f32 %v1958, %v2703
  %v2890 = vadd.f32 %v1963, %v2708
  %v2891 = vadd.f32 %v1966, %v2711
  %v2892 = vadd.f32 %v1971, %v2716
  %v2893 = vadd.f32 %v1974, %v2719
  %v2894 = vadd.f32 %v1979, %v2724
  %v2895 = vadd.f32 %v1982, %v2727
  %v2896 = vadd.f32 %v1987, %v2732
  %v2897 = vadd.f32 %v1990, %v2735
  %v2898 = vadd.f32 %v1995, %v2740
  %v2899 = vadd.f32 %v1998, %v2743
  %v2900 = vadd.f32 %v2003, %v2748
  %v2901 = vadd.f32 %v2006, %v2751
  %v2902 = vadd.f32 %v2011, %v2756
  %v2903 = vadd.f32 %v2014, %v2759
  %v2904 = vadd.f32 %v2019, %v2764
  %v2905 = vadd.f32 %v2022, %v2767
  %v2906 = vadd.f32 %v2027, %v2772
  %v2907 = vadd.f32 %v2030, %v2775
  %v2908 = vadd.f32 %v2035, %v2780
  %v2909 = vadd.f32 %v2038, %v2783
  %v2910 = vadd.f32 %v2043, %v2788
  %v2911 = vadd.f32 %v2046, %v2791
  %v2912 = vadd.f32 %v2051, %v2796
  %v2913 = vadd.f32 %v2054, %v2799
  %v2914 = vadd.f32 %v2059, %v2804
  %v2915 = vadd.f32 %v2062, %v2807
  %v2916 = vadd.f32 %v2067, %v2812
  %v2917 = vadd.f32 %v2070, %v2815
  %v2918 = vadd.f32 %v2075, %v2820
  %v2919 = vadd.f32 %v2078, %v2823
  %v2920 = vadd.f32 %v2083, %v2828
  %v2921 = vadd.f32 %v2086, %v2831
  %v2922 = vadd.f32 %v2091, %v2836
  %v2923 = vadd.f32 %v2094, %v2839
  %v2924 = vadd.f32 %v2099, %v2844
  %v2925 = vadd.f32 %v2102, %v2847
  %v2926 = vadd.f32 %v2107, %v2852
  %v2927 = vadd.f32 %v2110, %v2855
  %v2928 = vadd.f32 %v2115, %v2860
  %v2929 = vadd.f32 %v2118, %v2863
  %s2930 = scalar_lea.vmem %s3, 6
  %v2931 = vld [vmem:[%s2930] sm:$0x3]
  %v2996 = vunpack.c.l.b16 %v121
  %v2997 = vunpack.c.l.b16 %v122
  %v2998 = vunpack.c.l.b16 %v124
  %v2999 = vunpack.c.l.b16 %v125
  %v3000 = vunpack.c.l.b16 %v127
  %v3001 = vunpack.c.l.b16 %v128
  %v3002 = vunpack.c.l.b16 %v130
  %v3003 = vunpack.c.l.b16 %v131
  %v3004 = vunpack.c.l.b16 %v133
  %v3005 = vunpack.c.l.b16 %v134
  %v3006 = vunpack.c.l.b16 %v136
  %v3007 = vunpack.c.l.b16 %v137
  %v3008 = vunpack.c.l.b16 %v139
  %v3009 = vunpack.c.l.b16 %v140
  %v3010 = vunpack.c.l.b16 %v142
  %v3011 = vunpack.c.l.b16 %v143
  %v3012 = vunpack.c.l.b16 %v145
  %v3013 = vunpack.c.l.b16 %v146
  %v3014 = vunpack.c.l.b16 %v148
  %v3015 = vunpack.c.l.b16 %v149
  %v3016 = vunpack.c.l.b16 %v151
  %v3017 = vunpack.c.l.b16 %v152
  %v3018 = vunpack.c.l.b16 %v154
  %v3019 = vunpack.c.l.b16 %v155
  %v3020 = vunpack.c.l.b16 %v157
  %v3021 = vunpack.c.l.b16 %v158
  %v3022 = vunpack.c.l.b16 %v160
  %v3023 = vunpack.c.l.b16 %v161
  %v3024 = vunpack.c.l.b16 %v163
  %v3025 = vunpack.c.l.b16 %v164
  %v3026 = vunpack.c.l.b16 %v166
  %v3027 = vunpack.c.l.b16 %v167
  %v3028 = vunpack.c.l.b16 %v169
  %v3029 = vunpack.c.l.b16 %v170
  %v3030 = vunpack.c.l.b16 %v172
  %v3031 = vunpack.c.l.b16 %v173
  %v3032 = vunpack.c.l.b16 %v175
  %v3033 = vunpack.c.l.b16 %v176
  %v3034 = vunpack.c.l.b16 %v178
  %v3035 = vunpack.c.l.b16 %v179
  %v3036 = vunpack.c.l.b16 %v181
  %v3037 = vunpack.c.l.b16 %v182
  %v3038 = vunpack.c.l.b16 %v184
  %v3039 = vunpack.c.l.b16 %v185
  %v3040 = vunpack.c.l.b16 %v187
  %v3041 = vunpack.c.l.b16 %v188
  %v3042 = vunpack.c.l.b16 %v190
  %v3043 = vunpack.c.l.b16 %v191
  %v3044 = vunpack.c.l.b16 %v193
  %v3045 = vunpack.c.l.b16 %v194
  %v3046 = vunpack.c.l.b16 %v196
  %v3047 = vunpack.c.l.b16 %v197
  %v3048 = vunpack.c.l.b16 %v199
  %v3049 = vunpack.c.l.b16 %v200
  %v3050 = vunpack.c.l.b16 %v202
  %v3051 = vunpack.c.l.b16 %v203
  %v3052 = vunpack.c.l.b16 %v205
  %v3053 = vunpack.c.l.b16 %v206
  %v3054 = vunpack.c.l.b16 %v208
  %v3055 = vunpack.c.l.b16 %v209
  %v3056 = vunpack.c.l.b16 %v211
  %v3057 = vunpack.c.l.b16 %v212
  %v3058 = vunpack.c.l.b16 %v214
  %v3059 = vunpack.c.l.b16 %v215
  %v3060 = vpack.c.b16 %v2997, %v2996
  %v3061 = vpack.c.b16 %v2999, %v2998
  %v3062 = vpack.c.b16 %v3001, %v3000
  %v3063 = vpack.c.b16 %v3003, %v3002
  %v3064 = vpack.c.b16 %v3005, %v3004
  %v3065 = vpack.c.b16 %v3007, %v3006
  %v3066 = vpack.c.b16 %v3009, %v3008
  %v3067 = vpack.c.b16 %v3011, %v3010
  %v3068 = vpack.c.b16 %v3013, %v3012
  %v3069 = vpack.c.b16 %v3015, %v3014
  %v3070 = vpack.c.b16 %v3017, %v3016
  %v3071 = vpack.c.b16 %v3019, %v3018
  %v3072 = vpack.c.b16 %v3021, %v3020
  %v3073 = vpack.c.b16 %v3023, %v3022
  %v3074 = vpack.c.b16 %v3025, %v3024
  %v3075 = vpack.c.b16 %v3027, %v3026
  %v3076 = vpack.c.b16 %v3029, %v3028
  %v3077 = vpack.c.b16 %v3031, %v3030
  %v3078 = vpack.c.b16 %v3033, %v3032
  %v3079 = vpack.c.b16 %v3035, %v3034
  %v3080 = vpack.c.b16 %v3037, %v3036
  %v3081 = vpack.c.b16 %v3039, %v3038
  %v3082 = vpack.c.b16 %v3041, %v3040
  %v3083 = vpack.c.b16 %v3043, %v3042
  %v3084 = vpack.c.b16 %v3045, %v3044
  %v3085 = vpack.c.b16 %v3047, %v3046
  %v3086 = vpack.c.b16 %v3049, %v3048
  %v3087 = vpack.c.b16 %v3051, %v3050
  %v3088 = vpack.c.b16 %v3053, %v3052
  %v3089 = vpack.c.b16 %v3055, %v3054
  %v3090 = vpack.c.b16 %v3057, %v3056
  %v3091 = vpack.c.b16 %v3059, %v3058
  %v3093 = vsel %vm1183, %v3060, 0
  %v3096 = vsel %vm1183, %v3061, 0
  %v3099 = vsel %vm1183, %v3062, 0
  %v3102 = vsel %vm1183, %v3063, 0
  %v3105 = vsel %vm1183, %v3064, 0
  %v3108 = vsel %vm1183, %v3065, 0
  %v3111 = vsel %vm1183, %v3066, 0
  %v3114 = vsel %vm1183, %v3067, 0
  %v3117 = vsel %vm1183, %v3068, 0
  %v3120 = vsel %vm1183, %v3069, 0
  %v3123 = vsel %vm1183, %v3070, 0
  %v3126 = vsel %vm1183, %v3071, 0
  %v3129 = vsel %vm1183, %v3072, 0
  %v3132 = vsel %vm1183, %v3073, 0
  %v3135 = vsel %vm1183, %v3074, 0
  %v3138 = vsel %vm1183, %v3075, 0
  %v3141 = vsel %vm1183, %v3076, 0
  %v3144 = vsel %vm1183, %v3077, 0
  %v3147 = vsel %vm1183, %v3078, 0
  %v3150 = vsel %vm1183, %v3079, 0
  %v3153 = vsel %vm1183, %v3080, 0
  %v3156 = vsel %vm1183, %v3081, 0
  %v3159 = vsel %vm1183, %v3082, 0
  %v3162 = vsel %vm1183, %v3083, 0
  %v3165 = vsel %vm1183, %v3084, 0
  %v3168 = vsel %vm1183, %v3085, 0
  %v3171 = vsel %vm1183, %v3086, 0
  %v3174 = vsel %vm1183, %v3087, 0
  %v3177 = vsel %vm1183, %v3088, 0
  %v3180 = vsel %vm1183, %v3089, 0
  %v3183 = vsel %vm1183, %v3090, 0
  %v3186 = vsel %vm1183, %v3091, 0
  %v3189 = vsel %vm1280, %v2931, 0
  %3191 = vmatprep.subr.bf16.mxu0 0
  %3192 = vmatpush1.bf16.msra.mxu0 %v3189
  %3193 = vmatprep.subr.bf16.mxu0 0
  %3194 = vmatpush1.bf16.msra.mxu0 0
  %3195 = vmatprep.subr.bf16.mxu0 0
  %3196 = vmatpush1.bf16.msra.mxu0 0
  %3197 = vmatprep.subr.bf16.mxu0 0
  %3198 = vmatpush1.bf16.msra.mxu0 0
  %3199 = vmatprep.subr.bf16.mxu0 0
  %3200 = vmatpush1.bf16.msra.mxu0 0
  %3201 = vmatprep.subr.bf16.mxu0 0
  %3202 = vmatpush1.bf16.msra.mxu0 0
  %3203 = vmatprep.subr.bf16.mxu0 0
  %3204 = vmatpush1.bf16.msra.mxu0 0
  %3205 = vmatprep.subr.bf16.mxu0 0
  %3206 = vmatpush1.bf16.msra.mxu0 0
  %3207 = vmatprep.subr.bf16.mxu0 0
  %3208 = vmatpush1.bf16.msra.mxu0 0
  %3209 = vmatprep.subr.bf16.mxu0 0
  %3210 = vmatpush1.bf16.msra.mxu0 0
  %3211 = vmatprep.subr.bf16.mxu0 0
  %3212 = vmatpush1.bf16.msra.mxu0 0
  %3213 = vmatprep.subr.bf16.mxu0 0
  %3214 = vmatpush1.bf16.msra.mxu0 0
  %3215 = vmatprep.subr.bf16.mxu0 0
  %3216 = vmatpush1.bf16.msra.mxu0 0
  %3217 = vmatprep.subr.bf16.mxu0 0
  %3218 = vmatpush1.bf16.msra.mxu0 0
  %3219 = vmatprep.subr.bf16.mxu0 0
  %3220 = vmatpush1.bf16.msra.mxu0 0
  %3221 = vmatprep.subr.bf16.mxu0 0
  %3222 = vmatpush1.bf16.msra.mxu0 0
  %3223 = vmatprep.mubr.bf16.mxu0 0
  %3224 = vmatmul.mubr.bf16.gmra.mrb[0].mxu0 %v3093
  %v3225 = vpop.f32.mrb[0].mxu0
  %v3226 = vadd.f32 0.0, %v3225
  %v3227 = vpop.f32.mrb[0].mxu0
  %v3228 = vpop.f32.mrb[0].mxu0
  %v3229 = vadd.f32 0.0, %v3228
  %v3230 = vpop.f32.mrb[0].mxu0
  %3231 = vmatprep.mubr.bf16.mxu0 0
  %3232 = vmatmul.mubr.bf16.gmra.mrb[0].mxu0 %v3096
  %v3233 = vpop.f32.mrb[0].mxu0
  %v3234 = vadd.f32 0.0, %v3233
  %v3235 = vpop.f32.mrb[0].mxu0
  %v3236 = vpop.f32.mrb[0].mxu0
  %v3237 = vadd.f32 0.0, %v3236
  %v3238 = vpop.f32.mrb[0].mxu0
  %3239 = vmatprep.mubr.bf16.mxu0 0
  %3240 = vmatmul.mubr.bf16.gmra.mrb[0].mxu0 %v3099
  %v3241 = vpop.f32.mrb[0].mxu0
  %v3242 = vadd.f32 0.0, %v3241
  %v3243 = vpop.f32.mrb[0].mxu0
  %v3244 = vpop.f32.mrb[0].mxu0
  %v3245 = vadd.f32 0.0, %v3244
  %v3246 = vpop.f32.mrb[0].mxu0
  %3247 = vmatprep.mubr.bf16.mxu0 0
  %3248 = vmatmul.mubr.bf16.gmra.mrb[0].mxu0 %v3102
  %v3249 = vpop.f32.mrb[0].mxu0
  %v3250 = vadd.f32 0.0, %v3249
  %v3251 = vpop.f32.mrb[0].mxu0
  %v3252 = vpop.f32.mrb[0].mxu0
  %v3253 = vadd.f32 0.0, %v3252
  %v3254 = vpop.f32.mrb[0].mxu0
  %3255 = vmatprep.mubr.bf16.mxu0 0
  %3256 = vmatmul.mubr.bf16.gmra.mrb[0].mxu0 %v3105
  %v3257 = vpop.f32.mrb[0].mxu0
  %v3258 = vadd.f32 0.0, %v3257
  %v3259 = vpop.f32.mrb[0].mxu0
  %v3260 = vpop.f32.mrb[0].mxu0
  %v3261 = vadd.f32 0.0, %v3260
  %v3262 = vpop.f32.mrb[0].mxu0
  %3263 = vmatprep.mubr.bf16.mxu0 0
  %3264 = vmatmul.mubr.bf16.gmra.mrb[0].mxu0 %v3108
  %v3265 = vpop.f32.mrb[0].mxu0
  %v3266 = vadd.f32 0.0, %v3265
  %v3267 = vpop.f32.mrb[0].mxu0
  %v3268 = vpop.f32.mrb[0].mxu0
  %v3269 = vadd.f32 0.0, %v3268
  %v3270 = vpop.f32.mrb[0].mxu0
  %3271 = vmatprep.mubr.bf16.mxu0 0
  %3272 = vmatmul.mubr.bf16.gmra.mrb[0].mxu0 %v3111
  %v3273 = vpop.f32.mrb[0].mxu0
  %v3274 = vadd.f32 0.0, %v3273
  %v3275 = vpop.f32.mrb[0].mxu0
  %v3276 = vpop.f32.mrb[0].mxu0
  %v3277 = vadd.f32 0.0, %v3276
  %v3278 = vpop.f32.mrb[0].mxu0
  %3279 = vmatprep.mubr.bf16.mxu0 0
  %3280 = vmatmul.mubr.bf16.gmra.mrb[0].mxu0 %v3114
  %v3281 = vpop.f32.mrb[0].mxu0
  %v3282 = vadd.f32 0.0, %v3281
  %v3283 = vpop.f32.mrb[0].mxu0
  %v3284 = vpop.f32.mrb[0].mxu0
  %v3285 = vadd.f32 0.0, %v3284
  %v3286 = vpop.f32.mrb[0].mxu0
  %3287 = vmatprep.mubr.bf16.mxu0 0
  %3288 = vmatmul.mubr.bf16.gmra.mrb[0].mxu0 %v3117
  %v3289 = vpop.f32.mrb[0].mxu0
  %v3290 = vadd.f32 0.0, %v3289
  %v3291 = vpop.f32.mrb[0].mxu0
  %v3292 = vpop.f32.mrb[0].mxu0
  %v3293 = vadd.f32 0.0, %v3292
  %v3294 = vpop.f32.mrb[0].mxu0
  %3295 = vmatprep.mubr.bf16.mxu0 0
  %3296 = vmatmul.mubr.bf16.gmra.mrb[0].mxu0 %v3120
  %v3297 = vpop.f32.mrb[0].mxu0
  %v3298 = vadd.f32 0.0, %v3297
  %v3299 = vpop.f32.mrb[0].mxu0
  %v3300 = vpop.f32.mrb[0].mxu0
  %v3301 = vadd.f32 0.0, %v3300
  %v3302 = vpop.f32.mrb[0].mxu0
  %3303 = vmatprep.mubr.bf16.mxu0 0
  %3304 = vmatmul.mubr.bf16.gmra.mrb[0].mxu0 %v3123
  %v3305 = vpop.f32.mrb[0].mxu0
  %v3306 = vadd.f32 0.0, %v3305
  %v3307 = vpop.f32.mrb[0].mxu0
  %v3308 = vpop.f32.mrb[0].mxu0
  %v3309 = vadd.f32 0.0, %v3308
  %v3310 = vpop.f32.mrb[0].mxu0
  %3311 = vmatprep.mubr.bf16.mxu0 0
  %3312 = vmatmul.mubr.bf16.gmra.mrb[0].mxu0 %v3126
  %v3313 = vpop.f32.mrb[0].mxu0
  %v3314 = vadd.f32 0.0, %v3313
  %v3315 = vpop.f32.mrb[0].mxu0
  %v3316 = vpop.f32.mrb[0].mxu0
  %v3317 = vadd.f32 0.0, %v3316
  %v3318 = vpop.f32.mrb[0].mxu0
  %3319 = vmatprep.mubr.bf16.mxu0 0
  %3320 = vmatmul.mubr.bf16.gmra.mrb[0].mxu0 %v3129
  %v3321 = vpop.f32.mrb[0].mxu0
  %v3322 = vadd.f32 0.0, %v3321
  %v3323 = vpop.f32.mrb[0].mxu0
  %v3324 = vpop.f32.mrb[0].mxu0
  %v3325 = vadd.f32 0.0, %v3324
  %v3326 = vpop.f32.mrb[0].mxu0
  %3327 = vmatprep.mubr.bf16.mxu0 0
  %3328 = vmatmul.mubr.bf16.gmra.mrb[0].mxu0 %v3132
  %v3329 = vpop.f32.mrb[0].mxu0
  %v3330 = vadd.f32 0.0, %v3329
  %v3331 = vpop.f32.mrb[0].mxu0
  %v3332 = vpop.f32.mrb[0].mxu0
  %v3333 = vadd.f32 0.0, %v3332
  %v3334 = vpop.f32.mrb[0].mxu0
  %3335 = vmatprep.mubr.bf16.mxu0 0
  %3336 = vmatmul.mubr.bf16.gmra.mrb[0].mxu0 %v3135
  %v3337 = vpop.f32.mrb[0].mxu0
  %v3338 = vadd.f32 0.0, %v3337
  %v3339 = vpop.f32.mrb[0].mxu0
  %v3340 = vpop.f32.mrb[0].mxu0
  %v3341 = vadd.f32 0.0, %v3340
  %v3342 = vpop.f32.mrb[0].mxu0
  %3343 = vmatprep.mubr.bf16.mxu0 0
  %3344 = vmatmul.mubr.bf16.gmra.mrb[0].mxu0 %v3138
  %v3345 = vpop.f32.mrb[0].mxu0
  %v3346 = vadd.f32 0.0, %v3345
  %v3347 = vpop.f32.mrb[0].mxu0
  %v3348 = vpop.f32.mrb[0].mxu0
  %v3349 = vadd.f32 0.0, %v3348
  %v3350 = vpop.f32.mrb[0].mxu0
  %3351 = vmatprep.mubr.bf16.mxu0 0
  %3352 = vmatmul.mubr.bf16.gmra.mrb[0].mxu0 %v3141
  %v3353 = vpop.f32.mrb[0].mxu0
  %v3354 = vadd.f32 0.0, %v3353
  %v3355 = vpop.f32.mrb[0].mxu0
  %v3356 = vpop.f32.mrb[0].mxu0
  %v3357 = vadd.f32 0.0, %v3356
  %v3358 = vpop.f32.mrb[0].mxu0
  %3359 = vmatprep.mubr.bf16.mxu0 0
  %3360 = vmatmul.mubr.bf16.gmra.mrb[0].mxu0 %v3144
  %v3361 = vpop.f32.mrb[0].mxu0
  %v3362 = vadd.f32 0.0, %v3361
  %v3363 = vpop.f32.mrb[0].mxu0
  %v3364 = vpop.f32.mrb[0].mxu0
  %v3365 = vadd.f32 0.0, %v3364
  %v3366 = vpop.f32.mrb[0].mxu0
  %3367 = vmatprep.mubr.bf16.mxu0 0
  %3368 = vmatmul.mubr.bf16.gmra.mrb[0].mxu0 %v3147
  %v3369 = vpop.f32.mrb[0].mxu0
  %v3370 = vadd.f32 0.0, %v3369
  %v3371 = vpop.f32.mrb[0].mxu0
  %v3372 = vpop.f32.mrb[0].mxu0
  %v3373 = vadd.f32 0.0, %v3372
  %v3374 = vpop.f32.mrb[0].mxu0
  %3375 = vmatprep.mubr.bf16.mxu0 0
  %3376 = vmatmul.mubr.bf16.gmra.mrb[0].mxu0 %v3150
  %v3377 = vpop.f32.mrb[0].mxu0
  %v3378 = vadd.f32 0.0, %v3377
  %v3379 = vpop.f32.mrb[0].mxu0
  %v3380 = vpop.f32.mrb[0].mxu0
  %v3381 = vadd.f32 0.0, %v3380
  %v3382 = vpop.f32.mrb[0].mxu0
  %3383 = vmatprep.mubr.bf16.mxu0 0
  %3384 = vmatmul.mubr.bf16.gmra.mrb[0].mxu0 %v3153
  %v3385 = vpop.f32.mrb[0].mxu0
  %v3386 = vadd.f32 0.0, %v3385
  %v3387 = vpop.f32.mrb[0].mxu0
  %v3388 = vpop.f32.mrb[0].mxu0
  %v3389 = vadd.f32 0.0, %v3388
  %v3390 = vpop.f32.mrb[0].mxu0
  %3391 = vmatprep.mubr.bf16.mxu0 0
  %3392 = vmatmul.mubr.bf16.gmra.mrb[0].mxu0 %v3156
  %v3393 = vpop.f32.mrb[0].mxu0
  %v3394 = vadd.f32 0.0, %v3393
  %v3395 = vpop.f32.mrb[0].mxu0
  %v3396 = vpop.f32.mrb[0].mxu0
  %v3397 = vadd.f32 0.0, %v3396
  %v3398 = vpop.f32.mrb[0].mxu0
  %3399 = vmatprep.mubr.bf16.mxu0 0
  %3400 = vmatmul.mubr.bf16.gmra.mrb[0].mxu0 %v3159
  %v3401 = vpop.f32.mrb[0].mxu0
  %v3402 = vadd.f32 0.0, %v3401
  %v3403 = vpop.f32.mrb[0].mxu0
  %v3404 = vpop.f32.mrb[0].mxu0
  %v3405 = vadd.f32 0.0, %v3404
  %v3406 = vpop.f32.mrb[0].mxu0
  %3407 = vmatprep.mubr.bf16.mxu0 0
  %3408 = vmatmul.mubr.bf16.gmra.mrb[0].mxu0 %v3162
  %v3409 = vpop.f32.mrb[0].mxu0
  %v3410 = vadd.f32 0.0, %v3409
  %v3411 = vpop.f32.mrb[0].mxu0
  %v3412 = vpop.f32.mrb[0].mxu0
  %v3413 = vadd.f32 0.0, %v3412
  %v3414 = vpop.f32.mrb[0].mxu0
  %3415 = vmatprep.mubr.bf16.mxu0 0
  %3416 = vmatmul.mubr.bf16.gmra.mrb[0].mxu0 %v3165
  %v3417 = vpop.f32.mrb[0].mxu0
  %v3418 = vadd.f32 0.0, %v3417
  %v3419 = vpop.f32.mrb[0].mxu0
  %v3420 = vpop.f32.mrb[0].mxu0
  %v3421 = vadd.f32 0.0, %v3420
  %v3422 = vpop.f32.mrb[0].mxu0
  %3423 = vmatprep.mubr.bf16.mxu0 0
  %3424 = vmatmul.mubr.bf16.gmra.mrb[0].mxu0 %v3168
  %v3425 = vpop.f32.mrb[0].mxu0
  %v3426 = vadd.f32 0.0, %v3425
  %v3427 = vpop.f32.mrb[0].mxu0
  %v3428 = vpop.f32.mrb[0].mxu0
  %v3429 = vadd.f32 0.0, %v3428
  %v3430 = vpop.f32.mrb[0].mxu0
  %3431 = vmatprep.mubr.bf16.mxu0 0
  %3432 = vmatmul.mubr.bf16.gmra.mrb[0].mxu0 %v3171
  %v3433 = vpop.f32.mrb[0].mxu0
  %v3434 = vadd.f32 0.0, %v3433
  %v3435 = vpop.f32.mrb[0].mxu0
  %v3436 = vpop.f32.mrb[0].mxu0
  %v3437 = vadd.f32 0.0, %v3436
  %v3438 = vpop.f32.mrb[0].mxu0
  %3439 = vmatprep.mubr.bf16.mxu0 0
  %3440 = vmatmul.mubr.bf16.gmra.mrb[0].mxu0 %v3174
  %v3441 = vpop.f32.mrb[0].mxu0
  %v3442 = vadd.f32 0.0, %v3441
  %v3443 = vpop.f32.mrb[0].mxu0
  %v3444 = vpop.f32.mrb[0].mxu0
  %v3445 = vadd.f32 0.0, %v3444
  %v3446 = vpop.f32.mrb[0].mxu0
  %3447 = vmatprep.mubr.bf16.mxu0 0
  %3448 = vmatmul.mubr.bf16.gmra.mrb[0].mxu0 %v3177
  %v3449 = vpop.f32.mrb[0].mxu0
  %v3450 = vadd.f32 0.0, %v3449
  %v3451 = vpop.f32.mrb[0].mxu0
  %v3452 = vpop.f32.mrb[0].mxu0
  %v3453 = vadd.f32 0.0, %v3452
  %v3454 = vpop.f32.mrb[0].mxu0
  %3455 = vmatprep.mubr.bf16.mxu0 0
  %3456 = vmatmul.mubr.bf16.gmra.mrb[0].mxu0 %v3180
  %v3457 = vpop.f32.mrb[0].mxu0
  %v3458 = vadd.f32 0.0, %v3457
  %v3459 = vpop.f32.mrb[0].mxu0
  %v3460 = vpop.f32.mrb[0].mxu0
  %v3461 = vadd.f32 0.0, %v3460
  %v3462 = vpop.f32.mrb[0].mxu0
  %3463 = vmatprep.mubr.bf16.mxu0 0
  %3464 = vmatmul.mubr.bf16.gmra.mrb[0].mxu0 %v3183
  %v3465 = vpop.f32.mrb[0].mxu0
  %v3466 = vadd.f32 0.0, %v3465
  %v3467 = vpop.f32.mrb[0].mxu0
  %v3468 = vpop.f32.mrb[0].mxu0
  %v3469 = vadd.f32 0.0, %v3468
  %v3470 = vpop.f32.mrb[0].mxu0
  %3471 = vmatprep.mubr.bf16.mxu0 0
  %3472 = vmatmul.mubr.bf16.gmra.mrb[0].mxu0 %v3186
  %v3473 = vpop.f32.mrb[0].mxu0
  %v3474 = vadd.f32 0.0, %v3473
  %v3475 = vpop.f32.mrb[0].mxu0
  %v3476 = vpop.f32.mrb[0].mxu0
  %v3477 = vadd.f32 0.0, %v3476
  %v3478 = vpop.f32.mrb[0].mxu0
  %3479 = vdwg.mxu0
  %v3480 = vadd.f32 %v2866, %v3226
  %v3481 = vadd.f32 %v2867, %v3229
  %v3482 = vadd.f32 %v2868, %v3234
  %v3483 = vadd.f32 %v2869, %v3237
  %v3484 = vadd.f32 %v2870, %v3242
  %v3485 = vadd.f32 %v2871, %v3245
  %v3486 = vadd.f32 %v2872, %v3250
  %v3487 = vadd.f32 %v2873, %v3253
  %v3488 = vadd.f32 %v2874, %v3258
  %v3489 = vadd.f32 %v2875, %v3261
  %v3490 = vadd.f32 %v2876, %v3266
  %v3491 = vadd.f32 %v2877, %v3269
  %v3492 = vadd.f32 %v2878, %v3274
  %v3493 = vadd.f32 %v2879, %v3277
  %v3494 = vadd.f32 %v2880, %v3282
  %v3495 = vadd.f32 %v2881, %v3285
  %v3496 = vadd.f32 %v2882, %v3290
  %v3497 = vadd.f32 %v2883, %v3293
  %v3498 = vadd.f32 %v2884, %v3298
  %v3499 = vadd.f32 %v2885, %v3301
  %v3500 = vadd.f32 %v2886, %v3306
  %v3501 = vadd.f32 %v2887, %v3309
  %v3502 = vadd.f32 %v2888, %v3314
  %v3503 = vadd.f32 %v2889, %v3317
  %v3504 = vadd.f32 %v2890, %v3322
  %v3505 = vadd.f32 %v2891, %v3325
  %v3506 = vadd.f32 %v2892, %v3330
  %v3507 = vadd.f32 %v2893, %v3333
  %v3508 = vadd.f32 %v2894, %v3338
  %v3509 = vadd.f32 %v2895, %v3341
  %v3510 = vadd.f32 %v2896, %v3346
  %v3511 = vadd.f32 %v2897, %v3349
  %v3512 = vadd.f32 %v2898, %v3354
  %v3513 = vadd.f32 %v2899, %v3357
  %v3514 = vadd.f32 %v2900, %v3362
  %v3515 = vadd.f32 %v2901, %v3365
  %v3516 = vadd.f32 %v2902, %v3370
  %v3517 = vadd.f32 %v2903, %v3373
  %v3518 = vadd.f32 %v2904, %v3378
  %v3519 = vadd.f32 %v2905, %v3381
  %v3520 = vadd.f32 %v2906, %v3386
  %v3521 = vadd.f32 %v2907, %v3389
  %v3522 = vadd.f32 %v2908, %v3394
  %v3523 = vadd.f32 %v2909, %v3397
  %v3524 = vadd.f32 %v2910, %v3402
  %v3525 = vadd.f32 %v2911, %v3405
  %v3526 = vadd.f32 %v2912, %v3410
  %v3527 = vadd.f32 %v2913, %v3413
  %v3528 = vadd.f32 %v2914, %v3418
  %v3529 = vadd.f32 %v2915, %v3421
  %v3530 = vadd.f32 %v2916, %v3426
  %v3531 = vadd.f32 %v2917, %v3429
  %v3532 = vadd.f32 %v2918, %v3434
  %v3533 = vadd.f32 %v2919, %v3437
  %v3534 = vadd.f32 %v2920, %v3442
  %v3535 = vadd.f32 %v2921, %v3445
  %v3536 = vadd.f32 %v2922, %v3450
  %v3537 = vadd.f32 %v2923, %v3453
  %v3538 = vadd.f32 %v2924, %v3458
  %v3539 = vadd.f32 %v2925, %v3461
  %v3540 = vadd.f32 %v2926, %v3466
  %v3541 = vadd.f32 %v2927, %v3469
  %v3542 = vadd.f32 %v2928, %v3474
  %v3543 = vadd.f32 %v2929, %v3477
  %v3545 = vshrl.u32 %v121, 16
  %v3547 = vrot.slane %v3545, 4
  %v3548 = vshll.u32 %v121, 16
  %v3550 = vrot.slane %v3548, 5
  %v3551 = vor.u32 %v3547, %v3550
  %v3552 = vrot.slane %v3551, 4
  %v3554 = vshll.u32 %v122, 16
  %v3556 = vrot.slane %v3554, 5
  %v3557 = vsel %vm316, %v3552, %v3556
  %v3558 = vshrl.u32 %v122, 16
  %v3560 = vrot.slane %v3558, 4
  %v3561 = vor.u32 %v3560, %v3556
  %v3562 = vrot.slane %v3561, 4
  %v3564 = vshll.u32 %v123, 16
  %v3566 = vrot.slane %v3564, 5
  %v3567 = vsel %vm316, %v3562, %v3566
  %v3569 = vshrl.u32 %v124, 16
  %v3571 = vrot.slane %v3569, 4
  %v3572 = vshll.u32 %v124, 16
  %v3574 = vrot.slane %v3572, 5
  %v3575 = vor.u32 %v3571, %v3574
  %v3576 = vrot.slane %v3575, 4
  %v3578 = vshll.u32 %v125, 16
  %v3580 = vrot.slane %v3578, 5
  %v3581 = vsel %vm316, %v3576, %v3580
  %v3582 = vshrl.u32 %v125, 16
  %v3584 = vrot.slane %v3582, 4
  %v3585 = vor.u32 %v3584, %v3580
  %v3586 = vrot.slane %v3585, 4
  %v3588 = vshll.u32 %v126, 16
  %v3590 = vrot.slane %v3588, 5
  %v3591 = vsel %vm316, %v3586, %v3590
  %v3593 = vshrl.u32 %v127, 16
  %v3595 = vrot.slane %v3593, 4
  %v3596 = vshll.u32 %v127, 16
  %v3598 = vrot.slane %v3596, 5
  %v3599 = vor.u32 %v3595, %v3598
  %v3600 = vrot.slane %v3599, 4
  %v3602 = vshll.u32 %v128, 16
  %v3604 = vrot.slane %v3602, 5
  %v3605 = vsel %vm316, %v3600, %v3604
  %v3606 = vshrl.u32 %v128, 16
  %v3608 = vrot.slane %v3606, 4
  %v3609 = vor.u32 %v3608, %v3604
  %v3610 = vrot.slane %v3609, 4
  %v3612 = vshll.u32 %v129, 16
  %v3614 = vrot.slane %v3612, 5
  %v3615 = vsel %vm316, %v3610, %v3614
  %v3617 = vshrl.u32 %v130, 16
  %v3619 = vrot.slane %v3617, 4
  %v3620 = vshll.u32 %v130, 16
  %v3622 = vrot.slane %v3620, 5
  %v3623 = vor.u32 %v3619, %v3622
  %v3624 = vrot.slane %v3623, 4
  %v3626 = vshll.u32 %v131, 16
  %v3628 = vrot.slane %v3626, 5
  %v3629 = vsel %vm316, %v3624, %v3628
  %v3630 = vshrl.u32 %v131, 16
  %v3632 = vrot.slane %v3630, 4
  %v3633 = vor.u32 %v3632, %v3628
  %v3634 = vrot.slane %v3633, 4
  %v3636 = vshll.u32 %v132, 16
  %v3638 = vrot.slane %v3636, 5
  %v3639 = vsel %vm316, %v3634, %v3638
  %v3641 = vshrl.u32 %v133, 16
  %v3643 = vrot.slane %v3641, 4
  %v3644 = vshll.u32 %v133, 16
  %v3646 = vrot.slane %v3644, 5
  %v3647 = vor.u32 %v3643, %v3646
  %v3648 = vrot.slane %v3647, 4
  %v3650 = vshll.u32 %v134, 16
  %v3652 = vrot.slane %v3650, 5
  %v3653 = vsel %vm316, %v3648, %v3652
  %v3654 = vshrl.u32 %v134, 16
  %v3656 = vrot.slane %v3654, 4
  %v3657 = vor.u32 %v3656, %v3652
  %v3658 = vrot.slane %v3657, 4
  %v3660 = vshll.u32 %v135, 16
  %v3662 = vrot.slane %v3660, 5
  %v3663 = vsel %vm316, %v3658, %v3662
  %v3665 = vshrl.u32 %v136, 16
  %v3667 = vrot.slane %v3665, 4
  %v3668 = vshll.u32 %v136, 16
  %v3670 = vrot.slane %v3668, 5
  %v3671 = vor.u32 %v3667, %v3670
  %v3672 = vrot.slane %v3671, 4
  %v3674 = vshll.u32 %v137, 16
  %v3676 = vrot.slane %v3674, 5
  %v3677 = vsel %vm316, %v3672, %v3676
  %v3678 = vshrl.u32 %v137, 16
  %v3680 = vrot.slane %v3678, 4
  %v3681 = vor.u32 %v3680, %v3676
  %v3682 = vrot.slane %v3681, 4
  %v3684 = vshll.u32 %v138, 16
  %v3686 = vrot.slane %v3684, 5
  %v3687 = vsel %vm316, %v3682, %v3686
  %v3689 = vshrl.u32 %v139, 16
  %v3691 = vrot.slane %v3689, 4
  %v3692 = vshll.u32 %v139, 16
  %v3694 = vrot.slane %v3692, 5
  %v3695 = vor.u32 %v3691, %v3694
  %v3696 = vrot.slane %v3695, 4
  %v3698 = vshll.u32 %v140, 16
  %v3700 = vrot.slane %v3698, 5
  %v3701 = vsel %vm316, %v3696, %v3700
  %v3702 = vshrl.u32 %v140, 16
  %v3704 = vrot.slane %v3702, 4
  %v3705 = vor.u32 %v3704, %v3700
  %v3706 = vrot.slane %v3705, 4
  %v3708 = vshll.u32 %v141, 16
  %v3710 = vrot.slane %v3708, 5
  %v3711 = vsel %vm316, %v3706, %v3710
  %v3713 = vshrl.u32 %v142, 16
  %v3715 = vrot.slane %v3713, 4
  %v3716 = vshll.u32 %v142, 16
  %v3718 = vrot.slane %v3716, 5
  %v3719 = vor.u32 %v3715, %v3718
  %v3720 = vrot.slane %v3719, 4
  %v3722 = vshll.u32 %v143, 16
  %v3724 = vrot.slane %v3722, 5
  %v3725 = vsel %vm316, %v3720, %v3724
  %v3726 = vshrl.u32 %v143, 16
  %v3728 = vrot.slane %v3726, 4
  %v3729 = vor.u32 %v3728, %v3724
  %v3730 = vrot.slane %v3729, 4
  %v3732 = vshll.u32 %v144, 16
  %v3734 = vrot.slane %v3732, 5
  %v3735 = vsel %vm316, %v3730, %v3734
  %v3737 = vshrl.u32 %v145, 16
  %v3739 = vrot.slane %v3737, 4
  %v3740 = vshll.u32 %v145, 16
  %v3742 = vrot.slane %v3740, 5
  %v3743 = vor.u32 %v3739, %v3742
  %v3744 = vrot.slane %v3743, 4
  %v3746 = vshll.u32 %v146, 16
  %v3748 = vrot.slane %v3746, 5
  %v3749 = vsel %vm316, %v3744, %v3748
  %v3750 = vshrl.u32 %v146, 16
  %v3752 = vrot.slane %v3750, 4
  %v3753 = vor.u32 %v3752, %v3748
  %v3754 = vrot.slane %v3753, 4
  %v3756 = vshll.u32 %v147, 16
  %v3758 = vrot.slane %v3756, 5
  %v3759 = vsel %vm316, %v3754, %v3758
  %v3761 = vshrl.u32 %v148, 16
  %v3763 = vrot.slane %v3761, 4
  %v3764 = vshll.u32 %v148, 16
  %v3766 = vrot.slane %v3764, 5
  %v3767 = vor.u32 %v3763, %v3766
  %v3768 = vrot.slane %v3767, 4
  %v3770 = vshll.u32 %v149, 16
  %v3772 = vrot.slane %v3770, 5
  %v3773 = vsel %vm316, %v3768, %v3772
  %v3774 = vshrl.u32 %v149, 16
  %v3776 = vrot.slane %v3774, 4
  %v3777 = vor.u32 %v3776, %v3772
  %v3778 = vrot.slane %v3777, 4
  %v3780 = vshll.u32 %v150, 16
  %v3782 = vrot.slane %v3780, 5
  %v3783 = vsel %vm316, %v3778, %v3782
  %v3785 = vshrl.u32 %v151, 16
  %v3787 = vrot.slane %v3785, 4
  %v3788 = vshll.u32 %v151, 16
  %v3790 = vrot.slane %v3788, 5
  %v3791 = vor.u32 %v3787, %v3790
  %v3792 = vrot.slane %v3791, 4
  %v3794 = vshll.u32 %v152, 16
  %v3796 = vrot.slane %v3794, 5
  %v3797 = vsel %vm316, %v3792, %v3796
  %v3798 = vshrl.u32 %v152, 16
  %v3800 = vrot.slane %v3798, 4
  %v3801 = vor.u32 %v3800, %v3796
  %v3802 = vrot.slane %v3801, 4
  %v3804 = vshll.u32 %v153, 16
  %v3806 = vrot.slane %v3804, 5
  %v3807 = vsel %vm316, %v3802, %v3806
  %v3809 = vshrl.u32 %v154, 16
  %v3811 = vrot.slane %v3809, 4
  %v3812 = vshll.u32 %v154, 16
  %v3814 = vrot.slane %v3812, 5
  %v3815 = vor.u32 %v3811, %v3814
  %v3816 = vrot.slane %v3815, 4
  %v3818 = vshll.u32 %v155, 16
  %v3820 = vrot.slane %v3818, 5
  %v3821 = vsel %vm316, %v3816, %v3820
  %v3822 = vshrl.u32 %v155, 16
  %v3824 = vrot.slane %v3822, 4
  %v3825 = vor.u32 %v3824, %v3820
  %v3826 = vrot.slane %v3825, 4
  %v3828 = vshll.u32 %v156, 16
  %v3830 = vrot.slane %v3828, 5
  %v3831 = vsel %vm316, %v3826, %v3830
  %v3833 = vshrl.u32 %v157, 16
  %v3835 = vrot.slane %v3833, 4
  %v3836 = vshll.u32 %v157, 16
  %v3838 = vrot.slane %v3836, 5
  %v3839 = vor.u32 %v3835, %v3838
  %v3840 = vrot.slane %v3839, 4
  %v3842 = vshll.u32 %v158, 16
  %v3844 = vrot.slane %v3842, 5
  %v3845 = vsel %vm316, %v3840, %v3844
  %v3846 = vshrl.u32 %v158, 16
  %v3848 = vrot.slane %v3846, 4
  %v3849 = vor.u32 %v3848, %v3844
  %v3850 = vrot.slane %v3849, 4
  %v3852 = vshll.u32 %v159, 16
  %v3854 = vrot.slane %v3852, 5
  %v3855 = vsel %vm316, %v3850, %v3854
  %v3857 = vshrl.u32 %v160, 16
  %v3859 = vrot.slane %v3857, 4
  %v3860 = vshll.u32 %v160, 16
  %v3862 = vrot.slane %v3860, 5
  %v3863 = vor.u32 %v3859, %v3862
  %v3864 = vrot.slane %v3863, 4
  %v3866 = vshll.u32 %v161, 16
  %v3868 = vrot.slane %v3866, 5
  %v3869 = vsel %vm316, %v3864, %v3868
  %v3870 = vshrl.u32 %v161, 16
  %v3872 = vrot.slane %v3870, 4
  %v3873 = vor.u32 %v3872, %v3868
  %v3874 = vrot.slane %v3873, 4
  %v3876 = vshll.u32 %v162, 16
  %v3878 = vrot.slane %v3876, 5
  %v3879 = vsel %vm316, %v3874, %v3878
  %v3881 = vshrl.u32 %v163, 16
  %v3883 = vrot.slane %v3881, 4
  %v3884 = vshll.u32 %v163, 16
  %v3886 = vrot.slane %v3884, 5
  %v3887 = vor.u32 %v3883, %v3886
  %v3888 = vrot.slane %v3887, 4
  %v3890 = vshll.u32 %v164, 16
  %v3892 = vrot.slane %v3890, 5
  %v3893 = vsel %vm316, %v3888, %v3892
  %v3894 = vshrl.u32 %v164, 16
  %v3896 = vrot.slane %v3894, 4
  %v3897 = vor.u32 %v3896, %v3892
  %v3898 = vrot.slane %v3897, 4
  %v3900 = vshll.u32 %v165, 16
  %v3902 = vrot.slane %v3900, 5
  %v3903 = vsel %vm316, %v3898, %v3902
  %v3905 = vshrl.u32 %v166, 16
  %v3907 = vrot.slane %v3905, 4
  %v3908 = vshll.u32 %v166, 16
  %v3910 = vrot.slane %v3908, 5
  %v3911 = vor.u32 %v3907, %v3910
  %v3912 = vrot.slane %v3911, 4
  %v3914 = vshll.u32 %v167, 16
  %v3916 = vrot.slane %v3914, 5
  %v3917 = vsel %vm316, %v3912, %v3916
  %v3918 = vshrl.u32 %v167, 16
  %v3920 = vrot.slane %v3918, 4
  %v3921 = vor.u32 %v3920, %v3916
  %v3922 = vrot.slane %v3921, 4
  %v3924 = vshll.u32 %v168, 16
  %v3926 = vrot.slane %v3924, 5
  %v3927 = vsel %vm316, %v3922, %v3926
  %v3929 = vshrl.u32 %v169, 16
  %v3931 = vrot.slane %v3929, 4
  %v3932 = vshll.u32 %v169, 16
  %v3934 = vrot.slane %v3932, 5
  %v3935 = vor.u32 %v3931, %v3934
  %v3936 = vrot.slane %v3935, 4
  %v3938 = vshll.u32 %v170, 16
  %v3940 = vrot.slane %v3938, 5
  %v3941 = vsel %vm316, %v3936, %v3940
  %v3942 = vshrl.u32 %v170, 16
  %v3944 = vrot.slane %v3942, 4
  %v3945 = vor.u32 %v3944, %v3940
  %v3946 = vrot.slane %v3945, 4
  %v3948 = vshll.u32 %v171, 16
  %v3950 = vrot.slane %v3948, 5
  %v3951 = vsel %vm316, %v3946, %v3950
  %v3953 = vshrl.u32 %v172, 16
  %v3955 = vrot.slane %v3953, 4
  %v3956 = vshll.u32 %v172, 16
  %v3958 = vrot.slane %v3956, 5
  %v3959 = vor.u32 %v3955, %v3958
  %v3960 = vrot.slane %v3959, 4
  %v3962 = vshll.u32 %v173, 16
  %v3964 = vrot.slane %v3962, 5
  %v3965 = vsel %vm316, %v3960, %v3964
  %v3966 = vshrl.u32 %v173, 16
  %v3968 = vrot.slane %v3966, 4
  %v3969 = vor.u32 %v3968, %v3964
  %v3970 = vrot.slane %v3969, 4
  %v3972 = vshll.u32 %v174, 16
  %v3974 = vrot.slane %v3972, 5
  %v3975 = vsel %vm316, %v3970, %v3974
  %v3977 = vshrl.u32 %v175, 16
  %v3979 = vrot.slane %v3977, 4
  %v3980 = vshll.u32 %v175, 16
  %v3982 = vrot.slane %v3980, 5
  %v3983 = vor.u32 %v3979, %v3982
  %v3984 = vrot.slane %v3983, 4
  %v3986 = vshll.u32 %v176, 16
  %v3988 = vrot.slane %v3986, 5
  %v3989 = vsel %vm316, %v3984, %v3988
  %v3990 = vshrl.u32 %v176, 16
  %v3992 = vrot.slane %v3990, 4
  %v3993 = vor.u32 %v3992, %v3988
  %v3994 = vrot.slane %v3993, 4
  %v3996 = vshll.u32 %v177, 16
  %v3998 = vrot.slane %v3996, 5
  %v3999 = vsel %vm316, %v3994, %v3998
  %v4001 = vshrl.u32 %v178, 16
  %v4003 = vrot.slane %v4001, 4
  %v4004 = vshll.u32 %v178, 16
  %v4006 = vrot.slane %v4004, 5
  %v4007 = vor.u32 %v4003, %v4006
  %v4008 = vrot.slane %v4007, 4
  %v4010 = vshll.u32 %v179, 16
  %v4012 = vrot.slane %v4010, 5
  %v4013 = vsel %vm316, %v4008, %v4012
  %v4014 = vshrl.u32 %v179, 16
  %v4016 = vrot.slane %v4014, 4
  %v4017 = vor.u32 %v4016, %v4012
  %v4018 = vrot.slane %v4017, 4
  %v4020 = vshll.u32 %v180, 16
  %v4022 = vrot.slane %v4020, 5
  %v4023 = vsel %vm316, %v4018, %v4022
  %v4025 = vshrl.u32 %v181, 16
  %v4027 = vrot.slane %v4025, 4
  %v4028 = vshll.u32 %v181, 16
  %v4030 = vrot.slane %v4028, 5
  %v4031 = vor.u32 %v4027, %v4030
  %v4032 = vrot.slane %v4031, 4
  %v4034 = vshll.u32 %v182, 16
  %v4036 = vrot.slane %v4034, 5
  %v4037 = vsel %vm316, %v4032, %v4036
  %v4038 = vshrl.u32 %v182, 16
  %v4040 = vrot.slane %v4038, 4
  %v4041 = vor.u32 %v4040, %v4036
  %v4042 = vrot.slane %v4041, 4
  %v4044 = vshll.u32 %v183, 16
  %v4046 = vrot.slane %v4044, 5
  %v4047 = vsel %vm316, %v4042, %v4046
  %v4049 = vshrl.u32 %v184, 16
  %v4051 = vrot.slane %v4049, 4
  %v4052 = vshll.u32 %v184, 16
  %v4054 = vrot.slane %v4052, 5
  %v4055 = vor.u32 %v4051, %v4054
  %v4056 = vrot.slane %v4055, 4
  %v4058 = vshll.u32 %v185, 16
  %v4060 = vrot.slane %v4058, 5
  %v4061 = vsel %vm316, %v4056, %v4060
  %v4062 = vshrl.u32 %v185, 16
  %v4064 = vrot.slane %v4062, 4
  %v4065 = vor.u32 %v4064, %v4060
  %v4066 = vrot.slane %v4065, 4
  %v4068 = vshll.u32 %v186, 16
  %v4070 = vrot.slane %v4068, 5
  %v4071 = vsel %vm316, %v4066, %v4070
  %v4073 = vshrl.u32 %v187, 16
  %v4075 = vrot.slane %v4073, 4
  %v4076 = vshll.u32 %v187, 16
  %v4078 = vrot.slane %v4076, 5
  %v4079 = vor.u32 %v4075, %v4078
  %v4080 = vrot.slane %v4079, 4
  %v4082 = vshll.u32 %v188, 16
  %v4084 = vrot.slane %v4082, 5
  %v4085 = vsel %vm316, %v4080, %v4084
  %v4086 = vshrl.u32 %v188, 16
  %v4088 = vrot.slane %v4086, 4
  %v4089 = vor.u32 %v4088, %v4084
  %v4090 = vrot.slane %v4089, 4
  %v4092 = vshll.u32 %v189, 16
  %v4094 = vrot.slane %v4092, 5
  %v4095 = vsel %vm316, %v4090, %v4094
  %v4097 = vshrl.u32 %v190, 16
  %v4099 = vrot.slane %v4097, 4
  %v4100 = vshll.u32 %v190, 16
  %v4102 = vrot.slane %v4100, 5
  %v4103 = vor.u32 %v4099, %v4102
  %v4104 = vrot.slane %v4103, 4
  %v4106 = vshll.u32 %v191, 16
  %v4108 = vrot.slane %v4106, 5
  %v4109 = vsel %vm316, %v4104, %v4108
  %v4110 = vshrl.u32 %v191, 16
  %v4112 = vrot.slane %v4110, 4
  %v4113 = vor.u32 %v4112, %v4108
  %v4114 = vrot.slane %v4113, 4
  %v4116 = vshll.u32 %v192, 16
  %v4118 = vrot.slane %v4116, 5
  %v4119 = vsel %vm316, %v4114, %v4118
  %v4121 = vshrl.u32 %v193, 16
  %v4123 = vrot.slane %v4121, 4
  %v4124 = vshll.u32 %v193, 16
  %v4126 = vrot.slane %v4124, 5
  %v4127 = vor.u32 %v4123, %v4126
  %v4128 = vrot.slane %v4127, 4
  %v4130 = vshll.u32 %v194, 16
  %v4132 = vrot.slane %v4130, 5
  %v4133 = vsel %vm316, %v4128, %v4132
  %v4134 = vshrl.u32 %v194, 16
  %v4136 = vrot.slane %v4134, 4
  %v4137 = vor.u32 %v4136, %v4132
  %v4138 = vrot.slane %v4137, 4
  %v4140 = vshll.u32 %v195, 16
  %v4142 = vrot.slane %v4140, 5
  %v4143 = vsel %vm316, %v4138, %v4142
  %v4145 = vshrl.u32 %v196, 16
  %v4147 = vrot.slane %v4145, 4
  %v4148 = vshll.u32 %v196, 16
  %v4150 = vrot.slane %v4148, 5
  %v4151 = vor.u32 %v4147, %v4150
  %v4152 = vrot.slane %v4151, 4
  %v4154 = vshll.u32 %v197, 16
  %v4156 = vrot.slane %v4154, 5
  %v4157 = vsel %vm316, %v4152, %v4156
  %v4158 = vshrl.u32 %v197, 16
  %v4160 = vrot.slane %v4158, 4
  %v4161 = vor.u32 %v4160, %v4156
  %v4162 = vrot.slane %v4161, 4
  %v4164 = vshll.u32 %v198, 16
  %v4166 = vrot.slane %v4164, 5
  %v4167 = vsel %vm316, %v4162, %v4166
  %v4169 = vshrl.u32 %v199, 16
  %v4171 = vrot.slane %v4169, 4
  %v4172 = vshll.u32 %v199, 16
  %v4174 = vrot.slane %v4172, 5
  %v4175 = vor.u32 %v4171, %v4174
  %v4176 = vrot.slane %v4175, 4
  %v4178 = vshll.u32 %v200, 16
  %v4180 = vrot.slane %v4178, 5
  %v4181 = vsel %vm316, %v4176, %v4180
  %v4182 = vshrl.u32 %v200, 16
  %v4184 = vrot.slane %v4182, 4
  %v4185 = vor.u32 %v4184, %v4180
  %v4186 = vrot.slane %v4185, 4
  %v4188 = vshll.u32 %v201, 16
  %v4190 = vrot.slane %v4188, 5
  %v4191 = vsel %vm316, %v4186, %v4190
  %v4193 = vshrl.u32 %v202, 16
  %v4195 = vrot.slane %v4193, 4
  %v4196 = vshll.u32 %v202, 16
  %v4198 = vrot.slane %v4196, 5
  %v4199 = vor.u32 %v4195, %v4198
  %v4200 = vrot.slane %v4199, 4
  %v4202 = vshll.u32 %v203, 16
  %v4204 = vrot.slane %v4202, 5
  %v4205 = vsel %vm316, %v4200, %v4204
  %v4206 = vshrl.u32 %v203, 16
  %v4208 = vrot.slane %v4206, 4
  %v4209 = vor.u32 %v4208, %v4204
  %v4210 = vrot.slane %v4209, 4
  %v4212 = vshll.u32 %v204, 16
  %v4214 = vrot.slane %v4212, 5
  %v4215 = vsel %vm316, %v4210, %v4214
  %v4217 = vshrl.u32 %v205, 16
  %v4219 = vrot.slane %v4217, 4
  %v4220 = vshll.u32 %v205, 16
  %v4222 = vrot.slane %v4220, 5
  %v4223 = vor.u32 %v4219, %v4222
  %v4224 = vrot.slane %v4223, 4
  %v4226 = vshll.u32 %v206, 16
  %v4228 = vrot.slane %v4226, 5
  %v4229 = vsel %vm316, %v4224, %v4228
  %v4230 = vshrl.u32 %v206, 16
  %v4232 = vrot.slane %v4230, 4
  %v4233 = vor.u32 %v4232, %v4228
  %v4234 = vrot.slane %v4233, 4
  %v4236 = vshll.u32 %v207, 16
  %v4238 = vrot.slane %v4236, 5
  %v4239 = vsel %vm316, %v4234, %v4238
  %v4241 = vshrl.u32 %v208, 16
  %v4243 = vrot.slane %v4241, 4
  %v4244 = vshll.u32 %v208, 16
  %v4246 = vrot.slane %v4244, 5
  %v4247 = vor.u32 %v4243, %v4246
  %v4248 = vrot.slane %v4247, 4
  %v4250 = vshll.u32 %v209, 16
  %v4252 = vrot.slane %v4250, 5
  %v4253 = vsel %vm316, %v4248, %v4252
  %v4254 = vshrl.u32 %v209, 16
  %v4256 = vrot.slane %v4254, 4
  %v4257 = vor.u32 %v4256, %v4252
  %v4258 = vrot.slane %v4257, 4
  %v4260 = vshll.u32 %v210, 16
  %v4262 = vrot.slane %v4260, 5
  %v4263 = vsel %vm316, %v4258, %v4262
  %v4265 = vshrl.u32 %v211, 16
  %v4267 = vrot.slane %v4265, 4
  %v4268 = vshll.u32 %v211, 16
  %v4270 = vrot.slane %v4268, 5
  %v4271 = vor.u32 %v4267, %v4270
  %v4272 = vrot.slane %v4271, 4
  %v4274 = vshll.u32 %v212, 16
  %v4276 = vrot.slane %v4274, 5
  %v4277 = vsel %vm316, %v4272, %v4276
  %v4278 = vshrl.u32 %v212, 16
  %v4280 = vrot.slane %v4278, 4
  %v4281 = vor.u32 %v4280, %v4276
  %v4282 = vrot.slane %v4281, 4
  %v4284 = vshll.u32 %v213, 16
  %v4286 = vrot.slane %v4284, 5
  %v4287 = vsel %vm316, %v4282, %v4286
  %v4289 = vshrl.u32 %v214, 16
  %v4291 = vrot.slane %v4289, 4
  %v4292 = vshll.u32 %v214, 16
  %v4294 = vrot.slane %v4292, 5
  %v4295 = vor.u32 %v4291, %v4294
  %v4296 = vrot.slane %v4295, 4
  %v4298 = vshll.u32 %v215, 16
  %v4300 = vrot.slane %v4298, 5
  %v4301 = vsel %vm316, %v4296, %v4300
  %v4302 = vshrl.u32 %v215, 16
  %v4304 = vrot.slane %v4302, 4
  %v4305 = vor.u32 %v4304, %v4300
  %v4306 = vrot.slane %v4305, 4
  %v4308 = vshll.u32 %v216, 16
  %v4310 = vrot.slane %v4308, 5
  %v4311 = vsel %vm316, %v4306, %v4310
  %s4312 = scalar_lea.vmem %s3, 8
  %v4313 = vld [vmem:[%s4312] sm:$0x3]
  %v4314 = vunpack.c.l.b16 %v3557
  %v4315 = vunpack.c.l.b16 %v3567
  %v4316 = vunpack.c.l.b16 %v3581
  %v4317 = vunpack.c.l.b16 %v3591
  %v4318 = vunpack.c.l.b16 %v3605
  %v4319 = vunpack.c.l.b16 %v3615
  %v4320 = vunpack.c.l.b16 %v3629
  %v4321 = vunpack.c.l.b16 %v3639
  %v4322 = vunpack.c.l.b16 %v3653
  %v4323 = vunpack.c.l.b16 %v3663
  %v4324 = vunpack.c.l.b16 %v3677
  %v4325 = vunpack.c.l.b16 %v3687
  %v4326 = vunpack.c.l.b16 %v3701
  %v4327 = vunpack.c.l.b16 %v3711
  %v4328 = vunpack.c.l.b16 %v3725
  %v4329 = vunpack.c.l.b16 %v3735
  %v4330 = vunpack.c.l.b16 %v3749
  %v4331 = vunpack.c.l.b16 %v3759
  %v4332 = vunpack.c.l.b16 %v3773
  %v4333 = vunpack.c.l.b16 %v3783
  %v4334 = vunpack.c.l.b16 %v3797
  %v4335 = vunpack.c.l.b16 %v3807
  %v4336 = vunpack.c.l.b16 %v3821
  %v4337 = vunpack.c.l.b16 %v3831
  %v4338 = vunpack.c.l.b16 %v3845
  %v4339 = vunpack.c.l.b16 %v3855
  %v4340 = vunpack.c.l.b16 %v3869
  %v4341 = vunpack.c.l.b16 %v3879
  %v4342 = vunpack.c.l.b16 %v3893
  %v4343 = vunpack.c.l.b16 %v3903
  %v4344 = vunpack.c.l.b16 %v3917
  %v4345 = vunpack.c.l.b16 %v3927
  %v4346 = vunpack.c.l.b16 %v3941
  %v4347 = vunpack.c.l.b16 %v3951
  %v4348 = vunpack.c.l.b16 %v3965
  %v4349 = vunpack.c.l.b16 %v3975
  %v4350 = vunpack.c.l.b16 %v3989
  %v4351 = vunpack.c.l.b16 %v3999
  %v4352 = vunpack.c.l.b16 %v4013
  %v4353 = vunpack.c.l.b16 %v4023
  %v4354 = vunpack.c.l.b16 %v4037
  %v4355 = vunpack.c.l.b16 %v4047
  %v4356 = vunpack.c.l.b16 %v4061
  %v4357 = vunpack.c.l.b16 %v4071
  %v4358 = vunpack.c.l.b16 %v4085
  %v4359 = vunpack.c.l.b16 %v4095
  %v4360 = vunpack.c.l.b16 %v4109
  %v4361 = vunpack.c.l.b16 %v4119
  %v4362 = vunpack.c.l.b16 %v4133
  %v4363 = vunpack.c.l.b16 %v4143
  %v4364 = vunpack.c.l.b16 %v4157
  %v4365 = vunpack.c.l.b16 %v4167
  %v4366 = vunpack.c.l.b16 %v4181
  %v4367 = vunpack.c.l.b16 %v4191
  %v4368 = vunpack.c.l.b16 %v4205
  %v4369 = vunpack.c.l.b16 %v4215
  %v4370 = vunpack.c.l.b16 %v4229
  %v4371 = vunpack.c.l.b16 %v4239
  %v4372 = vunpack.c.l.b16 %v4253
  %v4373 = vunpack.c.l.b16 %v4263
  %v4374 = vunpack.c.l.b16 %v4277
  %v4375 = vunpack.c.l.b16 %v4287
  %v4376 = vunpack.c.l.b16 %v4301
  %v4377 = vunpack.c.l.b16 %v4311
  %v4378 = vpack.c.b16 %v4315, %v4314
  %v4379 = vpack.c.b16 %v4317, %v4316
  %v4380 = vpack.c.b16 %v4319, %v4318
  %v4381 = vpack.c.b16 %v4321, %v4320
  %v4382 = vpack.c.b16 %v4323, %v4322
  %v4383 = vpack.c.b16 %v4325, %v4324
  %v4384 = vpack.c.b16 %v4327, %v4326
  %v4385 = vpack.c.b16 %v4329, %v4328
  %v4386 = vpack.c.b16 %v4331, %v4330
  %v4387 = vpack.c.b16 %v4333, %v4332
  %v4388 = vpack.c.b16 %v4335, %v4334
  %v4389 = vpack.c.b16 %v4337, %v4336
  %v4390 = vpack.c.b16 %v4339, %v4338
  %v4391 = vpack.c.b16 %v4341, %v4340
  %v4392 = vpack.c.b16 %v4343, %v4342
  %v4393 = vpack.c.b16 %v4345, %v4344
  %v4394 = vpack.c.b16 %v4347, %v4346
  %v4395 = vpack.c.b16 %v4349, %v4348
  %v4396 = vpack.c.b16 %v4351, %v4350
  %v4397 = vpack.c.b16 %v4353, %v4352
  %v4398 = vpack.c.b16 %v4355, %v4354
  %v4399 = vpack.c.b16 %v4357, %v4356
  %v4400 = vpack.c.b16 %v4359, %v4358
  %v4401 = vpack.c.b16 %v4361, %v4360
  %v4402 = vpack.c.b16 %v4363, %v4362
  %v4403 = vpack.c.b16 %v4365, %v4364
  %v4404 = vpack.c.b16 %v4367, %v4366
  %v4405 = vpack.c.b16 %v4369, %v4368
  %v4406 = vpack.c.b16 %v4371, %v4370
  %v4407 = vpack.c.b16 %v4373, %v4372
  %v4408 = vpack.c.b16 %v4375, %v4374
  %v4409 = vpack.c.b16 %v4377, %v4376
  %v4411 = vsel %vm1183, %v4378, 0
  %v4414 = vsel %vm1183, %v4379, 0
  %v4417 = vsel %vm1183, %v4380, 0
  %v4420 = vsel %vm1183, %v4381, 0
  %v4423 = vsel %vm1183, %v4382, 0
  %v4426 = vsel %vm1183, %v4383, 0
  %v4429 = vsel %vm1183, %v4384, 0
  %v4432 = vsel %vm1183, %v4385, 0
  %v4435 = vsel %vm1183, %v4386, 0
  %v4438 = vsel %vm1183, %v4387, 0
  %v4441 = vsel %vm1183, %v4388, 0
  %v4444 = vsel %vm1183, %v4389, 0
  %v4447 = vsel %vm1183, %v4390, 0
  %v4450 = vsel %vm1183, %v4391, 0
  %v4453 = vsel %vm1183, %v4392, 0
  %v4456 = vsel %vm1183, %v4393, 0
  %v4459 = vsel %vm1183, %v4394, 0
  %v4462 = vsel %vm1183, %v4395, 0
  %v4465 = vsel %vm1183, %v4396, 0
  %v4468 = vsel %vm1183, %v4397, 0
  %v4471 = vsel %vm1183, %v4398, 0
  %v4474 = vsel %vm1183, %v4399, 0
  %v4477 = vsel %vm1183, %v4400, 0
  %v4480 = vsel %vm1183, %v4401, 0
  %v4483 = vsel %vm1183, %v4402, 0
  %v4486 = vsel %vm1183, %v4403, 0
  %v4489 = vsel %vm1183, %v4404, 0
  %v4492 = vsel %vm1183, %v4405, 0
  %v4495 = vsel %vm1183, %v4406, 0
  %v4498 = vsel %vm1183, %v4407, 0
  %v4501 = vsel %vm1183, %v4408, 0
  %v4504 = vsel %vm1183, %v4409, 0
  %v4507 = vsel %vm1280, %v4313, 0
  %4509 = vmatprep.subr.bf16.mxu0 0
  %4510 = vmatpush1.bf16.msra.mxu0 %v4507
  %4511 = vmatprep.subr.bf16.mxu0 0
  %4512 = vmatpush1.bf16.msra.mxu0 0
  %4513 = vmatprep.subr.bf16.mxu0 0
  %4514 = vmatpush1.bf16.msra.mxu0 0
  %4515 = vmatprep.subr.bf16.mxu0 0
  %4516 = vmatpush1.bf16.msra.mxu0 0
  %4517 = vmatprep.subr.bf16.mxu0 0
  %4518 = vmatpush1.bf16.msra.mxu0 0
  %4519 = vmatprep.subr.bf16.mxu0 0
  %4520 = vmatpush1.bf16.msra.mxu0 0
  %4521 = vmatprep.subr.bf16.mxu0 0
  %4522 = vmatpush1.bf16.msra.mxu0 0
  %4523 = vmatprep.subr.bf16.mxu0 0
  %4524 = vmatpush1.bf16.msra.mxu0 0
  %4525 = vmatprep.subr.bf16.mxu0 0
  %4526 = vmatpush1.bf16.msra.mxu0 0
  %4527 = vmatprep.subr.bf16.mxu0 0
  %4528 = vmatpush1.bf16.msra.mxu0 0
  %4529 = vmatprep.subr.bf16.mxu0 0
  %4530 = vmatpush1.bf16.msra.mxu0 0
  %4531 = vmatprep.subr.bf16.mxu0 0
  %4532 = vmatpush1.bf16.msra.mxu0 0
  %4533 = vmatprep.subr.bf16.mxu0 0
  %4534 = vmatpush1.bf16.msra.mxu0 0
  %4535 = vmatprep.subr.bf16.mxu0 0
  %4536 = vmatpush1.bf16.msra.mxu0 0
  %4537 = vmatprep.subr.bf16.mxu0 0
  %4538 = vmatpush1.bf16.msra.mxu0 0
  %4539 = vmatprep.subr.bf16.mxu0 0
  %4540 = vmatpush1.bf16.msra.mxu0 0
  %4541 = vmatprep.mubr.bf16.mxu0 0
  %4542 = vmatmul.mubr.bf16.gmra.mrb[0].mxu0 %v4411
  %v4543 = vpop.f32.mrb[0].mxu0
  %v4544 = vadd.f32 0.0, %v4543
  %v4545 = vpop.f32.mrb[0].mxu0
  %v4546 = vpop.f32.mrb[0].mxu0
  %v4547 = vadd.f32 0.0, %v4546
  %v4548 = vpop.f32.mrb[0].mxu0
  %4549 = vmatprep.mubr.bf16.mxu0 0
  %4550 = vmatmul.mubr.bf16.gmra.mrb[0].mxu0 %v4414
  %v4551 = vpop.f32.mrb[0].mxu0
  %v4552 = vadd.f32 0.0, %v4551
  %v4553 = vpop.f32.mrb[0].mxu0
  %v4554 = vpop.f32.mrb[0].mxu0
  %v4555 = vadd.f32 0.0, %v4554
  %v4556 = vpop.f32.mrb[0].mxu0
  %4557 = vmatprep.mubr.bf16.mxu0 0
  %4558 = vmatmul.mubr.bf16.gmra.mrb[0].mxu0 %v4417
  %v4559 = vpop.f32.mrb[0].mxu0
  %v4560 = vadd.f32 0.0, %v4559
  %v4561 = vpop.f32.mrb[0].mxu0
  %v4562 = vpop.f32.mrb[0].mxu0
  %v4563 = vadd.f32 0.0, %v4562
  %v4564 = vpop.f32.mrb[0].mxu0
  %4565 = vmatprep.mubr.bf16.mxu0 0
  %4566 = vmatmul.mubr.bf16.gmra.mrb[0].mxu0 %v4420
  %v4567 = vpop.f32.mrb[0].mxu0
  %v4568 = vadd.f32 0.0, %v4567
  %v4569 = vpop.f32.mrb[0].mxu0
  %v4570 = vpop.f32.mrb[0].mxu0
  %v4571 = vadd.f32 0.0, %v4570
  %v4572 = vpop.f32.mrb[0].mxu0
  %4573 = vmatprep.mubr.bf16.mxu0 0
  %4574 = vmatmul.mubr.bf16.gmra.mrb[0].mxu0 %v4423
  %v4575 = vpop.f32.mrb[0].mxu0
  %v4576 = vadd.f32 0.0, %v4575
  %v4577 = vpop.f32.mrb[0].mxu0
  %v4578 = vpop.f32.mrb[0].mxu0
  %v4579 = vadd.f32 0.0, %v4578
  %v4580 = vpop.f32.mrb[0].mxu0
  %4581 = vmatprep.mubr.bf16.mxu0 0
  %4582 = vmatmul.mubr.bf16.gmra.mrb[0].mxu0 %v4426
  %v4583 = vpop.f32.mrb[0].mxu0
  %v4584 = vadd.f32 0.0, %v4583
  %v4585 = vpop.f32.mrb[0].mxu0
  %v4586 = vpop.f32.mrb[0].mxu0
  %v4587 = vadd.f32 0.0, %v4586
  %v4588 = vpop.f32.mrb[0].mxu0
  %4589 = vmatprep.mubr.bf16.mxu0 0
  %4590 = vmatmul.mubr.bf16.gmra.mrb[0].mxu0 %v4429
  %v4591 = vpop.f32.mrb[0].mxu0
  %v4592 = vadd.f32 0.0, %v4591
  %v4593 = vpop.f32.mrb[0].mxu0
  %v4594 = vpop.f32.mrb[0].mxu0
  %v4595 = vadd.f32 0.0, %v4594
  %v4596 = vpop.f32.mrb[0].mxu0
  %4597 = vmatprep.mubr.bf16.mxu0 0
  %4598 = vmatmul.mubr.bf16.gmra.mrb[0].mxu0 %v4432
  %v4599 = vpop.f32.mrb[0].mxu0
  %v4600 = vadd.f32 0.0, %v4599
  %v4601 = vpop.f32.mrb[0].mxu0
  %v4602 = vpop.f32.mrb[0].mxu0
  %v4603 = vadd.f32 0.0, %v4602
  %v4604 = vpop.f32.mrb[0].mxu0
  %4605 = vmatprep.mubr.bf16.mxu0 0
  %4606 = vmatmul.mubr.bf16.gmra.mrb[0].mxu0 %v4435
  %v4607 = vpop.f32.mrb[0].mxu0
  %v4608 = vadd.f32 0.0, %v4607
  %v4609 = vpop.f32.mrb[0].mxu0
  %v4610 = vpop.f32.mrb[0].mxu0
  %v4611 = vadd.f32 0.0, %v4610
  %v4612 = vpop.f32.mrb[0].mxu0
  %4613 = vmatprep.mubr.bf16.mxu0 0
  %4614 = vmatmul.mubr.bf16.gmra.mrb[0].mxu0 %v4438
  %v4615 = vpop.f32.mrb[0].mxu0
  %v4616 = vadd.f32 0.0, %v4615
  %v4617 = vpop.f32.mrb[0].mxu0
  %v4618 = vpop.f32.mrb[0].mxu0
  %v4619 = vadd.f32 0.0, %v4618
  %v4620 = vpop.f32.mrb[0].mxu0
  %4621 = vmatprep.mubr.bf16.mxu0 0
  %4622 = vmatmul.mubr.bf16.gmra.mrb[0].mxu0 %v4441
  %v4623 = vpop.f32.mrb[0].mxu0
  %v4624 = vadd.f32 0.0, %v4623
  %v4625 = vpop.f32.mrb[0].mxu0
  %v4626 = vpop.f32.mrb[0].mxu0
  %v4627 = vadd.f32 0.0, %v4626
  %v4628 = vpop.f32.mrb[0].mxu0
  %4629 = vmatprep.mubr.bf16.mxu0 0
  %4630 = vmatmul.mubr.bf16.gmra.mrb[0].mxu0 %v4444
  %v4631 = vpop.f32.mrb[0].mxu0
  %v4632 = vadd.f32 0.0, %v4631
  %v4633 = vpop.f32.mrb[0].mxu0
  %v4634 = vpop.f32.mrb[0].mxu0
  %v4635 = vadd.f32 0.0, %v4634
  %v4636 = vpop.f32.mrb[0].mxu0
  %4637 = vmatprep.mubr.bf16.mxu0 0
  %4638 = vmatmul.mubr.bf16.gmra.mrb[0].mxu0 %v4447
  %v4639 = vpop.f32.mrb[0].mxu0
  %v4640 = vadd.f32 0.0, %v4639
  %v4641 = vpop.f32.mrb[0].mxu0
  %v4642 = vpop.f32.mrb[0].mxu0
  %v4643 = vadd.f32 0.0, %v4642
  %v4644 = vpop.f32.mrb[0].mxu0
  %4645 = vmatprep.mubr.bf16.mxu0 0
  %4646 = vmatmul.mubr.bf16.gmra.mrb[0].mxu0 %v4450
  %v4647 = vpop.f32.mrb[0].mxu0
  %v4648 = vadd.f32 0.0, %v4647
  %v4649 = vpop.f32.mrb[0].mxu0
  %v4650 = vpop.f32.mrb[0].mxu0
  %v4651 = vadd.f32 0.0, %v4650
  %v4652 = vpop.f32.mrb[0].mxu0
  %4653 = vmatprep.mubr.bf16.mxu0 0
  %4654 = vmatmul.mubr.bf16.gmra.mrb[0].mxu0 %v4453
  %v4655 = vpop.f32.mrb[0].mxu0
  %v4656 = vadd.f32 0.0, %v4655
  %v4657 = vpop.f32.mrb[0].mxu0
  %v4658 = vpop.f32.mrb[0].mxu0
  %v4659 = vadd.f32 0.0, %v4658
  %v4660 = vpop.f32.mrb[0].mxu0
  %4661 = vmatprep.mubr.bf16.mxu0 0
  %4662 = vmatmul.mubr.bf16.gmra.mrb[0].mxu0 %v4456
  %v4663 = vpop.f32.mrb[0].mxu0
  %v4664 = vadd.f32 0.0, %v4663
  %v4665 = vpop.f32.mrb[0].mxu0
  %v4666 = vpop.f32.mrb[0].mxu0
  %v4667 = vadd.f32 0.0, %v4666
  %v4668 = vpop.f32.mrb[0].mxu0
  %4669 = vmatprep.mubr.bf16.mxu0 0
  %4670 = vmatmul.mubr.bf16.gmra.mrb[0].mxu0 %v4459
  %v4671 = vpop.f32.mrb[0].mxu0
  %v4672 = vadd.f32 0.0, %v4671
  %v4673 = vpop.f32.mrb[0].mxu0
  %v4674 = vpop.f32.mrb[0].mxu0
  %v4675 = vadd.f32 0.0, %v4674
  %v4676 = vpop.f32.mrb[0].mxu0
  %4677 = vmatprep.mubr.bf16.mxu0 0
  %4678 = vmatmul.mubr.bf16.gmra.mrb[0].mxu0 %v4462
  %v4679 = vpop.f32.mrb[0].mxu0
  %v4680 = vadd.f32 0.0, %v4679
  %v4681 = vpop.f32.mrb[0].mxu0
  %v4682 = vpop.f32.mrb[0].mxu0
  %v4683 = vadd.f32 0.0, %v4682
  %v4684 = vpop.f32.mrb[0].mxu0
  %4685 = vmatprep.mubr.bf16.mxu0 0
  %4686 = vmatmul.mubr.bf16.gmra.mrb[0].mxu0 %v4465
  %v4687 = vpop.f32.mrb[0].mxu0
  %v4688 = vadd.f32 0.0, %v4687
  %v4689 = vpop.f32.mrb[0].mxu0
  %v4690 = vpop.f32.mrb[0].mxu0
  %v4691 = vadd.f32 0.0, %v4690
  %v4692 = vpop.f32.mrb[0].mxu0
  %4693 = vmatprep.mubr.bf16.mxu0 0
  %4694 = vmatmul.mubr.bf16.gmra.mrb[0].mxu0 %v4468
  %v4695 = vpop.f32.mrb[0].mxu0
  %v4696 = vadd.f32 0.0, %v4695
  %v4697 = vpop.f32.mrb[0].mxu0
  %v4698 = vpop.f32.mrb[0].mxu0
  %v4699 = vadd.f32 0.0, %v4698
  %v4700 = vpop.f32.mrb[0].mxu0
  %4701 = vmatprep.mubr.bf16.mxu0 0
  %4702 = vmatmul.mubr.bf16.gmra.mrb[0].mxu0 %v4471
  %v4703 = vpop.f32.mrb[0].mxu0
  %v4704 = vadd.f32 0.0, %v4703
  %v4705 = vpop.f32.mrb[0].mxu0
  %v4706 = vpop.f32.mrb[0].mxu0
  %v4707 = vadd.f32 0.0, %v4706
  %v4708 = vpop.f32.mrb[0].mxu0
  %4709 = vmatprep.mubr.bf16.mxu0 0
  %4710 = vmatmul.mubr.bf16.gmra.mrb[0].mxu0 %v4474
  %v4711 = vpop.f32.mrb[0].mxu0
  %v4712 = vadd.f32 0.0, %v4711
  %v4713 = vpop.f32.mrb[0].mxu0
  %v4714 = vpop.f32.mrb[0].mxu0
  %v4715 = vadd.f32 0.0, %v4714
  %v4716 = vpop.f32.mrb[0].mxu0
  %4717 = vmatprep.mubr.bf16.mxu0 0
  %4718 = vmatmul.mubr.bf16.gmra.mrb[0].mxu0 %v4477
  %v4719 = vpop.f32.mrb[0].mxu0
  %v4720 = vadd.f32 0.0, %v4719
  %v4721 = vpop.f32.mrb[0].mxu0
  %v4722 = vpop.f32.mrb[0].mxu0
  %v4723 = vadd.f32 0.0, %v4722
  %v4724 = vpop.f32.mrb[0].mxu0
  %4725 = vmatprep.mubr.bf16.mxu0 0
  %4726 = vmatmul.mubr.bf16.gmra.mrb[0].mxu0 %v4480
  %v4727 = vpop.f32.mrb[0].mxu0
  %v4728 = vadd.f32 0.0, %v4727
  %v4729 = vpop.f32.mrb[0].mxu0
  %v4730 = vpop.f32.mrb[0].mxu0
  %v4731 = vadd.f32 0.0, %v4730
  %v4732 = vpop.f32.mrb[0].mxu0
  %4733 = vmatprep.mubr.bf16.mxu0 0
  %4734 = vmatmul.mubr.bf16.gmra.mrb[0].mxu0 %v4483
  %v4735 = vpop.f32.mrb[0].mxu0
  %v4736 = vadd.f32 0.0, %v4735
  %v4737 = vpop.f32.mrb[0].mxu0
  %v4738 = vpop.f32.mrb[0].mxu0
  %v4739 = vadd.f32 0.0, %v4738
  %v4740 = vpop.f32.mrb[0].mxu0
  %4741 = vmatprep.mubr.bf16.mxu0 0
  %4742 = vmatmul.mubr.bf16.gmra.mrb[0].mxu0 %v4486
  %v4743 = vpop.f32.mrb[0].mxu0
  %v4744 = vadd.f32 0.0, %v4743
  %v4745 = vpop.f32.mrb[0].mxu0
  %v4746 = vpop.f32.mrb[0].mxu0
  %v4747 = vadd.f32 0.0, %v4746
  %v4748 = vpop.f32.mrb[0].mxu0
  %4749 = vmatprep.mubr.bf16.mxu0 0
  %4750 = vmatmul.mubr.bf16.gmra.mrb[0].mxu0 %v4489
  %v4751 = vpop.f32.mrb[0].mxu0
  %v4752 = vadd.f32 0.0, %v4751
  %v4753 = vpop.f32.mrb[0].mxu0
  %v4754 = vpop.f32.mrb[0].mxu0
  %v4755 = vadd.f32 0.0, %v4754
  %v4756 = vpop.f32.mrb[0].mxu0
  %4757 = vmatprep.mubr.bf16.mxu0 0
  %4758 = vmatmul.mubr.bf16.gmra.mrb[0].mxu0 %v4492
  %v4759 = vpop.f32.mrb[0].mxu0
  %v4760 = vadd.f32 0.0, %v4759
  %v4761 = vpop.f32.mrb[0].mxu0
  %v4762 = vpop.f32.mrb[0].mxu0
  %v4763 = vadd.f32 0.0, %v4762
  %v4764 = vpop.f32.mrb[0].mxu0
  %4765 = vmatprep.mubr.bf16.mxu0 0
  %4766 = vmatmul.mubr.bf16.gmra.mrb[0].mxu0 %v4495
  %v4767 = vpop.f32.mrb[0].mxu0
  %v4768 = vadd.f32 0.0, %v4767
  %v4769 = vpop.f32.mrb[0].mxu0
  %v4770 = vpop.f32.mrb[0].mxu0
  %v4771 = vadd.f32 0.0, %v4770
  %v4772 = vpop.f32.mrb[0].mxu0
  %4773 = vmatprep.mubr.bf16.mxu0 0
  %4774 = vmatmul.mubr.bf16.gmra.mrb[0].mxu0 %v4498
  %v4775 = vpop.f32.mrb[0].mxu0
  %v4776 = vadd.f32 0.0, %v4775
  %v4777 = vpop.f32.mrb[0].mxu0
  %v4778 = vpop.f32.mrb[0].mxu0
  %v4779 = vadd.f32 0.0, %v4778
  %v4780 = vpop.f32.mrb[0].mxu0
  %4781 = vmatprep.mubr.bf16.mxu0 0
  %4782 = vmatmul.mubr.bf16.gmra.mrb[0].mxu0 %v4501
  %v4783 = vpop.f32.mrb[0].mxu0
  %v4784 = vadd.f32 0.0, %v4783
  %v4785 = vpop.f32.mrb[0].mxu0
  %v4786 = vpop.f32.mrb[0].mxu0
  %v4787 = vadd.f32 0.0, %v4786
  %v4788 = vpop.f32.mrb[0].mxu0
  %4789 = vmatprep.mubr.bf16.mxu0 0
  %4790 = vmatmul.mubr.bf16.gmra.mrb[0].mxu0 %v4504
  %v4791 = vpop.f32.mrb[0].mxu0
  %v4792 = vadd.f32 0.0, %v4791
  %v4793 = vpop.f32.mrb[0].mxu0
  %v4794 = vpop.f32.mrb[0].mxu0
  %v4795 = vadd.f32 0.0, %v4794
  %v4796 = vpop.f32.mrb[0].mxu0
  %4797 = vdwg.mxu0
  %v4798 = vadd.f32 %v3480, %v4544
  %v4799 = vadd.f32 %v3481, %v4547
  %v4800 = vadd.f32 %v3482, %v4552
  %v4801 = vadd.f32 %v3483, %v4555
  %v4802 = vadd.f32 %v3484, %v4560
  %v4803 = vadd.f32 %v3485, %v4563
  %v4804 = vadd.f32 %v3486, %v4568
  %v4805 = vadd.f32 %v3487, %v4571
  %v4806 = vadd.f32 %v3488, %v4576
  %v4807 = vadd.f32 %v3489, %v4579
  %v4808 = vadd.f32 %v3490, %v4584
  %v4809 = vadd.f32 %v3491, %v4587
  %v4810 = vadd.f32 %v3492, %v4592
  %v4811 = vadd.f32 %v3493, %v4595
  %v4812 = vadd.f32 %v3494, %v4600
  %v4813 = vadd.f32 %v3495, %v4603
  %v4814 = vadd.f32 %v3496, %v4608
  %v4815 = vadd.f32 %v3497, %v4611
  %v4816 = vadd.f32 %v3498, %v4616
  %v4817 = vadd.f32 %v3499, %v4619
  %v4818 = vadd.f32 %v3500, %v4624
  %v4819 = vadd.f32 %v3501, %v4627
  %v4820 = vadd.f32 %v3502, %v4632
  %v4821 = vadd.f32 %v3503, %v4635
  %v4822 = vadd.f32 %v3504, %v4640
  %v4823 = vadd.f32 %v3505, %v4643
  %v4824 = vadd.f32 %v3506, %v4648
  %v4825 = vadd.f32 %v3507, %v4651
  %v4826 = vadd.f32 %v3508, %v4656
  %v4827 = vadd.f32 %v3509, %v4659
  %v4828 = vadd.f32 %v3510, %v4664
  %v4829 = vadd.f32 %v3511, %v4667
  %v4830 = vadd.f32 %v3512, %v4672
  %v4831 = vadd.f32 %v3513, %v4675
  %v4832 = vadd.f32 %v3514, %v4680
  %v4833 = vadd.f32 %v3515, %v4683
  %v4834 = vadd.f32 %v3516, %v4688
  %v4835 = vadd.f32 %v3517, %v4691
  %v4836 = vadd.f32 %v3518, %v4696
  %v4837 = vadd.f32 %v3519, %v4699
  %v4838 = vadd.f32 %v3520, %v4704
  %v4839 = vadd.f32 %v3521, %v4707
  %v4840 = vadd.f32 %v3522, %v4712
  %v4841 = vadd.f32 %v3523, %v4715
  %v4842 = vadd.f32 %v3524, %v4720
  %v4843 = vadd.f32 %v3525, %v4723
  %v4844 = vadd.f32 %v3526, %v4728
  %v4845 = vadd.f32 %v3527, %v4731
  %v4846 = vadd.f32 %v3528, %v4736
  %v4847 = vadd.f32 %v3529, %v4739
  %v4848 = vadd.f32 %v3530, %v4744
  %v4849 = vadd.f32 %v3531, %v4747
  %v4850 = vadd.f32 %v3532, %v4752
  %v4851 = vadd.f32 %v3533, %v4755
  %v4852 = vadd.f32 %v3534, %v4760
  %v4853 = vadd.f32 %v3535, %v4763
  %v4854 = vadd.f32 %v3536, %v4768
  %v4855 = vadd.f32 %v3537, %v4771
  %v4856 = vadd.f32 %v3538, %v4776
  %v4857 = vadd.f32 %v3539, %v4779
  %v4858 = vadd.f32 %v3540, %v4784
  %v4859 = vadd.f32 %v3541, %v4787
  %v4860 = vadd.f32 %v3542, %v4792
  %v4861 = vadd.f32 %v3543, %v4795
  %v4894 = vrot.slane %v121, 5
  %v4895 = vrot.slane %v4894, 4
  %v4896 = vrot.slane %v122, 5
  %v4897 = vsel %vm2155, %v4895, %v4896
  %v4898 = vrot.slane %v4896, 4
  %v4899 = vrot.slane %v123, 5
  %v4900 = vsel %vm2155, %v4898, %v4899
  %v4901 = vrot.slane %v124, 5
  %v4902 = vrot.slane %v4901, 4
  %v4903 = vrot.slane %v125, 5
  %v4904 = vsel %vm2155, %v4902, %v4903
  %v4905 = vrot.slane %v4903, 4
  %v4906 = vrot.slane %v126, 5
  %v4907 = vsel %vm2155, %v4905, %v4906
  %v4908 = vrot.slane %v127, 5
  %v4909 = vrot.slane %v4908, 4
  %v4910 = vrot.slane %v128, 5
  %v4911 = vsel %vm2155, %v4909, %v4910
  %v4912 = vrot.slane %v4910, 4
  %v4913 = vrot.slane %v129, 5
  %v4914 = vsel %vm2155, %v4912, %v4913
  %v4915 = vrot.slane %v130, 5
  %v4916 = vrot.slane %v4915, 4
  %v4917 = vrot.slane %v131, 5
  %v4918 = vsel %vm2155, %v4916, %v4917
  %v4919 = vrot.slane %v4917, 4
  %v4920 = vrot.slane %v132, 5
  %v4921 = vsel %vm2155, %v4919, %v4920
  %v4922 = vrot.slane %v133, 5
  %v4923 = vrot.slane %v4922, 4
  %v4924 = vrot.slane %v134, 5
  %v4925 = vsel %vm2155, %v4923, %v4924
  %v4926 = vrot.slane %v4924, 4
  %v4927 = vrot.slane %v135, 5
  %v4928 = vsel %vm2155, %v4926, %v4927
  %v4929 = vrot.slane %v136, 5
  %v4930 = vrot.slane %v4929, 4
  %v4931 = vrot.slane %v137, 5
  %v4932 = vsel %vm2155, %v4930, %v4931
  %v4933 = vrot.slane %v4931, 4
  %v4934 = vrot.slane %v138, 5
  %v4935 = vsel %vm2155, %v4933, %v4934
  %v4936 = vrot.slane %v139, 5
  %v4937 = vrot.slane %v4936, 4
  %v4938 = vrot.slane %v140, 5
  %v4939 = vsel %vm2155, %v4937, %v4938
  %v4940 = vrot.slane %v4938, 4
  %v4941 = vrot.slane %v141, 5
  %v4942 = vsel %vm2155, %v4940, %v4941
  %v4943 = vrot.slane %v142, 5
  %v4944 = vrot.slane %v4943, 4
  %v4945 = vrot.slane %v143, 5
  %v4946 = vsel %vm2155, %v4944, %v4945
  %v4947 = vrot.slane %v4945, 4
  %v4948 = vrot.slane %v144, 5
  %v4949 = vsel %vm2155, %v4947, %v4948
  %v4950 = vrot.slane %v145, 5
  %v4951 = vrot.slane %v4950, 4
  %v4952 = vrot.slane %v146, 5
  %v4953 = vsel %vm2155, %v4951, %v4952
  %v4954 = vrot.slane %v4952, 4
  %v4955 = vrot.slane %v147, 5
  %v4956 = vsel %vm2155, %v4954, %v4955
  %v4957 = vrot.slane %v148, 5
  %v4958 = vrot.slane %v4957, 4
  %v4959 = vrot.slane %v149, 5
  %v4960 = vsel %vm2155, %v4958, %v4959
  %v4961 = vrot.slane %v4959, 4
  %v4962 = vrot.slane %v150, 5
  %v4963 = vsel %vm2155, %v4961, %v4962
  %v4964 = vrot.slane %v151, 5
  %v4965 = vrot.slane %v4964, 4
  %v4966 = vrot.slane %v152, 5
  %v4967 = vsel %vm2155, %v4965, %v4966
  %v4968 = vrot.slane %v4966, 4
  %v4969 = vrot.slane %v153, 5
  %v4970 = vsel %vm2155, %v4968, %v4969
  %v4971 = vrot.slane %v154, 5
  %v4972 = vrot.slane %v4971, 4
  %v4973 = vrot.slane %v155, 5
  %v4974 = vsel %vm2155, %v4972, %v4973
  %v4975 = vrot.slane %v4973, 4
  %v4976 = vrot.slane %v156, 5
  %v4977 = vsel %vm2155, %v4975, %v4976
  %v4978 = vrot.slane %v157, 5
  %v4979 = vrot.slane %v4978, 4
  %v4980 = vrot.slane %v158, 5
  %v4981 = vsel %vm2155, %v4979, %v4980
  %v4982 = vrot.slane %v4980, 4
  %v4983 = vrot.slane %v159, 5
  %v4984 = vsel %vm2155, %v4982, %v4983
  %v4985 = vrot.slane %v160, 5
  %v4986 = vrot.slane %v4985, 4
  %v4987 = vrot.slane %v161, 5
  %v4988 = vsel %vm2155, %v4986, %v4987
  %v4989 = vrot.slane %v4987, 4
  %v4990 = vrot.slane %v162, 5
  %v4991 = vsel %vm2155, %v4989, %v4990
  %v4992 = vrot.slane %v163, 5
  %v4993 = vrot.slane %v4992, 4
  %v4994 = vrot.slane %v164, 5
  %v4995 = vsel %vm2155, %v4993, %v4994
  %v4996 = vrot.slane %v4994, 4
  %v4997 = vrot.slane %v165, 5
  %v4998 = vsel %vm2155, %v4996, %v4997
  %v4999 = vrot.slane %v166, 5
  %v5000 = vrot.slane %v4999, 4
  %v5001 = vrot.slane %v167, 5
  %v5002 = vsel %vm2155, %v5000, %v5001
  %v5003 = vrot.slane %v5001, 4
  %v5004 = vrot.slane %v168, 5
  %v5005 = vsel %vm2155, %v5003, %v5004
  %v5006 = vrot.slane %v169, 5
  %v5007 = vrot.slane %v5006, 4
  %v5008 = vrot.slane %v170, 5
  %v5009 = vsel %vm2155, %v5007, %v5008
  %v5010 = vrot.slane %v5008, 4
  %v5011 = vrot.slane %v171, 5
  %v5012 = vsel %vm2155, %v5010, %v5011
  %v5013 = vrot.slane %v172, 5
  %v5014 = vrot.slane %v5013, 4
  %v5015 = vrot.slane %v173, 5
  %v5016 = vsel %vm2155, %v5014, %v5015
  %v5017 = vrot.slane %v5015, 4
  %v5018 = vrot.slane %v174, 5
  %v5019 = vsel %vm2155, %v5017, %v5018
  %v5020 = vrot.slane %v175, 5
  %v5021 = vrot.slane %v5020, 4
  %v5022 = vrot.slane %v176, 5
  %v5023 = vsel %vm2155, %v5021, %v5022
  %v5024 = vrot.slane %v5022, 4
  %v5025 = vrot.slane %v177, 5
  %v5026 = vsel %vm2155, %v5024, %v5025
  %v5027 = vrot.slane %v178, 5
  %v5028 = vrot.slane %v5027, 4
  %v5029 = vrot.slane %v179, 5
  %v5030 = vsel %vm2155, %v5028, %v5029
  %v5031 = vrot.slane %v5029, 4
  %v5032 = vrot.slane %v180, 5
  %v5033 = vsel %vm2155, %v5031, %v5032
  %v5034 = vrot.slane %v181, 5
  %v5035 = vrot.slane %v5034, 4
  %v5036 = vrot.slane %v182, 5
  %v5037 = vsel %vm2155, %v5035, %v5036
  %v5038 = vrot.slane %v5036, 4
  %v5039 = vrot.slane %v183, 5
  %v5040 = vsel %vm2155, %v5038, %v5039
  %v5041 = vrot.slane %v184, 5
  %v5042 = vrot.slane %v5041, 4
  %v5043 = vrot.slane %v185, 5
  %v5044 = vsel %vm2155, %v5042, %v5043
  %v5045 = vrot.slane %v5043, 4
  %v5046 = vrot.slane %v186, 5
  %v5047 = vsel %vm2155, %v5045, %v5046
  %v5048 = vrot.slane %v187, 5
  %v5049 = vrot.slane %v5048, 4
  %v5050 = vrot.slane %v188, 5
  %v5051 = vsel %vm2155, %v5049, %v5050
  %v5052 = vrot.slane %v5050, 4
  %v5053 = vrot.slane %v189, 5
  %v5054 = vsel %vm2155, %v5052, %v5053
  %v5055 = vrot.slane %v190, 5
  %v5056 = vrot.slane %v5055, 4
  %v5057 = vrot.slane %v191, 5
  %v5058 = vsel %vm2155, %v5056, %v5057
  %v5059 = vrot.slane %v5057, 4
  %v5060 = vrot.slane %v192, 5
  %v5061 = vsel %vm2155, %v5059, %v5060
  %v5062 = vrot.slane %v193, 5
  %v5063 = vrot.slane %v5062, 4
  %v5064 = vrot.slane %v194, 5
  %v5065 = vsel %vm2155, %v5063, %v5064
  %v5066 = vrot.slane %v5064, 4
  %v5067 = vrot.slane %v195, 5
  %v5068 = vsel %vm2155, %v5066, %v5067
  %v5069 = vrot.slane %v196, 5
  %v5070 = vrot.slane %v5069, 4
  %v5071 = vrot.slane %v197, 5
  %v5072 = vsel %vm2155, %v5070, %v5071
  %v5073 = vrot.slane %v5071, 4
  %v5074 = vrot.slane %v198, 5
  %v5075 = vsel %vm2155, %v5073, %v5074
  %v5076 = vrot.slane %v199, 5
  %v5077 = vrot.slane %v5076, 4
  %v5078 = vrot.slane %v200, 5
  %v5079 = vsel %vm2155, %v5077, %v5078
  %v5080 = vrot.slane %v5078, 4
  %v5081 = vrot.slane %v201, 5
  %v5082 = vsel %vm2155, %v5080, %v5081
  %v5083 = vrot.slane %v202, 5
  %v5084 = vrot.slane %v5083, 4
  %v5085 = vrot.slane %v203, 5
  %v5086 = vsel %vm2155, %v5084, %v5085
  %v5087 = vrot.slane %v5085, 4
  %v5088 = vrot.slane %v204, 5
  %v5089 = vsel %vm2155, %v5087, %v5088
  %v5090 = vrot.slane %v205, 5
  %v5091 = vrot.slane %v5090, 4
  %v5092 = vrot.slane %v206, 5
  %v5093 = vsel %vm2155, %v5091, %v5092
  %v5094 = vrot.slane %v5092, 4
  %v5095 = vrot.slane %v207, 5
  %v5096 = vsel %vm2155, %v5094, %v5095
  %v5097 = vrot.slane %v208, 5
  %v5098 = vrot.slane %v5097, 4
  %v5099 = vrot.slane %v209, 5
  %v5100 = vsel %vm2155, %v5098, %v5099
  %v5101 = vrot.slane %v5099, 4
  %v5102 = vrot.slane %v210, 5
  %v5103 = vsel %vm2155, %v5101, %v5102
  %v5104 = vrot.slane %v211, 5
  %v5105 = vrot.slane %v5104, 4
  %v5106 = vrot.slane %v212, 5
  %v5107 = vsel %vm2155, %v5105, %v5106
  %v5108 = vrot.slane %v5106, 4
  %v5109 = vrot.slane %v213, 5
  %v5110 = vsel %vm2155, %v5108, %v5109
  %v5111 = vrot.slane %v214, 5
  %v5112 = vrot.slane %v5111, 4
  %v5113 = vrot.slane %v215, 5
  %v5114 = vsel %vm2155, %v5112, %v5113
  %v5115 = vrot.slane %v5113, 4
  %v5116 = vrot.slane %v216, 5
  %v5117 = vsel %vm2155, %v5115, %v5116
  %s5118 = scalar_lea.vmem %s3, 10
  %v5119 = vld [vmem:[%s5118] sm:$0x3]
  %v5120 = vunpack.c.l.b16 %v4897
  %v5121 = vunpack.c.l.b16 %v4900
  %v5122 = vunpack.c.l.b16 %v4904
  %v5123 = vunpack.c.l.b16 %v4907
  %v5124 = vunpack.c.l.b16 %v4911
  %v5125 = vunpack.c.l.b16 %v4914
  %v5126 = vunpack.c.l.b16 %v4918
  %v5127 = vunpack.c.l.b16 %v4921
  %v5128 = vunpack.c.l.b16 %v4925
  %v5129 = vunpack.c.l.b16 %v4928
  %v5130 = vunpack.c.l.b16 %v4932
  %v5131 = vunpack.c.l.b16 %v4935
  %v5132 = vunpack.c.l.b16 %v4939
  %v5133 = vunpack.c.l.b16 %v4942
  %v5134 = vunpack.c.l.b16 %v4946
  %v5135 = vunpack.c.l.b16 %v4949
  %v5136 = vunpack.c.l.b16 %v4953
  %v5137 = vunpack.c.l.b16 %v4956
  %v5138 = vunpack.c.l.b16 %v4960
  %v5139 = vunpack.c.l.b16 %v4963
  %v5140 = vunpack.c.l.b16 %v4967
  %v5141 = vunpack.c.l.b16 %v4970
  %v5142 = vunpack.c.l.b16 %v4974
  %v5143 = vunpack.c.l.b16 %v4977
  %v5144 = vunpack.c.l.b16 %v4981
  %v5145 = vunpack.c.l.b16 %v4984
  %v5146 = vunpack.c.l.b16 %v4988
  %v5147 = vunpack.c.l.b16 %v4991
  %v5148 = vunpack.c.l.b16 %v4995
  %v5149 = vunpack.c.l.b16 %v4998
  %v5150 = vunpack.c.l.b16 %v5002
  %v5151 = vunpack.c.l.b16 %v5005
  %v5152 = vunpack.c.l.b16 %v5009
  %v5153 = vunpack.c.l.b16 %v5012
  %v5154 = vunpack.c.l.b16 %v5016
  %v5155 = vunpack.c.l.b16 %v5019
  %v5156 = vunpack.c.l.b16 %v5023
  %v5157 = vunpack.c.l.b16 %v5026
  %v5158 = vunpack.c.l.b16 %v5030
  %v5159 = vunpack.c.l.b16 %v5033
  %v5160 = vunpack.c.l.b16 %v5037
  %v5161 = vunpack.c.l.b16 %v5040
  %v5162 = vunpack.c.l.b16 %v5044
  %v5163 = vunpack.c.l.b16 %v5047
  %v5164 = vunpack.c.l.b16 %v5051
  %v5165 = vunpack.c.l.b16 %v5054
  %v5166 = vunpack.c.l.b16 %v5058
  %v5167 = vunpack.c.l.b16 %v5061
  %v5168 = vunpack.c.l.b16 %v5065
  %v5169 = vunpack.c.l.b16 %v5068
  %v5170 = vunpack.c.l.b16 %v5072
  %v5171 = vunpack.c.l.b16 %v5075
  %v5172 = vunpack.c.l.b16 %v5079
  %v5173 = vunpack.c.l.b16 %v5082
  %v5174 = vunpack.c.l.b16 %v5086
  %v5175 = vunpack.c.l.b16 %v5089
  %v5176 = vunpack.c.l.b16 %v5093
  %v5177 = vunpack.c.l.b16 %v5096
  %v5178 = vunpack.c.l.b16 %v5100
  %v5179 = vunpack.c.l.b16 %v5103
  %v5180 = vunpack.c.l.b16 %v5107
  %v5181 = vunpack.c.l.b16 %v5110
  %v5182 = vunpack.c.l.b16 %v5114
  %v5183 = vunpack.c.l.b16 %v5117
  %v5184 = vpack.c.b16 %v5121, %v5120
  %v5185 = vpack.c.b16 %v5123, %v5122
  %v5186 = vpack.c.b16 %v5125, %v5124
  %v5187 = vpack.c.b16 %v5127, %v5126
  %v5188 = vpack.c.b16 %v5129, %v5128
  %v5189 = vpack.c.b16 %v5131, %v5130
  %v5190 = vpack.c.b16 %v5133, %v5132
  %v5191 = vpack.c.b16 %v5135, %v5134
  %v5192 = vpack.c.b16 %v5137, %v5136
  %v5193 = vpack.c.b16 %v5139, %v5138
  %v5194 = vpack.c.b16 %v5141, %v5140
  %v5195 = vpack.c.b16 %v5143, %v5142
  %v5196 = vpack.c.b16 %v5145, %v5144
  %v5197 = vpack.c.b16 %v5147, %v5146
  %v5198 = vpack.c.b16 %v5149, %v5148
  %v5199 = vpack.c.b16 %v5151, %v5150
  %v5200 = vpack.c.b16 %v5153, %v5152
  %v5201 = vpack.c.b16 %v5155, %v5154
  %v5202 = vpack.c.b16 %v5157, %v5156
  %v5203 = vpack.c.b16 %v5159, %v5158
  %v5204 = vpack.c.b16 %v5161, %v5160
  %v5205 = vpack.c.b16 %v5163, %v5162
  %v5206 = vpack.c.b16 %v5165, %v5164
  %v5207 = vpack.c.b16 %v5167, %v5166
  %v5208 = vpack.c.b16 %v5169, %v5168
  %v5209 = vpack.c.b16 %v5171, %v5170
  %v5210 = vpack.c.b16 %v5173, %v5172
  %v5211 = vpack.c.b16 %v5175, %v5174
  %v5212 = vpack.c.b16 %v5177, %v5176
  %v5213 = vpack.c.b16 %v5179, %v5178
  %v5214 = vpack.c.b16 %v5181, %v5180
  %v5215 = vpack.c.b16 %v5183, %v5182
  %v5217 = vsel %vm1183, %v5184, 0
  %v5220 = vsel %vm1183, %v5185, 0
  %v5223 = vsel %vm1183, %v5186, 0
  %v5226 = vsel %vm1183, %v5187, 0
  %v5229 = vsel %vm1183, %v5188, 0
  %v5232 = vsel %vm1183, %v5189, 0
  %v5235 = vsel %vm1183, %v5190, 0
  %v5238 = vsel %vm1183, %v5191, 0
  %v5241 = vsel %vm1183, %v5192, 0
  %v5244 = vsel %vm1183, %v5193, 0
  %v5247 = vsel %vm1183, %v5194, 0
  %v5250 = vsel %vm1183, %v5195, 0
  %v5253 = vsel %vm1183, %v5196, 0
  %v5256 = vsel %vm1183, %v5197, 0
  %v5259 = vsel %vm1183, %v5198, 0
  %v5262 = vsel %vm1183, %v5199, 0
  %v5265 = vsel %vm1183, %v5200, 0
  %v5268 = vsel %vm1183, %v5201, 0
  %v5271 = vsel %vm1183, %v5202, 0
  %v5274 = vsel %vm1183, %v5203, 0
  %v5277 = vsel %vm1183, %v5204, 0
  %v5280 = vsel %vm1183, %v5205, 0
  %v5283 = vsel %vm1183, %v5206, 0
  %v5286 = vsel %vm1183, %v5207, 0
  %v5289 = vsel %vm1183, %v5208, 0
  %v5292 = vsel %vm1183, %v5209, 0
  %v5295 = vsel %vm1183, %v5210, 0
  %v5298 = vsel %vm1183, %v5211, 0
  %v5301 = vsel %vm1183, %v5212, 0
  %v5304 = vsel %vm1183, %v5213, 0
  %v5307 = vsel %vm1183, %v5214, 0
  %v5310 = vsel %vm1183, %v5215, 0
  %v5313 = vsel %vm1280, %v5119, 0
  %5315 = vmatprep.subr.bf16.mxu0 0
  %5316 = vmatpush1.bf16.msra.mxu0 %v5313
  %5317 = vmatprep.subr.bf16.mxu0 0
  %5318 = vmatpush1.bf16.msra.mxu0 0
  %5319 = vmatprep.subr.bf16.mxu0 0
  %5320 = vmatpush1.bf16.msra.mxu0 0
  %5321 = vmatprep.subr.bf16.mxu0 0
  %5322 = vmatpush1.bf16.msra.mxu0 0
  %5323 = vmatprep.subr.bf16.mxu0 0
  %5324 = vmatpush1.bf16.msra.mxu0 0
  %5325 = vmatprep.subr.bf16.mxu0 0
  %5326 = vmatpush1.bf16.msra.mxu0 0
  %5327 = vmatprep.subr.bf16.mxu0 0
  %5328 = vmatpush1.bf16.msra.mxu0 0
  %5329 = vmatprep.subr.bf16.mxu0 0
  %5330 = vmatpush1.bf16.msra.mxu0 0
  %5331 = vmatprep.subr.bf16.mxu0 0
  %5332 = vmatpush1.bf16.msra.mxu0 0
  %5333 = vmatprep.subr.bf16.mxu0 0
  %5334 = vmatpush1.bf16.msra.mxu0 0
  %5335 = vmatprep.subr.bf16.mxu0 0
  %5336 = vmatpush1.bf16.msra.mxu0 0
  %5337 = vmatprep.subr.bf16.mxu0 0
  %5338 = vmatpush1.bf16.msra.mxu0 0
  %5339 = vmatprep.subr.bf16.mxu0 0
  %5340 = vmatpush1.bf16.msra.mxu0 0
  %5341 = vmatprep.subr.bf16.mxu0 0
  %5342 = vmatpush1.bf16.msra.mxu0 0
  %5343 = vmatprep.subr.bf16.mxu0 0
  %5344 = vmatpush1.bf16.msra.mxu0 0
  %5345 = vmatprep.subr.bf16.mxu0 0
  %5346 = vmatpush1.bf16.msra.mxu0 0
  %5347 = vmatprep.mubr.bf16.mxu0 0
  %5348 = vmatmul.mubr.bf16.gmra.mrb[0].mxu0 %v5217
  %v5349 = vpop.f32.mrb[0].mxu0
  %v5350 = vadd.f32 0.0, %v5349
  %v5351 = vpop.f32.mrb[0].mxu0
  %v5352 = vpop.f32.mrb[0].mxu0
  %v5353 = vadd.f32 0.0, %v5352
  %v5354 = vpop.f32.mrb[0].mxu0
  %5355 = vmatprep.mubr.bf16.mxu0 0
  %5356 = vmatmul.mubr.bf16.gmra.mrb[0].mxu0 %v5220
  %v5357 = vpop.f32.mrb[0].mxu0
  %v5358 = vadd.f32 0.0, %v5357
  %v5359 = vpop.f32.mrb[0].mxu0
  %v5360 = vpop.f32.mrb[0].mxu0
  %v5361 = vadd.f32 0.0, %v5360
  %v5362 = vpop.f32.mrb[0].mxu0
  %5363 = vmatprep.mubr.bf16.mxu0 0
  %5364 = vmatmul.mubr.bf16.gmra.mrb[0].mxu0 %v5223
  %v5365 = vpop.f32.mrb[0].mxu0
  %v5366 = vadd.f32 0.0, %v5365
  %v5367 = vpop.f32.mrb[0].mxu0
  %v5368 = vpop.f32.mrb[0].mxu0
  %v5369 = vadd.f32 0.0, %v5368
  %v5370 = vpop.f32.mrb[0].mxu0
  %5371 = vmatprep.mubr.bf16.mxu0 0
  %5372 = vmatmul.mubr.bf16.gmra.mrb[0].mxu0 %v5226
  %v5373 = vpop.f32.mrb[0].mxu0
  %v5374 = vadd.f32 0.0, %v5373
  %v5375 = vpop.f32.mrb[0].mxu0
  %v5376 = vpop.f32.mrb[0].mxu0
  %v5377 = vadd.f32 0.0, %v5376
  %v5378 = vpop.f32.mrb[0].mxu0
  %5379 = vmatprep.mubr.bf16.mxu0 0
  %5380 = vmatmul.mubr.bf16.gmra.mrb[0].mxu0 %v5229
  %v5381 = vpop.f32.mrb[0].mxu0
  %v5382 = vadd.f32 0.0, %v5381
  %v5383 = vpop.f32.mrb[0].mxu0
  %v5384 = vpop.f32.mrb[0].mxu0
  %v5385 = vadd.f32 0.0, %v5384
  %v5386 = vpop.f32.mrb[0].mxu0
  %5387 = vmatprep.mubr.bf16.mxu0 0
  %5388 = vmatmul.mubr.bf16.gmra.mrb[0].mxu0 %v5232
  %v5389 = vpop.f32.mrb[0].mxu0
  %v5390 = vadd.f32 0.0, %v5389
  %v5391 = vpop.f32.mrb[0].mxu0
  %v5392 = vpop.f32.mrb[0].mxu0
  %v5393 = vadd.f32 0.0, %v5392
  %v5394 = vpop.f32.mrb[0].mxu0
  %5395 = vmatprep.mubr.bf16.mxu0 0
  %5396 = vmatmul.mubr.bf16.gmra.mrb[0].mxu0 %v5235
  %v5397 = vpop.f32.mrb[0].mxu0
  %v5398 = vadd.f32 0.0, %v5397
  %v5399 = vpop.f32.mrb[0].mxu0
  %v5400 = vpop.f32.mrb[0].mxu0
  %v5401 = vadd.f32 0.0, %v5400
  %v5402 = vpop.f32.mrb[0].mxu0
  %5403 = vmatprep.mubr.bf16.mxu0 0
  %5404 = vmatmul.mubr.bf16.gmra.mrb[0].mxu0 %v5238
  %v5405 = vpop.f32.mrb[0].mxu0
  %v5406 = vadd.f32 0.0, %v5405
  %v5407 = vpop.f32.mrb[0].mxu0
  %v5408 = vpop.f32.mrb[0].mxu0
  %v5409 = vadd.f32 0.0, %v5408
  %v5410 = vpop.f32.mrb[0].mxu0
  %5411 = vmatprep.mubr.bf16.mxu0 0
  %5412 = vmatmul.mubr.bf16.gmra.mrb[0].mxu0 %v5241
  %v5413 = vpop.f32.mrb[0].mxu0
  %v5414 = vadd.f32 0.0, %v5413
  %v5415 = vpop.f32.mrb[0].mxu0
  %v5416 = vpop.f32.mrb[0].mxu0
  %v5417 = vadd.f32 0.0, %v5416
  %v5418 = vpop.f32.mrb[0].mxu0
  %5419 = vmatprep.mubr.bf16.mxu0 0
  %5420 = vmatmul.mubr.bf16.gmra.mrb[0].mxu0 %v5244
  %v5421 = vpop.f32.mrb[0].mxu0
  %v5422 = vadd.f32 0.0, %v5421
  %v5423 = vpop.f32.mrb[0].mxu0
  %v5424 = vpop.f32.mrb[0].mxu0
  %v5425 = vadd.f32 0.0, %v5424
  %v5426 = vpop.f32.mrb[0].mxu0
  %5427 = vmatprep.mubr.bf16.mxu0 0
  %5428 = vmatmul.mubr.bf16.gmra.mrb[0].mxu0 %v5247
  %v5429 = vpop.f32.mrb[0].mxu0
  %v5430 = vadd.f32 0.0, %v5429
  %v5431 = vpop.f32.mrb[0].mxu0
  %v5432 = vpop.f32.mrb[0].mxu0
  %v5433 = vadd.f32 0.0, %v5432
  %v5434 = vpop.f32.mrb[0].mxu0
  %5435 = vmatprep.mubr.bf16.mxu0 0
  %5436 = vmatmul.mubr.bf16.gmra.mrb[0].mxu0 %v5250
  %v5437 = vpop.f32.mrb[0].mxu0
  %v5438 = vadd.f32 0.0, %v5437
  %v5439 = vpop.f32.mrb[0].mxu0
  %v5440 = vpop.f32.mrb[0].mxu0
  %v5441 = vadd.f32 0.0, %v5440
  %v5442 = vpop.f32.mrb[0].mxu0
  %5443 = vmatprep.mubr.bf16.mxu0 0
  %5444 = vmatmul.mubr.bf16.gmra.mrb[0].mxu0 %v5253
  %v5445 = vpop.f32.mrb[0].mxu0
  %v5446 = vadd.f32 0.0, %v5445
  %v5447 = vpop.f32.mrb[0].mxu0
  %v5448 = vpop.f32.mrb[0].mxu0
  %v5449 = vadd.f32 0.0, %v5448
  %v5450 = vpop.f32.mrb[0].mxu0
  %5451 = vmatprep.mubr.bf16.mxu0 0
  %5452 = vmatmul.mubr.bf16.gmra.mrb[0].mxu0 %v5256
  %v5453 = vpop.f32.mrb[0].mxu0
  %v5454 = vadd.f32 0.0, %v5453
  %v5455 = vpop.f32.mrb[0].mxu0
  %v5456 = vpop.f32.mrb[0].mxu0
  %v5457 = vadd.f32 0.0, %v5456
  %v5458 = vpop.f32.mrb[0].mxu0
  %5459 = vmatprep.mubr.bf16.mxu0 0
  %5460 = vmatmul.mubr.bf16.gmra.mrb[0].mxu0 %v5259
  %v5461 = vpop.f32.mrb[0].mxu0
  %v5462 = vadd.f32 0.0, %v5461
  %v5463 = vpop.f32.mrb[0].mxu0
  %v5464 = vpop.f32.mrb[0].mxu0
  %v5465 = vadd.f32 0.0, %v5464
  %v5466 = vpop.f32.mrb[0].mxu0
  %5467 = vmatprep.mubr.bf16.mxu0 0
  %5468 = vmatmul.mubr.bf16.gmra.mrb[0].mxu0 %v5262
  %v5469 = vpop.f32.mrb[0].mxu0
  %v5470 = vadd.f32 0.0, %v5469
  %v5471 = vpop.f32.mrb[0].mxu0
  %v5472 = vpop.f32.mrb[0].mxu0
  %v5473 = vadd.f32 0.0, %v5472
  %v5474 = vpop.f32.mrb[0].mxu0
  %5475 = vmatprep.mubr.bf16.mxu0 0
  %5476 = vmatmul.mubr.bf16.gmra.mrb[0].mxu0 %v5265
  %v5477 = vpop.f32.mrb[0].mxu0
  %v5478 = vadd.f32 0.0, %v5477
  %v5479 = vpop.f32.mrb[0].mxu0
  %v5480 = vpop.f32.mrb[0].mxu0
  %v5481 = vadd.f32 0.0, %v5480
  %v5482 = vpop.f32.mrb[0].mxu0
  %5483 = vmatprep.mubr.bf16.mxu0 0
  %5484 = vmatmul.mubr.bf16.gmra.mrb[0].mxu0 %v5268
  %v5485 = vpop.f32.mrb[0].mxu0
  %v5486 = vadd.f32 0.0, %v5485
  %v5487 = vpop.f32.mrb[0].mxu0
  %v5488 = vpop.f32.mrb[0].mxu0
  %v5489 = vadd.f32 0.0, %v5488
  %v5490 = vpop.f32.mrb[0].mxu0
  %5491 = vmatprep.mubr.bf16.mxu0 0
  %5492 = vmatmul.mubr.bf16.gmra.mrb[0].mxu0 %v5271
  %v5493 = vpop.f32.mrb[0].mxu0
  %v5494 = vadd.f32 0.0, %v5493
  %v5495 = vpop.f32.mrb[0].mxu0
  %v5496 = vpop.f32.mrb[0].mxu0
  %v5497 = vadd.f32 0.0, %v5496
  %v5498 = vpop.f32.mrb[0].mxu0
  %5499 = vmatprep.mubr.bf16.mxu0 0
  %5500 = vmatmul.mubr.bf16.gmra.mrb[0].mxu0 %v5274
  %v5501 = vpop.f32.mrb[0].mxu0
  %v5502 = vadd.f32 0.0, %v5501
  %v5503 = vpop.f32.mrb[0].mxu0
  %v5504 = vpop.f32.mrb[0].mxu0
  %v5505 = vadd.f32 0.0, %v5504
  %v5506 = vpop.f32.mrb[0].mxu0
  %5507 = vmatprep.mubr.bf16.mxu0 0
  %5508 = vmatmul.mubr.bf16.gmra.mrb[0].mxu0 %v5277
  %v5509 = vpop.f32.mrb[0].mxu0
  %v5510 = vadd.f32 0.0, %v5509
  %v5511 = vpop.f32.mrb[0].mxu0
  %v5512 = vpop.f32.mrb[0].mxu0
  %v5513 = vadd.f32 0.0, %v5512
  %v5514 = vpop.f32.mrb[0].mxu0
  %5515 = vmatprep.mubr.bf16.mxu0 0
  %5516 = vmatmul.mubr.bf16.gmra.mrb[0].mxu0 %v5280
  %v5517 = vpop.f32.mrb[0].mxu0
  %v5518 = vadd.f32 0.0, %v5517
  %v5519 = vpop.f32.mrb[0].mxu0
  %v5520 = vpop.f32.mrb[0].mxu0
  %v5521 = vadd.f32 0.0, %v5520
  %v5522 = vpop.f32.mrb[0].mxu0
  %5523 = vmatprep.mubr.bf16.mxu0 0
  %5524 = vmatmul.mubr.bf16.gmra.mrb[0].mxu0 %v5283
  %v5525 = vpop.f32.mrb[0].mxu0
  %v5526 = vadd.f32 0.0, %v5525
  %v5527 = vpop.f32.mrb[0].mxu0
  %v5528 = vpop.f32.mrb[0].mxu0
  %v5529 = vadd.f32 0.0, %v5528
  %v5530 = vpop.f32.mrb[0].mxu0
  %5531 = vmatprep.mubr.bf16.mxu0 0
  %5532 = vmatmul.mubr.bf16.gmra.mrb[0].mxu0 %v5286
  %v5533 = vpop.f32.mrb[0].mxu0
  %v5534 = vadd.f32 0.0, %v5533
  %v5535 = vpop.f32.mrb[0].mxu0
  %v5536 = vpop.f32.mrb[0].mxu0
  %v5537 = vadd.f32 0.0, %v5536
  %v5538 = vpop.f32.mrb[0].mxu0
  %5539 = vmatprep.mubr.bf16.mxu0 0
  %5540 = vmatmul.mubr.bf16.gmra.mrb[0].mxu0 %v5289
  %v5541 = vpop.f32.mrb[0].mxu0
  %v5542 = vadd.f32 0.0, %v5541
  %v5543 = vpop.f32.mrb[0].mxu0
  %v5544 = vpop.f32.mrb[0].mxu0
  %v5545 = vadd.f32 0.0, %v5544
  %v5546 = vpop.f32.mrb[0].mxu0
  %5547 = vmatprep.mubr.bf16.mxu0 0
  %5548 = vmatmul.mubr.bf16.gmra.mrb[0].mxu0 %v5292
  %v5549 = vpop.f32.mrb[0].mxu0
  %v5550 = vadd.f32 0.0, %v5549
  %v5551 = vpop.f32.mrb[0].mxu0
  %v5552 = vpop.f32.mrb[0].mxu0
  %v5553 = vadd.f32 0.0, %v5552
  %v5554 = vpop.f32.mrb[0].mxu0
  %5555 = vmatprep.mubr.bf16.mxu0 0
  %5556 = vmatmul.mubr.bf16.gmra.mrb[0].mxu0 %v5295
  %v5557 = vpop.f32.mrb[0].mxu0
  %v5558 = vadd.f32 0.0, %v5557
  %v5559 = vpop.f32.mrb[0].mxu0
  %v5560 = vpop.f32.mrb[0].mxu0
  %v5561 = vadd.f32 0.0, %v5560
  %v5562 = vpop.f32.mrb[0].mxu0
  %5563 = vmatprep.mubr.bf16.mxu0 0
  %5564 = vmatmul.mubr.bf16.gmra.mrb[0].mxu0 %v5298
  %v5565 = vpop.f32.mrb[0].mxu0
  %v5566 = vadd.f32 0.0, %v5565
  %v5567 = vpop.f32.mrb[0].mxu0
  %v5568 = vpop.f32.mrb[0].mxu0
  %v5569 = vadd.f32 0.0, %v5568
  %v5570 = vpop.f32.mrb[0].mxu0
  %5571 = vmatprep.mubr.bf16.mxu0 0
  %5572 = vmatmul.mubr.bf16.gmra.mrb[0].mxu0 %v5301
  %v5573 = vpop.f32.mrb[0].mxu0
  %v5574 = vadd.f32 0.0, %v5573
  %v5575 = vpop.f32.mrb[0].mxu0
  %v5576 = vpop.f32.mrb[0].mxu0
  %v5577 = vadd.f32 0.0, %v5576
  %v5578 = vpop.f32.mrb[0].mxu0
  %5579 = vmatprep.mubr.bf16.mxu0 0
  %5580 = vmatmul.mubr.bf16.gmra.mrb[0].mxu0 %v5304
  %v5581 = vpop.f32.mrb[0].mxu0
  %v5582 = vadd.f32 0.0, %v5581
  %v5583 = vpop.f32.mrb[0].mxu0
  %v5584 = vpop.f32.mrb[0].mxu0
  %v5585 = vadd.f32 0.0, %v5584
  %v5586 = vpop.f32.mrb[0].mxu0
  %5587 = vmatprep.mubr.bf16.mxu0 0
  %5588 = vmatmul.mubr.bf16.gmra.mrb[0].mxu0 %v5307
  %v5589 = vpop.f32.mrb[0].mxu0
  %v5590 = vadd.f32 0.0, %v5589
  %v5591 = vpop.f32.mrb[0].mxu0
  %v5592 = vpop.f32.mrb[0].mxu0
  %v5593 = vadd.f32 0.0, %v5592
  %v5594 = vpop.f32.mrb[0].mxu0
  %5595 = vmatprep.mubr.bf16.mxu0 0
  %5596 = vmatmul.mubr.bf16.gmra.mrb[0].mxu0 %v5310
  %v5597 = vpop.f32.mrb[0].mxu0
  %v5598 = vadd.f32 0.0, %v5597
  %v5599 = vpop.f32.mrb[0].mxu0
  %v5600 = vpop.f32.mrb[0].mxu0
  %v5601 = vadd.f32 0.0, %v5600
  %v5602 = vpop.f32.mrb[0].mxu0
  %5603 = vdwg.mxu0
  %v5604 = vadd.f32 %v4798, %v5350
  %v5605 = vadd.f32 %v4799, %v5353
  %v5606 = vadd.f32 %v4800, %v5358
  %v5607 = vadd.f32 %v4801, %v5361
  %v5608 = vadd.f32 %v4802, %v5366
  %v5609 = vadd.f32 %v4803, %v5369
  %v5610 = vadd.f32 %v4804, %v5374
  %v5611 = vadd.f32 %v4805, %v5377
  %v5612 = vadd.f32 %v4806, %v5382
  %v5613 = vadd.f32 %v4807, %v5385
  %v5614 = vadd.f32 %v4808, %v5390
  %v5615 = vadd.f32 %v4809, %v5393
  %v5616 = vadd.f32 %v4810, %v5398
  %v5617 = vadd.f32 %v4811, %v5401
  %v5618 = vadd.f32 %v4812, %v5406
  %v5619 = vadd.f32 %v4813, %v5409
  %v5620 = vadd.f32 %v4814, %v5414
  %v5621 = vadd.f32 %v4815, %v5417
  %v5622 = vadd.f32 %v4816, %v5422
  %v5623 = vadd.f32 %v4817, %v5425
  %v5624 = vadd.f32 %v4818, %v5430
  %v5625 = vadd.f32 %v4819, %v5433
  %v5626 = vadd.f32 %v4820, %v5438
  %v5627 = vadd.f32 %v4821, %v5441
  %v5628 = vadd.f32 %v4822, %v5446
  %v5629 = vadd.f32 %v4823, %v5449
  %v5630 = vadd.f32 %v4824, %v5454
  %v5631 = vadd.f32 %v4825, %v5457
  %v5632 = vadd.f32 %v4826, %v5462
  %v5633 = vadd.f32 %v4827, %v5465
  %v5634 = vadd.f32 %v4828, %v5470
  %v5635 = vadd.f32 %v4829, %v5473
  %v5636 = vadd.f32 %v4830, %v5478
  %v5637 = vadd.f32 %v4831, %v5481
  %v5638 = vadd.f32 %v4832, %v5486
  %v5639 = vadd.f32 %v4833, %v5489
  %v5640 = vadd.f32 %v4834, %v5494
  %v5641 = vadd.f32 %v4835, %v5497
  %v5642 = vadd.f32 %v4836, %v5502
  %v5643 = vadd.f32 %v4837, %v5505
  %v5644 = vadd.f32 %v4838, %v5510
  %v5645 = vadd.f32 %v4839, %v5513
  %v5646 = vadd.f32 %v4840, %v5518
  %v5647 = vadd.f32 %v4841, %v5521
  %v5648 = vadd.f32 %v4842, %v5526
  %v5649 = vadd.f32 %v4843, %v5529
  %v5650 = vadd.f32 %v4844, %v5534
  %v5651 = vadd.f32 %v4845, %v5537
  %v5652 = vadd.f32 %v4846, %v5542
  %v5653 = vadd.f32 %v4847, %v5545
  %v5654 = vadd.f32 %v4848, %v5550
  %v5655 = vadd.f32 %v4849, %v5553
  %v5656 = vadd.f32 %v4850, %v5558
  %v5657 = vadd.f32 %v4851, %v5561
  %v5658 = vadd.f32 %v4852, %v5566
  %v5659 = vadd.f32 %v4853, %v5569
  %v5660 = vadd.f32 %v4854, %v5574
  %v5661 = vadd.f32 %v4855, %v5577
  %v5662 = vadd.f32 %v4856, %v5582
  %v5663 = vadd.f32 %v4857, %v5585
  %v5664 = vadd.f32 %v4858, %v5590
  %v5665 = vadd.f32 %v4859, %v5593
  %v5666 = vadd.f32 %v4860, %v5598
  %v5667 = vadd.f32 %v4861, %v5601
  %s5668 = scalar_lea.vmem %s3, 12
  %v5669 = vld [vmem:[%s5668] sm:$0x3]
  %v5734 = vunpack.c.l.b16 %v217
  %v5735 = vunpack.c.l.b16 %v218
  %v5736 = vunpack.c.l.b16 %v220
  %v5737 = vunpack.c.l.b16 %v221
  %v5738 = vunpack.c.l.b16 %v223
  %v5739 = vunpack.c.l.b16 %v224
  %v5740 = vunpack.c.l.b16 %v226
  %v5741 = vunpack.c.l.b16 %v227
  %v5742 = vunpack.c.l.b16 %v229
  %v5743 = vunpack.c.l.b16 %v230
  %v5744 = vunpack.c.l.b16 %v232
  %v5745 = vunpack.c.l.b16 %v233
  %v5746 = vunpack.c.l.b16 %v235
  %v5747 = vunpack.c.l.b16 %v236
  %v5748 = vunpack.c.l.b16 %v238
  %v5749 = vunpack.c.l.b16 %v239
  %v5750 = vunpack.c.l.b16 %v241
  %v5751 = vunpack.c.l.b16 %v242
  %v5752 = vunpack.c.l.b16 %v244
  %v5753 = vunpack.c.l.b16 %v245
  %v5754 = vunpack.c.l.b16 %v247
  %v5755 = vunpack.c.l.b16 %v248
  %v5756 = vunpack.c.l.b16 %v250
  %v5757 = vunpack.c.l.b16 %v251
  %v5758 = vunpack.c.l.b16 %v253
  %v5759 = vunpack.c.l.b16 %v254
  %v5760 = vunpack.c.l.b16 %v256
  %v5761 = vunpack.c.l.b16 %v257
  %v5762 = vunpack.c.l.b16 %v259
  %v5763 = vunpack.c.l.b16 %v260
  %v5764 = vunpack.c.l.b16 %v262
  %v5765 = vunpack.c.l.b16 %v263
  %v5766 = vunpack.c.l.b16 %v265
  %v5767 = vunpack.c.l.b16 %v266
  %v5768 = vunpack.c.l.b16 %v268
  %v5769 = vunpack.c.l.b16 %v269
  %v5770 = vunpack.c.l.b16 %v271
  %v5771 = vunpack.c.l.b16 %v272
  %v5772 = vunpack.c.l.b16 %v274
  %v5773 = vunpack.c.l.b16 %v275
  %v5774 = vunpack.c.l.b16 %v277
  %v5775 = vunpack.c.l.b16 %v278
  %v5776 = vunpack.c.l.b16 %v280
  %v5777 = vunpack.c.l.b16 %v281
  %v5778 = vunpack.c.l.b16 %v283
  %v5779 = vunpack.c.l.b16 %v284
  %v5780 = vunpack.c.l.b16 %v286
  %v5781 = vunpack.c.l.b16 %v287
  %v5782 = vunpack.c.l.b16 %v289
  %v5783 = vunpack.c.l.b16 %v290
  %v5784 = vunpack.c.l.b16 %v292
  %v5785 = vunpack.c.l.b16 %v293
  %v5786 = vunpack.c.l.b16 %v295
  %v5787 = vunpack.c.l.b16 %v296
  %v5788 = vunpack.c.l.b16 %v298
  %v5789 = vunpack.c.l.b16 %v299
  %v5790 = vunpack.c.l.b16 %v301
  %v5791 = vunpack.c.l.b16 %v302
  %v5792 = vunpack.c.l.b16 %v304
  %v5793 = vunpack.c.l.b16 %v305
  %v5794 = vunpack.c.l.b16 %v307
  %v5795 = vunpack.c.l.b16 %v308
  %v5796 = vunpack.c.l.b16 %v310
  %v5797 = vunpack.c.l.b16 %v311
  %v5798 = vpack.c.b16 %v5735, %v5734
  %v5799 = vpack.c.b16 %v5737, %v5736
  %v5800 = vpack.c.b16 %v5739, %v5738
  %v5801 = vpack.c.b16 %v5741, %v5740
  %v5802 = vpack.c.b16 %v5743, %v5742
  %v5803 = vpack.c.b16 %v5745, %v5744
  %v5804 = vpack.c.b16 %v5747, %v5746
  %v5805 = vpack.c.b16 %v5749, %v5748
  %v5806 = vpack.c.b16 %v5751, %v5750
  %v5807 = vpack.c.b16 %v5753, %v5752
  %v5808 = vpack.c.b16 %v5755, %v5754
  %v5809 = vpack.c.b16 %v5757, %v5756
  %v5810 = vpack.c.b16 %v5759, %v5758
  %v5811 = vpack.c.b16 %v5761, %v5760
  %v5812 = vpack.c.b16 %v5763, %v5762
  %v5813 = vpack.c.b16 %v5765, %v5764
  %v5814 = vpack.c.b16 %v5767, %v5766
  %v5815 = vpack.c.b16 %v5769, %v5768
  %v5816 = vpack.c.b16 %v5771, %v5770
  %v5817 = vpack.c.b16 %v5773, %v5772
  %v5818 = vpack.c.b16 %v5775, %v5774
  %v5819 = vpack.c.b16 %v5777, %v5776
  %v5820 = vpack.c.b16 %v5779, %v5778
  %v5821 = vpack.c.b16 %v5781, %v5780
  %v5822 = vpack.c.b16 %v5783, %v5782
  %v5823 = vpack.c.b16 %v5785, %v5784
  %v5824 = vpack.c.b16 %v5787, %v5786
  %v5825 = vpack.c.b16 %v5789, %v5788
  %v5826 = vpack.c.b16 %v5791, %v5790
  %v5827 = vpack.c.b16 %v5793, %v5792
  %v5828 = vpack.c.b16 %v5795, %v5794
  %v5829 = vpack.c.b16 %v5797, %v5796
  %v5831 = vsel %vm1183, %v5798, 0
  %v5834 = vsel %vm1183, %v5799, 0
  %v5837 = vsel %vm1183, %v5800, 0
  %v5840 = vsel %vm1183, %v5801, 0
  %v5843 = vsel %vm1183, %v5802, 0
  %v5846 = vsel %vm1183, %v5803, 0
  %v5849 = vsel %vm1183, %v5804, 0
  %v5852 = vsel %vm1183, %v5805, 0
  %v5855 = vsel %vm1183, %v5806, 0
  %v5858 = vsel %vm1183, %v5807, 0
  %v5861 = vsel %vm1183, %v5808, 0
  %v5864 = vsel %vm1183, %v5809, 0
  %v5867 = vsel %vm1183, %v5810, 0
  %v5870 = vsel %vm1183, %v5811, 0
  %v5873 = vsel %vm1183, %v5812, 0
  %v5876 = vsel %vm1183, %v5813, 0
  %v5879 = vsel %vm1183, %v5814, 0
  %v5882 = vsel %vm1183, %v5815, 0
  %v5885 = vsel %vm1183, %v5816, 0
  %v5888 = vsel %vm1183, %v5817, 0
  %v5891 = vsel %vm1183, %v5818, 0
  %v5894 = vsel %vm1183, %v5819, 0
  %v5897 = vsel %vm1183, %v5820, 0
  %v5900 = vsel %vm1183, %v5821, 0
  %v5903 = vsel %vm1183, %v5822, 0
  %v5906 = vsel %vm1183, %v5823, 0
  %v5909 = vsel %vm1183, %v5824, 0
  %v5912 = vsel %vm1183, %v5825, 0
  %v5915 = vsel %vm1183, %v5826, 0
  %v5918 = vsel %vm1183, %v5827, 0
  %v5921 = vsel %vm1183, %v5828, 0
  %v5924 = vsel %vm1183, %v5829, 0
  %v5927 = vsel %vm1280, %v5669, 0
  %5929 = vmatprep.subr.bf16.mxu0 0
  %5930 = vmatpush1.bf16.msra.mxu0 %v5927
  %5931 = vmatprep.subr.bf16.mxu0 0
  %5932 = vmatpush1.bf16.msra.mxu0 0
  %5933 = vmatprep.subr.bf16.mxu0 0
  %5934 = vmatpush1.bf16.msra.mxu0 0
  %5935 = vmatprep.subr.bf16.mxu0 0
  %5936 = vmatpush1.bf16.msra.mxu0 0
  %5937 = vmatprep.subr.bf16.mxu0 0
  %5938 = vmatpush1.bf16.msra.mxu0 0
  %5939 = vmatprep.subr.bf16.mxu0 0
  %5940 = vmatpush1.bf16.msra.mxu0 0
  %5941 = vmatprep.subr.bf16.mxu0 0
  %5942 = vmatpush1.bf16.msra.mxu0 0
  %5943 = vmatprep.subr.bf16.mxu0 0
  %5944 = vmatpush1.bf16.msra.mxu0 0
  %5945 = vmatprep.subr.bf16.mxu0 0
  %5946 = vmatpush1.bf16.msra.mxu0 0
  %5947 = vmatprep.subr.bf16.mxu0 0
  %5948 = vmatpush1.bf16.msra.mxu0 0
  %5949 = vmatprep.subr.bf16.mxu0 0
  %5950 = vmatpush1.bf16.msra.mxu0 0
  %5951 = vmatprep.subr.bf16.mxu0 0
  %5952 = vmatpush1.bf16.msra.mxu0 0
  %5953 = vmatprep.subr.bf16.mxu0 0
  %5954 = vmatpush1.bf16.msra.mxu0 0
  %5955 = vmatprep.subr.bf16.mxu0 0
  %5956 = vmatpush1.bf16.msra.mxu0 0
  %5957 = vmatprep.subr.bf16.mxu0 0
  %5958 = vmatpush1.bf16.msra.mxu0 0
  %5959 = vmatprep.subr.bf16.mxu0 0
  %5960 = vmatpush1.bf16.msra.mxu0 0
  %5961 = vmatprep.mubr.bf16.mxu0 0
  %5962 = vmatmul.mubr.bf16.gmra.mrb[0].mxu0 %v5831
  %v5963 = vpop.f32.mrb[0].mxu0
  %v5964 = vadd.f32 0.0, %v5963
  %v5965 = vpop.f32.mrb[0].mxu0
  %v5966 = vpop.f32.mrb[0].mxu0
  %v5967 = vadd.f32 0.0, %v5966
  %v5968 = vpop.f32.mrb[0].mxu0
  %5969 = vmatprep.mubr.bf16.mxu0 0
  %5970 = vmatmul.mubr.bf16.gmra.mrb[0].mxu0 %v5834
  %v5971 = vpop.f32.mrb[0].mxu0
  %v5972 = vadd.f32 0.0, %v5971
  %v5973 = vpop.f32.mrb[0].mxu0
  %v5974 = vpop.f32.mrb[0].mxu0
  %v5975 = vadd.f32 0.0, %v5974
  %v5976 = vpop.f32.mrb[0].mxu0
  %5977 = vmatprep.mubr.bf16.mxu0 0
  %5978 = vmatmul.mubr.bf16.gmra.mrb[0].mxu0 %v5837
  %v5979 = vpop.f32.mrb[0].mxu0
  %v5980 = vadd.f32 0.0, %v5979
  %v5981 = vpop.f32.mrb[0].mxu0
  %v5982 = vpop.f32.mrb[0].mxu0
  %v5983 = vadd.f32 0.0, %v5982
  %v5984 = vpop.f32.mrb[0].mxu0
  %5985 = vmatprep.mubr.bf16.mxu0 0
  %5986 = vmatmul.mubr.bf16.gmra.mrb[0].mxu0 %v5840
  %v5987 = vpop.f32.mrb[0].mxu0
  %v5988 = vadd.f32 0.0, %v5987
  %v5989 = vpop.f32.mrb[0].mxu0
  %v5990 = vpop.f32.mrb[0].mxu0
  %v5991 = vadd.f32 0.0, %v5990
  %v5992 = vpop.f32.mrb[0].mxu0
  %5993 = vmatprep.mubr.bf16.mxu0 0
  %5994 = vmatmul.mubr.bf16.gmra.mrb[0].mxu0 %v5843
  %v5995 = vpop.f32.mrb[0].mxu0
  %v5996 = vadd.f32 0.0, %v5995
  %v5997 = vpop.f32.mrb[0].mxu0
  %v5998 = vpop.f32.mrb[0].mxu0
  %v5999 = vadd.f32 0.0, %v5998
  %v6000 = vpop.f32.mrb[0].mxu0
  %6001 = vmatprep.mubr.bf16.mxu0 0
  %6002 = vmatmul.mubr.bf16.gmra.mrb[0].mxu0 %v5846
  %v6003 = vpop.f32.mrb[0].mxu0
  %v6004 = vadd.f32 0.0, %v6003
  %v6005 = vpop.f32.mrb[0].mxu0
  %v6006 = vpop.f32.mrb[0].mxu0
  %v6007 = vadd.f32 0.0, %v6006
  %v6008 = vpop.f32.mrb[0].mxu0
  %6009 = vmatprep.mubr.bf16.mxu0 0
  %6010 = vmatmul.mubr.bf16.gmra.mrb[0].mxu0 %v5849
  %v6011 = vpop.f32.mrb[0].mxu0
  %v6012 = vadd.f32 0.0, %v6011
  %v6013 = vpop.f32.mrb[0].mxu0
  %v6014 = vpop.f32.mrb[0].mxu0
  %v6015 = vadd.f32 0.0, %v6014
  %v6016 = vpop.f32.mrb[0].mxu0
  %6017 = vmatprep.mubr.bf16.mxu0 0
  %6018 = vmatmul.mubr.bf16.gmra.mrb[0].mxu0 %v5852
  %v6019 = vpop.f32.mrb[0].mxu0
  %v6020 = vadd.f32 0.0, %v6019
  %v6021 = vpop.f32.mrb[0].mxu0
  %v6022 = vpop.f32.mrb[0].mxu0
  %v6023 = vadd.f32 0.0, %v6022
  %v6024 = vpop.f32.mrb[0].mxu0
  %6025 = vmatprep.mubr.bf16.mxu0 0
  %6026 = vmatmul.mubr.bf16.gmra.mrb[0].mxu0 %v5855
  %v6027 = vpop.f32.mrb[0].mxu0
  %v6028 = vadd.f32 0.0, %v6027
  %v6029 = vpop.f32.mrb[0].mxu0
  %v6030 = vpop.f32.mrb[0].mxu0
  %v6031 = vadd.f32 0.0, %v6030
  %v6032 = vpop.f32.mrb[0].mxu0
  %6033 = vmatprep.mubr.bf16.mxu0 0
  %6034 = vmatmul.mubr.bf16.gmra.mrb[0].mxu0 %v5858
  %v6035 = vpop.f32.mrb[0].mxu0
  %v6036 = vadd.f32 0.0, %v6035
  %v6037 = vpop.f32.mrb[0].mxu0
  %v6038 = vpop.f32.mrb[0].mxu0
  %v6039 = vadd.f32 0.0, %v6038
  %v6040 = vpop.f32.mrb[0].mxu0
  %6041 = vmatprep.mubr.bf16.mxu0 0
  %6042 = vmatmul.mubr.bf16.gmra.mrb[0].mxu0 %v5861
  %v6043 = vpop.f32.mrb[0].mxu0
  %v6044 = vadd.f32 0.0, %v6043
  %v6045 = vpop.f32.mrb[0].mxu0
  %v6046 = vpop.f32.mrb[0].mxu0
  %v6047 = vadd.f32 0.0, %v6046
  %v6048 = vpop.f32.mrb[0].mxu0
  %6049 = vmatprep.mubr.bf16.mxu0 0
  %6050 = vmatmul.mubr.bf16.gmra.mrb[0].mxu0 %v5864
  %v6051 = vpop.f32.mrb[0].mxu0
  %v6052 = vadd.f32 0.0, %v6051
  %v6053 = vpop.f32.mrb[0].mxu0
  %v6054 = vpop.f32.mrb[0].mxu0
  %v6055 = vadd.f32 0.0, %v6054
  %v6056 = vpop.f32.mrb[0].mxu0
  %6057 = vmatprep.mubr.bf16.mxu0 0
  %6058 = vmatmul.mubr.bf16.gmra.mrb[0].mxu0 %v5867
  %v6059 = vpop.f32.mrb[0].mxu0
  %v6060 = vadd.f32 0.0, %v6059
  %v6061 = vpop.f32.mrb[0].mxu0
  %v6062 = vpop.f32.mrb[0].mxu0
  %v6063 = vadd.f32 0.0, %v6062
  %v6064 = vpop.f32.mrb[0].mxu0
  %6065 = vmatprep.mubr.bf16.mxu0 0
  %6066 = vmatmul.mubr.bf16.gmra.mrb[0].mxu0 %v5870
  %v6067 = vpop.f32.mrb[0].mxu0
  %v6068 = vadd.f32 0.0, %v6067
  %v6069 = vpop.f32.mrb[0].mxu0
  %v6070 = vpop.f32.mrb[0].mxu0
  %v6071 = vadd.f32 0.0, %v6070
  %v6072 = vpop.f32.mrb[0].mxu0
  %6073 = vmatprep.mubr.bf16.mxu0 0
  %6074 = vmatmul.mubr.bf16.gmra.mrb[0].mxu0 %v5873
  %v6075 = vpop.f32.mrb[0].mxu0
  %v6076 = vadd.f32 0.0, %v6075
  %v6077 = vpop.f32.mrb[0].mxu0
  %v6078 = vpop.f32.mrb[0].mxu0
  %v6079 = vadd.f32 0.0, %v6078
  %v6080 = vpop.f32.mrb[0].mxu0
  %6081 = vmatprep.mubr.bf16.mxu0 0
  %6082 = vmatmul.mubr.bf16.gmra.mrb[0].mxu0 %v5876
  %v6083 = vpop.f32.mrb[0].mxu0
  %v6084 = vadd.f32 0.0, %v6083
  %v6085 = vpop.f32.mrb[0].mxu0
  %v6086 = vpop.f32.mrb[0].mxu0
  %v6087 = vadd.f32 0.0, %v6086
  %v6088 = vpop.f32.mrb[0].mxu0
  %6089 = vmatprep.mubr.bf16.mxu0 0
  %6090 = vmatmul.mubr.bf16.gmra.mrb[0].mxu0 %v5879
  %v6091 = vpop.f32.mrb[0].mxu0
  %v6092 = vadd.f32 0.0, %v6091
  %v6093 = vpop.f32.mrb[0].mxu0
  %v6094 = vpop.f32.mrb[0].mxu0
  %v6095 = vadd.f32 0.0, %v6094
  %v6096 = vpop.f32.mrb[0].mxu0
  %6097 = vmatprep.mubr.bf16.mxu0 0
  %6098 = vmatmul.mubr.bf16.gmra.mrb[0].mxu0 %v5882
  %v6099 = vpop.f32.mrb[0].mxu0
  %v6100 = vadd.f32 0.0, %v6099
  %v6101 = vpop.f32.mrb[0].mxu0
  %v6102 = vpop.f32.mrb[0].mxu0
  %v6103 = vadd.f32 0.0, %v6102
  %v6104 = vpop.f32.mrb[0].mxu0
  %6105 = vmatprep.mubr.bf16.mxu0 0
  %6106 = vmatmul.mubr.bf16.gmra.mrb[0].mxu0 %v5885
  %v6107 = vpop.f32.mrb[0].mxu0
  %v6108 = vadd.f32 0.0, %v6107
  %v6109 = vpop.f32.mrb[0].mxu0
  %v6110 = vpop.f32.mrb[0].mxu0
  %v6111 = vadd.f32 0.0, %v6110
  %v6112 = vpop.f32.mrb[0].mxu0
  %6113 = vmatprep.mubr.bf16.mxu0 0
  %6114 = vmatmul.mubr.bf16.gmra.mrb[0].mxu0 %v5888
  %v6115 = vpop.f32.mrb[0].mxu0
  %v6116 = vadd.f32 0.0, %v6115
  %v6117 = vpop.f32.mrb[0].mxu0
  %v6118 = vpop.f32.mrb[0].mxu0
  %v6119 = vadd.f32 0.0, %v6118
  %v6120 = vpop.f32.mrb[0].mxu0
  %6121 = vmatprep.mubr.bf16.mxu0 0
  %6122 = vmatmul.mubr.bf16.gmra.mrb[0].mxu0 %v5891
  %v6123 = vpop.f32.mrb[0].mxu0
  %v6124 = vadd.f32 0.0, %v6123
  %v6125 = vpop.f32.mrb[0].mxu0
  %v6126 = vpop.f32.mrb[0].mxu0
  %v6127 = vadd.f32 0.0, %v6126
  %v6128 = vpop.f32.mrb[0].mxu0
  %6129 = vmatprep.mubr.bf16.mxu0 0
  %6130 = vmatmul.mubr.bf16.gmra.mrb[0].mxu0 %v5894
  %v6131 = vpop.f32.mrb[0].mxu0
  %v6132 = vadd.f32 0.0, %v6131
  %v6133 = vpop.f32.mrb[0].mxu0
  %v6134 = vpop.f32.mrb[0].mxu0
  %v6135 = vadd.f32 0.0, %v6134
  %v6136 = vpop.f32.mrb[0].mxu0
  %6137 = vmatprep.mubr.bf16.mxu0 0
  %6138 = vmatmul.mubr.bf16.gmra.mrb[0].mxu0 %v5897
  %v6139 = vpop.f32.mrb[0].mxu0
  %v6140 = vadd.f32 0.0, %v6139
  %v6141 = vpop.f32.mrb[0].mxu0
  %v6142 = vpop.f32.mrb[0].mxu0
  %v6143 = vadd.f32 0.0, %v6142
  %v6144 = vpop.f32.mrb[0].mxu0
  %6145 = vmatprep.mubr.bf16.mxu0 0
  %6146 = vmatmul.mubr.bf16.gmra.mrb[0].mxu0 %v5900
  %v6147 = vpop.f32.mrb[0].mxu0
  %v6148 = vadd.f32 0.0, %v6147
  %v6149 = vpop.f32.mrb[0].mxu0
  %v6150 = vpop.f32.mrb[0].mxu0
  %v6151 = vadd.f32 0.0, %v6150
  %v6152 = vpop.f32.mrb[0].mxu0
  %6153 = vmatprep.mubr.bf16.mxu0 0
  %6154 = vmatmul.mubr.bf16.gmra.mrb[0].mxu0 %v5903
  %v6155 = vpop.f32.mrb[0].mxu0
  %v6156 = vadd.f32 0.0, %v6155
  %v6157 = vpop.f32.mrb[0].mxu0
  %v6158 = vpop.f32.mrb[0].mxu0
  %v6159 = vadd.f32 0.0, %v6158
  %v6160 = vpop.f32.mrb[0].mxu0
  %6161 = vmatprep.mubr.bf16.mxu0 0
  %6162 = vmatmul.mubr.bf16.gmra.mrb[0].mxu0 %v5906
  %v6163 = vpop.f32.mrb[0].mxu0
  %v6164 = vadd.f32 0.0, %v6163
  %v6165 = vpop.f32.mrb[0].mxu0
  %v6166 = vpop.f32.mrb[0].mxu0
  %v6167 = vadd.f32 0.0, %v6166
  %v6168 = vpop.f32.mrb[0].mxu0
  %6169 = vmatprep.mubr.bf16.mxu0 0
  %6170 = vmatmul.mubr.bf16.gmra.mrb[0].mxu0 %v5909
  %v6171 = vpop.f32.mrb[0].mxu0
  %v6172 = vadd.f32 0.0, %v6171
  %v6173 = vpop.f32.mrb[0].mxu0
  %v6174 = vpop.f32.mrb[0].mxu0
  %v6175 = vadd.f32 0.0, %v6174
  %v6176 = vpop.f32.mrb[0].mxu0
  %6177 = vmatprep.mubr.bf16.mxu0 0
  %6178 = vmatmul.mubr.bf16.gmra.mrb[0].mxu0 %v5912
  %v6179 = vpop.f32.mrb[0].mxu0
  %v6180 = vadd.f32 0.0, %v6179
  %v6181 = vpop.f32.mrb[0].mxu0
  %v6182 = vpop.f32.mrb[0].mxu0
  %v6183 = vadd.f32 0.0, %v6182
  %v6184 = vpop.f32.mrb[0].mxu0
  %6185 = vmatprep.mubr.bf16.mxu0 0
  %6186 = vmatmul.mubr.bf16.gmra.mrb[0].mxu0 %v5915
  %v6187 = vpop.f32.mrb[0].mxu0
  %v6188 = vadd.f32 0.0, %v6187
  %v6189 = vpop.f32.mrb[0].mxu0
  %v6190 = vpop.f32.mrb[0].mxu0
  %v6191 = vadd.f32 0.0, %v6190
  %v6192 = vpop.f32.mrb[0].mxu0
  %6193 = vmatprep.mubr.bf16.mxu0 0
  %6194 = vmatmul.mubr.bf16.gmra.mrb[0].mxu0 %v5918
  %v6195 = vpop.f32.mrb[0].mxu0
  %v6196 = vadd.f32 0.0, %v6195
  %v6197 = vpop.f32.mrb[0].mxu0
  %v6198 = vpop.f32.mrb[0].mxu0
  %v6199 = vadd.f32 0.0, %v6198
  %v6200 = vpop.f32.mrb[0].mxu0
  %6201 = vmatprep.mubr.bf16.mxu0 0
  %6202 = vmatmul.mubr.bf16.gmra.mrb[0].mxu0 %v5921
  %v6203 = vpop.f32.mrb[0].mxu0
  %v6204 = vadd.f32 0.0, %v6203
  %v6205 = vpop.f32.mrb[0].mxu0
  %v6206 = vpop.f32.mrb[0].mxu0
  %v6207 = vadd.f32 0.0, %v6206
  %v6208 = vpop.f32.mrb[0].mxu0
  %6209 = vmatprep.mubr.bf16.mxu0 0
  %6210 = vmatmul.mubr.bf16.gmra.mrb[0].mxu0 %v5924
  %v6211 = vpop.f32.mrb[0].mxu0
  %v6212 = vadd.f32 0.0, %v6211
  %v6213 = vpop.f32.mrb[0].mxu0
  %v6214 = vpop.f32.mrb[0].mxu0
  %v6215 = vadd.f32 0.0, %v6214
  %v6216 = vpop.f32.mrb[0].mxu0
  %6217 = vdwg.mxu0
  %v6218 = vadd.f32 %v5604, %v5964
  %v6219 = vadd.f32 %v5605, %v5967
  %v6220 = vadd.f32 %v5606, %v5972
  %v6221 = vadd.f32 %v5607, %v5975
  %v6222 = vadd.f32 %v5608, %v5980
  %v6223 = vadd.f32 %v5609, %v5983
  %v6224 = vadd.f32 %v5610, %v5988
  %v6225 = vadd.f32 %v5611, %v5991
  %v6226 = vadd.f32 %v5612, %v5996
  %v6227 = vadd.f32 %v5613, %v5999
  %v6228 = vadd.f32 %v5614, %v6004
  %v6229 = vadd.f32 %v5615, %v6007
  %v6230 = vadd.f32 %v5616, %v6012
  %v6231 = vadd.f32 %v5617, %v6015
  %v6232 = vadd.f32 %v5618, %v6020
  %v6233 = vadd.f32 %v5619, %v6023
  %v6234 = vadd.f32 %v5620, %v6028
  %v6235 = vadd.f32 %v5621, %v6031
  %v6236 = vadd.f32 %v5622, %v6036
  %v6237 = vadd.f32 %v5623, %v6039
  %v6238 = vadd.f32 %v5624, %v6044
  %v6239 = vadd.f32 %v5625, %v6047
  %v6240 = vadd.f32 %v5626, %v6052
  %v6241 = vadd.f32 %v5627, %v6055
  %v6242 = vadd.f32 %v5628, %v6060
  %v6243 = vadd.f32 %v5629, %v6063
  %v6244 = vadd.f32 %v5630, %v6068
  %v6245 = vadd.f32 %v5631, %v6071
  %v6246 = vadd.f32 %v5632, %v6076
  %v6247 = vadd.f32 %v5633, %v6079
  %v6248 = vadd.f32 %v5634, %v6084
  %v6249 = vadd.f32 %v5635, %v6087
  %v6250 = vadd.f32 %v5636, %v6092
  %v6251 = vadd.f32 %v5637, %v6095
  %v6252 = vadd.f32 %v5638, %v6100
  %v6253 = vadd.f32 %v5639, %v6103
  %v6254 = vadd.f32 %v5640, %v6108
  %v6255 = vadd.f32 %v5641, %v6111
  %v6256 = vadd.f32 %v5642, %v6116
  %v6257 = vadd.f32 %v5643, %v6119
  %v6258 = vadd.f32 %v5644, %v6124
  %v6259 = vadd.f32 %v5645, %v6127
  %v6260 = vadd.f32 %v5646, %v6132
  %v6261 = vadd.f32 %v5647, %v6135
  %v6262 = vadd.f32 %v5648, %v6140
  %v6263 = vadd.f32 %v5649, %v6143
  %v6264 = vadd.f32 %v5650, %v6148
  %v6265 = vadd.f32 %v5651, %v6151
  %v6266 = vadd.f32 %v5652, %v6156
  %v6267 = vadd.f32 %v5653, %v6159
  %v6268 = vadd.f32 %v5654, %v6164
  %v6269 = vadd.f32 %v5655, %v6167
  %v6270 = vadd.f32 %v5656, %v6172
  %v6271 = vadd.f32 %v5657, %v6175
  %v6272 = vadd.f32 %v5658, %v6180
  %v6273 = vadd.f32 %v5659, %v6183
  %v6274 = vadd.f32 %v5660, %v6188
  %v6275 = vadd.f32 %v5661, %v6191
  %v6276 = vadd.f32 %v5662, %v6196
  %v6277 = vadd.f32 %v5663, %v6199
  %v6278 = vadd.f32 %v5664, %v6204
  %v6279 = vadd.f32 %v5665, %v6207
  %v6280 = vadd.f32 %v5666, %v6212
  %v6281 = vadd.f32 %v5667, %v6215
  %v6283 = vshrl.u32 %v217, 16
  %v6285 = vrot.slane %v6283, 4
  %v6286 = vshll.u32 %v217, 16
  %v6288 = vrot.slane %v6286, 5
  %v6289 = vor.u32 %v6285, %v6288
  %v6290 = vrot.slane %v6289, 4
  %v6292 = vshll.u32 %v218, 16
  %v6294 = vrot.slane %v6292, 5
  %v6295 = vsel %vm316, %v6290, %v6294
  %v6296 = vshrl.u32 %v218, 16
  %v6298 = vrot.slane %v6296, 4
  %v6299 = vor.u32 %v6298, %v6294
  %v6300 = vrot.slane %v6299, 4
  %v6302 = vshll.u32 %v219, 16
  %v6304 = vrot.slane %v6302, 5
  %v6305 = vsel %vm316, %v6300, %v6304
  %v6307 = vshrl.u32 %v220, 16
  %v6309 = vrot.slane %v6307, 4
  %v6310 = vshll.u32 %v220, 16
  %v6312 = vrot.slane %v6310, 5
  %v6313 = vor.u32 %v6309, %v6312
  %v6314 = vrot.slane %v6313, 4
  %v6316 = vshll.u32 %v221, 16
  %v6318 = vrot.slane %v6316, 5
  %v6319 = vsel %vm316, %v6314, %v6318
  %v6320 = vshrl.u32 %v221, 16
  %v6322 = vrot.slane %v6320, 4
  %v6323 = vor.u32 %v6322, %v6318
  %v6324 = vrot.slane %v6323, 4
  %v6326 = vshll.u32 %v222, 16
  %v6328 = vrot.slane %v6326, 5
  %v6329 = vsel %vm316, %v6324, %v6328
  %v6331 = vshrl.u32 %v223, 16
  %v6333 = vrot.slane %v6331, 4
  %v6334 = vshll.u32 %v223, 16
  %v6336 = vrot.slane %v6334, 5
  %v6337 = vor.u32 %v6333, %v6336
  %v6338 = vrot.slane %v6337, 4
  %v6340 = vshll.u32 %v224, 16
  %v6342 = vrot.slane %v6340, 5
  %v6343 = vsel %vm316, %v6338, %v6342
  %v6344 = vshrl.u32 %v224, 16
  %v6346 = vrot.slane %v6344, 4
  %v6347 = vor.u32 %v6346, %v6342
  %v6348 = vrot.slane %v6347, 4
  %v6350 = vshll.u32 %v225, 16
  %v6352 = vrot.slane %v6350, 5
  %v6353 = vsel %vm316, %v6348, %v6352
  %v6355 = vshrl.u32 %v226, 16
  %v6357 = vrot.slane %v6355, 4
  %v6358 = vshll.u32 %v226, 16
  %v6360 = vrot.slane %v6358, 5
  %v6361 = vor.u32 %v6357, %v6360
  %v6362 = vrot.slane %v6361, 4
  %v6364 = vshll.u32 %v227, 16
  %v6366 = vrot.slane %v6364, 5
  %v6367 = vsel %vm316, %v6362, %v6366
  %v6368 = vshrl.u32 %v227, 16
  %v6370 = vrot.slane %v6368, 4
  %v6371 = vor.u32 %v6370, %v6366
  %v6372 = vrot.slane %v6371, 4
  %v6374 = vshll.u32 %v228, 16
  %v6376 = vrot.slane %v6374, 5
  %v6377 = vsel %vm316, %v6372, %v6376
  %v6379 = vshrl.u32 %v229, 16
  %v6381 = vrot.slane %v6379, 4
  %v6382 = vshll.u32 %v229, 16
  %v6384 = vrot.slane %v6382, 5
  %v6385 = vor.u32 %v6381, %v6384
  %v6386 = vrot.slane %v6385, 4
  %v6388 = vshll.u32 %v230, 16
  %v6390 = vrot.slane %v6388, 5
  %v6391 = vsel %vm316, %v6386, %v6390
  %v6392 = vshrl.u32 %v230, 16
  %v6394 = vrot.slane %v6392, 4
  %v6395 = vor.u32 %v6394, %v6390
  %v6396 = vrot.slane %v6395, 4
  %v6398 = vshll.u32 %v231, 16
  %v6400 = vrot.slane %v6398, 5
  %v6401 = vsel %vm316, %v6396, %v6400
  %v6403 = vshrl.u32 %v232, 16
  %v6405 = vrot.slane %v6403, 4
  %v6406 = vshll.u32 %v232, 16
  %v6408 = vrot.slane %v6406, 5
  %v6409 = vor.u32 %v6405, %v6408
  %v6410 = vrot.slane %v6409, 4
  %v6412 = vshll.u32 %v233, 16
  %v6414 = vrot.slane %v6412, 5
  %v6415 = vsel %vm316, %v6410, %v6414
  %v6416 = vshrl.u32 %v233, 16
  %v6418 = vrot.slane %v6416, 4
  %v6419 = vor.u32 %v6418, %v6414
  %v6420 = vrot.slane %v6419, 4
  %v6422 = vshll.u32 %v234, 16
  %v6424 = vrot.slane %v6422, 5
  %v6425 = vsel %vm316, %v6420, %v6424
  %v6427 = vshrl.u32 %v235, 16
  %v6429 = vrot.slane %v6427, 4
  %v6430 = vshll.u32 %v235, 16
  %v6432 = vrot.slane %v6430, 5
  %v6433 = vor.u32 %v6429, %v6432
  %v6434 = vrot.slane %v6433, 4
  %v6436 = vshll.u32 %v236, 16
  %v6438 = vrot.slane %v6436, 5
  %v6439 = vsel %vm316, %v6434, %v6438
  %v6440 = vshrl.u32 %v236, 16
  %v6442 = vrot.slane %v6440, 4
  %v6443 = vor.u32 %v6442, %v6438
  %v6444 = vrot.slane %v6443, 4
  %v6446 = vshll.u32 %v237, 16
  %v6448 = vrot.slane %v6446, 5
  %v6449 = vsel %vm316, %v6444, %v6448
  %v6451 = vshrl.u32 %v238, 16
  %v6453 = vrot.slane %v6451, 4
  %v6454 = vshll.u32 %v238, 16
  %v6456 = vrot.slane %v6454, 5
  %v6457 = vor.u32 %v6453, %v6456
  %v6458 = vrot.slane %v6457, 4
  %v6460 = vshll.u32 %v239, 16
  %v6462 = vrot.slane %v6460, 5
  %v6463 = vsel %vm316, %v6458, %v6462
  %v6464 = vshrl.u32 %v239, 16
  %v6466 = vrot.slane %v6464, 4
  %v6467 = vor.u32 %v6466, %v6462
  %v6468 = vrot.slane %v6467, 4
  %v6470 = vshll.u32 %v240, 16
  %v6472 = vrot.slane %v6470, 5
  %v6473 = vsel %vm316, %v6468, %v6472
  %v6475 = vshrl.u32 %v241, 16
  %v6477 = vrot.slane %v6475, 4
  %v6478 = vshll.u32 %v241, 16
  %v6480 = vrot.slane %v6478, 5
  %v6481 = vor.u32 %v6477, %v6480
  %v6482 = vrot.slane %v6481, 4
  %v6484 = vshll.u32 %v242, 16
  %v6486 = vrot.slane %v6484, 5
  %v6487 = vsel %vm316, %v6482, %v6486
  %v6488 = vshrl.u32 %v242, 16
  %v6490 = vrot.slane %v6488, 4
  %v6491 = vor.u32 %v6490, %v6486
  %v6492 = vrot.slane %v6491, 4
  %v6494 = vshll.u32 %v243, 16
  %v6496 = vrot.slane %v6494, 5
  %v6497 = vsel %vm316, %v6492, %v6496
  %v6499 = vshrl.u32 %v244, 16
  %v6501 = vrot.slane %v6499, 4
  %v6502 = vshll.u32 %v244, 16
  %v6504 = vrot.slane %v6502, 5
  %v6505 = vor.u32 %v6501, %v6504
  %v6506 = vrot.slane %v6505, 4
  %v6508 = vshll.u32 %v245, 16
  %v6510 = vrot.slane %v6508, 5
  %v6511 = vsel %vm316, %v6506, %v6510
  %v6512 = vshrl.u32 %v245, 16
  %v6514 = vrot.slane %v6512, 4
  %v6515 = vor.u32 %v6514, %v6510
  %v6516 = vrot.slane %v6515, 4
  %v6518 = vshll.u32 %v246, 16
  %v6520 = vrot.slane %v6518, 5
  %v6521 = vsel %vm316, %v6516, %v6520
  %v6523 = vshrl.u32 %v247, 16
  %v6525 = vrot.slane %v6523, 4
  %v6526 = vshll.u32 %v247, 16
  %v6528 = vrot.slane %v6526, 5
  %v6529 = vor.u32 %v6525, %v6528
  %v6530 = vrot.slane %v6529, 4
  %v6532 = vshll.u32 %v248, 16
  %v6534 = vrot.slane %v6532, 5
  %v6535 = vsel %vm316, %v6530, %v6534
  %v6536 = vshrl.u32 %v248, 16
  %v6538 = vrot.slane %v6536, 4
  %v6539 = vor.u32 %v6538, %v6534
  %v6540 = vrot.slane %v6539, 4
  %v6542 = vshll.u32 %v249, 16
  %v6544 = vrot.slane %v6542, 5
  %v6545 = vsel %vm316, %v6540, %v6544
  %v6547 = vshrl.u32 %v250, 16
  %v6549 = vrot.slane %v6547, 4
  %v6550 = vshll.u32 %v250, 16
  %v6552 = vrot.slane %v6550, 5
  %v6553 = vor.u32 %v6549, %v6552
  %v6554 = vrot.slane %v6553, 4
  %v6556 = vshll.u32 %v251, 16
  %v6558 = vrot.slane %v6556, 5
  %v6559 = vsel %vm316, %v6554, %v6558
  %v6560 = vshrl.u32 %v251, 16
  %v6562 = vrot.slane %v6560, 4
  %v6563 = vor.u32 %v6562, %v6558
  %v6564 = vrot.slane %v6563, 4
  %v6566 = vshll.u32 %v252, 16
  %v6568 = vrot.slane %v6566, 5
  %v6569 = vsel %vm316, %v6564, %v6568
  %v6571 = vshrl.u32 %v253, 16
  %v6573 = vrot.slane %v6571, 4
  %v6574 = vshll.u32 %v253, 16
  %v6576 = vrot.slane %v6574, 5
  %v6577 = vor.u32 %v6573, %v6576
  %v6578 = vrot.slane %v6577, 4
  %v6580 = vshll.u32 %v254, 16
  %v6582 = vrot.slane %v6580, 5
  %v6583 = vsel %vm316, %v6578, %v6582
  %v6584 = vshrl.u32 %v254, 16
  %v6586 = vrot.slane %v6584, 4
  %v6587 = vor.u32 %v6586, %v6582
  %v6588 = vrot.slane %v6587, 4
  %v6590 = vshll.u32 %v255, 16
  %v6592 = vrot.slane %v6590, 5
  %v6593 = vsel %vm316, %v6588, %v6592
  %v6595 = vshrl.u32 %v256, 16
  %v6597 = vrot.slane %v6595, 4
  %v6598 = vshll.u32 %v256, 16
  %v6600 = vrot.slane %v6598, 5
  %v6601 = vor.u32 %v6597, %v6600
  %v6602 = vrot.slane %v6601, 4
  %v6604 = vshll.u32 %v257, 16
  %v6606 = vrot.slane %v6604, 5
  %v6607 = vsel %vm316, %v6602, %v6606
  %v6608 = vshrl.u32 %v257, 16
  %v6610 = vrot.slane %v6608, 4
  %v6611 = vor.u32 %v6610, %v6606
  %v6612 = vrot.slane %v6611, 4
  %v6614 = vshll.u32 %v258, 16
  %v6616 = vrot.slane %v6614, 5
  %v6617 = vsel %vm316, %v6612, %v6616
  %v6619 = vshrl.u32 %v259, 16
  %v6621 = vrot.slane %v6619, 4
  %v6622 = vshll.u32 %v259, 16
  %v6624 = vrot.slane %v6622, 5
  %v6625 = vor.u32 %v6621, %v6624
  %v6626 = vrot.slane %v6625, 4
  %v6628 = vshll.u32 %v260, 16
  %v6630 = vrot.slane %v6628, 5
  %v6631 = vsel %vm316, %v6626, %v6630
  %v6632 = vshrl.u32 %v260, 16
  %v6634 = vrot.slane %v6632, 4
  %v6635 = vor.u32 %v6634, %v6630
  %v6636 = vrot.slane %v6635, 4
  %v6638 = vshll.u32 %v261, 16
  %v6640 = vrot.slane %v6638, 5
  %v6641 = vsel %vm316, %v6636, %v6640
  %v6643 = vshrl.u32 %v262, 16
  %v6645 = vrot.slane %v6643, 4
  %v6646 = vshll.u32 %v262, 16
  %v6648 = vrot.slane %v6646, 5
  %v6649 = vor.u32 %v6645, %v6648
  %v6650 = vrot.slane %v6649, 4
  %v6652 = vshll.u32 %v263, 16
  %v6654 = vrot.slane %v6652, 5
  %v6655 = vsel %vm316, %v6650, %v6654
  %v6656 = vshrl.u32 %v263, 16
  %v6658 = vrot.slane %v6656, 4
  %v6659 = vor.u32 %v6658, %v6654
  %v6660 = vrot.slane %v6659, 4
  %v6662 = vshll.u32 %v264, 16
  %v6664 = vrot.slane %v6662, 5
  %v6665 = vsel %vm316, %v6660, %v6664
  %v6667 = vshrl.u32 %v265, 16
  %v6669 = vrot.slane %v6667, 4
  %v6670 = vshll.u32 %v265, 16
  %v6672 = vrot.slane %v6670, 5
  %v6673 = vor.u32 %v6669, %v6672
  %v6674 = vrot.slane %v6673, 4
  %v6676 = vshll.u32 %v266, 16
  %v6678 = vrot.slane %v6676, 5
  %v6679 = vsel %vm316, %v6674, %v6678
  %v6680 = vshrl.u32 %v266, 16
  %v6682 = vrot.slane %v6680, 4
  %v6683 = vor.u32 %v6682, %v6678
  %v6684 = vrot.slane %v6683, 4
  %v6686 = vshll.u32 %v267, 16
  %v6688 = vrot.slane %v6686, 5
  %v6689 = vsel %vm316, %v6684, %v6688
  %v6691 = vshrl.u32 %v268, 16
  %v6693 = vrot.slane %v6691, 4
  %v6694 = vshll.u32 %v268, 16
  %v6696 = vrot.slane %v6694, 5
  %v6697 = vor.u32 %v6693, %v6696
  %v6698 = vrot.slane %v6697, 4
  %v6700 = vshll.u32 %v269, 16
  %v6702 = vrot.slane %v6700, 5
  %v6703 = vsel %vm316, %v6698, %v6702
  %v6704 = vshrl.u32 %v269, 16
  %v6706 = vrot.slane %v6704, 4
  %v6707 = vor.u32 %v6706, %v6702
  %v6708 = vrot.slane %v6707, 4
  %v6710 = vshll.u32 %v270, 16
  %v6712 = vrot.slane %v6710, 5
  %v6713 = vsel %vm316, %v6708, %v6712
  %v6715 = vshrl.u32 %v271, 16
  %v6717 = vrot.slane %v6715, 4
  %v6718 = vshll.u32 %v271, 16
  %v6720 = vrot.slane %v6718, 5
  %v6721 = vor.u32 %v6717, %v6720
  %v6722 = vrot.slane %v6721, 4
  %v6724 = vshll.u32 %v272, 16
  %v6726 = vrot.slane %v6724, 5
  %v6727 = vsel %vm316, %v6722, %v6726
  %v6728 = vshrl.u32 %v272, 16
  %v6730 = vrot.slane %v6728, 4
  %v6731 = vor.u32 %v6730, %v6726
  %v6732 = vrot.slane %v6731, 4
  %v6734 = vshll.u32 %v273, 16
  %v6736 = vrot.slane %v6734, 5
  %v6737 = vsel %vm316, %v6732, %v6736
  %v6739 = vshrl.u32 %v274, 16
  %v6741 = vrot.slane %v6739, 4
  %v6742 = vshll.u32 %v274, 16
  %v6744 = vrot.slane %v6742, 5
  %v6745 = vor.u32 %v6741, %v6744
  %v6746 = vrot.slane %v6745, 4
  %v6748 = vshll.u32 %v275, 16
  %v6750 = vrot.slane %v6748, 5
  %v6751 = vsel %vm316, %v6746, %v6750
  %v6752 = vshrl.u32 %v275, 16
  %v6754 = vrot.slane %v6752, 4
  %v6755 = vor.u32 %v6754, %v6750
  %v6756 = vrot.slane %v6755, 4
  %v6758 = vshll.u32 %v276, 16
  %v6760 = vrot.slane %v6758, 5
  %v6761 = vsel %vm316, %v6756, %v6760
  %v6763 = vshrl.u32 %v277, 16
  %v6765 = vrot.slane %v6763, 4
  %v6766 = vshll.u32 %v277, 16
  %v6768 = vrot.slane %v6766, 5
  %v6769 = vor.u32 %v6765, %v6768
  %v6770 = vrot.slane %v6769, 4
  %v6772 = vshll.u32 %v278, 16
  %v6774 = vrot.slane %v6772, 5
  %v6775 = vsel %vm316, %v6770, %v6774
  %v6776 = vshrl.u32 %v278, 16
  %v6778 = vrot.slane %v6776, 4
  %v6779 = vor.u32 %v6778, %v6774
  %v6780 = vrot.slane %v6779, 4
  %v6782 = vshll.u32 %v279, 16
  %v6784 = vrot.slane %v6782, 5
  %v6785 = vsel %vm316, %v6780, %v6784
  %v6787 = vshrl.u32 %v280, 16
  %v6789 = vrot.slane %v6787, 4
  %v6790 = vshll.u32 %v280, 16
  %v6792 = vrot.slane %v6790, 5
  %v6793 = vor.u32 %v6789, %v6792
  %v6794 = vrot.slane %v6793, 4
  %v6796 = vshll.u32 %v281, 16
  %v6798 = vrot.slane %v6796, 5
  %v6799 = vsel %vm316, %v6794, %v6798
  %v6800 = vshrl.u32 %v281, 16
  %v6802 = vrot.slane %v6800, 4
  %v6803 = vor.u32 %v6802, %v6798
  %v6804 = vrot.slane %v6803, 4
  %v6806 = vshll.u32 %v282, 16
  %v6808 = vrot.slane %v6806, 5
  %v6809 = vsel %vm316, %v6804, %v6808
  %v6811 = vshrl.u32 %v283, 16
  %v6813 = vrot.slane %v6811, 4
  %v6814 = vshll.u32 %v283, 16
  %v6816 = vrot.slane %v6814, 5
  %v6817 = vor.u32 %v6813, %v6816
  %v6818 = vrot.slane %v6817, 4
  %v6820 = vshll.u32 %v284, 16
  %v6822 = vrot.slane %v6820, 5
  %v6823 = vsel %vm316, %v6818, %v6822
  %v6824 = vshrl.u32 %v284, 16
  %v6826 = vrot.slane %v6824, 4
  %v6827 = vor.u32 %v6826, %v6822
  %v6828 = vrot.slane %v6827, 4
  %v6830 = vshll.u32 %v285, 16
  %v6832 = vrot.slane %v6830, 5
  %v6833 = vsel %vm316, %v6828, %v6832
  %v6835 = vshrl.u32 %v286, 16
  %v6837 = vrot.slane %v6835, 4
  %v6838 = vshll.u32 %v286, 16
  %v6840 = vrot.slane %v6838, 5
  %v6841 = vor.u32 %v6837, %v6840
  %v6842 = vrot.slane %v6841, 4
  %v6844 = vshll.u32 %v287, 16
  %v6846 = vrot.slane %v6844, 5
  %v6847 = vsel %vm316, %v6842, %v6846
  %v6848 = vshrl.u32 %v287, 16
  %v6850 = vrot.slane %v6848, 4
  %v6851 = vor.u32 %v6850, %v6846
  %v6852 = vrot.slane %v6851, 4
  %v6854 = vshll.u32 %v288, 16
  %v6856 = vrot.slane %v6854, 5
  %v6857 = vsel %vm316, %v6852, %v6856
  %v6859 = vshrl.u32 %v289, 16
  %v6861 = vrot.slane %v6859, 4
  %v6862 = vshll.u32 %v289, 16
  %v6864 = vrot.slane %v6862, 5
  %v6865 = vor.u32 %v6861, %v6864
  %v6866 = vrot.slane %v6865, 4
  %v6868 = vshll.u32 %v290, 16
  %v6870 = vrot.slane %v6868, 5
  %v6871 = vsel %vm316, %v6866, %v6870
  %v6872 = vshrl.u32 %v290, 16
  %v6874 = vrot.slane %v6872, 4
  %v6875 = vor.u32 %v6874, %v6870
  %v6876 = vrot.slane %v6875, 4
  %v6878 = vshll.u32 %v291, 16
  %v6880 = vrot.slane %v6878, 5
  %v6881 = vsel %vm316, %v6876, %v6880
  %v6883 = vshrl.u32 %v292, 16
  %v6885 = vrot.slane %v6883, 4
  %v6886 = vshll.u32 %v292, 16
  %v6888 = vrot.slane %v6886, 5
  %v6889 = vor.u32 %v6885, %v6888
  %v6890 = vrot.slane %v6889, 4
  %v6892 = vshll.u32 %v293, 16
  %v6894 = vrot.slane %v6892, 5
  %v6895 = vsel %vm316, %v6890, %v6894
  %v6896 = vshrl.u32 %v293, 16
  %v6898 = vrot.slane %v6896, 4
  %v6899 = vor.u32 %v6898, %v6894
  %v6900 = vrot.slane %v6899, 4
  %v6902 = vshll.u32 %v294, 16
  %v6904 = vrot.slane %v6902, 5
  %v6905 = vsel %vm316, %v6900, %v6904
  %v6907 = vshrl.u32 %v295, 16
  %v6909 = vrot.slane %v6907, 4
  %v6910 = vshll.u32 %v295, 16
  %v6912 = vrot.slane %v6910, 5
  %v6913 = vor.u32 %v6909, %v6912
  %v6914 = vrot.slane %v6913, 4
  %v6916 = vshll.u32 %v296, 16
  %v6918 = vrot.slane %v6916, 5
  %v6919 = vsel %vm316, %v6914, %v6918
  %v6920 = vshrl.u32 %v296, 16
  %v6922 = vrot.slane %v6920, 4
  %v6923 = vor.u32 %v6922, %v6918
  %v6924 = vrot.slane %v6923, 4
  %v6926 = vshll.u32 %v297, 16
  %v6928 = vrot.slane %v6926, 5
  %v6929 = vsel %vm316, %v6924, %v6928
  %v6931 = vshrl.u32 %v298, 16
  %v6933 = vrot.slane %v6931, 4
  %v6934 = vshll.u32 %v298, 16
  %v6936 = vrot.slane %v6934, 5
  %v6937 = vor.u32 %v6933, %v6936
  %v6938 = vrot.slane %v6937, 4
  %v6940 = vshll.u32 %v299, 16
  %v6942 = vrot.slane %v6940, 5
  %v6943 = vsel %vm316, %v6938, %v6942
  %v6944 = vshrl.u32 %v299, 16
  %v6946 = vrot.slane %v6944, 4
  %v6947 = vor.u32 %v6946, %v6942
  %v6948 = vrot.slane %v6947, 4
  %v6950 = vshll.u32 %v300, 16
  %v6952 = vrot.slane %v6950, 5
  %v6953 = vsel %vm316, %v6948, %v6952
  %v6955 = vshrl.u32 %v301, 16
  %v6957 = vrot.slane %v6955, 4
  %v6958 = vshll.u32 %v301, 16
  %v6960 = vrot.slane %v6958, 5
  %v6961 = vor.u32 %v6957, %v6960
  %v6962 = vrot.slane %v6961, 4
  %v6964 = vshll.u32 %v302, 16
  %v6966 = vrot.slane %v6964, 5
  %v6967 = vsel %vm316, %v6962, %v6966
  %v6968 = vshrl.u32 %v302, 16
  %v6970 = vrot.slane %v6968, 4
  %v6971 = vor.u32 %v6970, %v6966
  %v6972 = vrot.slane %v6971, 4
  %v6974 = vshll.u32 %v303, 16
  %v6976 = vrot.slane %v6974, 5
  %v6977 = vsel %vm316, %v6972, %v6976
  %v6979 = vshrl.u32 %v304, 16
  %v6981 = vrot.slane %v6979, 4
  %v6982 = vshll.u32 %v304, 16
  %v6984 = vrot.slane %v6982, 5
  %v6985 = vor.u32 %v6981, %v6984
  %v6986 = vrot.slane %v6985, 4
  %v6988 = vshll.u32 %v305, 16
  %v6990 = vrot.slane %v6988, 5
  %v6991 = vsel %vm316, %v6986, %v6990
  %v6992 = vshrl.u32 %v305, 16
  %v6994 = vrot.slane %v6992, 4
  %v6995 = vor.u32 %v6994, %v6990
  %v6996 = vrot.slane %v6995, 4
  %v6998 = vshll.u32 %v306, 16
  %v7000 = vrot.slane %v6998, 5
  %v7001 = vsel %vm316, %v6996, %v7000
  %v7003 = vshrl.u32 %v307, 16
  %v7005 = vrot.slane %v7003, 4
  %v7006 = vshll.u32 %v307, 16
  %v7008 = vrot.slane %v7006, 5
  %v7009 = vor.u32 %v7005, %v7008
  %v7010 = vrot.slane %v7009, 4
  %v7012 = vshll.u32 %v308, 16
  %v7014 = vrot.slane %v7012, 5
  %v7015 = vsel %vm316, %v7010, %v7014
  %v7016 = vshrl.u32 %v308, 16
  %v7018 = vrot.slane %v7016, 4
  %v7019 = vor.u32 %v7018, %v7014
  %v7020 = vrot.slane %v7019, 4
  %v7022 = vshll.u32 %v309, 16
  %v7024 = vrot.slane %v7022, 5
  %v7025 = vsel %vm316, %v7020, %v7024
  %v7027 = vshrl.u32 %v310, 16
  %v7029 = vrot.slane %v7027, 4
  %v7030 = vshll.u32 %v310, 16
  %v7032 = vrot.slane %v7030, 5
  %v7033 = vor.u32 %v7029, %v7032
  %v7034 = vrot.slane %v7033, 4
  %v7036 = vshll.u32 %v311, 16
  %v7038 = vrot.slane %v7036, 5
  %v7039 = vsel %vm316, %v7034, %v7038
  %v7040 = vshrl.u32 %v311, 16
  %v7042 = vrot.slane %v7040, 4
  %v7043 = vor.u32 %v7042, %v7038
  %v7044 = vrot.slane %v7043, 4
  %v7046 = vshll.u32 %v312, 16
  %v7048 = vrot.slane %v7046, 5
  %v7049 = vsel %vm316, %v7044, %v7048
  %s7050 = scalar_lea.vmem %s3, 14
  %v7051 = vld [vmem:[%s7050] sm:$0x3]
  %v7052 = vunpack.c.l.b16 %v6295
  %v7053 = vunpack.c.l.b16 %v6305
  %v7054 = vunpack.c.l.b16 %v6319
  %v7055 = vunpack.c.l.b16 %v6329
  %v7056 = vunpack.c.l.b16 %v6343
  %v7057 = vunpack.c.l.b16 %v6353
  %v7058 = vunpack.c.l.b16 %v6367
  %v7059 = vunpack.c.l.b16 %v6377
  %v7060 = vunpack.c.l.b16 %v6391
  %v7061 = vunpack.c.l.b16 %v6401
  %v7062 = vunpack.c.l.b16 %v6415
  %v7063 = vunpack.c.l.b16 %v6425
  %v7064 = vunpack.c.l.b16 %v6439
  %v7065 = vunpack.c.l.b16 %v6449
  %v7066 = vunpack.c.l.b16 %v6463
  %v7067 = vunpack.c.l.b16 %v6473
  %v7068 = vunpack.c.l.b16 %v6487
  %v7069 = vunpack.c.l.b16 %v6497
  %v7070 = vunpack.c.l.b16 %v6511
  %v7071 = vunpack.c.l.b16 %v6521
  %v7072 = vunpack.c.l.b16 %v6535
  %v7073 = vunpack.c.l.b16 %v6545
  %v7074 = vunpack.c.l.b16 %v6559
  %v7075 = vunpack.c.l.b16 %v6569
  %v7076 = vunpack.c.l.b16 %v6583
  %v7077 = vunpack.c.l.b16 %v6593
  %v7078 = vunpack.c.l.b16 %v6607
  %v7079 = vunpack.c.l.b16 %v6617
  %v7080 = vunpack.c.l.b16 %v6631
  %v7081 = vunpack.c.l.b16 %v6641
  %v7082 = vunpack.c.l.b16 %v6655
  %v7083 = vunpack.c.l.b16 %v6665
  %v7084 = vunpack.c.l.b16 %v6679
  %v7085 = vunpack.c.l.b16 %v6689
  %v7086 = vunpack.c.l.b16 %v6703
  %v7087 = vunpack.c.l.b16 %v6713
  %v7088 = vunpack.c.l.b16 %v6727
  %v7089 = vunpack.c.l.b16 %v6737
  %v7090 = vunpack.c.l.b16 %v6751
  %v7091 = vunpack.c.l.b16 %v6761
  %v7092 = vunpack.c.l.b16 %v6775
  %v7093 = vunpack.c.l.b16 %v6785
  %v7094 = vunpack.c.l.b16 %v6799
  %v7095 = vunpack.c.l.b16 %v6809
  %v7096 = vunpack.c.l.b16 %v6823
  %v7097 = vunpack.c.l.b16 %v6833
  %v7098 = vunpack.c.l.b16 %v6847
  %v7099 = vunpack.c.l.b16 %v6857
  %v7100 = vunpack.c.l.b16 %v6871
  %v7101 = vunpack.c.l.b16 %v6881
  %v7102 = vunpack.c.l.b16 %v6895
  %v7103 = vunpack.c.l.b16 %v6905
  %v7104 = vunpack.c.l.b16 %v6919
  %v7105 = vunpack.c.l.b16 %v6929
  %v7106 = vunpack.c.l.b16 %v6943
  %v7107 = vunpack.c.l.b16 %v6953
  %v7108 = vunpack.c.l.b16 %v6967
  %v7109 = vunpack.c.l.b16 %v6977
  %v7110 = vunpack.c.l.b16 %v6991
  %v7111 = vunpack.c.l.b16 %v7001
  %v7112 = vunpack.c.l.b16 %v7015
  %v7113 = vunpack.c.l.b16 %v7025
  %v7114 = vunpack.c.l.b16 %v7039
  %v7115 = vunpack.c.l.b16 %v7049
  %v7116 = vpack.c.b16 %v7053, %v7052
  %v7117 = vpack.c.b16 %v7055, %v7054
  %v7118 = vpack.c.b16 %v7057, %v7056
  %v7119 = vpack.c.b16 %v7059, %v7058
  %v7120 = vpack.c.b16 %v7061, %v7060
  %v7121 = vpack.c.b16 %v7063, %v7062
  %v7122 = vpack.c.b16 %v7065, %v7064
  %v7123 = vpack.c.b16 %v7067, %v7066
  %v7124 = vpack.c.b16 %v7069, %v7068
  %v7125 = vpack.c.b16 %v7071, %v7070
  %v7126 = vpack.c.b16 %v7073, %v7072
  %v7127 = vpack.c.b16 %v7075, %v7074
  %v7128 = vpack.c.b16 %v7077, %v7076
  %v7129 = vpack.c.b16 %v7079, %v7078
  %v7130 = vpack.c.b16 %v7081, %v7080
  %v7131 = vpack.c.b16 %v7083, %v7082
  %v7132 = vpack.c.b16 %v7085, %v7084
  %v7133 = vpack.c.b16 %v7087, %v7086
  %v7134 = vpack.c.b16 %v7089, %v7088
  %v7135 = vpack.c.b16 %v7091, %v7090
  %v7136 = vpack.c.b16 %v7093, %v7092
  %v7137 = vpack.c.b16 %v7095, %v7094
  %v7138 = vpack.c.b16 %v7097, %v7096
  %v7139 = vpack.c.b16 %v7099, %v7098
  %v7140 = vpack.c.b16 %v7101, %v7100
  %v7141 = vpack.c.b16 %v7103, %v7102
  %v7142 = vpack.c.b16 %v7105, %v7104
  %v7143 = vpack.c.b16 %v7107, %v7106
  %v7144 = vpack.c.b16 %v7109, %v7108
  %v7145 = vpack.c.b16 %v7111, %v7110
  %v7146 = vpack.c.b16 %v7113, %v7112
  %v7147 = vpack.c.b16 %v7115, %v7114
  %v7149 = vsel %vm1183, %v7116, 0
  %v7152 = vsel %vm1183, %v7117, 0
  %v7155 = vsel %vm1183, %v7118, 0
  %v7158 = vsel %vm1183, %v7119, 0
  %v7161 = vsel %vm1183, %v7120, 0
  %v7164 = vsel %vm1183, %v7121, 0
  %v7167 = vsel %vm1183, %v7122, 0
  %v7170 = vsel %vm1183, %v7123, 0
  %v7173 = vsel %vm1183, %v7124, 0
  %v7176 = vsel %vm1183, %v7125, 0
  %v7179 = vsel %vm1183, %v7126, 0
  %v7182 = vsel %vm1183, %v7127, 0
  %v7185 = vsel %vm1183, %v7128, 0
  %v7188 = vsel %vm1183, %v7129, 0
  %v7191 = vsel %vm1183, %v7130, 0
  %v7194 = vsel %vm1183, %v7131, 0
  %v7197 = vsel %vm1183, %v7132, 0
  %v7200 = vsel %vm1183, %v7133, 0
  %v7203 = vsel %vm1183, %v7134, 0
  %v7206 = vsel %vm1183, %v7135, 0
  %v7209 = vsel %vm1183, %v7136, 0
  %v7212 = vsel %vm1183, %v7137, 0
  %v7215 = vsel %vm1183, %v7138, 0
  %v7218 = vsel %vm1183, %v7139, 0
  %v7221 = vsel %vm1183, %v7140, 0
  %v7224 = vsel %vm1183, %v7141, 0
  %v7227 = vsel %vm1183, %v7142, 0
  %v7230 = vsel %vm1183, %v7143, 0
  %v7233 = vsel %vm1183, %v7144, 0
  %v7236 = vsel %vm1183, %v7145, 0
  %v7239 = vsel %vm1183, %v7146, 0
  %v7242 = vsel %vm1183, %v7147, 0
  %v7245 = vsel %vm1280, %v7051, 0
  %7247 = vmatprep.subr.bf16.mxu0 0
  %7248 = vmatpush1.bf16.msra.mxu0 %v7245
  %7249 = vmatprep.subr.bf16.mxu0 0
  %7250 = vmatpush1.bf16.msra.mxu0 0
  %7251 = vmatprep.subr.bf16.mxu0 0
  %7252 = vmatpush1.bf16.msra.mxu0 0
  %7253 = vmatprep.subr.bf16.mxu0 0
  %7254 = vmatpush1.bf16.msra.mxu0 0
  %7255 = vmatprep.subr.bf16.mxu0 0
  %7256 = vmatpush1.bf16.msra.mxu0 0
  %7257 = vmatprep.subr.bf16.mxu0 0
  %7258 = vmatpush1.bf16.msra.mxu0 0
  %7259 = vmatprep.subr.bf16.mxu0 0
  %7260 = vmatpush1.bf16.msra.mxu0 0
  %7261 = vmatprep.subr.bf16.mxu0 0
  %7262 = vmatpush1.bf16.msra.mxu0 0
  %7263 = vmatprep.subr.bf16.mxu0 0
  %7264 = vmatpush1.bf16.msra.mxu0 0
  %7265 = vmatprep.subr.bf16.mxu0 0
  %7266 = vmatpush1.bf16.msra.mxu0 0
  %7267 = vmatprep.subr.bf16.mxu0 0
  %7268 = vmatpush1.bf16.msra.mxu0 0
  %7269 = vmatprep.subr.bf16.mxu0 0
  %7270 = vmatpush1.bf16.msra.mxu0 0
  %7271 = vmatprep.subr.bf16.mxu0 0
  %7272 = vmatpush1.bf16.msra.mxu0 0
  %7273 = vmatprep.subr.bf16.mxu0 0
  %7274 = vmatpush1.bf16.msra.mxu0 0
  %7275 = vmatprep.subr.bf16.mxu0 0
  %7276 = vmatpush1.bf16.msra.mxu0 0
  %7277 = vmatprep.subr.bf16.mxu0 0
  %7278 = vmatpush1.bf16.msra.mxu0 0
  %7279 = vmatprep.mubr.bf16.mxu0 0
  %7280 = vmatmul.mubr.bf16.gmra.mrb[0].mxu0 %v7149
  %v7281 = vpop.f32.mrb[0].mxu0
  %v7282 = vadd.f32 0.0, %v7281
  %v7283 = vpop.f32.mrb[0].mxu0
  %v7284 = vpop.f32.mrb[0].mxu0
  %v7285 = vadd.f32 0.0, %v7284
  %v7286 = vpop.f32.mrb[0].mxu0
  %7287 = vmatprep.mubr.bf16.mxu0 0
  %7288 = vmatmul.mubr.bf16.gmra.mrb[0].mxu0 %v7152
  %v7289 = vpop.f32.mrb[0].mxu0
  %v7290 = vadd.f32 0.0, %v7289
  %v7291 = vpop.f32.mrb[0].mxu0
  %v7292 = vpop.f32.mrb[0].mxu0
  %v7293 = vadd.f32 0.0, %v7292
  %v7294 = vpop.f32.mrb[0].mxu0
  %7295 = vmatprep.mubr.bf16.mxu0 0
  %7296 = vmatmul.mubr.bf16.gmra.mrb[0].mxu0 %v7155
  %v7297 = vpop.f32.mrb[0].mxu0
  %v7298 = vadd.f32 0.0, %v7297
  %v7299 = vpop.f32.mrb[0].mxu0
  %v7300 = vpop.f32.mrb[0].mxu0
  %v7301 = vadd.f32 0.0, %v7300
  %v7302 = vpop.f32.mrb[0].mxu0
  %7303 = vmatprep.mubr.bf16.mxu0 0
  %7304 = vmatmul.mubr.bf16.gmra.mrb[0].mxu0 %v7158
  %v7305 = vpop.f32.mrb[0].mxu0
  %v7306 = vadd.f32 0.0, %v7305
  %v7307 = vpop.f32.mrb[0].mxu0
  %v7308 = vpop.f32.mrb[0].mxu0
  %v7309 = vadd.f32 0.0, %v7308
  %v7310 = vpop.f32.mrb[0].mxu0
  %7311 = vmatprep.mubr.bf16.mxu0 0
  %7312 = vmatmul.mubr.bf16.gmra.mrb[0].mxu0 %v7161
  %v7313 = vpop.f32.mrb[0].mxu0
  %v7314 = vadd.f32 0.0, %v7313
  %v7315 = vpop.f32.mrb[0].mxu0
  %v7316 = vpop.f32.mrb[0].mxu0
  %v7317 = vadd.f32 0.0, %v7316
  %v7318 = vpop.f32.mrb[0].mxu0
  %7319 = vmatprep.mubr.bf16.mxu0 0
  %7320 = vmatmul.mubr.bf16.gmra.mrb[0].mxu0 %v7164
  %v7321 = vpop.f32.mrb[0].mxu0
  %v7322 = vadd.f32 0.0, %v7321
  %v7323 = vpop.f32.mrb[0].mxu0
  %v7324 = vpop.f32.mrb[0].mxu0
  %v7325 = vadd.f32 0.0, %v7324
  %v7326 = vpop.f32.mrb[0].mxu0
  %7327 = vmatprep.mubr.bf16.mxu0 0
  %7328 = vmatmul.mubr.bf16.gmra.mrb[0].mxu0 %v7167
  %v7329 = vpop.f32.mrb[0].mxu0
  %v7330 = vadd.f32 0.0, %v7329
  %v7331 = vpop.f32.mrb[0].mxu0
  %v7332 = vpop.f32.mrb[0].mxu0
  %v7333 = vadd.f32 0.0, %v7332
  %v7334 = vpop.f32.mrb[0].mxu0
  %7335 = vmatprep.mubr.bf16.mxu0 0
  %7336 = vmatmul.mubr.bf16.gmra.mrb[0].mxu0 %v7170
  %v7337 = vpop.f32.mrb[0].mxu0
  %v7338 = vadd.f32 0.0, %v7337
  %v7339 = vpop.f32.mrb[0].mxu0
  %v7340 = vpop.f32.mrb[0].mxu0
  %v7341 = vadd.f32 0.0, %v7340
  %v7342 = vpop.f32.mrb[0].mxu0
  %7343 = vmatprep.mubr.bf16.mxu0 0
  %7344 = vmatmul.mubr.bf16.gmra.mrb[0].mxu0 %v7173
  %v7345 = vpop.f32.mrb[0].mxu0
  %v7346 = vadd.f32 0.0, %v7345
  %v7347 = vpop.f32.mrb[0].mxu0
  %v7348 = vpop.f32.mrb[0].mxu0
  %v7349 = vadd.f32 0.0, %v7348
  %v7350 = vpop.f32.mrb[0].mxu0
  %7351 = vmatprep.mubr.bf16.mxu0 0
  %7352 = vmatmul.mubr.bf16.gmra.mrb[0].mxu0 %v7176
  %v7353 = vpop.f32.mrb[0].mxu0
  %v7354 = vadd.f32 0.0, %v7353
  %v7355 = vpop.f32.mrb[0].mxu0
  %v7356 = vpop.f32.mrb[0].mxu0
  %v7357 = vadd.f32 0.0, %v7356
  %v7358 = vpop.f32.mrb[0].mxu0
  %7359 = vmatprep.mubr.bf16.mxu0 0
  %7360 = vmatmul.mubr.bf16.gmra.mrb[0].mxu0 %v7179
  %v7361 = vpop.f32.mrb[0].mxu0
  %v7362 = vadd.f32 0.0, %v7361
  %v7363 = vpop.f32.mrb[0].mxu0
  %v7364 = vpop.f32.mrb[0].mxu0
  %v7365 = vadd.f32 0.0, %v7364
  %v7366 = vpop.f32.mrb[0].mxu0
  %7367 = vmatprep.mubr.bf16.mxu0 0
  %7368 = vmatmul.mubr.bf16.gmra.mrb[0].mxu0 %v7182
  %v7369 = vpop.f32.mrb[0].mxu0
  %v7370 = vadd.f32 0.0, %v7369
  %v7371 = vpop.f32.mrb[0].mxu0
  %v7372 = vpop.f32.mrb[0].mxu0
  %v7373 = vadd.f32 0.0, %v7372
  %v7374 = vpop.f32.mrb[0].mxu0
  %7375 = vmatprep.mubr.bf16.mxu0 0
  %7376 = vmatmul.mubr.bf16.gmra.mrb[0].mxu0 %v7185
  %v7377 = vpop.f32.mrb[0].mxu0
  %v7378 = vadd.f32 0.0, %v7377
  %v7379 = vpop.f32.mrb[0].mxu0
  %v7380 = vpop.f32.mrb[0].mxu0
  %v7381 = vadd.f32 0.0, %v7380
  %v7382 = vpop.f32.mrb[0].mxu0
  %7383 = vmatprep.mubr.bf16.mxu0 0
  %7384 = vmatmul.mubr.bf16.gmra.mrb[0].mxu0 %v7188
  %v7385 = vpop.f32.mrb[0].mxu0
  %v7386 = vadd.f32 0.0, %v7385
  %v7387 = vpop.f32.mrb[0].mxu0
  %v7388 = vpop.f32.mrb[0].mxu0
  %v7389 = vadd.f32 0.0, %v7388
  %v7390 = vpop.f32.mrb[0].mxu0
  %7391 = vmatprep.mubr.bf16.mxu0 0
  %7392 = vmatmul.mubr.bf16.gmra.mrb[0].mxu0 %v7191
  %v7393 = vpop.f32.mrb[0].mxu0
  %v7394 = vadd.f32 0.0, %v7393
  %v7395 = vpop.f32.mrb[0].mxu0
  %v7396 = vpop.f32.mrb[0].mxu0
  %v7397 = vadd.f32 0.0, %v7396
  %v7398 = vpop.f32.mrb[0].mxu0
  %7399 = vmatprep.mubr.bf16.mxu0 0
  %7400 = vmatmul.mubr.bf16.gmra.mrb[0].mxu0 %v7194
  %v7401 = vpop.f32.mrb[0].mxu0
  %v7402 = vadd.f32 0.0, %v7401
  %v7403 = vpop.f32.mrb[0].mxu0
  %v7404 = vpop.f32.mrb[0].mxu0
  %v7405 = vadd.f32 0.0, %v7404
  %v7406 = vpop.f32.mrb[0].mxu0
  %7407 = vmatprep.mubr.bf16.mxu0 0
  %7408 = vmatmul.mubr.bf16.gmra.mrb[0].mxu0 %v7197
  %v7409 = vpop.f32.mrb[0].mxu0
  %v7410 = vadd.f32 0.0, %v7409
  %v7411 = vpop.f32.mrb[0].mxu0
  %v7412 = vpop.f32.mrb[0].mxu0
  %v7413 = vadd.f32 0.0, %v7412
  %v7414 = vpop.f32.mrb[0].mxu0
  %7415 = vmatprep.mubr.bf16.mxu0 0
  %7416 = vmatmul.mubr.bf16.gmra.mrb[0].mxu0 %v7200
  %v7417 = vpop.f32.mrb[0].mxu0
  %v7418 = vadd.f32 0.0, %v7417
  %v7419 = vpop.f32.mrb[0].mxu0
  %v7420 = vpop.f32.mrb[0].mxu0
  %v7421 = vadd.f32 0.0, %v7420
  %v7422 = vpop.f32.mrb[0].mxu0
  %7423 = vmatprep.mubr.bf16.mxu0 0
  %7424 = vmatmul.mubr.bf16.gmra.mrb[0].mxu0 %v7203
  %v7425 = vpop.f32.mrb[0].mxu0
  %v7426 = vadd.f32 0.0, %v7425
  %v7427 = vpop.f32.mrb[0].mxu0
  %v7428 = vpop.f32.mrb[0].mxu0
  %v7429 = vadd.f32 0.0, %v7428
  %v7430 = vpop.f32.mrb[0].mxu0
  %7431 = vmatprep.mubr.bf16.mxu0 0
  %7432 = vmatmul.mubr.bf16.gmra.mrb[0].mxu0 %v7206
  %v7433 = vpop.f32.mrb[0].mxu0
  %v7434 = vadd.f32 0.0, %v7433
  %v7435 = vpop.f32.mrb[0].mxu0
  %v7436 = vpop.f32.mrb[0].mxu0
  %v7437 = vadd.f32 0.0, %v7436
  %v7438 = vpop.f32.mrb[0].mxu0
  %7439 = vmatprep.mubr.bf16.mxu0 0
  %7440 = vmatmul.mubr.bf16.gmra.mrb[0].mxu0 %v7209
  %v7441 = vpop.f32.mrb[0].mxu0
  %v7442 = vadd.f32 0.0, %v7441
  %v7443 = vpop.f32.mrb[0].mxu0
  %v7444 = vpop.f32.mrb[0].mxu0
  %v7445 = vadd.f32 0.0, %v7444
  %v7446 = vpop.f32.mrb[0].mxu0
  %7447 = vmatprep.mubr.bf16.mxu0 0
  %7448 = vmatmul.mubr.bf16.gmra.mrb[0].mxu0 %v7212
  %v7449 = vpop.f32.mrb[0].mxu0
  %v7450 = vadd.f32 0.0, %v7449
  %v7451 = vpop.f32.mrb[0].mxu0
  %v7452 = vpop.f32.mrb[0].mxu0
  %v7453 = vadd.f32 0.0, %v7452
  %v7454 = vpop.f32.mrb[0].mxu0
  %7455 = vmatprep.mubr.bf16.mxu0 0
  %7456 = vmatmul.mubr.bf16.gmra.mrb[0].mxu0 %v7215
  %v7457 = vpop.f32.mrb[0].mxu0
  %v7458 = vadd.f32 0.0, %v7457
  %v7459 = vpop.f32.mrb[0].mxu0
  %v7460 = vpop.f32.mrb[0].mxu0
  %v7461 = vadd.f32 0.0, %v7460
  %v7462 = vpop.f32.mrb[0].mxu0
  %7463 = vmatprep.mubr.bf16.mxu0 0
  %7464 = vmatmul.mubr.bf16.gmra.mrb[0].mxu0 %v7218
  %v7465 = vpop.f32.mrb[0].mxu0
  %v7466 = vadd.f32 0.0, %v7465
  %v7467 = vpop.f32.mrb[0].mxu0
  %v7468 = vpop.f32.mrb[0].mxu0
  %v7469 = vadd.f32 0.0, %v7468
  %v7470 = vpop.f32.mrb[0].mxu0
  %7471 = vmatprep.mubr.bf16.mxu0 0
  %7472 = vmatmul.mubr.bf16.gmra.mrb[0].mxu0 %v7221
  %v7473 = vpop.f32.mrb[0].mxu0
  %v7474 = vadd.f32 0.0, %v7473
  %v7475 = vpop.f32.mrb[0].mxu0
  %v7476 = vpop.f32.mrb[0].mxu0
  %v7477 = vadd.f32 0.0, %v7476
  %v7478 = vpop.f32.mrb[0].mxu0
  %7479 = vmatprep.mubr.bf16.mxu0 0
  %7480 = vmatmul.mubr.bf16.gmra.mrb[0].mxu0 %v7224
  %v7481 = vpop.f32.mrb[0].mxu0
  %v7482 = vadd.f32 0.0, %v7481
  %v7483 = vpop.f32.mrb[0].mxu0
  %v7484 = vpop.f32.mrb[0].mxu0
  %v7485 = vadd.f32 0.0, %v7484
  %v7486 = vpop.f32.mrb[0].mxu0
  %7487 = vmatprep.mubr.bf16.mxu0 0
  %7488 = vmatmul.mubr.bf16.gmra.mrb[0].mxu0 %v7227
  %v7489 = vpop.f32.mrb[0].mxu0
  %v7490 = vadd.f32 0.0, %v7489
  %v7491 = vpop.f32.mrb[0].mxu0
  %v7492 = vpop.f32.mrb[0].mxu0
  %v7493 = vadd.f32 0.0, %v7492
  %v7494 = vpop.f32.mrb[0].mxu0
  %7495 = vmatprep.mubr.bf16.mxu0 0
  %7496 = vmatmul.mubr.bf16.gmra.mrb[0].mxu0 %v7230
  %v7497 = vpop.f32.mrb[0].mxu0
  %v7498 = vadd.f32 0.0, %v7497
  %v7499 = vpop.f32.mrb[0].mxu0
  %v7500 = vpop.f32.mrb[0].mxu0
  %v7501 = vadd.f32 0.0, %v7500
  %v7502 = vpop.f32.mrb[0].mxu0
  %7503 = vmatprep.mubr.bf16.mxu0 0
  %7504 = vmatmul.mubr.bf16.gmra.mrb[0].mxu0 %v7233
  %v7505 = vpop.f32.mrb[0].mxu0
  %v7506 = vadd.f32 0.0, %v7505
  %v7507 = vpop.f32.mrb[0].mxu0
  %v7508 = vpop.f32.mrb[0].mxu0
  %v7509 = vadd.f32 0.0, %v7508
  %v7510 = vpop.f32.mrb[0].mxu0
  %7511 = vmatprep.mubr.bf16.mxu0 0
  %7512 = vmatmul.mubr.bf16.gmra.mrb[0].mxu0 %v7236
  %v7513 = vpop.f32.mrb[0].mxu0
  %v7514 = vadd.f32 0.0, %v7513
  %v7515 = vpop.f32.mrb[0].mxu0
  %v7516 = vpop.f32.mrb[0].mxu0
  %v7517 = vadd.f32 0.0, %v7516
  %v7518 = vpop.f32.mrb[0].mxu0
  %7519 = vmatprep.mubr.bf16.mxu0 0
  %7520 = vmatmul.mubr.bf16.gmra.mrb[0].mxu0 %v7239
  %v7521 = vpop.f32.mrb[0].mxu0
  %v7522 = vadd.f32 0.0, %v7521
  %v7523 = vpop.f32.mrb[0].mxu0
  %v7524 = vpop.f32.mrb[0].mxu0
  %v7525 = vadd.f32 0.0, %v7524
  %v7526 = vpop.f32.mrb[0].mxu0
  %7527 = vmatprep.mubr.bf16.mxu0 0
  %7528 = vmatmul.mubr.bf16.gmra.mrb[0].mxu0 %v7242
  %v7529 = vpop.f32.mrb[0].mxu0
  %v7530 = vadd.f32 0.0, %v7529
  %v7531 = vpop.f32.mrb[0].mxu0
  %v7532 = vpop.f32.mrb[0].mxu0
  %v7533 = vadd.f32 0.0, %v7532
  %v7534 = vpop.f32.mrb[0].mxu0
  %7535 = vdwg.mxu0
  %v7536 = vadd.f32 %v6218, %v7282
  %v7537 = vadd.f32 %v6219, %v7285
  %v7538 = vadd.f32 %v6220, %v7290
  %v7539 = vadd.f32 %v6221, %v7293
  %v7540 = vadd.f32 %v6222, %v7298
  %v7541 = vadd.f32 %v6223, %v7301
  %v7542 = vadd.f32 %v6224, %v7306
  %v7543 = vadd.f32 %v6225, %v7309
  %v7544 = vadd.f32 %v6226, %v7314
  %v7545 = vadd.f32 %v6227, %v7317
  %v7546 = vadd.f32 %v6228, %v7322
  %v7547 = vadd.f32 %v6229, %v7325
  %v7548 = vadd.f32 %v6230, %v7330
  %v7549 = vadd.f32 %v6231, %v7333
  %v7550 = vadd.f32 %v6232, %v7338
  %v7551 = vadd.f32 %v6233, %v7341
  %v7552 = vadd.f32 %v6234, %v7346
  %v7553 = vadd.f32 %v6235, %v7349
  %v7554 = vadd.f32 %v6236, %v7354
  %v7555 = vadd.f32 %v6237, %v7357
  %v7556 = vadd.f32 %v6238, %v7362
  %v7557 = vadd.f32 %v6239, %v7365
  %v7558 = vadd.f32 %v6240, %v7370
  %v7559 = vadd.f32 %v6241, %v7373
  %v7560 = vadd.f32 %v6242, %v7378
  %v7561 = vadd.f32 %v6243, %v7381
  %v7562 = vadd.f32 %v6244, %v7386
  %v7563 = vadd.f32 %v6245, %v7389
  %v7564 = vadd.f32 %v6246, %v7394
  %v7565 = vadd.f32 %v6247, %v7397
  %v7566 = vadd.f32 %v6248, %v7402
  %v7567 = vadd.f32 %v6249, %v7405
  %v7568 = vadd.f32 %v6250, %v7410
  %v7569 = vadd.f32 %v6251, %v7413
  %v7570 = vadd.f32 %v6252, %v7418
  %v7571 = vadd.f32 %v6253, %v7421
  %v7572 = vadd.f32 %v6254, %v7426
  %v7573 = vadd.f32 %v6255, %v7429
  %v7574 = vadd.f32 %v6256, %v7434
  %v7575 = vadd.f32 %v6257, %v7437
  %v7576 = vadd.f32 %v6258, %v7442
  %v7577 = vadd.f32 %v6259, %v7445
  %v7578 = vadd.f32 %v6260, %v7450
  %v7579 = vadd.f32 %v6261, %v7453
  %v7580 = vadd.f32 %v6262, %v7458
  %v7581 = vadd.f32 %v6263, %v7461
  %v7582 = vadd.f32 %v6264, %v7466
  %v7583 = vadd.f32 %v6265, %v7469
  %v7584 = vadd.f32 %v6266, %v7474
  %v7585 = vadd.f32 %v6267, %v7477
  %v7586 = vadd.f32 %v6268, %v7482
  %v7587 = vadd.f32 %v6269, %v7485
  %v7588 = vadd.f32 %v6270, %v7490
  %v7589 = vadd.f32 %v6271, %v7493
  %v7590 = vadd.f32 %v6272, %v7498
  %v7591 = vadd.f32 %v6273, %v7501
  %v7592 = vadd.f32 %v6274, %v7506
  %v7593 = vadd.f32 %v6275, %v7509
  %v7594 = vadd.f32 %v6276, %v7514
  %v7595 = vadd.f32 %v6277, %v7517
  %v7596 = vadd.f32 %v6278, %v7522
  %v7597 = vadd.f32 %v6279, %v7525
  %v7598 = vadd.f32 %v6280, %v7530
  %v7599 = vadd.f32 %v6281, %v7533
  %v7632 = vrot.slane %v217, 5
  %v7633 = vrot.slane %v7632, 4
  %v7634 = vrot.slane %v218, 5
  %v7635 = vsel %vm2155, %v7633, %v7634
  %v7636 = vrot.slane %v7634, 4
  %v7637 = vrot.slane %v219, 5
  %v7638 = vsel %vm2155, %v7636, %v7637
  %v7639 = vrot.slane %v220, 5
  %v7640 = vrot.slane %v7639, 4
  %v7641 = vrot.slane %v221, 5
  %v7642 = vsel %vm2155, %v7640, %v7641
  %v7643 = vrot.slane %v7641, 4
  %v7644 = vrot.slane %v222, 5
  %v7645 = vsel %vm2155, %v7643, %v7644
  %v7646 = vrot.slane %v223, 5
  %v7647 = vrot.slane %v7646, 4
  %v7648 = vrot.slane %v224, 5
  %v7649 = vsel %vm2155, %v7647, %v7648
  %v7650 = vrot.slane %v7648, 4
  %v7651 = vrot.slane %v225, 5
  %v7652 = vsel %vm2155, %v7650, %v7651
  %v7653 = vrot.slane %v226, 5
  %v7654 = vrot.slane %v7653, 4
  %v7655 = vrot.slane %v227, 5
  %v7656 = vsel %vm2155, %v7654, %v7655
  %v7657 = vrot.slane %v7655, 4
  %v7658 = vrot.slane %v228, 5
  %v7659 = vsel %vm2155, %v7657, %v7658
  %v7660 = vrot.slane %v229, 5
  %v7661 = vrot.slane %v7660, 4
  %v7662 = vrot.slane %v230, 5
  %v7663 = vsel %vm2155, %v7661, %v7662
  %v7664 = vrot.slane %v7662, 4
  %v7665 = vrot.slane %v231, 5
  %v7666 = vsel %vm2155, %v7664, %v7665
  %v7667 = vrot.slane %v232, 5
  %v7668 = vrot.slane %v7667, 4
  %v7669 = vrot.slane %v233, 5
  %v7670 = vsel %vm2155, %v7668, %v7669
  %v7671 = vrot.slane %v7669, 4
  %v7672 = vrot.slane %v234, 5
  %v7673 = vsel %vm2155, %v7671, %v7672
  %v7674 = vrot.slane %v235, 5
  %v7675 = vrot.slane %v7674, 4
  %v7676 = vrot.slane %v236, 5
  %v7677 = vsel %vm2155, %v7675, %v7676
  %v7678 = vrot.slane %v7676, 4
  %v7679 = vrot.slane %v237, 5
  %v7680 = vsel %vm2155, %v7678, %v7679
  %v7681 = vrot.slane %v238, 5
  %v7682 = vrot.slane %v7681, 4
  %v7683 = vrot.slane %v239, 5
  %v7684 = vsel %vm2155, %v7682, %v7683
  %v7685 = vrot.slane %v7683, 4
  %v7686 = vrot.slane %v240, 5
  %v7687 = vsel %vm2155, %v7685, %v7686
  %v7688 = vrot.slane %v241, 5
  %v7689 = vrot.slane %v7688, 4
  %v7690 = vrot.slane %v242, 5
  %v7691 = vsel %vm2155, %v7689, %v7690
  %v7692 = vrot.slane %v7690, 4
  %v7693 = vrot.slane %v243, 5
  %v7694 = vsel %vm2155, %v7692, %v7693
  %v7695 = vrot.slane %v244, 5
  %v7696 = vrot.slane %v7695, 4
  %v7697 = vrot.slane %v245, 5
  %v7698 = vsel %vm2155, %v7696, %v7697
  %v7699 = vrot.slane %v7697, 4
  %v7700 = vrot.slane %v246, 5
  %v7701 = vsel %vm2155, %v7699, %v7700
  %v7702 = vrot.slane %v247, 5
  %v7703 = vrot.slane %v7702, 4
  %v7704 = vrot.slane %v248, 5
  %v7705 = vsel %vm2155, %v7703, %v7704
  %v7706 = vrot.slane %v7704, 4
  %v7707 = vrot.slane %v249, 5
  %v7708 = vsel %vm2155, %v7706, %v7707
  %v7709 = vrot.slane %v250, 5
  %v7710 = vrot.slane %v7709, 4
  %v7711 = vrot.slane %v251, 5
  %v7712 = vsel %vm2155, %v7710, %v7711
  %v7713 = vrot.slane %v7711, 4
  %v7714 = vrot.slane %v252, 5
  %v7715 = vsel %vm2155, %v7713, %v7714
  %v7716 = vrot.slane %v253, 5
  %v7717 = vrot.slane %v7716, 4
  %v7718 = vrot.slane %v254, 5
  %v7719 = vsel %vm2155, %v7717, %v7718
  %v7720 = vrot.slane %v7718, 4
  %v7721 = vrot.slane %v255, 5
  %v7722 = vsel %vm2155, %v7720, %v7721
  %v7723 = vrot.slane %v256, 5
  %v7724 = vrot.slane %v7723, 4
  %v7725 = vrot.slane %v257, 5
  %v7726 = vsel %vm2155, %v7724, %v7725
  %v7727 = vrot.slane %v7725, 4
  %v7728 = vrot.slane %v258, 5
  %v7729 = vsel %vm2155, %v7727, %v7728
  %v7730 = vrot.slane %v259, 5
  %v7731 = vrot.slane %v7730, 4
  %v7732 = vrot.slane %v260, 5
  %v7733 = vsel %vm2155, %v7731, %v7732
  %v7734 = vrot.slane %v7732, 4
  %v7735 = vrot.slane %v261, 5
  %v7736 = vsel %vm2155, %v7734, %v7735
  %v7737 = vrot.slane %v262, 5
  %v7738 = vrot.slane %v7737, 4
  %v7739 = vrot.slane %v263, 5
  %v7740 = vsel %vm2155, %v7738, %v7739
  %v7741 = vrot.slane %v7739, 4
  %v7742 = vrot.slane %v264, 5
  %v7743 = vsel %vm2155, %v7741, %v7742
  %v7744 = vrot.slane %v265, 5
  %v7745 = vrot.slane %v7744, 4
  %v7746 = vrot.slane %v266, 5
  %v7747 = vsel %vm2155, %v7745, %v7746
  %v7748 = vrot.slane %v7746, 4
  %v7749 = vrot.slane %v267, 5
  %v7750 = vsel %vm2155, %v7748, %v7749
  %v7751 = vrot.slane %v268, 5
  %v7752 = vrot.slane %v7751, 4
  %v7753 = vrot.slane %v269, 5
  %v7754 = vsel %vm2155, %v7752, %v7753
  %v7755 = vrot.slane %v7753, 4
  %v7756 = vrot.slane %v270, 5
  %v7757 = vsel %vm2155, %v7755, %v7756
  %v7758 = vrot.slane %v271, 5
  %v7759 = vrot.slane %v7758, 4
  %v7760 = vrot.slane %v272, 5
  %v7761 = vsel %vm2155, %v7759, %v7760
  %v7762 = vrot.slane %v7760, 4
  %v7763 = vrot.slane %v273, 5
  %v7764 = vsel %vm2155, %v7762, %v7763
  %v7765 = vrot.slane %v274, 5
  %v7766 = vrot.slane %v7765, 4
  %v7767 = vrot.slane %v275, 5
  %v7768 = vsel %vm2155, %v7766, %v7767
  %v7769 = vrot.slane %v7767, 4
  %v7770 = vrot.slane %v276, 5
  %v7771 = vsel %vm2155, %v7769, %v7770
  %v7772 = vrot.slane %v277, 5
  %v7773 = vrot.slane %v7772, 4
  %v7774 = vrot.slane %v278, 5
  %v7775 = vsel %vm2155, %v7773, %v7774
  %v7776 = vrot.slane %v7774, 4
  %v7777 = vrot.slane %v279, 5
  %v7778 = vsel %vm2155, %v7776, %v7777
  %v7779 = vrot.slane %v280, 5
  %v7780 = vrot.slane %v7779, 4
  %v7781 = vrot.slane %v281, 5
  %v7782 = vsel %vm2155, %v7780, %v7781
  %v7783 = vrot.slane %v7781, 4
  %v7784 = vrot.slane %v282, 5
  %v7785 = vsel %vm2155, %v7783, %v7784
  %v7786 = vrot.slane %v283, 5
  %v7787 = vrot.slane %v7786, 4
  %v7788 = vrot.slane %v284, 5
  %v7789 = vsel %vm2155, %v7787, %v7788
  %v7790 = vrot.slane %v7788, 4
  %v7791 = vrot.slane %v285, 5
  %v7792 = vsel %vm2155, %v7790, %v7791
  %v7793 = vrot.slane %v286, 5
  %v7794 = vrot.slane %v7793, 4
  %v7795 = vrot.slane %v287, 5
  %v7796 = vsel %vm2155, %v7794, %v7795
  %v7797 = vrot.slane %v7795, 4
  %v7798 = vrot.slane %v288, 5
  %v7799 = vsel %vm2155, %v7797, %v7798
  %v7800 = vrot.slane %v289, 5
  %v7801 = vrot.slane %v7800, 4
  %v7802 = vrot.slane %v290, 5
  %v7803 = vsel %vm2155, %v7801, %v7802
  %v7804 = vrot.slane %v7802, 4
  %v7805 = vrot.slane %v291, 5
  %v7806 = vsel %vm2155, %v7804, %v7805
  %v7807 = vrot.slane %v292, 5
  %v7808 = vrot.slane %v7807, 4
  %v7809 = vrot.slane %v293, 5
  %v7810 = vsel %vm2155, %v7808, %v7809
  %v7811 = vrot.slane %v7809, 4
  %v7812 = vrot.slane %v294, 5
  %v7813 = vsel %vm2155, %v7811, %v7812
  %v7814 = vrot.slane %v295, 5
  %v7815 = vrot.slane %v7814, 4
  %v7816 = vrot.slane %v296, 5
  %v7817 = vsel %vm2155, %v7815, %v7816
  %v7818 = vrot.slane %v7816, 4
  %v7819 = vrot.slane %v297, 5
  %v7820 = vsel %vm2155, %v7818, %v7819
  %v7821 = vrot.slane %v298, 5
  %v7822 = vrot.slane %v7821, 4
  %v7823 = vrot.slane %v299, 5
  %v7824 = vsel %vm2155, %v7822, %v7823
  %v7825 = vrot.slane %v7823, 4
  %v7826 = vrot.slane %v300, 5
  %v7827 = vsel %vm2155, %v7825, %v7826
  %v7828 = vrot.slane %v301, 5
  %v7829 = vrot.slane %v7828, 4
  %v7830 = vrot.slane %v302, 5
  %v7831 = vsel %vm2155, %v7829, %v7830
  %v7832 = vrot.slane %v7830, 4
  %v7833 = vrot.slane %v303, 5
  %v7834 = vsel %vm2155, %v7832, %v7833
  %v7835 = vrot.slane %v304, 5
  %v7836 = vrot.slane %v7835, 4
  %v7837 = vrot.slane %v305, 5
  %v7838 = vsel %vm2155, %v7836, %v7837
  %v7839 = vrot.slane %v7837, 4
  %v7840 = vrot.slane %v306, 5
  %v7841 = vsel %vm2155, %v7839, %v7840
  %v7842 = vrot.slane %v307, 5
  %v7843 = vrot.slane %v7842, 4
  %v7844 = vrot.slane %v308, 5
  %v7845 = vsel %vm2155, %v7843, %v7844
  %v7846 = vrot.slane %v7844, 4
  %v7847 = vrot.slane %v309, 5
  %v7848 = vsel %vm2155, %v7846, %v7847
  %v7849 = vrot.slane %v310, 5
  %v7850 = vrot.slane %v7849, 4
  %v7851 = vrot.slane %v311, 5
  %v7852 = vsel %vm2155, %v7850, %v7851
  %v7853 = vrot.slane %v7851, 4
  %v7854 = vrot.slane %v312, 5
  %v7855 = vsel %vm2155, %v7853, %v7854
  %s7856 = scalar_lea.vmem %s3, 16
  %v7857 = vld [vmem:[%s7856] sm:$0x3]
  %v7858 = vunpack.c.l.b16 %v7635
  %v7859 = vunpack.c.l.b16 %v7638
  %v7860 = vunpack.c.l.b16 %v7642
  %v7861 = vunpack.c.l.b16 %v7645
  %v7862 = vunpack.c.l.b16 %v7649
  %v7863 = vunpack.c.l.b16 %v7652
  %v7864 = vunpack.c.l.b16 %v7656
  %v7865 = vunpack.c.l.b16 %v7659
  %v7866 = vunpack.c.l.b16 %v7663
  %v7867 = vunpack.c.l.b16 %v7666
  %v7868 = vunpack.c.l.b16 %v7670
  %v7869 = vunpack.c.l.b16 %v7673
  %v7870 = vunpack.c.l.b16 %v7677
  %v7871 = vunpack.c.l.b16 %v7680
  %v7872 = vunpack.c.l.b16 %v7684
  %v7873 = vunpack.c.l.b16 %v7687
  %v7874 = vunpack.c.l.b16 %v7691
  %v7875 = vunpack.c.l.b16 %v7694
  %v7876 = vunpack.c.l.b16 %v7698
  %v7877 = vunpack.c.l.b16 %v7701
  %v7878 = vunpack.c.l.b16 %v7705
  %v7879 = vunpack.c.l.b16 %v7708
  %v7880 = vunpack.c.l.b16 %v7712
  %v7881 = vunpack.c.l.b16 %v7715
  %v7882 = vunpack.c.l.b16 %v7719
  %v7883 = vunpack.c.l.b16 %v7722
  %v7884 = vunpack.c.l.b16 %v7726
  %v7885 = vunpack.c.l.b16 %v7729
  %v7886 = vunpack.c.l.b16 %v7733
  %v7887 = vunpack.c.l.b16 %v7736
  %v7888 = vunpack.c.l.b16 %v7740
  %v7889 = vunpack.c.l.b16 %v7743
  %v7890 = vunpack.c.l.b16 %v7747
  %v7891 = vunpack.c.l.b16 %v7750
  %v7892 = vunpack.c.l.b16 %v7754
  %v7893 = vunpack.c.l.b16 %v7757
  %v7894 = vunpack.c.l.b16 %v7761
  %v7895 = vunpack.c.l.b16 %v7764
  %v7896 = vunpack.c.l.b16 %v7768
  %v7897 = vunpack.c.l.b16 %v7771
  %v7898 = vunpack.c.l.b16 %v7775
  %v7899 = vunpack.c.l.b16 %v7778
  %v7900 = vunpack.c.l.b16 %v7782
  %v7901 = vunpack.c.l.b16 %v7785
  %v7902 = vunpack.c.l.b16 %v7789
  %v7903 = vunpack.c.l.b16 %v7792
  %v7904 = vunpack.c.l.b16 %v7796
  %v7905 = vunpack.c.l.b16 %v7799
  %v7906 = vunpack.c.l.b16 %v7803
  %v7907 = vunpack.c.l.b16 %v7806
  %v7908 = vunpack.c.l.b16 %v7810
  %v7909 = vunpack.c.l.b16 %v7813
  %v7910 = vunpack.c.l.b16 %v7817
  %v7911 = vunpack.c.l.b16 %v7820
  %v7912 = vunpack.c.l.b16 %v7824
  %v7913 = vunpack.c.l.b16 %v7827
  %v7914 = vunpack.c.l.b16 %v7831
  %v7915 = vunpack.c.l.b16 %v7834
  %v7916 = vunpack.c.l.b16 %v7838
  %v7917 = vunpack.c.l.b16 %v7841
  %v7918 = vunpack.c.l.b16 %v7845
  %v7919 = vunpack.c.l.b16 %v7848
  %v7920 = vunpack.c.l.b16 %v7852
  %v7921 = vunpack.c.l.b16 %v7855
  %v7922 = vpack.c.b16 %v7859, %v7858
  %v7923 = vpack.c.b16 %v7861, %v7860
  %v7924 = vpack.c.b16 %v7863, %v7862
  %v7925 = vpack.c.b16 %v7865, %v7864
  %v7926 = vpack.c.b16 %v7867, %v7866
  %v7927 = vpack.c.b16 %v7869, %v7868
  %v7928 = vpack.c.b16 %v7871, %v7870
  %v7929 = vpack.c.b16 %v7873, %v7872
  %v7930 = vpack.c.b16 %v7875, %v7874
  %v7931 = vpack.c.b16 %v7877, %v7876
  %v7932 = vpack.c.b16 %v7879, %v7878
  %v7933 = vpack.c.b16 %v7881, %v7880
  %v7934 = vpack.c.b16 %v7883, %v7882
  %v7935 = vpack.c.b16 %v7885, %v7884
  %v7936 = vpack.c.b16 %v7887, %v7886
  %v7937 = vpack.c.b16 %v7889, %v7888
  %v7938 = vpack.c.b16 %v7891, %v7890
  %v7939 = vpack.c.b16 %v7893, %v7892
  %v7940 = vpack.c.b16 %v7895, %v7894
  %v7941 = vpack.c.b16 %v7897, %v7896
  %v7942 = vpack.c.b16 %v7899, %v7898
  %v7943 = vpack.c.b16 %v7901, %v7900
  %v7944 = vpack.c.b16 %v7903, %v7902
  %v7945 = vpack.c.b16 %v7905, %v7904
  %v7946 = vpack.c.b16 %v7907, %v7906
  %v7947 = vpack.c.b16 %v7909, %v7908
  %v7948 = vpack.c.b16 %v7911, %v7910
  %v7949 = vpack.c.b16 %v7913, %v7912
  %v7950 = vpack.c.b16 %v7915, %v7914
  %v7951 = vpack.c.b16 %v7917, %v7916
  %v7952 = vpack.c.b16 %v7919, %v7918
  %v7953 = vpack.c.b16 %v7921, %v7920
  %v7955 = vsel %vm1183, %v7922, 0
  %v7958 = vsel %vm1183, %v7923, 0
  %v7961 = vsel %vm1183, %v7924, 0
  %v7964 = vsel %vm1183, %v7925, 0
  %v7967 = vsel %vm1183, %v7926, 0
  %v7970 = vsel %vm1183, %v7927, 0
  %v7973 = vsel %vm1183, %v7928, 0
  %v7976 = vsel %vm1183, %v7929, 0
  %v7979 = vsel %vm1183, %v7930, 0
  %v7982 = vsel %vm1183, %v7931, 0
  %v7985 = vsel %vm1183, %v7932, 0
  %v7988 = vsel %vm1183, %v7933, 0
  %v7991 = vsel %vm1183, %v7934, 0
  %v7994 = vsel %vm1183, %v7935, 0
  %v7997 = vsel %vm1183, %v7936, 0
  %v8000 = vsel %vm1183, %v7937, 0
  %v8003 = vsel %vm1183, %v7938, 0
  %v8006 = vsel %vm1183, %v7939, 0
  %v8009 = vsel %vm1183, %v7940, 0
  %v8012 = vsel %vm1183, %v7941, 0
  %v8015 = vsel %vm1183, %v7942, 0
  %v8018 = vsel %vm1183, %v7943, 0
  %v8021 = vsel %vm1183, %v7944, 0
  %v8024 = vsel %vm1183, %v7945, 0
  %v8027 = vsel %vm1183, %v7946, 0
  %v8030 = vsel %vm1183, %v7947, 0
  %v8033 = vsel %vm1183, %v7948, 0
  %v8036 = vsel %vm1183, %v7949, 0
  %v8039 = vsel %vm1183, %v7950, 0
  %v8042 = vsel %vm1183, %v7951, 0
  %v8045 = vsel %vm1183, %v7952, 0
  %v8048 = vsel %vm1183, %v7953, 0
  %v8051 = vsel %vm1280, %v7857, 0
  %8053 = vmatprep.subr.bf16.mxu0 0
  %8054 = vmatpush1.bf16.msra.mxu0 %v8051
  %8055 = vmatprep.subr.bf16.mxu0 0
  %8056 = vmatpush1.bf16.msra.mxu0 0
  %8057 = vmatprep.subr.bf16.mxu0 0
  %8058 = vmatpush1.bf16.msra.mxu0 0
  %8059 = vmatprep.subr.bf16.mxu0 0
  %8060 = vmatpush1.bf16.msra.mxu0 0
  %8061 = vmatprep.subr.bf16.mxu0 0
  %8062 = vmatpush1.bf16.msra.mxu0 0
  %8063 = vmatprep.subr.bf16.mxu0 0
  %8064 = vmatpush1.bf16.msra.mxu0 0
  %8065 = vmatprep.subr.bf16.mxu0 0
  %8066 = vmatpush1.bf16.msra.mxu0 0
  %8067 = vmatprep.subr.bf16.mxu0 0
  %8068 = vmatpush1.bf16.msra.mxu0 0
  %8069 = vmatprep.subr.bf16.mxu0 0
  %8070 = vmatpush1.bf16.msra.mxu0 0
  %8071 = vmatprep.subr.bf16.mxu0 0
  %8072 = vmatpush1.bf16.msra.mxu0 0
  %8073 = vmatprep.subr.bf16.mxu0 0
  %8074 = vmatpush1.bf16.msra.mxu0 0
  %8075 = vmatprep.subr.bf16.mxu0 0
  %8076 = vmatpush1.bf16.msra.mxu0 0
  %8077 = vmatprep.subr.bf16.mxu0 0
  %8078 = vmatpush1.bf16.msra.mxu0 0
  %8079 = vmatprep.subr.bf16.mxu0 0
  %8080 = vmatpush1.bf16.msra.mxu0 0
  %8081 = vmatprep.subr.bf16.mxu0 0
  %8082 = vmatpush1.bf16.msra.mxu0 0
  %8083 = vmatprep.subr.bf16.mxu0 0
  %8084 = vmatpush1.bf16.msra.mxu0 0
  %8085 = vmatprep.mubr.bf16.mxu0 0
  %8086 = vmatmul.mubr.bf16.gmra.mrb[0].mxu0 %v7955
  %v8087 = vpop.f32.mrb[0].mxu0
  %v8088 = vadd.f32 0.0, %v8087
  %v8089 = vpop.f32.mrb[0].mxu0
  %v8090 = vpop.f32.mrb[0].mxu0
  %v8091 = vadd.f32 0.0, %v8090
  %v8092 = vpop.f32.mrb[0].mxu0
  %8093 = vmatprep.mubr.bf16.mxu0 0
  %8094 = vmatmul.mubr.bf16.gmra.mrb[0].mxu0 %v7958
  %v8095 = vpop.f32.mrb[0].mxu0
  %v8096 = vadd.f32 0.0, %v8095
  %v8097 = vpop.f32.mrb[0].mxu0
  %v8098 = vpop.f32.mrb[0].mxu0
  %v8099 = vadd.f32 0.0, %v8098
  %v8100 = vpop.f32.mrb[0].mxu0
  %8101 = vmatprep.mubr.bf16.mxu0 0
  %8102 = vmatmul.mubr.bf16.gmra.mrb[0].mxu0 %v7961
  %v8103 = vpop.f32.mrb[0].mxu0
  %v8104 = vadd.f32 0.0, %v8103
  %v8105 = vpop.f32.mrb[0].mxu0
  %v8106 = vpop.f32.mrb[0].mxu0
  %v8107 = vadd.f32 0.0, %v8106
  %v8108 = vpop.f32.mrb[0].mxu0
  %8109 = vmatprep.mubr.bf16.mxu0 0
  %8110 = vmatmul.mubr.bf16.gmra.mrb[0].mxu0 %v7964
  %v8111 = vpop.f32.mrb[0].mxu0
  %v8112 = vadd.f32 0.0, %v8111
  %v8113 = vpop.f32.mrb[0].mxu0
  %v8114 = vpop.f32.mrb[0].mxu0
  %v8115 = vadd.f32 0.0, %v8114
  %v8116 = vpop.f32.mrb[0].mxu0
  %8117 = vmatprep.mubr.bf16.mxu0 0
  %8118 = vmatmul.mubr.bf16.gmra.mrb[0].mxu0 %v7967
  %v8119 = vpop.f32.mrb[0].mxu0
  %v8120 = vadd.f32 0.0, %v8119
  %v8121 = vpop.f32.mrb[0].mxu0
  %v8122 = vpop.f32.mrb[0].mxu0
  %v8123 = vadd.f32 0.0, %v8122
  %v8124 = vpop.f32.mrb[0].mxu0
  %8125 = vmatprep.mubr.bf16.mxu0 0
  %8126 = vmatmul.mubr.bf16.gmra.mrb[0].mxu0 %v7970
  %v8127 = vpop.f32.mrb[0].mxu0
  %v8128 = vadd.f32 0.0, %v8127
  %v8129 = vpop.f32.mrb[0].mxu0
  %v8130 = vpop.f32.mrb[0].mxu0
  %v8131 = vadd.f32 0.0, %v8130
  %v8132 = vpop.f32.mrb[0].mxu0
  %8133 = vmatprep.mubr.bf16.mxu0 0
  %8134 = vmatmul.mubr.bf16.gmra.mrb[0].mxu0 %v7973
  %v8135 = vpop.f32.mrb[0].mxu0
  %v8136 = vadd.f32 0.0, %v8135
  %v8137 = vpop.f32.mrb[0].mxu0
  %v8138 = vpop.f32.mrb[0].mxu0
  %v8139 = vadd.f32 0.0, %v8138
  %v8140 = vpop.f32.mrb[0].mxu0
  %8141 = vmatprep.mubr.bf16.mxu0 0
  %8142 = vmatmul.mubr.bf16.gmra.mrb[0].mxu0 %v7976
  %v8143 = vpop.f32.mrb[0].mxu0
  %v8144 = vadd.f32 0.0, %v8143
  %v8145 = vpop.f32.mrb[0].mxu0
  %v8146 = vpop.f32.mrb[0].mxu0
  %v8147 = vadd.f32 0.0, %v8146
  %v8148 = vpop.f32.mrb[0].mxu0
  %8149 = vmatprep.mubr.bf16.mxu0 0
  %8150 = vmatmul.mubr.bf16.gmra.mrb[0].mxu0 %v7979
  %v8151 = vpop.f32.mrb[0].mxu0
  %v8152 = vadd.f32 0.0, %v8151
  %v8153 = vpop.f32.mrb[0].mxu0
  %v8154 = vpop.f32.mrb[0].mxu0
  %v8155 = vadd.f32 0.0, %v8154
  %v8156 = vpop.f32.mrb[0].mxu0
  %8157 = vmatprep.mubr.bf16.mxu0 0
  %8158 = vmatmul.mubr.bf16.gmra.mrb[0].mxu0 %v7982
  %v8159 = vpop.f32.mrb[0].mxu0
  %v8160 = vadd.f32 0.0, %v8159
  %v8161 = vpop.f32.mrb[0].mxu0
  %v8162 = vpop.f32.mrb[0].mxu0
  %v8163 = vadd.f32 0.0, %v8162
  %v8164 = vpop.f32.mrb[0].mxu0
  %8165 = vmatprep.mubr.bf16.mxu0 0
  %8166 = vmatmul.mubr.bf16.gmra.mrb[0].mxu0 %v7985
  %v8167 = vpop.f32.mrb[0].mxu0
  %v8168 = vadd.f32 0.0, %v8167
  %v8169 = vpop.f32.mrb[0].mxu0
  %v8170 = vpop.f32.mrb[0].mxu0
  %v8171 = vadd.f32 0.0, %v8170
  %v8172 = vpop.f32.mrb[0].mxu0
  %8173 = vmatprep.mubr.bf16.mxu0 0
  %8174 = vmatmul.mubr.bf16.gmra.mrb[0].mxu0 %v7988
  %v8175 = vpop.f32.mrb[0].mxu0
  %v8176 = vadd.f32 0.0, %v8175
  %v8177 = vpop.f32.mrb[0].mxu0
  %v8178 = vpop.f32.mrb[0].mxu0
  %v8179 = vadd.f32 0.0, %v8178
  %v8180 = vpop.f32.mrb[0].mxu0
  %8181 = vmatprep.mubr.bf16.mxu0 0
  %8182 = vmatmul.mubr.bf16.gmra.mrb[0].mxu0 %v7991
  %v8183 = vpop.f32.mrb[0].mxu0
  %v8184 = vadd.f32 0.0, %v8183
  %v8185 = vpop.f32.mrb[0].mxu0
  %v8186 = vpop.f32.mrb[0].mxu0
  %v8187 = vadd.f32 0.0, %v8186
  %v8188 = vpop.f32.mrb[0].mxu0
  %8189 = vmatprep.mubr.bf16.mxu0 0
  %8190 = vmatmul.mubr.bf16.gmra.mrb[0].mxu0 %v7994
  %v8191 = vpop.f32.mrb[0].mxu0
  %v8192 = vadd.f32 0.0, %v8191
  %v8193 = vpop.f32.mrb[0].mxu0
  %v8194 = vpop.f32.mrb[0].mxu0
  %v8195 = vadd.f32 0.0, %v8194
  %v8196 = vpop.f32.mrb[0].mxu0
  %8197 = vmatprep.mubr.bf16.mxu0 0
  %8198 = vmatmul.mubr.bf16.gmra.mrb[0].mxu0 %v7997
  %v8199 = vpop.f32.mrb[0].mxu0
  %v8200 = vadd.f32 0.0, %v8199
  %v8201 = vpop.f32.mrb[0].mxu0
  %v8202 = vpop.f32.mrb[0].mxu0
  %v8203 = vadd.f32 0.0, %v8202
  %v8204 = vpop.f32.mrb[0].mxu0
  %8205 = vmatprep.mubr.bf16.mxu0 0
  %8206 = vmatmul.mubr.bf16.gmra.mrb[0].mxu0 %v8000
  %v8207 = vpop.f32.mrb[0].mxu0
  %v8208 = vadd.f32 0.0, %v8207
  %v8209 = vpop.f32.mrb[0].mxu0
  %v8210 = vpop.f32.mrb[0].mxu0
  %v8211 = vadd.f32 0.0, %v8210
  %v8212 = vpop.f32.mrb[0].mxu0
  %8213 = vmatprep.mubr.bf16.mxu0 0
  %8214 = vmatmul.mubr.bf16.gmra.mrb[0].mxu0 %v8003
  %v8215 = vpop.f32.mrb[0].mxu0
  %v8216 = vadd.f32 0.0, %v8215
  %v8217 = vpop.f32.mrb[0].mxu0
  %v8218 = vpop.f32.mrb[0].mxu0
  %v8219 = vadd.f32 0.0, %v8218
  %v8220 = vpop.f32.mrb[0].mxu0
  %8221 = vmatprep.mubr.bf16.mxu0 0
  %8222 = vmatmul.mubr.bf16.gmra.mrb[0].mxu0 %v8006
  %v8223 = vpop.f32.mrb[0].mxu0
  %v8224 = vadd.f32 0.0, %v8223
  %v8225 = vpop.f32.mrb[0].mxu0
  %v8226 = vpop.f32.mrb[0].mxu0
  %v8227 = vadd.f32 0.0, %v8226
  %v8228 = vpop.f32.mrb[0].mxu0
  %8229 = vmatprep.mubr.bf16.mxu0 0
  %8230 = vmatmul.mubr.bf16.gmra.mrb[0].mxu0 %v8009
  %v8231 = vpop.f32.mrb[0].mxu0
  %v8232 = vadd.f32 0.0, %v8231
  %v8233 = vpop.f32.mrb[0].mxu0
  %v8234 = vpop.f32.mrb[0].mxu0
  %v8235 = vadd.f32 0.0, %v8234
  %v8236 = vpop.f32.mrb[0].mxu0
  %8237 = vmatprep.mubr.bf16.mxu0 0
  %8238 = vmatmul.mubr.bf16.gmra.mrb[0].mxu0 %v8012
  %v8239 = vpop.f32.mrb[0].mxu0
  %v8240 = vadd.f32 0.0, %v8239
  %v8241 = vpop.f32.mrb[0].mxu0
  %v8242 = vpop.f32.mrb[0].mxu0
  %v8243 = vadd.f32 0.0, %v8242
  %v8244 = vpop.f32.mrb[0].mxu0
  %8245 = vmatprep.mubr.bf16.mxu0 0
  %8246 = vmatmul.mubr.bf16.gmra.mrb[0].mxu0 %v8015
  %v8247 = vpop.f32.mrb[0].mxu0
  %v8248 = vadd.f32 0.0, %v8247
  %v8249 = vpop.f32.mrb[0].mxu0
  %v8250 = vpop.f32.mrb[0].mxu0
  %v8251 = vadd.f32 0.0, %v8250
  %v8252 = vpop.f32.mrb[0].mxu0
  %8253 = vmatprep.mubr.bf16.mxu0 0
  %8254 = vmatmul.mubr.bf16.gmra.mrb[0].mxu0 %v8018
  %v8255 = vpop.f32.mrb[0].mxu0
  %v8256 = vadd.f32 0.0, %v8255
  %v8257 = vpop.f32.mrb[0].mxu0
  %v8258 = vpop.f32.mrb[0].mxu0
  %v8259 = vadd.f32 0.0, %v8258
  %v8260 = vpop.f32.mrb[0].mxu0
  %8261 = vmatprep.mubr.bf16.mxu0 0
  %8262 = vmatmul.mubr.bf16.gmra.mrb[0].mxu0 %v8021
  %v8263 = vpop.f32.mrb[0].mxu0
  %v8264 = vadd.f32 0.0, %v8263
  %v8265 = vpop.f32.mrb[0].mxu0
  %v8266 = vpop.f32.mrb[0].mxu0
  %v8267 = vadd.f32 0.0, %v8266
  %v8268 = vpop.f32.mrb[0].mxu0
  %8269 = vmatprep.mubr.bf16.mxu0 0
  %8270 = vmatmul.mubr.bf16.gmra.mrb[0].mxu0 %v8024
  %v8271 = vpop.f32.mrb[0].mxu0
  %v8272 = vadd.f32 0.0, %v8271
  %v8273 = vpop.f32.mrb[0].mxu0
  %v8274 = vpop.f32.mrb[0].mxu0
  %v8275 = vadd.f32 0.0, %v8274
  %v8276 = vpop.f32.mrb[0].mxu0
  %8277 = vmatprep.mubr.bf16.mxu0 0
  %8278 = vmatmul.mubr.bf16.gmra.mrb[0].mxu0 %v8027
  %v8279 = vpop.f32.mrb[0].mxu0
  %v8280 = vadd.f32 0.0, %v8279
  %v8281 = vpop.f32.mrb[0].mxu0
  %v8282 = vpop.f32.mrb[0].mxu0
  %v8283 = vadd.f32 0.0, %v8282
  %v8284 = vpop.f32.mrb[0].mxu0
  %8285 = vmatprep.mubr.bf16.mxu0 0
  %8286 = vmatmul.mubr.bf16.gmra.mrb[0].mxu0 %v8030
  %v8287 = vpop.f32.mrb[0].mxu0
  %v8288 = vadd.f32 0.0, %v8287
  %v8289 = vpop.f32.mrb[0].mxu0
  %v8290 = vpop.f32.mrb[0].mxu0
  %v8291 = vadd.f32 0.0, %v8290
  %v8292 = vpop.f32.mrb[0].mxu0
  %8293 = vmatprep.mubr.bf16.mxu0 0
  %8294 = vmatmul.mubr.bf16.gmra.mrb[0].mxu0 %v8033
  %v8295 = vpop.f32.mrb[0].mxu0
  %v8296 = vadd.f32 0.0, %v8295
  %v8297 = vpop.f32.mrb[0].mxu0
  %v8298 = vpop.f32.mrb[0].mxu0
  %v8299 = vadd.f32 0.0, %v8298
  %v8300 = vpop.f32.mrb[0].mxu0
  %8301 = vmatprep.mubr.bf16.mxu0 0
  %8302 = vmatmul.mubr.bf16.gmra.mrb[0].mxu0 %v8036
  %v8303 = vpop.f32.mrb[0].mxu0
  %v8304 = vadd.f32 0.0, %v8303
  %v8305 = vpop.f32.mrb[0].mxu0
  %v8306 = vpop.f32.mrb[0].mxu0
  %v8307 = vadd.f32 0.0, %v8306
  %v8308 = vpop.f32.mrb[0].mxu0
  %8309 = vmatprep.mubr.bf16.mxu0 0
  %8310 = vmatmul.mubr.bf16.gmra.mrb[0].mxu0 %v8039
  %v8311 = vpop.f32.mrb[0].mxu0
  %v8312 = vadd.f32 0.0, %v8311
  %v8313 = vpop.f32.mrb[0].mxu0
  %v8314 = vpop.f32.mrb[0].mxu0
  %v8315 = vadd.f32 0.0, %v8314
  %v8316 = vpop.f32.mrb[0].mxu0
  %8317 = vmatprep.mubr.bf16.mxu0 0
  %8318 = vmatmul.mubr.bf16.gmra.mrb[0].mxu0 %v8042
  %v8319 = vpop.f32.mrb[0].mxu0
  %v8320 = vadd.f32 0.0, %v8319
  %v8321 = vpop.f32.mrb[0].mxu0
  %v8322 = vpop.f32.mrb[0].mxu0
  %v8323 = vadd.f32 0.0, %v8322
  %v8324 = vpop.f32.mrb[0].mxu0
  %8325 = vmatprep.mubr.bf16.mxu0 0
  %8326 = vmatmul.mubr.bf16.gmra.mrb[0].mxu0 %v8045
  %v8327 = vpop.f32.mrb[0].mxu0
  %v8328 = vadd.f32 0.0, %v8327
  %v8329 = vpop.f32.mrb[0].mxu0
  %v8330 = vpop.f32.mrb[0].mxu0
  %v8331 = vadd.f32 0.0, %v8330
  %v8332 = vpop.f32.mrb[0].mxu0
  %8333 = vmatprep.mubr.bf16.mxu0 0
  %8334 = vmatmul.mubr.bf16.gmra.mrb[0].mxu0 %v8048
  %v8335 = vpop.f32.mrb[0].mxu0
  %v8336 = vadd.f32 0.0, %v8335
  %v8337 = vpop.f32.mrb[0].mxu0
  %v8338 = vpop.f32.mrb[0].mxu0
  %v8339 = vadd.f32 0.0, %v8338
  %v8340 = vpop.f32.mrb[0].mxu0
  %8341 = vdwg.mxu0
  %v8342 = vadd.f32 %v7536, %v8088
  %v8343 = vadd.f32 %v7537, %v8091
  %v8344 = vadd.f32 %v7538, %v8096
  %v8345 = vadd.f32 %v7539, %v8099
  %v8346 = vadd.f32 %v7540, %v8104
  %v8347 = vadd.f32 %v7541, %v8107
  %v8348 = vadd.f32 %v7542, %v8112
  %v8349 = vadd.f32 %v7543, %v8115
  %v8350 = vadd.f32 %v7544, %v8120
  %v8351 = vadd.f32 %v7545, %v8123
  %v8352 = vadd.f32 %v7546, %v8128
  %v8353 = vadd.f32 %v7547, %v8131
  %v8354 = vadd.f32 %v7548, %v8136
  %v8355 = vadd.f32 %v7549, %v8139
  %v8356 = vadd.f32 %v7550, %v8144
  %v8357 = vadd.f32 %v7551, %v8147
  %v8358 = vadd.f32 %v7552, %v8152
  %v8359 = vadd.f32 %v7553, %v8155
  %v8360 = vadd.f32 %v7554, %v8160
  %v8361 = vadd.f32 %v7555, %v8163
  %v8362 = vadd.f32 %v7556, %v8168
  %v8363 = vadd.f32 %v7557, %v8171
  %v8364 = vadd.f32 %v7558, %v8176
  %v8365 = vadd.f32 %v7559, %v8179
  %v8366 = vadd.f32 %v7560, %v8184
  %v8367 = vadd.f32 %v7561, %v8187
  %v8368 = vadd.f32 %v7562, %v8192
  %v8369 = vadd.f32 %v7563, %v8195
  %v8370 = vadd.f32 %v7564, %v8200
  %v8371 = vadd.f32 %v7565, %v8203
  %v8372 = vadd.f32 %v7566, %v8208
  %v8373 = vadd.f32 %v7567, %v8211
  %v8374 = vadd.f32 %v7568, %v8216
  %v8375 = vadd.f32 %v7569, %v8219
  %v8376 = vadd.f32 %v7570, %v8224
  %v8377 = vadd.f32 %v7571, %v8227
  %v8378 = vadd.f32 %v7572, %v8232
  %v8379 = vadd.f32 %v7573, %v8235
  %v8380 = vadd.f32 %v7574, %v8240
  %v8381 = vadd.f32 %v7575, %v8243
  %v8382 = vadd.f32 %v7576, %v8248
  %v8383 = vadd.f32 %v7577, %v8251
  %v8384 = vadd.f32 %v7578, %v8256
  %v8385 = vadd.f32 %v7579, %v8259
  %v8386 = vadd.f32 %v7580, %v8264
  %v8387 = vadd.f32 %v7581, %v8267
  %v8388 = vadd.f32 %v7582, %v8272
  %v8389 = vadd.f32 %v7583, %v8275
  %v8390 = vadd.f32 %v7584, %v8280
  %v8391 = vadd.f32 %v7585, %v8283
  %v8392 = vadd.f32 %v7586, %v8288
  %v8393 = vadd.f32 %v7587, %v8291
  %v8394 = vadd.f32 %v7588, %v8296
  %v8395 = vadd.f32 %v7589, %v8299
  %v8396 = vadd.f32 %v7590, %v8304
  %v8397 = vadd.f32 %v7591, %v8307
  %v8398 = vadd.f32 %v7592, %v8312
  %v8399 = vadd.f32 %v7593, %v8315
  %v8400 = vadd.f32 %v7594, %v8320
  %v8401 = vadd.f32 %v7595, %v8323
  %v8402 = vadd.f32 %v7596, %v8328
  %v8403 = vadd.f32 %v7597, %v8331
  %v8404 = vadd.f32 %v7598, %v8336
  %v8405 = vadd.f32 %v7599, %v8339
  %v8406 = vld [vmem:[%s4] sm:$0x1]
  %v8408 = vlaneseq
  %v8409 = vshrl.u32 %v8408, 7
  %v8410 = vsub.s32 0, %v8409
  %v8411 = vrot.slane %v8406, %v8410
  %v8413 = vadd.f32 %v8342, %v8411
  %v8414 = vadd.f32 %v8343, %v8411
  %v8415 = vadd.f32 %v8344, %v8411
  %v8416 = vadd.f32 %v8345, %v8411
  %v8417 = vadd.f32 %v8346, %v8411
  %v8418 = vadd.f32 %v8347, %v8411
  %v8419 = vadd.f32 %v8348, %v8411
  %v8420 = vadd.f32 %v8349, %v8411
  %v8421 = vadd.f32 %v8350, %v8411
  %v8422 = vadd.f32 %v8351, %v8411
  %v8423 = vadd.f32 %v8352, %v8411
  %v8424 = vadd.f32 %v8353, %v8411
  %v8425 = vadd.f32 %v8354, %v8411
  %v8426 = vadd.f32 %v8355, %v8411
  %v8427 = vadd.f32 %v8356, %v8411
  %v8428 = vadd.f32 %v8357, %v8411
  %v8429 = vadd.f32 %v8358, %v8411
  %v8430 = vadd.f32 %v8359, %v8411
  %v8431 = vadd.f32 %v8360, %v8411
  %v8432 = vadd.f32 %v8361, %v8411
  %v8433 = vadd.f32 %v8362, %v8411
  %v8434 = vadd.f32 %v8363, %v8411
  %v8435 = vadd.f32 %v8364, %v8411
  %v8436 = vadd.f32 %v8365, %v8411
  %v8437 = vadd.f32 %v8366, %v8411
  %v8438 = vadd.f32 %v8367, %v8411
  %v8439 = vadd.f32 %v8368, %v8411
  %v8440 = vadd.f32 %v8369, %v8411
  %v8441 = vadd.f32 %v8370, %v8411
  %v8442 = vadd.f32 %v8371, %v8411
  %v8443 = vadd.f32 %v8372, %v8411
  %v8444 = vadd.f32 %v8373, %v8411
  %v8445 = vadd.f32 %v8374, %v8411
  %v8446 = vadd.f32 %v8375, %v8411
  %v8447 = vadd.f32 %v8376, %v8411
  %v8448 = vadd.f32 %v8377, %v8411
  %v8449 = vadd.f32 %v8378, %v8411
  %v8450 = vadd.f32 %v8379, %v8411
  %v8451 = vadd.f32 %v8380, %v8411
  %v8452 = vadd.f32 %v8381, %v8411
  %v8453 = vadd.f32 %v8382, %v8411
  %v8454 = vadd.f32 %v8383, %v8411
  %v8455 = vadd.f32 %v8384, %v8411
  %v8456 = vadd.f32 %v8385, %v8411
  %v8457 = vadd.f32 %v8386, %v8411
  %v8458 = vadd.f32 %v8387, %v8411
  %v8459 = vadd.f32 %v8388, %v8411
  %v8460 = vadd.f32 %v8389, %v8411
  %v8461 = vadd.f32 %v8390, %v8411
  %v8462 = vadd.f32 %v8391, %v8411
  %v8463 = vadd.f32 %v8392, %v8411
  %v8464 = vadd.f32 %v8393, %v8411
  %v8465 = vadd.f32 %v8394, %v8411
  %v8466 = vadd.f32 %v8395, %v8411
  %v8467 = vadd.f32 %v8396, %v8411
  %v8468 = vadd.f32 %v8397, %v8411
  %v8469 = vadd.f32 %v8398, %v8411
  %v8470 = vadd.f32 %v8399, %v8411
  %v8471 = vadd.f32 %v8400, %v8411
  %v8472 = vadd.f32 %v8401, %v8411
  %v8473 = vadd.f32 %v8402, %v8411
  %v8474 = vadd.f32 %v8403, %v8411
  %v8475 = vadd.f32 %v8404, %v8411
  %v8476 = vadd.f32 %v8405, %v8411
  %s8477 = sld [smem:[#allocation2]]
  %vm8478 = vcmp.gt.f32.partialorder %v8413, 0.0
  %vm8479 = vcmp.gt.f32.partialorder %v8414, 0.0
  %vm8480 = vcmp.gt.f32.partialorder %v8415, 0.0
  %vm8481 = vcmp.gt.f32.partialorder %v8416, 0.0
  %vm8482 = vcmp.gt.f32.partialorder %v8417, 0.0
  %vm8483 = vcmp.gt.f32.partialorder %v8418, 0.0
  %vm8484 = vcmp.gt.f32.partialorder %v8419, 0.0
  %vm8485 = vcmp.gt.f32.partialorder %v8420, 0.0
  %vm8486 = vcmp.gt.f32.partialorder %v8421, 0.0
  %vm8487 = vcmp.gt.f32.partialorder %v8422, 0.0
  %vm8488 = vcmp.gt.f32.partialorder %v8423, 0.0
  %vm8489 = vcmp.gt.f32.partialorder %v8424, 0.0
  %vm8490 = vcmp.gt.f32.partialorder %v8425, 0.0
  %vm8491 = vcmp.gt.f32.partialorder %v8426, 0.0
  %vm8492 = vcmp.gt.f32.partialorder %v8427, 0.0
  %vm8493 = vcmp.gt.f32.partialorder %v8428, 0.0
  %vm8494 = vcmp.gt.f32.partialorder %v8429, 0.0
  %vm8495 = vcmp.gt.f32.partialorder %v8430, 0.0
  %vm8496 = vcmp.gt.f32.partialorder %v8431, 0.0
  %vm8497 = vcmp.gt.f32.partialorder %v8432, 0.0
  %vm8498 = vcmp.gt.f32.partialorder %v8433, 0.0
  %vm8499 = vcmp.gt.f32.partialorder %v8434, 0.0
  %vm8500 = vcmp.gt.f32.partialorder %v8435, 0.0
  %vm8501 = vcmp.gt.f32.partialorder %v8436, 0.0
  %vm8502 = vcmp.gt.f32.partialorder %v8437, 0.0
  %vm8503 = vcmp.gt.f32.partialorder %v8438, 0.0
  %vm8504 = vcmp.gt.f32.partialorder %v8439, 0.0
  %vm8505 = vcmp.gt.f32.partialorder %v8440, 0.0
  %vm8506 = vcmp.gt.f32.partialorder %v8441, 0.0
  %vm8507 = vcmp.gt.f32.partialorder %v8442, 0.0
  %vm8508 = vcmp.gt.f32.partialorder %v8443, 0.0
  %vm8509 = vcmp.gt.f32.partialorder %v8444, 0.0
  %vm8510 = vcmp.gt.f32.partialorder %v8445, 0.0
  %vm8511 = vcmp.gt.f32.partialorder %v8446, 0.0
  %vm8512 = vcmp.gt.f32.partialorder %v8447, 0.0
  %vm8513 = vcmp.gt.f32.partialorder %v8448, 0.0
  %vm8514 = vcmp.gt.f32.partialorder %v8449, 0.0
  %vm8515 = vcmp.gt.f32.partialorder %v8450, 0.0
  %vm8516 = vcmp.gt.f32.partialorder %v8451, 0.0
  %vm8517 = vcmp.gt.f32.partialorder %v8452, 0.0
  %vm8518 = vcmp.gt.f32.partialorder %v8453, 0.0
  %vm8519 = vcmp.gt.f32.partialorder %v8454, 0.0
  %vm8520 = vcmp.gt.f32.partialorder %v8455, 0.0
  %vm8521 = vcmp.gt.f32.partialorder %v8456, 0.0
  %vm8522 = vcmp.gt.f32.partialorder %v8457, 0.0
  %vm8523 = vcmp.gt.f32.partialorder %v8458, 0.0
  %vm8524 = vcmp.gt.f32.partialorder %v8459, 0.0
  %vm8525 = vcmp.gt.f32.partialorder %v8460, 0.0
  %vm8526 = vcmp.gt.f32.partialorder %v8461, 0.0
  %vm8527 = vcmp.gt.f32.partialorder %v8462, 0.0
  %vm8528 = vcmp.gt.f32.partialorder %v8463, 0.0
  %vm8529 = vcmp.gt.f32.partialorder %v8464, 0.0
  %vm8530 = vcmp.gt.f32.partialorder %v8465, 0.0
  %vm8531 = vcmp.gt.f32.partialorder %v8466, 0.0
  %vm8532 = vcmp.gt.f32.partialorder %v8467, 0.0
  %vm8533 = vcmp.gt.f32.partialorder %v8468, 0.0
  %vm8534 = vcmp.gt.f32.partialorder %v8469, 0.0
  %vm8535 = vcmp.gt.f32.partialorder %v8470, 0.0
  %vm8536 = vcmp.gt.f32.partialorder %v8471, 0.0
  %vm8537 = vcmp.gt.f32.partialorder %v8472, 0.0
  %vm8538 = vcmp.gt.f32.partialorder %v8473, 0.0
  %vm8539 = vcmp.gt.f32.partialorder %v8474, 0.0
  %vm8540 = vcmp.gt.f32.partialorder %v8475, 0.0
  %vm8541 = vcmp.gt.f32.partialorder %v8476, 0.0
  %v8542 = vstv %s8477
  %v8543 = vmul.f32 %v8542, %v8413
  %v8544 = vmul.f32 %v8542, %v8414
  %v8545 = vmul.f32 %v8542, %v8415
  %v8546 = vmul.f32 %v8542, %v8416
  %v8547 = vmul.f32 %v8542, %v8417
  %v8548 = vmul.f32 %v8542, %v8418
  %v8549 = vmul.f32 %v8542, %v8419
  %v8550 = vmul.f32 %v8542, %v8420
  %v8551 = vmul.f32 %v8542, %v8421
  %v8552 = vmul.f32 %v8542, %v8422
  %v8553 = vmul.f32 %v8542, %v8423
  %v8554 = vmul.f32 %v8542, %v8424
  %v8555 = vmul.f32 %v8542, %v8425
  %v8556 = vmul.f32 %v8542, %v8426
  %v8557 = vmul.f32 %v8542, %v8427
  %v8558 = vmul.f32 %v8542, %v8428
  %v8559 = vmul.f32 %v8542, %v8429
  %v8560 = vmul.f32 %v8542, %v8430
  %v8561 = vmul.f32 %v8542, %v8431
  %v8562 = vmul.f32 %v8542, %v8432
  %v8563 = vmul.f32 %v8542, %v8433
  %v8564 = vmul.f32 %v8542, %v8434
  %v8565 = vmul.f32 %v8542, %v8435
  %v8566 = vmul.f32 %v8542, %v8436
  %v8567 = vmul.f32 %v8542, %v8437
  %v8568 = vmul.f32 %v8542, %v8438
  %v8569 = vmul.f32 %v8542, %v8439
  %v8570 = vmul.f32 %v8542, %v8440
  %v8571 = vmul.f32 %v8542, %v8441
  %v8572 = vmul.f32 %v8542, %v8442
  %v8573 = vmul.f32 %v8542, %v8443
  %v8574 = vmul.f32 %v8542, %v8444
  %v8575 = vmul.f32 %v8542, %v8445
  %v8576 = vmul.f32 %v8542, %v8446
  %v8577 = vmul.f32 %v8542, %v8447
  %v8578 = vmul.f32 %v8542, %v8448
  %v8579 = vmul.f32 %v8542, %v8449
  %v8580 = vmul.f32 %v8542, %v8450
  %v8581 = vmul.f32 %v8542, %v8451
  %v8582 = vmul.f32 %v8542, %v8452
  %v8583 = vmul.f32 %v8542, %v8453
  %v8584 = vmul.f32 %v8542, %v8454
  %v8585 = vmul.f32 %v8542, %v8455
  %v8586 = vmul.f32 %v8542, %v8456
  %v8587 = vmul.f32 %v8542, %v8457
  %v8588 = vmul.f32 %v8542, %v8458
  %v8589 = vmul.f32 %v8542, %v8459
  %v8590 = vmul.f32 %v8542, %v8460
  %v8591 = vmul.f32 %v8542, %v8461
  %v8592 = vmul.f32 %v8542, %v8462
  %v8593 = vmul.f32 %v8542, %v8463
  %v8594 = vmul.f32 %v8542, %v8464
  %v8595 = vmul.f32 %v8542, %v8465
  %v8596 = vmul.f32 %v8542, %v8466
  %v8597 = vmul.f32 %v8542, %v8467
  %v8598 = vmul.f32 %v8542, %v8468
  %v8599 = vmul.f32 %v8542, %v8469
  %v8600 = vmul.f32 %v8542, %v8470
  %v8601 = vmul.f32 %v8542, %v8471
  %v8602 = vmul.f32 %v8542, %v8472
  %v8603 = vmul.f32 %v8542, %v8473
  %v8604 = vmul.f32 %v8542, %v8474
  %v8605 = vmul.f32 %v8542, %v8475
  %v8606 = vmul.f32 %v8542, %v8476
  %v8607 = vsel %vm8478, %v8413, %v8543
  %v8608 = vsel %vm8479, %v8414, %v8544
  %v8609 = vsel %vm8480, %v8415, %v8545
  %v8610 = vsel %vm8481, %v8416, %v8546
  %v8611 = vsel %vm8482, %v8417, %v8547
  %v8612 = vsel %vm8483, %v8418, %v8548
  %v8613 = vsel %vm8484, %v8419, %v8549
  %v8614 = vsel %vm8485, %v8420, %v8550
  %v8615 = vsel %vm8486, %v8421, %v8551
  %v8616 = vsel %vm8487, %v8422, %v8552
  %v8617 = vsel %vm8488, %v8423, %v8553
  %v8618 = vsel %vm8489, %v8424, %v8554
  %v8619 = vsel %vm8490, %v8425, %v8555
  %v8620 = vsel %vm8491, %v8426, %v8556
  %v8621 = vsel %vm8492, %v8427, %v8557
  %v8622 = vsel %vm8493, %v8428, %v8558
  %v8623 = vsel %vm8494, %v8429, %v8559
  %v8624 = vsel %vm8495, %v8430, %v8560
  %v8625 = vsel %vm8496, %v8431, %v8561
  %v8626 = vsel %vm8497, %v8432, %v8562
  %v8627 = vsel %vm8498, %v8433, %v8563
  %v8628 = vsel %vm8499, %v8434, %v8564
  %v8629 = vsel %vm8500, %v8435, %v8565
  %v8630 = vsel %vm8501, %v8436, %v8566
  %v8631 = vsel %vm8502, %v8437, %v8567
  %v8632 = vsel %vm8503, %v8438, %v8568
  %v8633 = vsel %vm8504, %v8439, %v8569
  %v8634 = vsel %vm8505, %v8440, %v8570
  %v8635 = vsel %vm8506, %v8441, %v8571
  %v8636 = vsel %vm8507, %v8442, %v8572
  %v8637 = vsel %vm8508, %v8443, %v8573
  %v8638 = vsel %vm8509, %v8444, %v8574
  %v8639 = vsel %vm8510, %v8445, %v8575
  %v8640 = vsel %vm8511, %v8446, %v8576
  %v8641 = vsel %vm8512, %v8447, %v8577
  %v8642 = vsel %vm8513, %v8448, %v8578
  %v8643 = vsel %vm8514, %v8449, %v8579
  %v8644 = vsel %vm8515, %v8450, %v8580
  %v8645 = vsel %vm8516, %v8451, %v8581
  %v8646 = vsel %vm8517, %v8452, %v8582
  %v8647 = vsel %vm8518, %v8453, %v8583
  %v8648 = vsel %vm8519, %v8454, %v8584
  %v8649 = vsel %vm8520, %v8455, %v8585
  %v8650 = vsel %vm8521, %v8456, %v8586
  %v8651 = vsel %vm8522, %v8457, %v8587
  %v8652 = vsel %vm8523, %v8458, %v8588
  %v8653 = vsel %vm8524, %v8459, %v8589
  %v8654 = vsel %vm8525, %v8460, %v8590
  %v8655 = vsel %vm8526, %v8461, %v8591
  %v8656 = vsel %vm8527, %v8462, %v8592
  %v8657 = vsel %vm8528, %v8463, %v8593
  %v8658 = vsel %vm8529, %v8464, %v8594
  %v8659 = vsel %vm8530, %v8465, %v8595
  %v8660 = vsel %vm8531, %v8466, %v8596
  %v8661 = vsel %vm8532, %v8467, %v8597
  %v8662 = vsel %vm8533, %v8468, %v8598
  %v8663 = vsel %vm8534, %v8469, %v8599
  %v8664 = vsel %vm8535, %v8470, %v8600
  %v8665 = vsel %vm8536, %v8471, %v8601
  %v8666 = vsel %vm8537, %v8472, %v8602
  %v8667 = vsel %vm8538, %v8473, %v8603
  %v8668 = vsel %vm8539, %v8474, %v8604
  %v8669 = vsel %vm8540, %v8475, %v8605
  %v8670 = vsel %vm8541, %v8476, %v8606
  %8671 = vst [vmem:[%s6] sm:$0xff] %v8607
  %8672 = vst [vmem:[%s6 + $0x8] sm:$0xff] %v8608
  %8673 = vst [vmem:[%s6 + $0x10] sm:$0xff] %v8609
  %8674 = vst [vmem:[%s6 + $0x18] sm:$0xff] %v8610
  %8675 = vst [vmem:[%s6 + $0x20] sm:$0xff] %v8611
  %8676 = vst [vmem:[%s6 + $0x28] sm:$0xff] %v8612
  %8677 = vst [vmem:[%s6 + $0x30] sm:$0xff] %v8613
  %8678 = vst [vmem:[%s6 + $0x38] sm:$0xff] %v8614
  %8679 = vst [vmem:[%s6 + $0x40] sm:$0xff] %v8615
  %8680 = vst [vmem:[%s6 + $0x48] sm:$0xff] %v8616
  %8681 = vst [vmem:[%s6 + $0x50] sm:$0xff] %v8617
  %8682 = vst [vmem:[%s6 + $0x58] sm:$0xff] %v8618
  %8683 = vst [vmem:[%s6 + $0x60] sm:$0xff] %v8619
  %8684 = vst [vmem:[%s6 + $0x68] sm:$0xff] %v8620
  %8685 = vst [vmem:[%s6 + $0x70] sm:$0xff] %v8621
  %8686 = vst [vmem:[%s6 + $0x78] sm:$0xff] %v8622
  %8687 = vst [vmem:[%s6 + $0x80] sm:$0xff] %v8623
  %8688 = vst [vmem:[%s6 + $0x88] sm:$0xff] %v8624
  %8689 = vst [vmem:[%s6 + $0x90] sm:$0xff] %v8625
  %8690 = vst [vmem:[%s6 + $0x98] sm:$0xff] %v8626
  %8691 = vst [vmem:[%s6 + $0xa0] sm:$0xff] %v8627
  %8692 = vst [vmem:[%s6 + $0xa8] sm:$0xff] %v8628
  %8693 = vst [vmem:[%s6 + $0xb0] sm:$0xff] %v8629
  %8694 = vst [vmem:[%s6 + $0xb8] sm:$0xff] %v8630
  %8695 = vst [vmem:[%s6 + $0xc0] sm:$0xff] %v8631
  %8696 = vst [vmem:[%s6 + $0xc8] sm:$0xff] %v8632
  %8697 = vst [vmem:[%s6 + $0xd0] sm:$0xff] %v8633
  %8698 = vst [vmem:[%s6 + $0xd8] sm:$0xff] %v8634
  %8699 = vst [vmem:[%s6 + $0xe0] sm:$0xff] %v8635
  %8700 = vst [vmem:[%s6 + $0xe8] sm:$0xff] %v8636
  %8701 = vst [vmem:[%s6 + $0xf0] sm:$0xff] %v8637
  %8702 = vst [vmem:[%s6 + $0xf8] sm:$0xff] %v8638
  %8703 = vst [vmem:[%s6 + $0x100] sm:$0xff] %v8639
  %8704 = vst [vmem:[%s6 + $0x108] sm:$0xff] %v8640
  %8705 = vst [vmem:[%s6 + $0x110] sm:$0xff] %v8641
  %8706 = vst [vmem:[%s6 + $0x118] sm:$0xff] %v8642
  %8707 = vst [vmem:[%s6 + $0x120] sm:$0xff] %v8643
  %8708 = vst [vmem:[%s6 + $0x128] sm:$0xff] %v8644
  %8709 = vst [vmem:[%s6 + $0x130] sm:$0xff] %v8645
  %8710 = vst [vmem:[%s6 + $0x138] sm:$0xff] %v8646
  %8711 = vst [vmem:[%s6 + $0x140] sm:$0xff] %v8647
  %8712 = vst [vmem:[%s6 + $0x148] sm:$0xff] %v8648
  %8713 = vst [vmem:[%s6 + $0x150] sm:$0xff] %v8649
  %8714 = vst [vmem:[%s6 + $0x158] sm:$0xff] %v8650
  %8715 = vst [vmem:[%s6 + $0x160] sm:$0xff] %v8651
  %8716 = vst [vmem:[%s6 + $0x168] sm:$0xff] %v8652
  %8717 = vst [vmem:[%s6 + $0x170] sm:$0xff] %v8653
  %8718 = vst [vmem:[%s6 + $0x178] sm:$0xff] %v8654
  %8719 = vst [vmem:[%s6 + $0x180] sm:$0xff] %v8655
  %8720 = vst [vmem:[%s6 + $0x188] sm:$0xff] %v8656
  %8721 = vst [vmem:[%s6 + $0x190] sm:$0xff] %v8657
  %8722 = vst [vmem:[%s6 + $0x198] sm:$0xff] %v8658
  %8723 = vst [vmem:[%s6 + $0x1a0] sm:$0xff] %v8659
  %8724 = vst [vmem:[%s6 + $0x1a8] sm:$0xff] %v8660
  %8725 = vst [vmem:[%s6 + $0x1b0] sm:$0xff] %v8661
  %8726 = vst [vmem:[%s6 + $0x1b8] sm:$0xff] %v8662
  %8727 = vst [vmem:[%s6 + $0x1c0] sm:$0xff] %v8663
  %8728 = vst [vmem:[%s6 + $0x1c8] sm:$0xff] %v8664
  %8729 = vst [vmem:[%s6 + $0x1d0] sm:$0xff] %v8665
  %8730 = vst [vmem:[%s6 + $0x1d8] sm:$0xff] %v8666
  %8731 = vst [vmem:[%s6 + $0x1e0] sm:$0xff] %v8667
  %8732 = vst [vmem:[%s6 + $0x1e8] sm:$0xff] %v8668
  %8733 = vst [vmem:[%s6 + $0x1f0] sm:$0xff] %v8669
  %8734 = vst [vmem:[%s6 + $0x1f8] sm:$0xff] %v8670
  // Predicated region
  $region26: #{upsampler_forward.1} parent=0 // pred_check
    _
  $region27: #{upsampler_forward.1} parent=0 // pred_check_branch
    %8736 = sbr.rel (0) target = $region29
  $region28: #{upsampler_forward.1} parent=0 // pred_region
    _
  $region29: #{upsampler_forward.1} parent=0 // pred_fallthru
    _
  // Predicated region
  $region30: #{upsampler_forward.1} parent=0 // pred_check
    _
  $region31: #{upsampler_forward.1} parent=0 // pred_check_branch
    %8738 = sbr.rel (0) target = $region33
  $region32: #{upsampler_forward.1} parent=0 // pred_region
    _
  $region33: #{upsampler_forward.1} parent=0 // pred_fallthru
    _

</llo_original>
